<compile_context>
chip_gen: v7x
topology: tpu7x:2x2x1
jax: 0.10.0
libtpu: 0.0.40
codegen_flags: <defaults>
</compile_context>

<pallas_src>
import functools

import numpy as np
import jax
import jax.numpy as jnp
from jax.experimental import pallas as pl
from jax.experimental.pallas import tpu as pltpu

EPS = 1e-5
VMEM_LIMIT = 32 * 1024 * 1024  # explicit scoped-VMEM limit; safe on v5e/v6e/v7x


def _cparams(n_axes=1):
    return pltpu.CompilerParams(
        dimension_semantics=("parallel",) * n_axes,
        vmem_limit_bytes=VMEM_LIMIT,
    )


def _pick_rows(n, cap=1024):
    """Largest row tile <= cap dividing n that keeps (8,128) tiling legal."""
    if n <= cap:
        return n
    t = cap - cap % 8
    while t >= 8:
        if n % t == 0:
            return t
        t -= 8
    return n


def _pick_div(n, cap=256):
    """Largest divisor of n that is <= cap (leading-dim tiles, no alignment rule)."""
    if n <= cap:
        return n
    for t in range(cap, 0, -1):
        if n % t == 0:
            return t
    return n


# ----------------------------- Pallas kernels ------------------------------


def _conv_stats_kernel(x_ref, m_ref, y_ref, s_ref, *, H, KH):
    """Conv as ONE wide-K matmul + BN partial statistics.

    x_ref: (Hp, Wp*Cin) padded image (width flattened into lanes), f32
    m_ref: (KH*Wp*Cin, W*Cout) banded weight matrix, bf16
    y_ref: (H, W*Cout) conv result (lane-dense), f32
    s_ref: (2, W*Cout) per-image [sum; sum-of-squares] partials, f32
    """
    rows = [x_ref[kh:kh + H, :] for kh in range(KH)]           # KH row-shifted views
    lhs = rows[0] if KH == 1 else jnp.concatenate(rows, axis=-1)
    acc = jnp.dot(lhs.astype(jnp.bfloat16), m_ref[...],
                  preferred_element_type=jnp.float32)          # single MXU matmul
    y_ref[...] = acc
    s_ref[0:1, :] = jnp.sum(acc, axis=0, keepdims=True)
    s_ref[1:2, :] = jnp.sum(acc * acc, axis=0, keepdims=True)


def _bn_relu_kernel(x_ref, a_ref, b_ref, o_ref):
    """Lane-dense (rows, W*C) normalize+affine+ReLU: o = max(x*a + b, 0)."""
    o_ref[...] = jnp.maximum(x_ref[...] * a_ref[...] + b_ref[...], 0.0)


def _bn_relu_pool_kernel(x_ref, a_ref, b_ref, o_ref, *, C):
    """Fused BN-apply + ReLU + 2x2/2 max-pool.

    x_ref: (tr, 2, W/2, 2C)  -- (row-pair, even/odd row, half-width, even/odd col*C)
    a_ref, b_ref: (1, 1, 1, 2C) scale/shift
    o_ref: (tr, W/2, C)
    """
    x = jnp.maximum(x_ref[...] * a_ref[...] + b_ref[...], 0.0)
    m = jnp.maximum(x[:, 0], x[:, 1])                # max over the two H rows
    o_ref[...] = jnp.maximum(m[:, :, :C], m[:, :, C:])  # max over the two W columns


def _upsample_kernel(x_ref, ah_ref, awc_ref, o_ref):
    """Fused separable bilinear upsample for one image, lane-dense layout.

    x_ref: (Hi, Wi*C); ah_ref: (Ho, Hi); awc_ref: (Wi*C, Wo*C); o_ref: (Ho, Wo*C).
    """
    t = jnp.dot(ah_ref[...], x_ref[...], preferred_element_type=jnp.float32)
    o_ref[...] = jnp.dot(t, awc_ref[...], preferred_element_type=jnp.float32)


def _linear_ln_relu_kernel(x_ref, w_ref, b_ref, g_ref, bt_ref, o_ref):
    """Linear (bf16 MXU operands, f32 accum) + LayerNorm (f32) + ReLU."""
    y = jnp.dot(x_ref[...].astype(jnp.bfloat16), w_ref[...],
                preferred_element_type=jnp.float32) + b_ref[...]
    mu = jnp.mean(y, axis=-1, keepdims=True)
    var = jnp.mean((y - mu) ** 2, axis=-1, keepdims=True)
    y = (y - mu) * jax.lax.rsqrt(var + EPS)
    o_ref[...] = jnp.maximum(y * g_ref[...] + bt_ref[...], 0.0)


# ----------------------------- wrappers ------------------------------


def conv_bn_relu(x, p, kernel_hw, *, fuse_pool=False):
    """x: (B, H, W, Cin) NHWC.  Conv(same) + BatchNorm(train) + ReLU.

    If fuse_pool, the 2x2/2 max-pool is fused into the BN-apply epilogue.
    The Conv2d bias is omitted on purpose: it is exactly cancelled by the
    train-mode BatchNorm mean subtraction that always follows it.
    """
    B, H, W, Cin = x.shape
    KH, KW = kernel_hw
    ph, pw = KH // 2, KW // 2
    Hp, Wp = H + KH - 1, W + KW - 1
    Cout = p["w"].shape[-1]

    # Banded weight matrix: M[(kh, wp, ci), (w, co)] = weight[kh, kw, ci, co]
    # where wp == w + kw.  Folds the KW taps + output columns into one matmul.
    sel = np.zeros((KW, W, Wp), np.float32)
    for kw in range(KW):
        sel[kw, np.arange(W), np.arange(W) + kw] = 1.0
    band = jnp.einsum("xwp,hxio->hpiwo", jnp.asarray(sel), p["w"])
    band = band.reshape(KH * Wp * Cin, W * Cout).astype(jnp.bfloat16)

    xp = jnp.pad(x, ((0, 0), (ph, ph), (pw, pw), (0, 0)))
    x2d = xp.reshape(B, Hp, Wp * Cin)  # width flattened into lanes (free reshape)

    conv_out, stats = pl.pallas_call(
        functools.partial(_conv_stats_kernel, H=H, KH=KH),
        grid=(B,),
        in_specs=[
            pl.BlockSpec((None, Hp, Wp * Cin), lambda b: (b, 0, 0)),
            pl.BlockSpec((KH * Wp * Cin, W * Cout), lambda b: (0, 0)),
        ],
        out_specs=[
            pl.BlockSpec((None, H, W * Cout), lambda b: (b, 0, 0)),
            pl.BlockSpec((None, 2, W * Cout), lambda b: (b, 0, 0)),
        ],
        out_shape=[
            jax.ShapeDtypeStruct((B, H, W * Cout), jnp.float32),
            jax.ShapeDtypeStruct((B, 2, W * Cout), jnp.float32),
        ],
        compiler_params=_cparams(1),
    )(x2d, band)

    # Finish BN statistics (tiny reduction) and fold everything into scale/shift.
    n = B * H * W
    s = stats.reshape(B, 2, W, Cout).sum(axis=(0, 2))
    mean = s[0] / n
    var = jnp.maximum(s[1] / n - mean * mean, 0.0)
    scale = p["gamma"] * jax.lax.rsqrt(var + EPS)
    shift = p["beta"] - mean * scale

    if not fuse_pool:
        a_vec = jnp.tile(scale, W).reshape(1, W * Cout)
        b_vec = jnp.tile(shift, W).reshape(1, W * Cout)
        rows = B * H
        tr = _pick_rows(rows)
        out = pl.pallas_call(
            _bn_relu_kernel,
            grid=(rows // tr,),
            in_specs=[
                pl.BlockSpec((tr, W * Cout), lambda i: (i, 0)),
                pl.BlockSpec((1, W * Cout), lambda i: (0, 0)),
                pl.BlockSpec((1, W * Cout), lambda i: (0, 0)),
            ],
            out_specs=pl.BlockSpec((tr, W * Cout), lambda i: (i, 0)),
            out_shape=jax.ShapeDtypeStruct((rows, W * Cout), jnp.float32),
            compiler_params=_cparams(1),
        )(conv_out.reshape(rows, W * Cout), a_vec, b_vec)
        return out.reshape(B, H, W, Cout)

    # Fused BN + ReLU + 2x2 max-pool epilogue (no HBM round trip of the full-res map).
    assert H % 2 == 0 and W % 2 == 0, "max-pool needs even spatial dims"
    Hh, Wh = H // 2, W // 2
    a_vec = jnp.tile(scale, 2).reshape(1, 1, 1, 2 * Cout)
    b_vec = jnp.tile(shift, 2).reshape(1, 1, 1, 2 * Cout)
    rows = B * Hh
    tr = _pick_div(rows, 256)
    x5 = conv_out.reshape(rows, 2, Wh, 2 * Cout)  # free reshape of NHWC memory order
    out = pl.pallas_call(
        functools.partial(_bn_relu_pool_kernel, C=Cout),
        grid=(rows // tr,),
        in_specs=[
            pl.BlockSpec((tr, 2, Wh, 2 * Cout), lambda i: (i, 0, 0, 0)),
            pl.BlockSpec((1, 1, 1, 2 * Cout), lambda i: (0, 0, 0, 0)),
            pl.BlockSpec((1, 1, 1, 2 * Cout), lambda i: (0, 0, 0, 0)),
        ],
        out_specs=pl.BlockSpec((tr, Wh, Cout), lambda i: (i, 0, 0)),
        out_shape=jax.ShapeDtypeStruct((rows, Wh, Cout), jnp.float32),
        compiler_params=_cparams(1),
    )(x5, a_vec, b_vec)
    return out.reshape(B, Hh, Wh, Cout)


def _interp_matrix_np(out_size, in_size):
    """Row-stochastic bilinear interpolation matrix, align_corners=True (numpy)."""
    if in_size == 1:
        return np.ones((out_size, 1), np.float32)
    if out_size == 1:
        a = np.zeros((1, in_size), np.float32)
        a[0, 0] = 1.0
        return a
    src = np.arange(out_size, dtype=np.float64) * (in_size - 1) / (out_size - 1)
    i0 = np.clip(np.floor(src).astype(np.int64), 0, in_size - 2)
    frac = (src - i0).astype(np.float32)
    a = np.zeros((out_size, in_size), np.float32)
    a[np.arange(out_size), i0] += 1.0 - frac
    a[np.arange(out_size), i0 + 1] += frac
    return a


def upsample_bilinear(x, out_hw):
    """x: (B, Hi, Wi, C) -> (B, Ho, Wo, C), bilinear align_corners=True, fused."""
    B, Hi, Wi, C = x.shape
    Ho, Wo = out_hw
    ah = jnp.asarray(_interp_matrix_np(Ho, Hi))                       # (Ho, Hi)
    awc = jnp.asarray(
        np.kron(_interp_matrix_np(Wo, Wi), np.eye(C, dtype=np.float32)).T
    )                                                                 # (Wi*C, Wo*C)
    x2 = x.reshape(B, Hi, Wi * C)
    out = pl.pallas_call(
        _upsample_kernel,
        grid=(B,),
        in_specs=[
            pl.BlockSpec((None, Hi, Wi * C), lambda b: (b, 0, 0)),
            pl.BlockSpec((Ho, Hi), lambda b: (0, 0)),
            pl.BlockSpec((Wi * C, Wo * C), lambda b: (0, 0)),
        ],
        out_specs=pl.BlockSpec((None, Ho, Wo * C), lambda b: (b, 0, 0)),
        out_shape=jax.ShapeDtypeStruct((B, Ho, Wo * C), jnp.float32),
        compiler_params=_cparams(1),
    )(x2, ah, awc)
    return out.reshape(B, Ho, Wo, C)


def linear_ln_relu(x, p):
    """x: (B, Fin) -> (B, Fout). Linear + LayerNorm + ReLU, tiled over rows."""
    Bn, Fin = x.shape
    Fout = p["w"].shape[1]
    tb = _pick_rows(Bn, 256)
    return pl.pallas_call(
        _linear_ln_relu_kernel,
        grid=(Bn // tb,),
        in_specs=[
            pl.BlockSpec((tb, Fin), lambda i: (i, 0)),
            pl.BlockSpec((Fin, Fout), lambda i: (0, 0)),
            pl.BlockSpec((1, Fout), lambda i: (0, 0)),
            pl.BlockSpec((1, Fout), lambda i: (0, 0)),
            pl.BlockSpec((1, Fout), lambda i: (0, 0)),
        ],
        out_specs=pl.BlockSpec((tb, Fout), lambda i: (i, 0)),
        out_shape=jax.ShapeDtypeStruct((Bn, Fout), jnp.float32),
        compiler_params=_cparams(1),
    )(
        x,
        p["w"].astype(jnp.bfloat16),
        p["b"].reshape(1, -1),
        p["gamma"].reshape(1, -1),
        p["beta"].reshape(1, -1),
    )


# ----------------------------- parameters ------------------------------


def _init_conv(key, cin, cout, kh, kw):
    fan_in = cin * kh * kw
    return {
        # Conv bias omitted: exactly cancelled by the train-mode BN that follows.
        "w": jax.random.normal(key, (kh, kw, cin, cout), jnp.float32) / np.sqrt(fan_in),
        "gamma": jnp.ones((cout,), jnp.float32),   # BatchNorm weight
        "beta": jnp.zeros((cout,), jnp.float32),   # BatchNorm bias
    }


def _init_linear(key, fin, fout):
    k1, k2 = jax.random.split(key)
    return {
        "w": jax.random.normal(k1, (fin, fout), jnp.float32) / np.sqrt(fin),
        "b": jax.random.normal(k2, (fout,), jnp.float32) * 0.01,
        "gamma": jnp.ones((fout,), jnp.float32),   # LayerNorm weight
        "beta": jnp.zeros((fout,), jnp.float32),   # LayerNorm bias
    }


def init_conv_ae_params(key, channels, latent_dim, height, width, kernel=(3, 3)):
    if any(d % 2 == 0 for d in kernel):
        raise ValueError("Only odd kernel sizes accepted")
    kh, kw = kernel
    n_blocks = len(channels) - 1
    ki = iter(jax.random.split(key, 4 * n_blocks + 2))
    encoders = []
    for i in range(n_blocks):
        encoders.append({
            "conv1": _init_conv(next(ki), channels[i], channels[i + 1], kh, kw),
            "conv2": _init_conv(next(ki), channels[i + 1], channels[i + 1], kh, kw),
        })
    h_lat, w_lat = height >> n_blocks, width >> n_blocks
    latent_shape = channels[-1] * h_lat * w_lat
    bn = _init_linear(next(ki), latent_shape, latent_dim)
    fc = _init_linear(next(ki), latent_dim, latent_shape)
    decoders = []
    for i in range(n_blocks, 0, -1):
        decoders.append({
            "conv1": _init_conv(next(ki), channels[i], channels[i], kh, kw),
            "conv2": _init_conv(next(ki), channels[i], channels[i - 1], kh, kw),
        })
    return {"encoders": encoders, "bn": bn, "fc": fc, "decoders": decoders}


# ----------------------------- forward pass ------------------------------


def conv_ae_forward(params, x_nchw, kernel_hw=(3, 3)):
    """Exact ConvAE.forward: NCHW in, NCHW out (float32)."""
    x = jnp.transpose(x_nchw, (0, 2, 3, 1)).astype(jnp.float32)  # NCHW -> NHWC

    # ---- encode ----
    shapes = []
    for enc in params["encoders"]:
        shapes.append((x.shape[1], x.shape[2]))
        x = conv_bn_relu(x, enc["conv1"], kernel_hw)
        x = conv_bn_relu(x, enc["conv2"], kernel_hw, fuse_pool=True)  # + MaxPool2d
    B, h, w, c_last = x.shape
    flat = jnp.transpose(x, (0, 3, 1, 2)).reshape(B, -1)  # torch Flatten (C,H,W) order
    z = linear_ln_relu(flat, params["bn"])

    # ---- decode ----
    y = linear_ln_relu(z, params["fc"])
    y = y.reshape(B, c_last, h, w)              # .view(B, C, h, w) in torch
    y = jnp.transpose(y, (0, 2, 3, 1))          # back to NHWC
    for dec in params["decoders"]:
        y = conv_bn_relu(y, dec["conv1"], kernel_hw)
        y = conv_bn_relu(y, dec["conv2"], kernel_hw)
        y = upsample_bilinear(y, shapes.pop())
    return jnp.transpose(y, (0, 3, 1, 2))       # NHWC -> NCHW


if __name__ == "__main__":
    key = jax.random.PRNGKey(0)
    k_param, k_x = jax.random.split(key)

    channels = [4, 8, 16]
    latent_dim = 32
    B, H, W = 2, 16, 16

    params = init_conv_ae_params(k_param, channels, latent_dim, H, W, kernel=(3, 3))
    x = jax.random.normal(k_x, (B, channels[0], H, W), jnp.float32)  # NCHW like PyTorch

    fwd = jax.jit(conv_ae_forward, static_argnames=("kernel_hw",))
    out = jax.block_until_ready(fwd(params, x, kernel_hw=(3, 3)))

    assert out.shape == (B, channels[0], H, W), out.shape
    assert bool(jnp.all(jnp.isfinite(out)))
    print("KERNEL_OK")
</pallas_src>

<mosaic_0001>
module attributes {stable_mosaic.version = 11 : i64} {
  func.func @_conv_stats_kernel(%arg0: i32, %arg1: memref<1x18x72xf32, #tpu.memory_space<vmem>>, %arg2: memref<216x128xbf16, #tpu.memory_space<vmem>>, %arg3: memref<1x16x128xf32, #tpu.memory_space<vmem>>, %arg4: memref<1x2x128xf32, #tpu.memory_space<vmem>>) attributes {dimension_semantics = [#tpu.dimension_semantics<parallel>], iteration_bounds = array<i64: 2>, scalar_prefetch = 0 : i64, scratch_operands = 0 : i64, tpu.core_type = #tpu.core_type<tc>, window_params = [{transform_indices = @transform_0, window_bounds = array<i64: 1, 18, 72>}, {pipeline_mode = #tpu.pipeline_mode<synchronous>, transform_indices = @transform_1, window_bounds = array<i64: 216, 128>}, {transform_indices = @transform_2, window_bounds = array<i64: 1, 16, 128>}, {transform_indices = @transform_3, window_bounds = array<i64: 1, 2, 128>}]} {
    %c0 = arith.constant 0 : index
    %c0_0 = arith.constant 0 : index
    %c0_1 = arith.constant 0 : index
    %0 = vector.load %arg1[%c0, %c0_0, %c0_1] : memref<1x18x72xf32, #tpu.memory_space<vmem>>, vector<1x16x72xf32>
    %1 = vector.shape_cast %0 : vector<1x16x72xf32> to vector<16x72xf32>
    %c0_2 = arith.constant 0 : index
    %c1 = arith.constant 1 : index
    %c0_3 = arith.constant 0 : index
    %2 = vector.load %arg1[%c0_2, %c1, %c0_3] : memref<1x18x72xf32, #tpu.memory_space<vmem>>, vector<1x16x72xf32>
    %3 = vector.shape_cast %2 : vector<1x16x72xf32> to vector<16x72xf32>
    %c0_4 = arith.constant 0 : index
    %c2 = arith.constant 2 : index
    %c0_5 = arith.constant 0 : index
    %4 = vector.load %arg1[%c0_4, %c2, %c0_5] : memref<1x18x72xf32, #tpu.memory_space<vmem>>, vector<1x16x72xf32>
    %5 = vector.shape_cast %4 : vector<1x16x72xf32> to vector<16x72xf32>
    %6 = tpu.concatenate %1, %3, %5 in 1 : vector<16x72xf32>, vector<16x72xf32>, vector<16x72xf32> -> vector<16x216xf32>
    %7 = arith.truncf %6 : vector<16x216xf32> to vector<16x216xbf16>
    %c0_6 = arith.constant 0 : index
    %c0_7 = arith.constant 0 : index
    %8 = vector.load %arg2[%c0_6, %c0_7] : memref<216x128xbf16, #tpu.memory_space<vmem>>, vector<216x128xbf16>
    %cst = arith.constant dense<0.000000e+00> : vector<16x128xf32>
    %9 = tpu.matmul %7, %8, %cst {dimension_numbers = #tpu.dot_dimension_numbers<[1], [0], [0], [1], [0, 0, 1, 1], [], []>} : vector<16x216xbf16>, vector<216x128xbf16>, vector<16x128xf32> -> vector<16x128xf32>
    %c0_8 = arith.constant 0 : index
    %c0_9 = arith.constant 0 : index
    %c0_10 = arith.constant 0 : index
    %10 = vector.load %arg3[%c0_8, %c0_9, %c0_10] : memref<1x16x128xf32, #tpu.memory_space<vmem>>, vector<1x16x128xf32>
    %11 = vector.shape_cast %10 : vector<1x16x128xf32> to vector<16x128xf32>
    %12 = vector.shape_cast %9 : vector<16x128xf32> to vector<1x16x128xf32>
    tpu.vector_store %arg3[%c0_8, %c0_9, %c0_10], %12 {strides = array<i32>} : memref<1x16x128xf32, #tpu.memory_space<vmem>>, vector<1x16x128xf32>,
    %cst_11 = arith.constant dense<0.000000e+00> : vector<128xf32>
    %13 = vector.multi_reduction <add>, %9, %cst_11 [0] : vector<16x128xf32> to vector<128xf32>
    %14 = vector.shape_cast %13 : vector<128xf32> to vector<1x128xf32>
    %c0_12 = arith.constant 0 : index
    %c0_13 = arith.constant 0 : index
    %c0_14 = arith.constant 0 : index
    %15 = vector.load %arg4[%c0_12, %c0_13, %c0_14] : memref<1x2x128xf32, #tpu.memory_space<vmem>>, vector<1x1x128xf32>
    %16 = vector.shape_cast %15 : vector<1x1x128xf32> to vector<1x128xf32>
    %17 = vector.shape_cast %14 : vector<1x128xf32> to vector<1x1x128xf32>
    tpu.vector_store %arg4[%c0_12, %c0_13, %c0_14], %17 {strides = array<i32>} : memref<1x2x128xf32, #tpu.memory_space<vmem>>, vector<1x1x128xf32>,
    %18 = arith.mulf %9, %9 : vector<16x128xf32>
    %cst_15 = arith.constant dense<0.000000e+00> : vector<128xf32>
    %19 = vector.multi_reduction <add>, %18, %cst_15 [0] : vector<16x128xf32> to vector<128xf32>
    %20 = vector.shape_cast %19 : vector<128xf32> to vector<1x128xf32>
    %c0_16 = arith.constant 0 : index
    %c1_17 = arith.constant 1 : index
    %c0_18 = arith.constant 0 : index
    %21 = vector.load %arg4[%c0_16, %c1_17, %c0_18] : memref<1x2x128xf32, #tpu.memory_space<vmem>>, vector<1x1x128xf32>
    %22 = vector.shape_cast %21 : vector<1x1x128xf32> to vector<1x128xf32>
    %23 = vector.shape_cast %20 : vector<1x128xf32> to vector<1x1x128xf32>
    tpu.vector_store %arg4[%c0_16, %c1_17, %c0_18], %23 {strides = array<i32>} : memref<1x2x128xf32, #tpu.memory_space<vmem>>, vector<1x1x128xf32>,
    return
  }
  func.func @transform_0(%arg0: i32) -> (i32, i32, i32) {
    %c0_i32 = arith.constant 0 : i32
    %c0_i32_0 = arith.constant 0 : i32
    %c0_i32_1 = arith.constant 0 : i32
    return %arg0, %c0_i32, %c0_i32_0 : i32, i32, i32
  }
  func.func @transform_1(%arg0: i32) -> (i32, i32) {
    %c0_i32 = arith.constant 0 : i32
    %c0_i32_0 = arith.constant 0 : i32
    %c0_i32_1 = arith.constant 0 : i32
    return %c0_i32, %c0_i32_0 : i32, i32
  }
  func.func @transform_2(%arg0: i32) -> (i32, i32, i32) {
    %c0_i32 = arith.constant 0 : i32
    %c0_i32_0 = arith.constant 0 : i32
    %c0_i32_1 = arith.constant 0 : i32
    return %arg0, %c0_i32, %c0_i32_0 : i32, i32, i32
  }
  func.func @transform_3(%arg0: i32) -> (i32, i32, i32) {
    %c0_i32 = arith.constant 0 : i32
    %c0_i32_0 = arith.constant 0 : i32
    %c0_i32_1 = arith.constant 0 : i32
    return %arg0, %c0_i32, %c0_i32_0 : i32, i32, i32
  }
}

module attributes {stable_mosaic.version = 11 : i64} {
  func.func @_bn_relu_kernel(%arg0: i32, %arg1: memref<32x128xf32, #tpu.memory_space<vmem>>, %arg2: memref<1x128xf32, #tpu.memory_space<vmem>>, %arg3: memref<1x128xf32, #tpu.memory_space<vmem>>, %arg4: memref<32x128xf32, #tpu.memory_space<vmem>>) attributes {dimension_semantics = [#tpu.dimension_semantics<parallel>], iteration_bounds = array<i64: 1>, scalar_prefetch = 0 : i64, scratch_operands = 0 : i64, tpu.core_type = #tpu.core_type<tc>, window_params = [{transform_indices = @transform_0, window_bounds = array<i64: 32, 128>}, {pipeline_mode = #tpu.pipeline_mode<synchronous>, transform_indices = @transform_1, window_bounds = array<i64: 1, 128>}, {pipeline_mode = #tpu.pipeline_mode<synchronous>, transform_indices = @transform_2, window_bounds = array<i64: 1, 128>}, {transform_indices = @transform_3, window_bounds = array<i64: 32, 128>}]} {
    %c0 = arith.constant 0 : index
    %c0_0 = arith.constant 0 : index
    %0 = vector.load %arg1[%c0, %c0_0] : memref<32x128xf32, #tpu.memory_space<vmem>>, vector<32x128xf32>
    %c0_1 = arith.constant 0 : index
    %c0_2 = arith.constant 0 : index
    %1 = vector.load %arg2[%c0_1, %c0_2] : memref<1x128xf32, #tpu.memory_space<vmem>>, vector<1x128xf32>
    %2 = vector.broadcast %1 : vector<1x128xf32> to vector<32x128xf32>
    %3 = arith.mulf %0, %2 : vector<32x128xf32>
    %c0_3 = arith.constant 0 : index
    %c0_4 = arith.constant 0 : index
    %4 = vector.load %arg3[%c0_3, %c0_4] : memref<1x128xf32, #tpu.memory_space<vmem>>, vector<1x128xf32>
    %5 = vector.broadcast %4 : vector<1x128xf32> to vector<32x128xf32>
    %6 = arith.addf %3, %5 : vector<32x128xf32>
    %cst = arith.constant 0.000000e+00 : f32
    %7 = vector.broadcast %cst : f32 to vector<32x128xf32>
    %8 = arith.maximumf %6, %7 : vector<32x128xf32>
    %c0_5 = arith.constant 0 : index
    %c0_6 = arith.constant 0 : index
    %9 = vector.load %arg4[%c0_5, %c0_6] : memref<32x128xf32, #tpu.memory_space<vmem>>, vector<32x128xf32>
    tpu.vector_store %arg4[%c0_5, %c0_6], %8 {strides = array<i32>} : memref<32x128xf32, #tpu.memory_space<vmem>>, vector<32x128xf32>,
    return
  }
  func.func @transform_0(%arg0: i32) -> (i32, i32) {
    %c0_i32 = arith.constant 0 : i32
    %c0_i32_0 = arith.constant 0 : i32
    return %arg0, %c0_i32 : i32, i32
  }
  func.func @transform_1(%arg0: i32) -> (i32, i32) {
    %c0_i32 = arith.constant 0 : i32
    %c0_i32_0 = arith.constant 0 : i32
    %c0_i32_1 = arith.constant 0 : i32
    return %c0_i32, %c0_i32_0 : i32, i32
  }
  func.func @transform_2(%arg0: i32) -> (i32, i32) {
    %c0_i32 = arith.constant 0 : i32
    %c0_i32_0 = arith.constant 0 : i32
    %c0_i32_1 = arith.constant 0 : i32
    return %c0_i32, %c0_i32_0 : i32, i32
  }
  func.func @transform_3(%arg0: i32) -> (i32, i32) {
    %c0_i32 = arith.constant 0 : i32
    %c0_i32_0 = arith.constant 0 : i32
    return %arg0, %c0_i32 : i32, i32
  }
}

module attributes {stable_mosaic.version = 11 : i64} {
  func.func @_conv_stats_kernel(%arg0: i32, %arg1: memref<1x18x144xf32, #tpu.memory_space<vmem>>, %arg2: memref<432x128xbf16, #tpu.memory_space<vmem>>, %arg3: memref<1x16x128xf32, #tpu.memory_space<vmem>>, %arg4: memref<1x2x128xf32, #tpu.memory_space<vmem>>) attributes {dimension_semantics = [#tpu.dimension_semantics<parallel>], iteration_bounds = array<i64: 2>, scalar_prefetch = 0 : i64, scratch_operands = 0 : i64, tpu.core_type = #tpu.core_type<tc>, window_params = [{transform_indices = @transform_0, window_bounds = array<i64: 1, 18, 144>}, {pipeline_mode = #tpu.pipeline_mode<synchronous>, transform_indices = @transform_1, window_bounds = array<i64: 432, 128>}, {transform_indices = @transform_2, window_bounds = array<i64: 1, 16, 128>}, {transform_indices = @transform_3, window_bounds = array<i64: 1, 2, 128>}]} {
    %c0 = arith.constant 0 : index
    %c0_0 = arith.constant 0 : index
    %c0_1 = arith.constant 0 : index
    %0 = vector.load %arg1[%c0, %c0_0, %c0_1] : memref<1x18x144xf32, #tpu.memory_space<vmem>>, vector<1x16x144xf32>
    %1 = vector.shape_cast %0 : vector<1x16x144xf32> to vector<16x144xf32>
    %c0_2 = arith.constant 0 : index
    %c1 = arith.constant 1 : index
    %c0_3 = arith.constant 0 : index
    %2 = vector.load %arg1[%c0_2, %c1, %c0_3] : memref<1x18x144xf32, #tpu.memory_space<vmem>>, vector<1x16x144xf32>
    %3 = vector.shape_cast %2 : vector<1x16x144xf32> to vector<16x144xf32>
    %c0_4 = arith.constant 0 : index
    %c2 = arith.constant 2 : index
    %c0_5 = arith.constant 0 : index
    %4 = vector.load %arg1[%c0_4, %c2, %c0_5] : memref<1x18x144xf32, #tpu.memory_space<vmem>>, vector<1x16x144xf32>
    %5 = vector.shape_cast %4 : vector<1x16x144xf32> to vector<16x144xf32>
    %6 = tpu.concatenate %1, %3, %5 in 1 : vector<16x144xf32>, vector<16x144xf32>, vector<16x144xf32> -> vector<16x432xf32>
    %7 = arith.truncf %6 : vector<16x432xf32> to vector<16x432xbf16>
    %c0_6 = arith.constant 0 : index
    %c0_7 = arith.constant 0 : index
    %8 = vector.load %arg2[%c0_6, %c0_7] : memref<432x128xbf16, #tpu.memory_space<vmem>>, vector<432x128xbf16>
    %cst = arith.constant dense<0.000000e+00> : vector<16x128xf32>
    %9 = tpu.matmul %7, %8, %cst {dimension_numbers = #tpu.dot_dimension_numbers<[1], [0], [0], [1], [0, 0, 1, 1], [], []>} : vector<16x432xbf16>, vector<432x128xbf16>, vector<16x128xf32> -> vector<16x128xf32>
    %c0_8 = arith.constant 0 : index
    %c0_9 = arith.constant 0 : index
    %c0_10 = arith.constant 0 : index
    %10 = vector.load %arg3[%c0_8, %c0_9, %c0_10] : memref<1x16x128xf32, #tpu.memory_space<vmem>>, vector<1x16x128xf32>
    %11 = vector.shape_cast %10 : vector<1x16x128xf32> to vector<16x128xf32>
    %12 = vector.shape_cast %9 : vector<16x128xf32> to vector<1x16x128xf32>
    tpu.vector_store %arg3[%c0_8, %c0_9, %c0_10], %12 {strides = array<i32>} : memref<1x16x128xf32, #tpu.memory_space<vmem>>, vector<1x16x128xf32>,
    %cst_11 = arith.constant dense<0.000000e+00> : vector<128xf32>
    %13 = vector.multi_reduction <add>, %9, %cst_11 [0] : vector<16x128xf32> to vector<128xf32>
    %14 = vector.shape_cast %13 : vector<128xf32> to vector<1x128xf32>
    %c0_12 = arith.constant 0 : index
    %c0_13 = arith.constant 0 : index
    %c0_14 = arith.constant 0 : index
    %15 = vector.load %arg4[%c0_12, %c0_13, %c0_14] : memref<1x2x128xf32, #tpu.memory_space<vmem>>, vector<1x1x128xf32>
    %16 = vector.shape_cast %15 : vector<1x1x128xf32> to vector<1x128xf32>
    %17 = vector.shape_cast %14 : vector<1x128xf32> to vector<1x1x128xf32>
    tpu.vector_store %arg4[%c0_12, %c0_13, %c0_14], %17 {strides = array<i32>} : memref<1x2x128xf32, #tpu.memory_space<vmem>>, vector<1x1x128xf32>,
    %18 = arith.mulf %9, %9 : vector<16x128xf32>
    %cst_15 = arith.constant dense<0.000000e+00> : vector<128xf32>
    %19 = vector.multi_reduction <add>, %18, %cst_15 [0] : vector<16x128xf32> to vector<128xf32>
    %20 = vector.shape_cast %19 : vector<128xf32> to vector<1x128xf32>
    %c0_16 = arith.constant 0 : index
    %c1_17 = arith.constant 1 : index
    %c0_18 = arith.constant 0 : index
    %21 = vector.load %arg4[%c0_16, %c1_17, %c0_18] : memref<1x2x128xf32, #tpu.memory_space<vmem>>, vector<1x1x128xf32>
    %22 = vector.shape_cast %21 : vector<1x1x128xf32> to vector<1x128xf32>
    %23 = vector.shape_cast %20 : vector<1x128xf32> to vector<1x1x128xf32>
    tpu.vector_store %arg4[%c0_16, %c1_17, %c0_18], %23 {strides = array<i32>} : memref<1x2x128xf32, #tpu.memory_space<vmem>>, vector<1x1x128xf32>,
    return
  }
  func.func @transform_0(%arg0: i32) -> (i32, i32, i32) {
    %c0_i32 = arith.constant 0 : i32
    %c0_i32_0 = arith.constant 0 : i32
    %c0_i32_1 = arith.constant 0 : i32
    return %arg0, %c0_i32, %c0_i32_0 : i32, i32, i32
  }
  func.func @transform_1(%arg0: i32) -> (i32, i32) {
    %c0_i32 = arith.constant 0 : i32
    %c0_i32_0 = arith.constant 0 : i32
    %c0_i32_1 = arith.constant 0 : i32
    return %c0_i32, %c0_i32_0 : i32, i32
  }
  func.func @transform_2(%arg0: i32) -> (i32, i32, i32) {
    %c0_i32 = arith.constant 0 : i32
    %c0_i32_0 = arith.constant 0 : i32
    %c0_i32_1 = arith.constant 0 : i32
    return %arg0, %c0_i32, %c0_i32_0 : i32, i32, i32
  }
  func.func @transform_3(%arg0: i32) -> (i32, i32, i32) {
    %c0_i32 = arith.constant 0 : i32
    %c0_i32_0 = arith.constant 0 : i32
    %c0_i32_1 = arith.constant 0 : i32
    return %arg0, %c0_i32, %c0_i32_0 : i32, i32, i32
  }
}

module attributes {stable_mosaic.version = 11 : i64} {
  func.func @_bn_relu_pool_kernel(%arg0: i32, %arg1: memref<16x2x8x16xf32, #tpu.memory_space<vmem>>, %arg2: memref<1x1x1x16xf32, #tpu.memory_space<vmem>>, %arg3: memref<1x1x1x16xf32, #tpu.memory_space<vmem>>, %arg4: memref<16x8x8xf32, #tpu.memory_space<vmem>>) attributes {dimension_semantics = [#tpu.dimension_semantics<parallel>], iteration_bounds = array<i64: 1>, scalar_prefetch = 0 : i64, scratch_operands = 0 : i64, tpu.core_type = #tpu.core_type<tc>, window_params = [{transform_indices = @transform_0, window_bounds = array<i64: 16, 2, 8, 16>}, {pipeline_mode = #tpu.pipeline_mode<synchronous>, transform_indices = @transform_1, window_bounds = array<i64: 1, 1, 1, 16>}, {pipeline_mode = #tpu.pipeline_mode<synchronous>, transform_indices = @transform_2, window_bounds = array<i64: 1, 1, 1, 16>}, {transform_indices = @transform_3, window_bounds = array<i64: 16, 8, 8>}]} {
    %c0 = arith.constant 0 : index
    %c0_0 = arith.constant 0 : index
    %c0_1 = arith.constant 0 : index
    %c0_2 = arith.constant 0 : index
    %0 = vector.load %arg1[%c0, %c0_0, %c0_1, %c0_2] : memref<16x2x8x16xf32, #tpu.memory_space<vmem>>, vector<16x2x8x16xf32>
    %c0_3 = arith.constant 0 : index
    %c0_4 = arith.constant 0 : index
    %c0_5 = arith.constant 0 : index
    %c0_6 = arith.constant 0 : index
    %1 = vector.load %arg2[%c0_3, %c0_4, %c0_5, %c0_6] : memref<1x1x1x16xf32, #tpu.memory_space<vmem>>, vector<1x1x1x16xf32>
    %2 = vector.broadcast %1 : vector<1x1x1x16xf32> to vector<16x2x8x16xf32>
    %3 = arith.mulf %0, %2 : vector<16x2x8x16xf32>
    %c0_7 = arith.constant 0 : index
    %c0_8 = arith.constant 0 : index
    %c0_9 = arith.constant 0 : index
    %c0_10 = arith.constant 0 : index
    %4 = vector.load %arg3[%c0_7, %c0_8, %c0_9, %c0_10] : memref<1x1x1x16xf32, #tpu.memory_space<vmem>>, vector<1x1x1x16xf32>
    %5 = vector.broadcast %4 : vector<1x1x1x16xf32> to vector<16x2x8x16xf32>
    %6 = arith.addf %3, %5 : vector<16x2x8x16xf32>
    %cst = arith.constant 0.000000e+00 : f32
    %7 = vector.broadcast %cst : f32 to vector<16x2x8x16xf32>
    %8 = arith.maximumf %6, %7 : vector<16x2x8x16xf32>
    %9 = vector.extract_strided_slice %8 {offsets = [0, 0, 0, 0], sizes = [16, 1, 8, 16], strides = [1, 1, 1, 1]} : vector<16x2x8x16xf32> to vector<16x1x8x16xf32>
    %10 = vector.shape_cast %9 : vector<16x1x8x16xf32> to vector<16x8x16xf32>
    %11 = vector.extract_strided_slice %8 {offsets = [0, 1, 0, 0], sizes = [16, 1, 8, 16], strides = [1, 1, 1, 1]} : vector<16x2x8x16xf32> to vector<16x1x8x16xf32>
    %12 = vector.shape_cast %11 : vector<16x1x8x16xf32> to vector<16x8x16xf32>
    %13 = arith.maximumf %10, %12 : vector<16x8x16xf32>
    %14 = vector.extract_strided_slice %13 {offsets = [0, 0, 0], sizes = [16, 8, 8], strides = [1, 1, 1]} : vector<16x8x16xf32> to vector<16x8x8xf32>
    %15 = vector.extract_strided_slice %13 {offsets = [0, 0, 8], sizes = [16, 8, 8], strides = [1, 1, 1]} : vector<16x8x16xf32> to vector<16x8x8xf32>
    %16 = arith.maximumf %14, %15 : vector<16x8x8xf32>
    %c0_11 = arith.constant 0 : index
    %c0_12 = arith.constant 0 : index
    %c0_13 = arith.constant 0 : index
    %17 = vector.load %arg4[%c0_11, %c0_12, %c0_13] : memref<16x8x8xf32, #tpu.memory_space<vmem>>, vector<16x8x8xf32>
    tpu.vector_store %arg4[%c0_11, %c0_12, %c0_13], %16 {strides = array<i32>} : memref<16x8x8xf32, #tpu.memory_space<vmem>>, vector<16x8x8xf32>,
    return
  }
  func.func @transform_0(%arg0: i32) -> (i32, i32, i32, i32) {
    %c0_i32 = arith.constant 0 : i32
    %c0_i32_0 = arith.constant 0 : i32
    %c0_i32_1 = arith.constant 0 : i32
    %c0_i32_2 = arith.constant 0 : i32
    return %arg0, %c0_i32, %c0_i32_0, %c0_i32_1 : i32, i32, i32, i32
  }
  func.func @transform_1(%arg0: i32) -> (i32, i32, i32, i32) {
    %c0_i32 = arith.constant 0 : i32
    %c0_i32_0 = arith.constant 0 : i32
    %c0_i32_1 = arith.constant 0 : i32
    %c0_i32_2 = arith.constant 0 : i32
    %c0_i32_3 = arith.constant 0 : i32
    return %c0_i32, %c0_i32_0, %c0_i32_1, %c0_i32_2 : i32, i32, i32, i32
  }
  func.func @transform_2(%arg0: i32) -> (i32, i32, i32, i32) {
    %c0_i32 = arith.constant 0 : i32
    %c0_i32_0 = arith.constant 0 : i32
    %c0_i32_1 = arith.constant 0 : i32
    %c0_i32_2 = arith.constant 0 : i32
    %c0_i32_3 = arith.constant 0 : i32
    return %c0_i32, %c0_i32_0, %c0_i32_1, %c0_i32_2 : i32, i32, i32, i32
  }
  func.func @transform_3(%arg0: i32) -> (i32, i32, i32) {
    %c0_i32 = arith.constant 0 : i32
    %c0_i32_0 = arith.constant 0 : i32
    %c0_i32_1 = arith.constant 0 : i32
    return %arg0, %c0_i32, %c0_i32_0 : i32, i32, i32
  }
}

module attributes {stable_mosaic.version = 11 : i64} {
  func.func @_conv_stats_kernel(%arg0: i32, %arg1: memref<1x10x80xf32, #tpu.memory_space<vmem>>, %arg2: memref<240x128xbf16, #tpu.memory_space<vmem>>, %arg3: memref<1x8x128xf32, #tpu.memory_space<vmem>>, %arg4: memref<1x2x128xf32, #tpu.memory_space<vmem>>) attributes {dimension_semantics = [#tpu.dimension_semantics<parallel>], iteration_bounds = array<i64: 2>, scalar_prefetch = 0 : i64, scratch_operands = 0 : i64, tpu.core_type = #tpu.core_type<tc>, window_params = [{transform_indices = @transform_0, window_bounds = array<i64: 1, 10, 80>}, {pipeline_mode = #tpu.pipeline_mode<synchronous>, transform_indices = @transform_1, window_bounds = array<i64: 240, 128>}, {transform_indices = @transform_2, window_bounds = array<i64: 1, 8, 128>}, {transform_indices = @transform_3, window_bounds = array<i64: 1, 2, 128>}]} {
    %c0 = arith.constant 0 : index
    %c0_0 = arith.constant 0 : index
    %c0_1 = arith.constant 0 : index
    %0 = vector.load %arg1[%c0, %c0_0, %c0_1] : memref<1x10x80xf32, #tpu.memory_space<vmem>>, vector<1x8x80xf32>
    %1 = vector.shape_cast %0 : vector<1x8x80xf32> to vector<8x80xf32>
    %c0_2 = arith.constant 0 : index
    %c1 = arith.constant 1 : index
    %c0_3 = arith.constant 0 : index
    %2 = vector.load %arg1[%c0_2, %c1, %c0_3] : memref<1x10x80xf32, #tpu.memory_space<vmem>>, vector<1x8x80xf32>
    %3 = vector.shape_cast %2 : vector<1x8x80xf32> to vector<8x80xf32>
    %c0_4 = arith.constant 0 : index
    %c2 = arith.constant 2 : index
    %c0_5 = arith.constant 0 : index
    %4 = vector.load %arg1[%c0_4, %c2, %c0_5] : memref<1x10x80xf32, #tpu.memory_space<vmem>>, vector<1x8x80xf32>
    %5 = vector.shape_cast %4 : vector<1x8x80xf32> to vector<8x80xf32>
    %6 = tpu.concatenate %1, %3, %5 in 1 : vector<8x80xf32>, vector<8x80xf32>, vector<8x80xf32> -> vector<8x240xf32>
    %7 = arith.truncf %6 : vector<8x240xf32> to vector<8x240xbf16>
    %c0_6 = arith.constant 0 : index
    %c0_7 = arith.constant 0 : index
    %8 = vector.load %arg2[%c0_6, %c0_7] : memref<240x128xbf16, #tpu.memory_space<vmem>>, vector<240x128xbf16>
    %cst = arith.constant dense<0.000000e+00> : vector<8x128xf32>
    %9 = tpu.matmul %7, %8, %cst {dimension_numbers = #tpu.dot_dimension_numbers<[1], [0], [0], [1], [0, 0, 1, 1], [], []>} : vector<8x240xbf16>, vector<240x128xbf16>, vector<8x128xf32> -> vector<8x128xf32>
    %c0_8 = arith.constant 0 : index
    %c0_9 = arith.constant 0 : index
    %c0_10 = arith.constant 0 : index
    %10 = vector.load %arg3[%c0_8, %c0_9, %c0_10] : memref<1x8x128xf32, #tpu.memory_space<vmem>>, vector<1x8x128xf32>
    %11 = vector.shape_cast %10 : vector<1x8x128xf32> to vector<8x128xf32>
    %12 = vector.shape_cast %9 : vector<8x128xf32> to vector<1x8x128xf32>
    tpu.vector_store %arg3[%c0_8, %c0_9, %c0_10], %12 {strides = array<i32>} : memref<1x8x128xf32, #tpu.memory_space<vmem>>, vector<1x8x128xf32>,
    %cst_11 = arith.constant dense<0.000000e+00> : vector<128xf32>
    %13 = vector.multi_reduction <add>, %9, %cst_11 [0] : vector<8x128xf32> to vector<128xf32>
    %14 = vector.shape_cast %13 : vector<128xf32> to vector<1x128xf32>
    %c0_12 = arith.constant 0 : index
    %c0_13 = arith.constant 0 : index
    %c0_14 = arith.constant 0 : index
    %15 = vector.load %arg4[%c0_12, %c0_13, %c0_14] : memref<1x2x128xf32, #tpu.memory_space<vmem>>, vector<1x1x128xf32>
    %16 = vector.shape_cast %15 : vector<1x1x128xf32> to vector<1x128xf32>
    %17 = vector.shape_cast %14 : vector<1x128xf32> to vector<1x1x128xf32>
    tpu.vector_store %arg4[%c0_12, %c0_13, %c0_14], %17 {strides = array<i32>} : memref<1x2x128xf32, #tpu.memory_space<vmem>>, vector<1x1x128xf32>,
    %18 = arith.mulf %9, %9 : vector<8x128xf32>
    %cst_15 = arith.constant dense<0.000000e+00> : vector<128xf32>
    %19 = vector.multi_reduction <add>, %18, %cst_15 [0] : vector<8x128xf32> to vector<128xf32>
    %20 = vector.shape_cast %19 : vector<128xf32> to vector<1x128xf32>
    %c0_16 = arith.constant 0 : index
    %c1_17 = arith.constant 1 : index
    %c0_18 = arith.constant 0 : index
    %21 = vector.load %arg4[%c0_16, %c1_17, %c0_18] : memref<1x2x128xf32, #tpu.memory_space<vmem>>, vector<1x1x128xf32>
    %22 = vector.shape_cast %21 : vector<1x1x128xf32> to vector<1x128xf32>
    %23 = vector.shape_cast %20 : vector<1x128xf32> to vector<1x1x128xf32>
    tpu.vector_store %arg4[%c0_16, %c1_17, %c0_18], %23 {strides = array<i32>} : memref<1x2x128xf32, #tpu.memory_space<vmem>>, vector<1x1x128xf32>,
    return
  }
  func.func @transform_0(%arg0: i32) -> (i32, i32, i32) {
    %c0_i32 = arith.constant 0 : i32
    %c0_i32_0 = arith.constant 0 : i32
    %c0_i32_1 = arith.constant 0 : i32
    return %arg0, %c0_i32, %c0_i32_0 : i32, i32, i32
  }
  func.func @transform_1(%arg0: i32) -> (i32, i32) {
    %c0_i32 = arith.constant 0 : i32
    %c0_i32_0 = arith.constant 0 : i32
    %c0_i32_1 = arith.constant 0 : i32
    return %c0_i32, %c0_i32_0 : i32, i32
  }
  func.func @transform_2(%arg0: i32) -> (i32, i32, i32) {
    %c0_i32 = arith.constant 0 : i32
    %c0_i32_0 = arith.constant 0 : i32
    %c0_i32_1 = arith.constant 0 : i32
    return %arg0, %c0_i32, %c0_i32_0 : i32, i32, i32
  }
  func.func @transform_3(%arg0: i32) -> (i32, i32, i32) {
    %c0_i32 = arith.constant 0 : i32
    %c0_i32_0 = arith.constant 0 : i32
    %c0_i32_1 = arith.constant 0 : i32
    return %arg0, %c0_i32, %c0_i32_0 : i32, i32, i32
  }
}

module attributes {stable_mosaic.version = 11 : i64} {
  func.func @_bn_relu_kernel(%arg0: i32, %arg1: memref<16x128xf32, #tpu.memory_space<vmem>>, %arg2: memref<1x128xf32, #tpu.memory_space<vmem>>, %arg3: memref<1x128xf32, #tpu.memory_space<vmem>>, %arg4: memref<16x128xf32, #tpu.memory_space<vmem>>) attributes {dimension_semantics = [#tpu.dimension_semantics<parallel>], iteration_bounds = array<i64: 1>, scalar_prefetch = 0 : i64, scratch_operands = 0 : i64, tpu.core_type = #tpu.core_type<tc>, window_params = [{transform_indices = @transform_0, window_bounds = array<i64: 16, 128>}, {pipeline_mode = #tpu.pipeline_mode<synchronous>, transform_indices = @transform_1, window_bounds = array<i64: 1, 128>}, {pipeline_mode = #tpu.pipeline_mode<synchronous>, transform_indices = @transform_2, window_bounds = array<i64: 1, 128>}, {transform_indices = @transform_3, window_bounds = array<i64: 16, 128>}]} {
    %c0 = arith.constant 0 : index
    %c0_0 = arith.constant 0 : index
    %0 = vector.load %arg1[%c0, %c0_0] : memref<16x128xf32, #tpu.memory_space<vmem>>, vector<16x128xf32>
    %c0_1 = arith.constant 0 : index
    %c0_2 = arith.constant 0 : index
    %1 = vector.load %arg2[%c0_1, %c0_2] : memref<1x128xf32, #tpu.memory_space<vmem>>, vector<1x128xf32>
    %2 = vector.broadcast %1 : vector<1x128xf32> to vector<16x128xf32>
    %3 = arith.mulf %0, %2 : vector<16x128xf32>
    %c0_3 = arith.constant 0 : index
    %c0_4 = arith.constant 0 : index
    %4 = vector.load %arg3[%c0_3, %c0_4] : memref<1x128xf32, #tpu.memory_space<vmem>>, vector<1x128xf32>
    %5 = vector.broadcast %4 : vector<1x128xf32> to vector<16x128xf32>
    %6 = arith.addf %3, %5 : vector<16x128xf32>
    %cst = arith.constant 0.000000e+00 : f32
    %7 = vector.broadcast %cst : f32 to vector<16x128xf32>
    %8 = arith.maximumf %6, %7 : vector<16x128xf32>
    %c0_5 = arith.constant 0 : index
    %c0_6 = arith.constant 0 : index
    %9 = vector.load %arg4[%c0_5, %c0_6] : memref<16x128xf32, #tpu.memory_space<vmem>>, vector<16x128xf32>
    tpu.vector_store %arg4[%c0_5, %c0_6], %8 {strides = array<i32>} : memref<16x128xf32, #tpu.memory_space<vmem>>, vector<16x128xf32>,
    return
  }
  func.func @transform_0(%arg0: i32) -> (i32, i32) {
    %c0_i32 = arith.constant 0 : i32
    %c0_i32_0 = arith.constant 0 : i32
    return %arg0, %c0_i32 : i32, i32
  }
  func.func @transform_1(%arg0: i32) -> (i32, i32) {
    %c0_i32 = arith.constant 0 : i32
    %c0_i32_0 = arith.constant 0 : i32
    %c0_i32_1 = arith.constant 0 : i32
    return %c0_i32, %c0_i32_0 : i32, i32
  }
  func.func @transform_2(%arg0: i32) -> (i32, i32) {
    %c0_i32 = arith.constant 0 : i32
    %c0_i32_0 = arith.constant 0 : i32
    %c0_i32_1 = arith.constant 0 : i32
    return %c0_i32, %c0_i32_0 : i32, i32
  }
  func.func @transform_3(%arg0: i32) -> (i32, i32) {
    %c0_i32 = arith.constant 0 : i32
    %c0_i32_0 = arith.constant 0 : i32
    return %arg0, %c0_i32 : i32, i32
  }
}

module attributes {stable_mosaic.version = 11 : i64} {
  func.func @_conv_stats_kernel(%arg0: i32, %arg1: memref<1x10x160xf32, #tpu.memory_space<vmem>>, %arg2: memref<480x128xbf16, #tpu.memory_space<vmem>>, %arg3: memref<1x8x128xf32, #tpu.memory_space<vmem>>, %arg4: memref<1x2x128xf32, #tpu.memory_space<vmem>>) attributes {dimension_semantics = [#tpu.dimension_semantics<parallel>], iteration_bounds = array<i64: 2>, scalar_prefetch = 0 : i64, scratch_operands = 0 : i64, tpu.core_type = #tpu.core_type<tc>, window_params = [{transform_indices = @transform_0, window_bounds = array<i64: 1, 10, 160>}, {pipeline_mode = #tpu.pipeline_mode<synchronous>, transform_indices = @transform_1, window_bounds = array<i64: 480, 128>}, {transform_indices = @transform_2, window_bounds = array<i64: 1, 8, 128>}, {transform_indices = @transform_3, window_bounds = array<i64: 1, 2, 128>}]} {
    %c0 = arith.constant 0 : index
    %c0_0 = arith.constant 0 : index
    %c0_1 = arith.constant 0 : index
    %0 = vector.load %arg1[%c0, %c0_0, %c0_1] : memref<1x10x160xf32, #tpu.memory_space<vmem>>, vector<1x8x160xf32>
    %1 = vector.shape_cast %0 : vector<1x8x160xf32> to vector<8x160xf32>
    %c0_2 = arith.constant 0 : index
    %c1 = arith.constant 1 : index
    %c0_3 = arith.constant 0 : index
    %2 = vector.load %arg1[%c0_2, %c1, %c0_3] : memref<1x10x160xf32, #tpu.memory_space<vmem>>, vector<1x8x160xf32>
    %3 = vector.shape_cast %2 : vector<1x8x160xf32> to vector<8x160xf32>
    %c0_4 = arith.constant 0 : index
    %c2 = arith.constant 2 : index
    %c0_5 = arith.constant 0 : index
    %4 = vector.load %arg1[%c0_4, %c2, %c0_5] : memref<1x10x160xf32, #tpu.memory_space<vmem>>, vector<1x8x160xf32>
    %5 = vector.shape_cast %4 : vector<1x8x160xf32> to vector<8x160xf32>
    %6 = tpu.concatenate %1, %3, %5 in 1 : vector<8x160xf32>, vector<8x160xf32>, vector<8x160xf32> -> vector<8x480xf32>
    %7 = arith.truncf %6 : vector<8x480xf32> to vector<8x480xbf16>
    %c0_6 = arith.constant 0 : index
    %c0_7 = arith.constant 0 : index
    %8 = vector.load %arg2[%c0_6, %c0_7] : memref<480x128xbf16, #tpu.memory_space<vmem>>, vector<480x128xbf16>
    %cst = arith.constant dense<0.000000e+00> : vector<8x128xf32>
    %9 = tpu.matmul %7, %8, %cst {dimension_numbers = #tpu.dot_dimension_numbers<[1], [0], [0], [1], [0, 0, 1, 1], [], []>} : vector<8x480xbf16>, vector<480x128xbf16>, vector<8x128xf32> -> vector<8x128xf32>
    %c0_8 = arith.constant 0 : index
    %c0_9 = arith.constant 0 : index
    %c0_10 = arith.constant 0 : index
    %10 = vector.load %arg3[%c0_8, %c0_9, %c0_10] : memref<1x8x128xf32, #tpu.memory_space<vmem>>, vector<1x8x128xf32>
    %11 = vector.shape_cast %10 : vector<1x8x128xf32> to vector<8x128xf32>
    %12 = vector.shape_cast %9 : vector<8x128xf32> to vector<1x8x128xf32>
    tpu.vector_store %arg3[%c0_8, %c0_9, %c0_10], %12 {strides = array<i32>} : memref<1x8x128xf32, #tpu.memory_space<vmem>>, vector<1x8x128xf32>,
    %cst_11 = arith.constant dense<0.000000e+00> : vector<128xf32>
    %13 = vector.multi_reduction <add>, %9, %cst_11 [0] : vector<8x128xf32> to vector<128xf32>
    %14 = vector.shape_cast %13 : vector<128xf32> to vector<1x128xf32>
    %c0_12 = arith.constant 0 : index
    %c0_13 = arith.constant 0 : index
    %c0_14 = arith.constant 0 : index
    %15 = vector.load %arg4[%c0_12, %c0_13, %c0_14] : memref<1x2x128xf32, #tpu.memory_space<vmem>>, vector<1x1x128xf32>
    %16 = vector.shape_cast %15 : vector<1x1x128xf32> to vector<1x128xf32>
    %17 = vector.shape_cast %14 : vector<1x128xf32> to vector<1x1x128xf32>
    tpu.vector_store %arg4[%c0_12, %c0_13, %c0_14], %17 {strides = array<i32>} : memref<1x2x128xf32, #tpu.memory_space<vmem>>, vector<1x1x128xf32>,
    %18 = arith.mulf %9, %9 : vector<8x128xf32>
    %cst_15 = arith.constant dense<0.000000e+00> : vector<128xf32>
    %19 = vector.multi_reduction <add>, %18, %cst_15 [0] : vector<8x128xf32> to vector<128xf32>
    %20 = vector.shape_cast %19 : vector<128xf32> to vector<1x128xf32>
    %c0_16 = arith.constant 0 : index
    %c1_17 = arith.constant 1 : index
    %c0_18 = arith.constant 0 : index
    %21 = vector.load %arg4[%c0_16, %c1_17, %c0_18] : memref<1x2x128xf32, #tpu.memory_space<vmem>>, vector<1x1x128xf32>
    %22 = vector.shape_cast %21 : vector<1x1x128xf32> to vector<1x128xf32>
    %23 = vector.shape_cast %20 : vector<1x128xf32> to vector<1x1x128xf32>
    tpu.vector_store %arg4[%c0_16, %c1_17, %c0_18], %23 {strides = array<i32>} : memref<1x2x128xf32, #tpu.memory_space<vmem>>, vector<1x1x128xf32>,
    return
  }
  func.func @transform_0(%arg0: i32) -> (i32, i32, i32) {
    %c0_i32 = arith.constant 0 : i32
    %c0_i32_0 = arith.constant 0 : i32
    %c0_i32_1 = arith.constant 0 : i32
    return %arg0, %c0_i32, %c0_i32_0 : i32, i32, i32
  }
  func.func @transform_1(%arg0: i32) -> (i32, i32) {
    %c0_i32 = arith.constant 0 : i32
    %c0_i32_0 = arith.constant 0 : i32
    %c0_i32_1 = arith.constant 0 : i32
    return %c0_i32, %c0_i32_0 : i32, i32
  }
  func.func @transform_2(%arg0: i32) -> (i32, i32, i32) {
    %c0_i32 = arith.constant 0 : i32
    %c0_i32_0 = arith.constant 0 : i32
    %c0_i32_1 = arith.constant 0 : i32
    return %arg0, %c0_i32, %c0_i32_0 : i32, i32, i32
  }
  func.func @transform_3(%arg0: i32) -> (i32, i32, i32) {
    %c0_i32 = arith.constant 0 : i32
    %c0_i32_0 = arith.constant 0 : i32
    %c0_i32_1 = arith.constant 0 : i32
    return %arg0, %c0_i32, %c0_i32_0 : i32, i32, i32
  }
}

module attributes {stable_mosaic.version = 11 : i64} {
  func.func @_bn_relu_pool_kernel(%arg0: i32, %arg1: memref<8x2x4x32xf32, #tpu.memory_space<vmem>>, %arg2: memref<1x1x1x32xf32, #tpu.memory_space<vmem>>, %arg3: memref<1x1x1x32xf32, #tpu.memory_space<vmem>>, %arg4: memref<8x4x16xf32, #tpu.memory_space<vmem>>) attributes {dimension_semantics = [#tpu.dimension_semantics<parallel>], iteration_bounds = array<i64: 1>, scalar_prefetch = 0 : i64, scratch_operands = 0 : i64, tpu.core_type = #tpu.core_type<tc>, window_params = [{transform_indices = @transform_0, window_bounds = array<i64: 8, 2, 4, 32>}, {pipeline_mode = #tpu.pipeline_mode<synchronous>, transform_indices = @transform_1, window_bounds = array<i64: 1, 1, 1, 32>}, {pipeline_mode = #tpu.pipeline_mode<synchronous>, transform_indices = @transform_2, window_bounds = array<i64: 1, 1, 1, 32>}, {transform_indices = @transform_3, window_bounds = array<i64: 8, 4, 16>}]} {
    %c0 = arith.constant 0 : index
    %c0_0 = arith.constant 0 : index
    %c0_1 = arith.constant 0 : index
    %c0_2 = arith.constant 0 : index
    %0 = vector.load %arg1[%c0, %c0_0, %c0_1, %c0_2] : memref<8x2x4x32xf32, #tpu.memory_space<vmem>>, vector<8x2x4x32xf32>
    %c0_3 = arith.constant 0 : index
    %c0_4 = arith.constant 0 : index
    %c0_5 = arith.constant 0 : index
    %c0_6 = arith.constant 0 : index
    %1 = vector.load %arg2[%c0_3, %c0_4, %c0_5, %c0_6] : memref<1x1x1x32xf32, #tpu.memory_space<vmem>>, vector<1x1x1x32xf32>
    %2 = vector.broadcast %1 : vector<1x1x1x32xf32> to vector<8x2x4x32xf32>
    %3 = arith.mulf %0, %2 : vector<8x2x4x32xf32>
    %c0_7 = arith.constant 0 : index
    %c0_8 = arith.constant 0 : index
    %c0_9 = arith.constant 0 : index
    %c0_10 = arith.constant 0 : index
    %4 = vector.load %arg3[%c0_7, %c0_8, %c0_9, %c0_10] : memref<1x1x1x32xf32, #tpu.memory_space<vmem>>, vector<1x1x1x32xf32>
    %5 = vector.broadcast %4 : vector<1x1x1x32xf32> to vector<8x2x4x32xf32>
    %6 = arith.addf %3, %5 : vector<8x2x4x32xf32>
    %cst = arith.constant 0.000000e+00 : f32
    %7 = vector.broadcast %cst : f32 to vector<8x2x4x32xf32>
    %8 = arith.maximumf %6, %7 : vector<8x2x4x32xf32>
    %9 = vector.extract_strided_slice %8 {offsets = [0, 0, 0, 0], sizes = [8, 1, 4, 32], strides = [1, 1, 1, 1]} : vector<8x2x4x32xf32> to vector<8x1x4x32xf32>
    %10 = vector.shape_cast %9 : vector<8x1x4x32xf32> to vector<8x4x32xf32>
    %11 = vector.extract_strided_slice %8 {offsets = [0, 1, 0, 0], sizes = [8, 1, 4, 32], strides = [1, 1, 1, 1]} : vector<8x2x4x32xf32> to vector<8x1x4x32xf32>
    %12 = vector.shape_cast %11 : vector<8x1x4x32xf32> to vector<8x4x32xf32>
    %13 = arith.maximumf %10, %12 : vector<8x4x32xf32>
    %14 = vector.extract_strided_slice %13 {offsets = [0, 0, 0], sizes = [8, 4, 16], strides = [1, 1, 1]} : vector<8x4x32xf32> to vector<8x4x16xf32>
    %15 = vector.extract_strided_slice %13 {offsets = [0, 0, 16], sizes = [8, 4, 16], strides = [1, 1, 1]} : vector<8x4x32xf32> to vector<8x4x16xf32>
    %16 = arith.maximumf %14, %15 : vector<8x4x16xf32>
    %c0_11 = arith.constant 0 : index
    %c0_12 = arith.constant 0 : index
    %c0_13 = arith.constant 0 : index
    %17 = vector.load %arg4[%c0_11, %c0_12, %c0_13] : memref<8x4x16xf32, #tpu.memory_space<vmem>>, vector<8x4x16xf32>
    tpu.vector_store %arg4[%c0_11, %c0_12, %c0_13], %16 {strides = array<i32>} : memref<8x4x16xf32, #tpu.memory_space<vmem>>, vector<8x4x16xf32>,
    return
  }
  func.func @transform_0(%arg0: i32) -> (i32, i32, i32, i32) {
    %c0_i32 = arith.constant 0 : i32
    %c0_i32_0 = arith.constant 0 : i32
    %c0_i32_1 = arith.constant 0 : i32
    %c0_i32_2 = arith.constant 0 : i32
    return %arg0, %c0_i32, %c0_i32_0, %c0_i32_1 : i32, i32, i32, i32
  }
  func.func @transform_1(%arg0: i32) -> (i32, i32, i32, i32) {
    %c0_i32 = arith.constant 0 : i32
    %c0_i32_0 = arith.constant 0 : i32
    %c0_i32_1 = arith.constant 0 : i32
    %c0_i32_2 = arith.constant 0 : i32
    %c0_i32_3 = arith.constant 0 : i32
    return %c0_i32, %c0_i32_0, %c0_i32_1, %c0_i32_2 : i32, i32, i32, i32
  }
  func.func @transform_2(%arg0: i32) -> (i32, i32, i32, i32) {
    %c0_i32 = arith.constant 0 : i32
    %c0_i32_0 = arith.constant 0 : i32
    %c0_i32_1 = arith.constant 0 : i32
    %c0_i32_2 = arith.constant 0 : i32
    %c0_i32_3 = arith.constant 0 : i32
    return %c0_i32, %c0_i32_0, %c0_i32_1, %c0_i32_2 : i32, i32, i32, i32
  }
  func.func @transform_3(%arg0: i32) -> (i32, i32, i32) {
    %c0_i32 = arith.constant 0 : i32
    %c0_i32_0 = arith.constant 0 : i32
    %c0_i32_1 = arith.constant 0 : i32
    return %arg0, %c0_i32, %c0_i32_0 : i32, i32, i32
  }
}

module attributes {stable_mosaic.version = 11 : i64} {
  func.func @_linear_ln_relu_kernel(%arg0: i32, %arg1: memref<2x256xf32, #tpu.memory_space<vmem>>, %arg2: memref<256x32xbf16, #tpu.memory_space<vmem>>, %arg3: memref<1x32xf32, #tpu.memory_space<vmem>>, %arg4: memref<1x32xf32, #tpu.memory_space<vmem>>, %arg5: memref<1x32xf32, #tpu.memory_space<vmem>>, %arg6: memref<2x32xf32, #tpu.memory_space<vmem>>) attributes {dimension_semantics = [#tpu.dimension_semantics<parallel>], iteration_bounds = array<i64: 1>, scalar_prefetch = 0 : i64, scratch_operands = 0 : i64, tpu.core_type = #tpu.core_type<tc>, window_params = [{transform_indices = @transform_0, window_bounds = array<i64: 2, 256>}, {pipeline_mode = #tpu.pipeline_mode<synchronous>, transform_indices = @transform_1, window_bounds = array<i64: 256, 32>}, {pipeline_mode = #tpu.pipeline_mode<synchronous>, transform_indices = @transform_2, window_bounds = array<i64: 1, 32>}, {pipeline_mode = #tpu.pipeline_mode<synchronous>, transform_indices = @transform_3, window_bounds = array<i64: 1, 32>}, {pipeline_mode = #tpu.pipeline_mode<synchronous>, transform_indices = @transform_4, window_bounds = array<i64: 1, 32>}, {transform_indices = @transform_5, window_bounds = array<i64: 2, 32>}]} {
    %c0 = arith.constant 0 : index
    %c0_0 = arith.constant 0 : index
    %0 = vector.load %arg1[%c0, %c0_0] : memref<2x256xf32, #tpu.memory_space<vmem>>, vector<2x256xf32>
    %1 = arith.truncf %0 : vector<2x256xf32> to vector<2x256xbf16>
    %c0_1 = arith.constant 0 : index
    %c0_2 = arith.constant 0 : index
    %2 = vector.load %arg2[%c0_1, %c0_2] : memref<256x32xbf16, #tpu.memory_space<vmem>>, vector<256x32xbf16>
    %cst = arith.constant dense<0.000000e+00> : vector<2x32xf32>
    %3 = tpu.matmul %1, %2, %cst {dimension_numbers = #tpu.dot_dimension_numbers<[1], [0], [0], [1], [0, 0, 1, 1], [], []>} : vector<2x256xbf16>, vector<256x32xbf16>, vector<2x32xf32> -> vector<2x32xf32>
    %c0_3 = arith.constant 0 : index
    %c0_4 = arith.constant 0 : index
    %4 = vector.load %arg3[%c0_3, %c0_4] : memref<1x32xf32, #tpu.memory_space<vmem>>, vector<1x32xf32>
    %5 = vector.broadcast %4 : vector<1x32xf32> to vector<2x32xf32>
    %6 = arith.addf %3, %5 : vector<2x32xf32>
    %cst_5 = arith.constant dense<0.000000e+00> : vector<2xf32>
    %7 = vector.multi_reduction <add>, %6, %cst_5 [1] : vector<2x32xf32> to vector<2xf32>
    %8 = vector.shape_cast %7 : vector<2xf32> to vector<2x1xf32>
    %cst_6 = arith.constant 3.200000e+01 : f32
    %9 = vector.broadcast %cst_6 : f32 to vector<2x1xf32>
    %10 = arith.divf %8, %9 : vector<2x1xf32>
    %11 = vector.broadcast %10 : vector<2x1xf32> to vector<2x32xf32>
    %12 = arith.subf %6, %11 : vector<2x32xf32>
    %13 = arith.mulf %12, %12 : vector<2x32xf32>
    %cst_7 = arith.constant dense<0.000000e+00> : vector<2xf32>
    %14 = vector.multi_reduction <add>, %13, %cst_7 [1] : vector<2x32xf32> to vector<2xf32>
    %15 = vector.shape_cast %14 : vector<2xf32> to vector<2x1xf32>
    %cst_8 = arith.constant 3.200000e+01 : f32
    %16 = vector.broadcast %cst_8 : f32 to vector<2x1xf32>
    %17 = arith.divf %15, %16 : vector<2x1xf32>
    %18 = vector.broadcast %10 : vector<2x1xf32> to vector<2x32xf32>
    %19 = arith.subf %6, %18 : vector<2x32xf32>
    %cst_9 = arith.constant 9.99999974E-6 : f32
    %20 = vector.broadcast %cst_9 : f32 to vector<2x1xf32>
    %21 = arith.addf %17, %20 : vector<2x1xf32>
    %22 = math.rsqrt %21 : vector<2x1xf32>
    %23 = vector.broadcast %22 : vector<2x1xf32> to vector<2x32xf32>
    %24 = arith.mulf %19, %23 : vector<2x32xf32>
    %c0_10 = arith.constant 0 : index
    %c0_11 = arith.constant 0 : index
    %25 = vector.load %arg4[%c0_10, %c0_11] : memref<1x32xf32, #tpu.memory_space<vmem>>, vector<1x32xf32>
    %26 = vector.broadcast %25 : vector<1x32xf32> to vector<2x32xf32>
    %27 = arith.mulf %24, %26 : vector<2x32xf32>
    %c0_12 = arith.constant 0 : index
    %c0_13 = arith.constant 0 : index
    %28 = vector.load %arg5[%c0_12, %c0_13] : memref<1x32xf32, #tpu.memory_space<vmem>>, vector<1x32xf32>
    %29 = vector.broadcast %28 : vector<1x32xf32> to vector<2x32xf32>
    %30 = arith.addf %27, %29 : vector<2x32xf32>
    %cst_14 = arith.constant 0.000000e+00 : f32
    %31 = vector.broadcast %cst_14 : f32 to vector<2x32xf32>
    %32 = arith.maximumf %30, %31 : vector<2x32xf32>
    %c0_15 = arith.constant 0 : index
    %c0_16 = arith.constant 0 : index
    %33 = vector.load %arg6[%c0_15, %c0_16] : memref<2x32xf32, #tpu.memory_space<vmem>>, vector<2x32xf32>
    tpu.vector_store %arg6[%c0_15, %c0_16], %32 {strides = array<i32>} : memref<2x32xf32, #tpu.memory_space<vmem>>, vector<2x32xf32>,
    return
  }
  func.func @transform_0(%arg0: i32) -> (i32, i32) {
    %c0_i32 = arith.constant 0 : i32
    %c0_i32_0 = arith.constant 0 : i32
    return %arg0, %c0_i32 : i32, i32
  }
  func.func @transform_1(%arg0: i32) -> (i32, i32) {
    %c0_i32 = arith.constant 0 : i32
    %c0_i32_0 = arith.constant 0 : i32
    %c0_i32_1 = arith.constant 0 : i32
    return %c0_i32, %c0_i32_0 : i32, i32
  }
  func.func @transform_2(%arg0: i32) -> (i32, i32) {
    %c0_i32 = arith.constant 0 : i32
    %c0_i32_0 = arith.constant 0 : i32
    %c0_i32_1 = arith.constant 0 : i32
    return %c0_i32, %c0_i32_0 : i32, i32
  }
  func.func @transform_3(%arg0: i32) -> (i32, i32) {
    %c0_i32 = arith.constant 0 : i32
    %c0_i32_0 = arith.constant 0 : i32
    %c0_i32_1 = arith.constant 0 : i32
    return %c0_i32, %c0_i32_0 : i32, i32
  }
  func.func @transform_4(%arg0: i32) -> (i32, i32) {
    %c0_i32 = arith.constant 0 : i32
    %c0_i32_0 = arith.constant 0 : i32
    %c0_i32_1 = arith.constant 0 : i32
    return %c0_i32, %c0_i32_0 : i32, i32
  }
  func.func @transform_5(%arg0: i32) -> (i32, i32) {
    %c0_i32 = arith.constant 0 : i32
    %c0_i32_0 = arith.constant 0 : i32
    return %arg0, %c0_i32 : i32, i32
  }
}

module attributes {stable_mosaic.version = 11 : i64} {
  func.func @_linear_ln_relu_kernel(%arg0: i32, %arg1: memref<2x32xf32, #tpu.memory_space<vmem>>, %arg2: memref<32x256xbf16, #tpu.memory_space<vmem>>, %arg3: memref<1x256xf32, #tpu.memory_space<vmem>>, %arg4: memref<1x256xf32, #tpu.memory_space<vmem>>, %arg5: memref<1x256xf32, #tpu.memory_space<vmem>>, %arg6: memref<2x256xf32, #tpu.memory_space<vmem>>) attributes {dimension_semantics = [#tpu.dimension_semantics<parallel>], iteration_bounds = array<i64: 1>, scalar_prefetch = 0 : i64, scratch_operands = 0 : i64, tpu.core_type = #tpu.core_type<tc>, window_params = [{transform_indices = @transform_0, window_bounds = array<i64: 2, 32>}, {pipeline_mode = #tpu.pipeline_mode<synchronous>, transform_indices = @transform_1, window_bounds = array<i64: 32, 256>}, {pipeline_mode = #tpu.pipeline_mode<synchronous>, transform_indices = @transform_2, window_bounds = array<i64: 1, 256>}, {pipeline_mode = #tpu.pipeline_mode<synchronous>, transform_indices = @transform_3, window_bounds = array<i64: 1, 256>}, {pipeline_mode = #tpu.pipeline_mode<synchronous>, transform_indices = @transform_4, window_bounds = array<i64: 1, 256>}, {transform_indices = @transform_5, window_bounds = array<i64: 2, 256>}]} {
    %c0 = arith.constant 0 : index
    %c0_0 = arith.constant 0 : index
    %0 = vector.load %arg1[%c0, %c0_0] : memref<2x32xf32, #tpu.memory_space<vmem>>, vector<2x32xf32>
    %1 = arith.truncf %0 : vector<2x32xf32> to vector<2x32xbf16>
    %c0_1 = arith.constant 0 : index
    %c0_2 = arith.constant 0 : index
    %2 = vector.load %arg2[%c0_1, %c0_2] : memref<32x256xbf16, #tpu.memory_space<vmem>>, vector<32x256xbf16>
    %cst = arith.constant dense<0.000000e+00> : vector<2x256xf32>
    %3 = tpu.matmul %1, %2, %cst {dimension_numbers = #tpu.dot_dimension_numbers<[1], [0], [0], [1], [0, 0, 1, 1], [], []>} : vector<2x32xbf16>, vector<32x256xbf16>, vector<2x256xf32> -> vector<2x256xf32>
    %c0_3 = arith.constant 0 : index
    %c0_4 = arith.constant 0 : index
    %4 = vector.load %arg3[%c0_3, %c0_4] : memref<1x256xf32, #tpu.memory_space<vmem>>, vector<1x256xf32>
    %5 = vector.broadcast %4 : vector<1x256xf32> to vector<2x256xf32>
    %6 = arith.addf %3, %5 : vector<2x256xf32>
    %cst_5 = arith.constant dense<0.000000e+00> : vector<2xf32>
    %7 = vector.multi_reduction <add>, %6, %cst_5 [1] : vector<2x256xf32> to vector<2xf32>
    %8 = vector.shape_cast %7 : vector<2xf32> to vector<2x1xf32>
    %cst_6 = arith.constant 2.560000e+02 : f32
    %9 = vector.broadcast %cst_6 : f32 to vector<2x1xf32>
    %10 = arith.divf %8, %9 : vector<2x1xf32>
    %11 = vector.broadcast %10 : vector<2x1xf32> to vector<2x256xf32>
    %12 = arith.subf %6, %11 : vector<2x256xf32>
    %13 = arith.mulf %12, %12 : vector<2x256xf32>
    %cst_7 = arith.constant dense<0.000000e+00> : vector<2xf32>
    %14 = vector.multi_reduction <add>, %13, %cst_7 [1] : vector<2x256xf32> to vector<2xf32>
    %15 = vector.shape_cast %14 : vector<2xf32> to vector<2x1xf32>
    %cst_8 = arith.constant 2.560000e+02 : f32
    %16 = vector.broadcast %cst_8 : f32 to vector<2x1xf32>
    %17 = arith.divf %15, %16 : vector<2x1xf32>
    %18 = vector.broadcast %10 : vector<2x1xf32> to vector<2x256xf32>
    %19 = arith.subf %6, %18 : vector<2x256xf32>
    %cst_9 = arith.constant 9.99999974E-6 : f32
    %20 = vector.broadcast %cst_9 : f32 to vector<2x1xf32>
    %21 = arith.addf %17, %20 : vector<2x1xf32>
    %22 = math.rsqrt %21 : vector<2x1xf32>
    %23 = vector.broadcast %22 : vector<2x1xf32> to vector<2x256xf32>
    %24 = arith.mulf %19, %23 : vector<2x256xf32>
    %c0_10 = arith.constant 0 : index
    %c0_11 = arith.constant 0 : index
    %25 = vector.load %arg4[%c0_10, %c0_11] : memref<1x256xf32, #tpu.memory_space<vmem>>, vector<1x256xf32>
    %26 = vector.broadcast %25 : vector<1x256xf32> to vector<2x256xf32>
    %27 = arith.mulf %24, %26 : vector<2x256xf32>
    %c0_12 = arith.constant 0 : index
    %c0_13 = arith.constant 0 : index
    %28 = vector.load %arg5[%c0_12, %c0_13] : memref<1x256xf32, #tpu.memory_space<vmem>>, vector<1x256xf32>
    %29 = vector.broadcast %28 : vector<1x256xf32> to vector<2x256xf32>
    %30 = arith.addf %27, %29 : vector<2x256xf32>
    %cst_14 = arith.constant 0.000000e+00 : f32
    %31 = vector.broadcast %cst_14 : f32 to vector<2x256xf32>
    %32 = arith.maximumf %30, %31 : vector<2x256xf32>
    %c0_15 = arith.constant 0 : index
    %c0_16 = arith.constant 0 : index
    %33 = vector.load %arg6[%c0_15, %c0_16] : memref<2x256xf32, #tpu.memory_space<vmem>>, vector<2x256xf32>
    tpu.vector_store %arg6[%c0_15, %c0_16], %32 {strides = array<i32>} : memref<2x256xf32, #tpu.memory_space<vmem>>, vector<2x256xf32>,
    return
  }
  func.func @transform_0(%arg0: i32) -> (i32, i32) {
    %c0_i32 = arith.constant 0 : i32
    %c0_i32_0 = arith.constant 0 : i32
    return %arg0, %c0_i32 : i32, i32
  }
  func.func @transform_1(%arg0: i32) -> (i32, i32) {
    %c0_i32 = arith.constant 0 : i32
    %c0_i32_0 = arith.constant 0 : i32
    %c0_i32_1 = arith.constant 0 : i32
    return %c0_i32, %c0_i32_0 : i32, i32
  }
  func.func @transform_2(%arg0: i32) -> (i32, i32) {
    %c0_i32 = arith.constant 0 : i32
    %c0_i32_0 = arith.constant 0 : i32
    %c0_i32_1 = arith.constant 0 : i32
    return %c0_i32, %c0_i32_0 : i32, i32
  }
  func.func @transform_3(%arg0: i32) -> (i32, i32) {
    %c0_i32 = arith.constant 0 : i32
    %c0_i32_0 = arith.constant 0 : i32
    %c0_i32_1 = arith.constant 0 : i32
    return %c0_i32, %c0_i32_0 : i32, i32
  }
  func.func @transform_4(%arg0: i32) -> (i32, i32) {
    %c0_i32 = arith.constant 0 : i32
    %c0_i32_0 = arith.constant 0 : i32
    %c0_i32_1 = arith.constant 0 : i32
    return %c0_i32, %c0_i32_0 : i32, i32
  }
  func.func @transform_5(%arg0: i32) -> (i32, i32) {
    %c0_i32 = arith.constant 0 : i32
    %c0_i32_0 = arith.constant 0 : i32
    return %arg0, %c0_i32 : i32, i32
  }
}

module attributes {stable_mosaic.version = 11 : i64} {
  func.func @_conv_stats_kernel(%arg0: i32, %arg1: memref<1x6x96xf32, #tpu.memory_space<vmem>>, %arg2: memref<288x64xbf16, #tpu.memory_space<vmem>>, %arg3: memref<1x4x64xf32, #tpu.memory_space<vmem>>, %arg4: memref<1x2x64xf32, #tpu.memory_space<vmem>>) attributes {dimension_semantics = [#tpu.dimension_semantics<parallel>], iteration_bounds = array<i64: 2>, scalar_prefetch = 0 : i64, scratch_operands = 0 : i64, tpu.core_type = #tpu.core_type<tc>, window_params = [{transform_indices = @transform_0, window_bounds = array<i64: 1, 6, 96>}, {pipeline_mode = #tpu.pipeline_mode<synchronous>, transform_indices = @transform_1, window_bounds = array<i64: 288, 64>}, {transform_indices = @transform_2, window_bounds = array<i64: 1, 4, 64>}, {transform_indices = @transform_3, window_bounds = array<i64: 1, 2, 64>}]} {
    %c0 = arith.constant 0 : index
    %c0_0 = arith.constant 0 : index
    %c0_1 = arith.constant 0 : index
    %0 = vector.load %arg1[%c0, %c0_0, %c0_1] : memref<1x6x96xf32, #tpu.memory_space<vmem>>, vector<1x4x96xf32>
    %1 = vector.shape_cast %0 : vector<1x4x96xf32> to vector<4x96xf32>
    %c0_2 = arith.constant 0 : index
    %c1 = arith.constant 1 : index
    %c0_3 = arith.constant 0 : index
    %2 = vector.load %arg1[%c0_2, %c1, %c0_3] : memref<1x6x96xf32, #tpu.memory_space<vmem>>, vector<1x4x96xf32>
    %3 = vector.shape_cast %2 : vector<1x4x96xf32> to vector<4x96xf32>
    %c0_4 = arith.constant 0 : index
    %c2 = arith.constant 2 : index
    %c0_5 = arith.constant 0 : index
    %4 = vector.load %arg1[%c0_4, %c2, %c0_5] : memref<1x6x96xf32, #tpu.memory_space<vmem>>, vector<1x4x96xf32>
    %5 = vector.shape_cast %4 : vector<1x4x96xf32> to vector<4x96xf32>
    %6 = tpu.concatenate %1, %3, %5 in 1 : vector<4x96xf32>, vector<4x96xf32>, vector<4x96xf32> -> vector<4x288xf32>
    %7 = arith.truncf %6 : vector<4x288xf32> to vector<4x288xbf16>
    %c0_6 = arith.constant 0 : index
    %c0_7 = arith.constant 0 : index
    %8 = vector.load %arg2[%c0_6, %c0_7] : memref<288x64xbf16, #tpu.memory_space<vmem>>, vector<288x64xbf16>
    %cst = arith.constant dense<0.000000e+00> : vector<4x64xf32>
    %9 = tpu.matmul %7, %8, %cst {dimension_numbers = #tpu.dot_dimension_numbers<[1], [0], [0], [1], [0, 0, 1, 1], [], []>} : vector<4x288xbf16>, vector<288x64xbf16>, vector<4x64xf32> -> vector<4x64xf32>
    %c0_8 = arith.constant 0 : index
    %c0_9 = arith.constant 0 : index
    %c0_10 = arith.constant 0 : index
    %10 = vector.load %arg3[%c0_8, %c0_9, %c0_10] : memref<1x4x64xf32, #tpu.memory_space<vmem>>, vector<1x4x64xf32>
    %11 = vector.shape_cast %10 : vector<1x4x64xf32> to vector<4x64xf32>
    %12 = vector.shape_cast %9 : vector<4x64xf32> to vector<1x4x64xf32>
    tpu.vector_store %arg3[%c0_8, %c0_9, %c0_10], %12 {strides = array<i32>} : memref<1x4x64xf32, #tpu.memory_space<vmem>>, vector<1x4x64xf32>,
    %cst_11 = arith.constant dense<0.000000e+00> : vector<64xf32>
    %13 = vector.multi_reduction <add>, %9, %cst_11 [0] : vector<4x64xf32> to vector<64xf32>
    %14 = vector.shape_cast %13 : vector<64xf32> to vector<1x64xf32>
    %c0_12 = arith.constant 0 : index
    %c0_13 = arith.constant 0 : index
    %c0_14 = arith.constant 0 : index
    %15 = vector.load %arg4[%c0_12, %c0_13, %c0_14] : memref<1x2x64xf32, #tpu.memory_space<vmem>>, vector<1x1x64xf32>
    %16 = vector.shape_cast %15 : vector<1x1x64xf32> to vector<1x64xf32>
    %17 = vector.shape_cast %14 : vector<1x64xf32> to vector<1x1x64xf32>
    tpu.vector_store %arg4[%c0_12, %c0_13, %c0_14], %17 {strides = array<i32>} : memref<1x2x64xf32, #tpu.memory_space<vmem>>, vector<1x1x64xf32>,
    %18 = arith.mulf %9, %9 : vector<4x64xf32>
    %cst_15 = arith.constant dense<0.000000e+00> : vector<64xf32>
    %19 = vector.multi_reduction <add>, %18, %cst_15 [0] : vector<4x64xf32> to vector<64xf32>
    %20 = vector.shape_cast %19 : vector<64xf32> to vector<1x64xf32>
    %c0_16 = arith.constant 0 : index
    %c1_17 = arith.constant 1 : index
    %c0_18 = arith.constant 0 : index
    %21 = vector.load %arg4[%c0_16, %c1_17, %c0_18] : memref<1x2x64xf32, #tpu.memory_space<vmem>>, vector<1x1x64xf32>
    %22 = vector.shape_cast %21 : vector<1x1x64xf32> to vector<1x64xf32>
    %23 = vector.shape_cast %20 : vector<1x64xf32> to vector<1x1x64xf32>
    tpu.vector_store %arg4[%c0_16, %c1_17, %c0_18], %23 {strides = array<i32>} : memref<1x2x64xf32, #tpu.memory_space<vmem>>, vector<1x1x64xf32>,
    return
  }
  func.func @transform_0(%arg0: i32) -> (i32, i32, i32) {
    %c0_i32 = arith.constant 0 : i32
    %c0_i32_0 = arith.constant 0 : i32
    %c0_i32_1 = arith.constant 0 : i32
    return %arg0, %c0_i32, %c0_i32_0 : i32, i32, i32
  }
  func.func @transform_1(%arg0: i32) -> (i32, i32) {
    %c0_i32 = arith.constant 0 : i32
    %c0_i32_0 = arith.constant 0 : i32
    %c0_i32_1 = arith.constant 0 : i32
    return %c0_i32, %c0_i32_0 : i32, i32
  }
  func.func @transform_2(%arg0: i32) -> (i32, i32, i32) {
    %c0_i32 = arith.constant 0 : i32
    %c0_i32_0 = arith.constant 0 : i32
    %c0_i32_1 = arith.constant 0 : i32
    return %arg0, %c0_i32, %c0_i32_0 : i32, i32, i32
  }
  func.func @transform_3(%arg0: i32) -> (i32, i32, i32) {
    %c0_i32 = arith.constant 0 : i32
    %c0_i32_0 = arith.constant 0 : i32
    %c0_i32_1 = arith.constant 0 : i32
    return %arg0, %c0_i32, %c0_i32_0 : i32, i32, i32
  }
}

module attributes {stable_mosaic.version = 11 : i64} {
  func.func @_bn_relu_kernel(%arg0: i32, %arg1: memref<8x64xf32, #tpu.memory_space<vmem>>, %arg2: memref<1x64xf32, #tpu.memory_space<vmem>>, %arg3: memref<1x64xf32, #tpu.memory_space<vmem>>, %arg4: memref<8x64xf32, #tpu.memory_space<vmem>>) attributes {dimension_semantics = [#tpu.dimension_semantics<parallel>], iteration_bounds = array<i64: 1>, scalar_prefetch = 0 : i64, scratch_operands = 0 : i64, tpu.core_type = #tpu.core_type<tc>, window_params = [{transform_indices = @transform_0, window_bounds = array<i64: 8, 64>}, {pipeline_mode = #tpu.pipeline_mode<synchronous>, transform_indices = @transform_1, window_bounds = array<i64: 1, 64>}, {pipeline_mode = #tpu.pipeline_mode<synchronous>, transform_indices = @transform_2, window_bounds = array<i64: 1, 64>}, {transform_indices = @transform_3, window_bounds = array<i64: 8, 64>}]} {
    %c0 = arith.constant 0 : index
    %c0_0 = arith.constant 0 : index
    %0 = vector.load %arg1[%c0, %c0_0] : memref<8x64xf32, #tpu.memory_space<vmem>>, vector<8x64xf32>
    %c0_1 = arith.constant 0 : index
    %c0_2 = arith.constant 0 : index
    %1 = vector.load %arg2[%c0_1, %c0_2] : memref<1x64xf32, #tpu.memory_space<vmem>>, vector<1x64xf32>
    %2 = vector.broadcast %1 : vector<1x64xf32> to vector<8x64xf32>
    %3 = arith.mulf %0, %2 : vector<8x64xf32>
    %c0_3 = arith.constant 0 : index
    %c0_4 = arith.constant 0 : index
    %4 = vector.load %arg3[%c0_3, %c0_4] : memref<1x64xf32, #tpu.memory_space<vmem>>, vector<1x64xf32>
    %5 = vector.broadcast %4 : vector<1x64xf32> to vector<8x64xf32>
    %6 = arith.addf %3, %5 : vector<8x64xf32>
    %cst = arith.constant 0.000000e+00 : f32
    %7 = vector.broadcast %cst : f32 to vector<8x64xf32>
    %8 = arith.maximumf %6, %7 : vector<8x64xf32>
    %c0_5 = arith.constant 0 : index
    %c0_6 = arith.constant 0 : index
    %9 = vector.load %arg4[%c0_5, %c0_6] : memref<8x64xf32, #tpu.memory_space<vmem>>, vector<8x64xf32>
    tpu.vector_store %arg4[%c0_5, %c0_6], %8 {strides = array<i32>} : memref<8x64xf32, #tpu.memory_space<vmem>>, vector<8x64xf32>,
    return
  }
  func.func @transform_0(%arg0: i32) -> (i32, i32) {
    %c0_i32 = arith.constant 0 : i32
    %c0_i32_0 = arith.constant 0 : i32
    return %arg0, %c0_i32 : i32, i32
  }
  func.func @transform_1(%arg0: i32) -> (i32, i32) {
    %c0_i32 = arith.constant 0 : i32
    %c0_i32_0 = arith.constant 0 : i32
    %c0_i32_1 = arith.constant 0 : i32
    return %c0_i32, %c0_i32_0 : i32, i32
  }
  func.func @transform_2(%arg0: i32) -> (i32, i32) {
    %c0_i32 = arith.constant 0 : i32
    %c0_i32_0 = arith.constant 0 : i32
    %c0_i32_1 = arith.constant 0 : i32
    return %c0_i32, %c0_i32_0 : i32, i32
  }
  func.func @transform_3(%arg0: i32) -> (i32, i32) {
    %c0_i32 = arith.constant 0 : i32
    %c0_i32_0 = arith.constant 0 : i32
    return %arg0, %c0_i32 : i32, i32
  }
}

module attributes {stable_mosaic.version = 11 : i64} {
  func.func @_conv_stats_kernel(%arg0: i32, %arg1: memref<1x6x96xf32, #tpu.memory_space<vmem>>, %arg2: memref<288x32xbf16, #tpu.memory_space<vmem>>, %arg3: memref<1x4x32xf32, #tpu.memory_space<vmem>>, %arg4: memref<1x2x32xf32, #tpu.memory_space<vmem>>) attributes {dimension_semantics = [#tpu.dimension_semantics<parallel>], iteration_bounds = array<i64: 2>, scalar_prefetch = 0 : i64, scratch_operands = 0 : i64, tpu.core_type = #tpu.core_type<tc>, window_params = [{transform_indices = @transform_0, window_bounds = array<i64: 1, 6, 96>}, {pipeline_mode = #tpu.pipeline_mode<synchronous>, transform_indices = @transform_1, window_bounds = array<i64: 288, 32>}, {transform_indices = @transform_2, window_bounds = array<i64: 1, 4, 32>}, {transform_indices = @transform_3, window_bounds = array<i64: 1, 2, 32>}]} {
    %c0 = arith.constant 0 : index
    %c0_0 = arith.constant 0 : index
    %c0_1 = arith.constant 0 : index
    %0 = vector.load %arg1[%c0, %c0_0, %c0_1] : memref<1x6x96xf32, #tpu.memory_space<vmem>>, vector<1x4x96xf32>
    %1 = vector.shape_cast %0 : vector<1x4x96xf32> to vector<4x96xf32>
    %c0_2 = arith.constant 0 : index
    %c1 = arith.constant 1 : index
    %c0_3 = arith.constant 0 : index
    %2 = vector.load %arg1[%c0_2, %c1, %c0_3] : memref<1x6x96xf32, #tpu.memory_space<vmem>>, vector<1x4x96xf32>
    %3 = vector.shape_cast %2 : vector<1x4x96xf32> to vector<4x96xf32>
    %c0_4 = arith.constant 0 : index
    %c2 = arith.constant 2 : index
    %c0_5 = arith.constant 0 : index
    %4 = vector.load %arg1[%c0_4, %c2, %c0_5] : memref<1x6x96xf32, #tpu.memory_space<vmem>>, vector<1x4x96xf32>
    %5 = vector.shape_cast %4 : vector<1x4x96xf32> to vector<4x96xf32>
    %6 = tpu.concatenate %1, %3, %5 in 1 : vector<4x96xf32>, vector<4x96xf32>, vector<4x96xf32> -> vector<4x288xf32>
    %7 = arith.truncf %6 : vector<4x288xf32> to vector<4x288xbf16>
    %c0_6 = arith.constant 0 : index
    %c0_7 = arith.constant 0 : index
    %8 = vector.load %arg2[%c0_6, %c0_7] : memref<288x32xbf16, #tpu.memory_space<vmem>>, vector<288x32xbf16>
    %cst = arith.constant dense<0.000000e+00> : vector<4x32xf32>
    %9 = tpu.matmul %7, %8, %cst {dimension_numbers = #tpu.dot_dimension_numbers<[1], [0], [0], [1], [0, 0, 1, 1], [], []>} : vector<4x288xbf16>, vector<288x32xbf16>, vector<4x32xf32> -> vector<4x32xf32>
    %c0_8 = arith.constant 0 : index
    %c0_9 = arith.constant 0 : index
    %c0_10 = arith.constant 0 : index
    %10 = vector.load %arg3[%c0_8, %c0_9, %c0_10] : memref<1x4x32xf32, #tpu.memory_space<vmem>>, vector<1x4x32xf32>
    %11 = vector.shape_cast %10 : vector<1x4x32xf32> to vector<4x32xf32>
    %12 = vector.shape_cast %9 : vector<4x32xf32> to vector<1x4x32xf32>
    tpu.vector_store %arg3[%c0_8, %c0_9, %c0_10], %12 {strides = array<i32>} : memref<1x4x32xf32, #tpu.memory_space<vmem>>, vector<1x4x32xf32>,
    %cst_11 = arith.constant dense<0.000000e+00> : vector<32xf32>
    %13 = vector.multi_reduction <add>, %9, %cst_11 [0] : vector<4x32xf32> to vector<32xf32>
    %14 = vector.shape_cast %13 : vector<32xf32> to vector<1x32xf32>
    %c0_12 = arith.constant 0 : index
    %c0_13 = arith.constant 0 : index
    %c0_14 = arith.constant 0 : index
    %15 = vector.load %arg4[%c0_12, %c0_13, %c0_14] : memref<1x2x32xf32, #tpu.memory_space<vmem>>, vector<1x1x32xf32>
    %16 = vector.shape_cast %15 : vector<1x1x32xf32> to vector<1x32xf32>
    %17 = vector.shape_cast %14 : vector<1x32xf32> to vector<1x1x32xf32>
    tpu.vector_store %arg4[%c0_12, %c0_13, %c0_14], %17 {strides = array<i32>} : memref<1x2x32xf32, #tpu.memory_space<vmem>>, vector<1x1x32xf32>,
    %18 = arith.mulf %9, %9 : vector<4x32xf32>
    %cst_15 = arith.constant dense<0.000000e+00> : vector<32xf32>
    %19 = vector.multi_reduction <add>, %18, %cst_15 [0] : vector<4x32xf32> to vector<32xf32>
    %20 = vector.shape_cast %19 : vector<32xf32> to vector<1x32xf32>
    %c0_16 = arith.constant 0 : index
    %c1_17 = arith.constant 1 : index
    %c0_18 = arith.constant 0 : index
    %21 = vector.load %arg4[%c0_16, %c1_17, %c0_18] : memref<1x2x32xf32, #tpu.memory_space<vmem>>, vector<1x1x32xf32>
    %22 = vector.shape_cast %21 : vector<1x1x32xf32> to vector<1x32xf32>
    %23 = vector.shape_cast %20 : vector<1x32xf32> to vector<1x1x32xf32>
    tpu.vector_store %arg4[%c0_16, %c1_17, %c0_18], %23 {strides = array<i32>} : memref<1x2x32xf32, #tpu.memory_space<vmem>>, vector<1x1x32xf32>,
    return
  }
  func.func @transform_0(%arg0: i32) -> (i32, i32, i32) {
    %c0_i32 = arith.constant 0 : i32
    %c0_i32_0 = arith.constant 0 : i32
    %c0_i32_1 = arith.constant 0 : i32
    return %arg0, %c0_i32, %c0_i32_0 : i32, i32, i32
  }
  func.func @transform_1(%arg0: i32) -> (i32, i32) {
    %c0_i32 = arith.constant 0 : i32
    %c0_i32_0 = arith.constant 0 : i32
    %c0_i32_1 = arith.constant 0 : i32
    return %c0_i32, %c0_i32_0 : i32, i32
  }
  func.func @transform_2(%arg0: i32) -> (i32, i32, i32) {
    %c0_i32 = arith.constant 0 : i32
    %c0_i32_0 = arith.constant 0 : i32
    %c0_i32_1 = arith.constant 0 : i32
    return %arg0, %c0_i32, %c0_i32_0 : i32, i32, i32
  }
  func.func @transform_3(%arg0: i32) -> (i32, i32, i32) {
    %c0_i32 = arith.constant 0 : i32
    %c0_i32_0 = arith.constant 0 : i32
    %c0_i32_1 = arith.constant 0 : i32
    return %arg0, %c0_i32, %c0_i32_0 : i32, i32, i32
  }
}

module attributes {stable_mosaic.version = 11 : i64} {
  func.func @_bn_relu_kernel(%arg0: i32, %arg1: memref<8x32xf32, #tpu.memory_space<vmem>>, %arg2: memref<1x32xf32, #tpu.memory_space<vmem>>, %arg3: memref<1x32xf32, #tpu.memory_space<vmem>>, %arg4: memref<8x32xf32, #tpu.memory_space<vmem>>) attributes {dimension_semantics = [#tpu.dimension_semantics<parallel>], iteration_bounds = array<i64: 1>, scalar_prefetch = 0 : i64, scratch_operands = 0 : i64, tpu.core_type = #tpu.core_type<tc>, window_params = [{transform_indices = @transform_0, window_bounds = array<i64: 8, 32>}, {pipeline_mode = #tpu.pipeline_mode<synchronous>, transform_indices = @transform_1, window_bounds = array<i64: 1, 32>}, {pipeline_mode = #tpu.pipeline_mode<synchronous>, transform_indices = @transform_2, window_bounds = array<i64: 1, 32>}, {transform_indices = @transform_3, window_bounds = array<i64: 8, 32>}]} {
    %c0 = arith.constant 0 : index
    %c0_0 = arith.constant 0 : index
    %0 = vector.load %arg1[%c0, %c0_0] : memref<8x32xf32, #tpu.memory_space<vmem>>, vector<8x32xf32>
    %c0_1 = arith.constant 0 : index
    %c0_2 = arith.constant 0 : index
    %1 = vector.load %arg2[%c0_1, %c0_2] : memref<1x32xf32, #tpu.memory_space<vmem>>, vector<1x32xf32>
    %2 = vector.broadcast %1 : vector<1x32xf32> to vector<8x32xf32>
    %3 = arith.mulf %0, %2 : vector<8x32xf32>
    %c0_3 = arith.constant 0 : index
    %c0_4 = arith.constant 0 : index
    %4 = vector.load %arg3[%c0_3, %c0_4] : memref<1x32xf32, #tpu.memory_space<vmem>>, vector<1x32xf32>
    %5 = vector.broadcast %4 : vector<1x32xf32> to vector<8x32xf32>
    %6 = arith.addf %3, %5 : vector<8x32xf32>
    %cst = arith.constant 0.000000e+00 : f32
    %7 = vector.broadcast %cst : f32 to vector<8x32xf32>
    %8 = arith.maximumf %6, %7 : vector<8x32xf32>
    %c0_5 = arith.constant 0 : index
    %c0_6 = arith.constant 0 : index
    %9 = vector.load %arg4[%c0_5, %c0_6] : memref<8x32xf32, #tpu.memory_space<vmem>>, vector<8x32xf32>
    tpu.vector_store %arg4[%c0_5, %c0_6], %8 {strides = array<i32>} : memref<8x32xf32, #tpu.memory_space<vmem>>, vector<8x32xf32>,
    return
  }
  func.func @transform_0(%arg0: i32) -> (i32, i32) {
    %c0_i32 = arith.constant 0 : i32
    %c0_i32_0 = arith.constant 0 : i32
    return %arg0, %c0_i32 : i32, i32
  }
  func.func @transform_1(%arg0: i32) -> (i32, i32) {
    %c0_i32 = arith.constant 0 : i32
    %c0_i32_0 = arith.constant 0 : i32
    %c0_i32_1 = arith.constant 0 : i32
    return %c0_i32, %c0_i32_0 : i32, i32
  }
  func.func @transform_2(%arg0: i32) -> (i32, i32) {
    %c0_i32 = arith.constant 0 : i32
    %c0_i32_0 = arith.constant 0 : i32
    %c0_i32_1 = arith.constant 0 : i32
    return %c0_i32, %c0_i32_0 : i32, i32
  }
  func.func @transform_3(%arg0: i32) -> (i32, i32) {
    %c0_i32 = arith.constant 0 : i32
    %c0_i32_0 = arith.constant 0 : i32
    return %arg0, %c0_i32 : i32, i32
  }
}

module attributes {stable_mosaic.version = 11 : i64} {
  func.func @_upsample_kernel(%arg0: i32, %arg1: memref<1x4x32xf32, #tpu.memory_space<vmem>>, %arg2: memref<8x4xf32, #tpu.memory_space<vmem>>, %arg3: memref<32x64xf32, #tpu.memory_space<vmem>>, %arg4: memref<1x8x64xf32, #tpu.memory_space<vmem>>) attributes {dimension_semantics = [#tpu.dimension_semantics<parallel>], iteration_bounds = array<i64: 2>, scalar_prefetch = 0 : i64, scratch_operands = 0 : i64, tpu.core_type = #tpu.core_type<tc>, window_params = [{transform_indices = @transform_0, window_bounds = array<i64: 1, 4, 32>}, {pipeline_mode = #tpu.pipeline_mode<synchronous>, transform_indices = @transform_1, window_bounds = array<i64: 8, 4>}, {pipeline_mode = #tpu.pipeline_mode<synchronous>, transform_indices = @transform_2, window_bounds = array<i64: 32, 64>}, {transform_indices = @transform_3, window_bounds = array<i64: 1, 8, 64>}]} {
    %c0 = arith.constant 0 : index
    %c0_0 = arith.constant 0 : index
    %0 = vector.load %arg2[%c0, %c0_0] : memref<8x4xf32, #tpu.memory_space<vmem>>, vector<8x4xf32>
    %c0_1 = arith.constant 0 : index
    %c0_2 = arith.constant 0 : index
    %c0_3 = arith.constant 0 : index
    %1 = vector.load %arg1[%c0_1, %c0_2, %c0_3] : memref<1x4x32xf32, #tpu.memory_space<vmem>>, vector<1x4x32xf32>
    %2 = vector.shape_cast %1 : vector<1x4x32xf32> to vector<4x32xf32>
    %cst = arith.constant dense<0.000000e+00> : vector<8x32xf32>
    %3 = tpu.matmul %0, %2, %cst {dimension_numbers = #tpu.dot_dimension_numbers<[1], [0], [0], [1], [0, 0, 1, 1], [], []>} : vector<8x4xf32>, vector<4x32xf32>, vector<8x32xf32> -> vector<8x32xf32>
    %c0_4 = arith.constant 0 : index
    %c0_5 = arith.constant 0 : index
    %4 = vector.load %arg3[%c0_4, %c0_5] : memref<32x64xf32, #tpu.memory_space<vmem>>, vector<32x64xf32>
    %cst_6 = arith.constant dense<0.000000e+00> : vector<8x64xf32>
    %5 = tpu.matmul %3, %4, %cst_6 {dimension_numbers = #tpu.dot_dimension_numbers<[1], [0], [0], [1], [0, 0, 1, 1], [], []>} : vector<8x32xf32>, vector<32x64xf32>, vector<8x64xf32> -> vector<8x64xf32>
    %c0_7 = arith.constant 0 : index
    %c0_8 = arith.constant 0 : index
    %c0_9 = arith.constant 0 : index
    %6 = vector.load %arg4[%c0_7, %c0_8, %c0_9] : memref<1x8x64xf32, #tpu.memory_space<vmem>>, vector<1x8x64xf32>
    %7 = vector.shape_cast %6 : vector<1x8x64xf32> to vector<8x64xf32>
    %8 = vector.shape_cast %5 : vector<8x64xf32> to vector<1x8x64xf32>
    tpu.vector_store %arg4[%c0_7, %c0_8, %c0_9], %8 {strides = array<i32>} : memref<1x8x64xf32, #tpu.memory_space<vmem>>, vector<1x8x64xf32>,
    return
  }
  func.func @transform_0(%arg0: i32) -> (i32, i32, i32) {
    %c0_i32 = arith.constant 0 : i32
    %c0_i32_0 = arith.constant 0 : i32
    %c0_i32_1 = arith.constant 0 : i32
    return %arg0, %c0_i32, %c0_i32_0 : i32, i32, i32
  }
  func.func @transform_1(%arg0: i32) -> (i32, i32) {
    %c0_i32 = arith.constant 0 : i32
    %c0_i32_0 = arith.constant 0 : i32
    %c0_i32_1 = arith.constant 0 : i32
    return %c0_i32, %c0_i32_0 : i32, i32
  }
  func.func @transform_2(%arg0: i32) -> (i32, i32) {
    %c0_i32 = arith.constant 0 : i32
    %c0_i32_0 = arith.constant 0 : i32
    %c0_i32_1 = arith.constant 0 : i32
    return %c0_i32, %c0_i32_0 : i32, i32
  }
  func.func @transform_3(%arg0: i32) -> (i32, i32, i32) {
    %c0_i32 = arith.constant 0 : i32
    %c0_i32_0 = arith.constant 0 : i32
    %c0_i32_1 = arith.constant 0 : i32
    return %arg0, %c0_i32, %c0_i32_0 : i32, i32, i32
  }
}

module attributes {stable_mosaic.version = 11 : i64} {
  func.func @_conv_stats_kernel(%arg0: i32, %arg1: memref<1x10x80xf32, #tpu.memory_space<vmem>>, %arg2: memref<240x64xbf16, #tpu.memory_space<vmem>>, %arg3: memref<1x8x64xf32, #tpu.memory_space<vmem>>, %arg4: memref<1x2x64xf32, #tpu.memory_space<vmem>>) attributes {dimension_semantics = [#tpu.dimension_semantics<parallel>], iteration_bounds = array<i64: 2>, scalar_prefetch = 0 : i64, scratch_operands = 0 : i64, tpu.core_type = #tpu.core_type<tc>, window_params = [{transform_indices = @transform_0, window_bounds = array<i64: 1, 10, 80>}, {pipeline_mode = #tpu.pipeline_mode<synchronous>, transform_indices = @transform_1, window_bounds = array<i64: 240, 64>}, {transform_indices = @transform_2, window_bounds = array<i64: 1, 8, 64>}, {transform_indices = @transform_3, window_bounds = array<i64: 1, 2, 64>}]} {
    %c0 = arith.constant 0 : index
    %c0_0 = arith.constant 0 : index
    %c0_1 = arith.constant 0 : index
    %0 = vector.load %arg1[%c0, %c0_0, %c0_1] : memref<1x10x80xf32, #tpu.memory_space<vmem>>, vector<1x8x80xf32>
    %1 = vector.shape_cast %0 : vector<1x8x80xf32> to vector<8x80xf32>
    %c0_2 = arith.constant 0 : index
    %c1 = arith.constant 1 : index
    %c0_3 = arith.constant 0 : index
    %2 = vector.load %arg1[%c0_2, %c1, %c0_3] : memref<1x10x80xf32, #tpu.memory_space<vmem>>, vector<1x8x80xf32>
    %3 = vector.shape_cast %2 : vector<1x8x80xf32> to vector<8x80xf32>
    %c0_4 = arith.constant 0 : index
    %c2 = arith.constant 2 : index
    %c0_5 = arith.constant 0 : index
    %4 = vector.load %arg1[%c0_4, %c2, %c0_5] : memref<1x10x80xf32, #tpu.memory_space<vmem>>, vector<1x8x80xf32>
    %5 = vector.shape_cast %4 : vector<1x8x80xf32> to vector<8x80xf32>
    %6 = tpu.concatenate %1, %3, %5 in 1 : vector<8x80xf32>, vector<8x80xf32>, vector<8x80xf32> -> vector<8x240xf32>
    %7 = arith.truncf %6 : vector<8x240xf32> to vector<8x240xbf16>
    %c0_6 = arith.constant 0 : index
    %c0_7 = arith.constant 0 : index
    %8 = vector.load %arg2[%c0_6, %c0_7] : memref<240x64xbf16, #tpu.memory_space<vmem>>, vector<240x64xbf16>
    %cst = arith.constant dense<0.000000e+00> : vector<8x64xf32>
    %9 = tpu.matmul %7, %8, %cst {dimension_numbers = #tpu.dot_dimension_numbers<[1], [0], [0], [1], [0, 0, 1, 1], [], []>} : vector<8x240xbf16>, vector<240x64xbf16>, vector<8x64xf32> -> vector<8x64xf32>
    %c0_8 = arith.constant 0 : index
    %c0_9 = arith.constant 0 : index
    %c0_10 = arith.constant 0 : index
    %10 = vector.load %arg3[%c0_8, %c0_9, %c0_10] : memref<1x8x64xf32, #tpu.memory_space<vmem>>, vector<1x8x64xf32>
    %11 = vector.shape_cast %10 : vector<1x8x64xf32> to vector<8x64xf32>
    %12 = vector.shape_cast %9 : vector<8x64xf32> to vector<1x8x64xf32>
    tpu.vector_store %arg3[%c0_8, %c0_9, %c0_10], %12 {strides = array<i32>} : memref<1x8x64xf32, #tpu.memory_space<vmem>>, vector<1x8x64xf32>,
    %cst_11 = arith.constant dense<0.000000e+00> : vector<64xf32>
    %13 = vector.multi_reduction <add>, %9, %cst_11 [0] : vector<8x64xf32> to vector<64xf32>
    %14 = vector.shape_cast %13 : vector<64xf32> to vector<1x64xf32>
    %c0_12 = arith.constant 0 : index
    %c0_13 = arith.constant 0 : index
    %c0_14 = arith.constant 0 : index
    %15 = vector.load %arg4[%c0_12, %c0_13, %c0_14] : memref<1x2x64xf32, #tpu.memory_space<vmem>>, vector<1x1x64xf32>
    %16 = vector.shape_cast %15 : vector<1x1x64xf32> to vector<1x64xf32>
    %17 = vector.shape_cast %14 : vector<1x64xf32> to vector<1x1x64xf32>
    tpu.vector_store %arg4[%c0_12, %c0_13, %c0_14], %17 {strides = array<i32>} : memref<1x2x64xf32, #tpu.memory_space<vmem>>, vector<1x1x64xf32>,
    %18 = arith.mulf %9, %9 : vector<8x64xf32>
    %cst_15 = arith.constant dense<0.000000e+00> : vector<64xf32>
    %19 = vector.multi_reduction <add>, %18, %cst_15 [0] : vector<8x64xf32> to vector<64xf32>
    %20 = vector.shape_cast %19 : vector<64xf32> to vector<1x64xf32>
    %c0_16 = arith.constant 0 : index
    %c1_17 = arith.constant 1 : index
    %c0_18 = arith.constant 0 : index
    %21 = vector.load %arg4[%c0_16, %c1_17, %c0_18] : memref<1x2x64xf32, #tpu.memory_space<vmem>>, vector<1x1x64xf32>
    %22 = vector.shape_cast %21 : vector<1x1x64xf32> to vector<1x64xf32>
    %23 = vector.shape_cast %20 : vector<1x64xf32> to vector<1x1x64xf32>
    tpu.vector_store %arg4[%c0_16, %c1_17, %c0_18], %23 {strides = array<i32>} : memref<1x2x64xf32, #tpu.memory_space<vmem>>, vector<1x1x64xf32>,
    return
  }
  func.func @transform_0(%arg0: i32) -> (i32, i32, i32) {
    %c0_i32 = arith.constant 0 : i32
    %c0_i32_0 = arith.constant 0 : i32
    %c0_i32_1 = arith.constant 0 : i32
    return %arg0, %c0_i32, %c0_i32_0 : i32, i32, i32
  }
  func.func @transform_1(%arg0: i32) -> (i32, i32) {
    %c0_i32 = arith.constant 0 : i32
    %c0_i32_0 = arith.constant 0 : i32
    %c0_i32_1 = arith.constant 0 : i32
    return %c0_i32, %c0_i32_0 : i32, i32
  }
  func.func @transform_2(%arg0: i32) -> (i32, i32, i32) {
    %c0_i32 = arith.constant 0 : i32
    %c0_i32_0 = arith.constant 0 : i32
    %c0_i32_1 = arith.constant 0 : i32
    return %arg0, %c0_i32, %c0_i32_0 : i32, i32, i32
  }
  func.func @transform_3(%arg0: i32) -> (i32, i32, i32) {
    %c0_i32 = arith.constant 0 : i32
    %c0_i32_0 = arith.constant 0 : i32
    %c0_i32_1 = arith.constant 0 : i32
    return %arg0, %c0_i32, %c0_i32_0 : i32, i32, i32
  }
}

module attributes {stable_mosaic.version = 11 : i64} {
  func.func @_bn_relu_kernel(%arg0: i32, %arg1: memref<16x64xf32, #tpu.memory_space<vmem>>, %arg2: memref<1x64xf32, #tpu.memory_space<vmem>>, %arg3: memref<1x64xf32, #tpu.memory_space<vmem>>, %arg4: memref<16x64xf32, #tpu.memory_space<vmem>>) attributes {dimension_semantics = [#tpu.dimension_semantics<parallel>], iteration_bounds = array<i64: 1>, scalar_prefetch = 0 : i64, scratch_operands = 0 : i64, tpu.core_type = #tpu.core_type<tc>, window_params = [{transform_indices = @transform_0, window_bounds = array<i64: 16, 64>}, {pipeline_mode = #tpu.pipeline_mode<synchronous>, transform_indices = @transform_1, window_bounds = array<i64: 1, 64>}, {pipeline_mode = #tpu.pipeline_mode<synchronous>, transform_indices = @transform_2, window_bounds = array<i64: 1, 64>}, {transform_indices = @transform_3, window_bounds = array<i64: 16, 64>}]} {
    %c0 = arith.constant 0 : index
    %c0_0 = arith.constant 0 : index
    %0 = vector.load %arg1[%c0, %c0_0] : memref<16x64xf32, #tpu.memory_space<vmem>>, vector<16x64xf32>
    %c0_1 = arith.constant 0 : index
    %c0_2 = arith.constant 0 : index
    %1 = vector.load %arg2[%c0_1, %c0_2] : memref<1x64xf32, #tpu.memory_space<vmem>>, vector<1x64xf32>
    %2 = vector.broadcast %1 : vector<1x64xf32> to vector<16x64xf32>
    %3 = arith.mulf %0, %2 : vector<16x64xf32>
    %c0_3 = arith.constant 0 : index
    %c0_4 = arith.constant 0 : index
    %4 = vector.load %arg3[%c0_3, %c0_4] : memref<1x64xf32, #tpu.memory_space<vmem>>, vector<1x64xf32>
    %5 = vector.broadcast %4 : vector<1x64xf32> to vector<16x64xf32>
    %6 = arith.addf %3, %5 : vector<16x64xf32>
    %cst = arith.constant 0.000000e+00 : f32
    %7 = vector.broadcast %cst : f32 to vector<16x64xf32>
    %8 = arith.maximumf %6, %7 : vector<16x64xf32>
    %c0_5 = arith.constant 0 : index
    %c0_6 = arith.constant 0 : index
    %9 = vector.load %arg4[%c0_5, %c0_6] : memref<16x64xf32, #tpu.memory_space<vmem>>, vector<16x64xf32>
    tpu.vector_store %arg4[%c0_5, %c0_6], %8 {strides = array<i32>} : memref<16x64xf32, #tpu.memory_space<vmem>>, vector<16x64xf32>,
    return
  }
  func.func @transform_0(%arg0: i32) -> (i32, i32) {
    %c0_i32 = arith.constant 0 : i32
    %c0_i32_0 = arith.constant 0 : i32
    return %arg0, %c0_i32 : i32, i32
  }
  func.func @transform_1(%arg0: i32) -> (i32, i32) {
    %c0_i32 = arith.constant 0 : i32
    %c0_i32_0 = arith.constant 0 : i32
    %c0_i32_1 = arith.constant 0 : i32
    return %c0_i32, %c0_i32_0 : i32, i32
  }
  func.func @transform_2(%arg0: i32) -> (i32, i32) {
    %c0_i32 = arith.constant 0 : i32
    %c0_i32_0 = arith.constant 0 : i32
    %c0_i32_1 = arith.constant 0 : i32
    return %c0_i32, %c0_i32_0 : i32, i32
  }
  func.func @transform_3(%arg0: i32) -> (i32, i32) {
    %c0_i32 = arith.constant 0 : i32
    %c0_i32_0 = arith.constant 0 : i32
    return %arg0, %c0_i32 : i32, i32
  }
}

module attributes {stable_mosaic.version = 11 : i64} {
  func.func @_conv_stats_kernel(%arg0: i32, %arg1: memref<1x10x80xf32, #tpu.memory_space<vmem>>, %arg2: memref<240x32xbf16, #tpu.memory_space<vmem>>, %arg3: memref<1x8x32xf32, #tpu.memory_space<vmem>>, %arg4: memref<1x2x32xf32, #tpu.memory_space<vmem>>) attributes {dimension_semantics = [#tpu.dimension_semantics<parallel>], iteration_bounds = array<i64: 2>, scalar_prefetch = 0 : i64, scratch_operands = 0 : i64, tpu.core_type = #tpu.core_type<tc>, window_params = [{transform_indices = @transform_0, window_bounds = array<i64: 1, 10, 80>}, {pipeline_mode = #tpu.pipeline_mode<synchronous>, transform_indices = @transform_1, window_bounds = array<i64: 240, 32>}, {transform_indices = @transform_2, window_bounds = array<i64: 1, 8, 32>}, {transform_indices = @transform_3, window_bounds = array<i64: 1, 2, 32>}]} {
    %c0 = arith.constant 0 : index
    %c0_0 = arith.constant 0 : index
    %c0_1 = arith.constant 0 : index
    %0 = vector.load %arg1[%c0, %c0_0, %c0_1] : memref<1x10x80xf32, #tpu.memory_space<vmem>>, vector<1x8x80xf32>
    %1 = vector.shape_cast %0 : vector<1x8x80xf32> to vector<8x80xf32>
    %c0_2 = arith.constant 0 : index
    %c1 = arith.constant 1 : index
    %c0_3 = arith.constant 0 : index
    %2 = vector.load %arg1[%c0_2, %c1, %c0_3] : memref<1x10x80xf32, #tpu.memory_space<vmem>>, vector<1x8x80xf32>
    %3 = vector.shape_cast %2 : vector<1x8x80xf32> to vector<8x80xf32>
    %c0_4 = arith.constant 0 : index
    %c2 = arith.constant 2 : index
    %c0_5 = arith.constant 0 : index
    %4 = vector.load %arg1[%c0_4, %c2, %c0_5] : memref<1x10x80xf32, #tpu.memory_space<vmem>>, vector<1x8x80xf32>
    %5 = vector.shape_cast %4 : vector<1x8x80xf32> to vector<8x80xf32>
    %6 = tpu.concatenate %1, %3, %5 in 1 : vector<8x80xf32>, vector<8x80xf32>, vector<8x80xf32> -> vector<8x240xf32>
    %7 = arith.truncf %6 : vector<8x240xf32> to vector<8x240xbf16>
    %c0_6 = arith.constant 0 : index
    %c0_7 = arith.constant 0 : index
    %8 = vector.load %arg2[%c0_6, %c0_7] : memref<240x32xbf16, #tpu.memory_space<vmem>>, vector<240x32xbf16>
    %cst = arith.constant dense<0.000000e+00> : vector<8x32xf32>
    %9 = tpu.matmul %7, %8, %cst {dimension_numbers = #tpu.dot_dimension_numbers<[1], [0], [0], [1], [0, 0, 1, 1], [], []>} : vector<8x240xbf16>, vector<240x32xbf16>, vector<8x32xf32> -> vector<8x32xf32>
    %c0_8 = arith.constant 0 : index
    %c0_9 = arith.constant 0 : index
    %c0_10 = arith.constant 0 : index
    %10 = vector.load %arg3[%c0_8, %c0_9, %c0_10] : memref<1x8x32xf32, #tpu.memory_space<vmem>>, vector<1x8x32xf32>
    %11 = vector.shape_cast %10 : vector<1x8x32xf32> to vector<8x32xf32>
    %12 = vector.shape_cast %9 : vector<8x32xf32> to vector<1x8x32xf32>
    tpu.vector_store %arg3[%c0_8, %c0_9, %c0_10], %12 {strides = array<i32>} : memref<1x8x32xf32, #tpu.memory_space<vmem>>, vector<1x8x32xf32>,
    %cst_11 = arith.constant dense<0.000000e+00> : vector<32xf32>
    %13 = vector.multi_reduction <add>, %9, %cst_11 [0] : vector<8x32xf32> to vector<32xf32>
    %14 = vector.shape_cast %13 : vector<32xf32> to vector<1x32xf32>
    %c0_12 = arith.constant 0 : index
    %c0_13 = arith.constant 0 : index
    %c0_14 = arith.constant 0 : index
    %15 = vector.load %arg4[%c0_12, %c0_13, %c0_14] : memref<1x2x32xf32, #tpu.memory_space<vmem>>, vector<1x1x32xf32>
    %16 = vector.shape_cast %15 : vector<1x1x32xf32> to vector<1x32xf32>
    %17 = vector.shape_cast %14 : vector<1x32xf32> to vector<1x1x32xf32>
    tpu.vector_store %arg4[%c0_12, %c0_13, %c0_14], %17 {strides = array<i32>} : memref<1x2x32xf32, #tpu.memory_space<vmem>>, vector<1x1x32xf32>,
    %18 = arith.mulf %9, %9 : vector<8x32xf32>
    %cst_15 = arith.constant dense<0.000000e+00> : vector<32xf32>
    %19 = vector.multi_reduction <add>, %18, %cst_15 [0] : vector<8x32xf32> to vector<32xf32>
    %20 = vector.shape_cast %19 : vector<32xf32> to vector<1x32xf32>
    %c0_16 = arith.constant 0 : index
    %c1_17 = arith.constant 1 : index
    %c0_18 = arith.constant 0 : index
    %21 = vector.load %arg4[%c0_16, %c1_17, %c0_18] : memref<1x2x32xf32, #tpu.memory_space<vmem>>, vector<1x1x32xf32>
    %22 = vector.shape_cast %21 : vector<1x1x32xf32> to vector<1x32xf32>
    %23 = vector.shape_cast %20 : vector<1x32xf32> to vector<1x1x32xf32>
    tpu.vector_store %arg4[%c0_16, %c1_17, %c0_18], %23 {strides = array<i32>} : memref<1x2x32xf32, #tpu.memory_space<vmem>>, vector<1x1x32xf32>,
    return
  }
  func.func @transform_0(%arg0: i32) -> (i32, i32, i32) {
    %c0_i32 = arith.constant 0 : i32
    %c0_i32_0 = arith.constant 0 : i32
    %c0_i32_1 = arith.constant 0 : i32
    return %arg0, %c0_i32, %c0_i32_0 : i32, i32, i32
  }
  func.func @transform_1(%arg0: i32) -> (i32, i32) {
    %c0_i32 = arith.constant 0 : i32
    %c0_i32_0 = arith.constant 0 : i32
    %c0_i32_1 = arith.constant 0 : i32
    return %c0_i32, %c0_i32_0 : i32, i32
  }
  func.func @transform_2(%arg0: i32) -> (i32, i32, i32) {
    %c0_i32 = arith.constant 0 : i32
    %c0_i32_0 = arith.constant 0 : i32
    %c0_i32_1 = arith.constant 0 : i32
    return %arg0, %c0_i32, %c0_i32_0 : i32, i32, i32
  }
  func.func @transform_3(%arg0: i32) -> (i32, i32, i32) {
    %c0_i32 = arith.constant 0 : i32
    %c0_i32_0 = arith.constant 0 : i32
    %c0_i32_1 = arith.constant 0 : i32
    return %arg0, %c0_i32, %c0_i32_0 : i32, i32, i32
  }
}

module attributes {stable_mosaic.version = 11 : i64} {
  func.func @_bn_relu_kernel(%arg0: i32, %arg1: memref<16x32xf32, #tpu.memory_space<vmem>>, %arg2: memref<1x32xf32, #tpu.memory_space<vmem>>, %arg3: memref<1x32xf32, #tpu.memory_space<vmem>>, %arg4: memref<16x32xf32, #tpu.memory_space<vmem>>) attributes {dimension_semantics = [#tpu.dimension_semantics<parallel>], iteration_bounds = array<i64: 1>, scalar_prefetch = 0 : i64, scratch_operands = 0 : i64, tpu.core_type = #tpu.core_type<tc>, window_params = [{transform_indices = @transform_0, window_bounds = array<i64: 16, 32>}, {pipeline_mode = #tpu.pipeline_mode<synchronous>, transform_indices = @transform_1, window_bounds = array<i64: 1, 32>}, {pipeline_mode = #tpu.pipeline_mode<synchronous>, transform_indices = @transform_2, window_bounds = array<i64: 1, 32>}, {transform_indices = @transform_3, window_bounds = array<i64: 16, 32>}]} {
    %c0 = arith.constant 0 : index
    %c0_0 = arith.constant 0 : index
    %0 = vector.load %arg1[%c0, %c0_0] : memref<16x32xf32, #tpu.memory_space<vmem>>, vector<16x32xf32>
    %c0_1 = arith.constant 0 : index
    %c0_2 = arith.constant 0 : index
    %1 = vector.load %arg2[%c0_1, %c0_2] : memref<1x32xf32, #tpu.memory_space<vmem>>, vector<1x32xf32>
    %2 = vector.broadcast %1 : vector<1x32xf32> to vector<16x32xf32>
    %3 = arith.mulf %0, %2 : vector<16x32xf32>
    %c0_3 = arith.constant 0 : index
    %c0_4 = arith.constant 0 : index
    %4 = vector.load %arg3[%c0_3, %c0_4] : memref<1x32xf32, #tpu.memory_space<vmem>>, vector<1x32xf32>
    %5 = vector.broadcast %4 : vector<1x32xf32> to vector<16x32xf32>
    %6 = arith.addf %3, %5 : vector<16x32xf32>
    %cst = arith.constant 0.000000e+00 : f32
    %7 = vector.broadcast %cst : f32 to vector<16x32xf32>
    %8 = arith.maximumf %6, %7 : vector<16x32xf32>
    %c0_5 = arith.constant 0 : index
    %c0_6 = arith.constant 0 : index
    %9 = vector.load %arg4[%c0_5, %c0_6] : memref<16x32xf32, #tpu.memory_space<vmem>>, vector<16x32xf32>
    tpu.vector_store %arg4[%c0_5, %c0_6], %8 {strides = array<i32>} : memref<16x32xf32, #tpu.memory_space<vmem>>, vector<16x32xf32>,
    return
  }
  func.func @transform_0(%arg0: i32) -> (i32, i32) {
    %c0_i32 = arith.constant 0 : i32
    %c0_i32_0 = arith.constant 0 : i32
    return %arg0, %c0_i32 : i32, i32
  }
  func.func @transform_1(%arg0: i32) -> (i32, i32) {
    %c0_i32 = arith.constant 0 : i32
    %c0_i32_0 = arith.constant 0 : i32
    %c0_i32_1 = arith.constant 0 : i32
    return %c0_i32, %c0_i32_0 : i32, i32
  }
  func.func @transform_2(%arg0: i32) -> (i32, i32) {
    %c0_i32 = arith.constant 0 : i32
    %c0_i32_0 = arith.constant 0 : i32
    %c0_i32_1 = arith.constant 0 : i32
    return %c0_i32, %c0_i32_0 : i32, i32
  }
  func.func @transform_3(%arg0: i32) -> (i32, i32) {
    %c0_i32 = arith.constant 0 : i32
    %c0_i32_0 = arith.constant 0 : i32
    return %arg0, %c0_i32 : i32, i32
  }
}

module attributes {stable_mosaic.version = 11 : i64} {
  func.func @_upsample_kernel(%arg0: i32, %arg1: memref<1x8x32xf32, #tpu.memory_space<vmem>>, %arg2: memref<16x8xf32, #tpu.memory_space<vmem>>, %arg3: memref<32x64xf32, #tpu.memory_space<vmem>>, %arg4: memref<1x16x64xf32, #tpu.memory_space<vmem>>) attributes {dimension_semantics = [#tpu.dimension_semantics<parallel>], iteration_bounds = array<i64: 2>, scalar_prefetch = 0 : i64, scratch_operands = 0 : i64, tpu.core_type = #tpu.core_type<tc>, window_params = [{transform_indices = @transform_0, window_bounds = array<i64: 1, 8, 32>}, {pipeline_mode = #tpu.pipeline_mode<synchronous>, transform_indices = @transform_1, window_bounds = array<i64: 16, 8>}, {pipeline_mode = #tpu.pipeline_mode<synchronous>, transform_indices = @transform_2, window_bounds = array<i64: 32, 64>}, {transform_indices = @transform_3, window_bounds = array<i64: 1, 16, 64>}]} {
    %c0 = arith.constant 0 : index
    %c0_0 = arith.constant 0 : index
    %0 = vector.load %arg2[%c0, %c0_0] : memref<16x8xf32, #tpu.memory_space<vmem>>, vector<16x8xf32>
    %c0_1 = arith.constant 0 : index
    %c0_2 = arith.constant 0 : index
    %c0_3 = arith.constant 0 : index
    %1 = vector.load %arg1[%c0_1, %c0_2, %c0_3] : memref<1x8x32xf32, #tpu.memory_space<vmem>>, vector<1x8x32xf32>
    %2 = vector.shape_cast %1 : vector<1x8x32xf32> to vector<8x32xf32>
    %cst = arith.constant dense<0.000000e+00> : vector<16x32xf32>
    %3 = tpu.matmul %0, %2, %cst {dimension_numbers = #tpu.dot_dimension_numbers<[1], [0], [0], [1], [0, 0, 1, 1], [], []>} : vector<16x8xf32>, vector<8x32xf32>, vector<16x32xf32> -> vector<16x32xf32>
    %c0_4 = arith.constant 0 : index
    %c0_5 = arith.constant 0 : index
    %4 = vector.load %arg3[%c0_4, %c0_5] : memref<32x64xf32, #tpu.memory_space<vmem>>, vector<32x64xf32>
    %cst_6 = arith.constant dense<0.000000e+00> : vector<16x64xf32>
    %5 = tpu.matmul %3, %4, %cst_6 {dimension_numbers = #tpu.dot_dimension_numbers<[1], [0], [0], [1], [0, 0, 1, 1], [], []>} : vector<16x32xf32>, vector<32x64xf32>, vector<16x64xf32> -> vector<16x64xf32>
    %c0_7 = arith.constant 0 : index
    %c0_8 = arith.constant 0 : index
    %c0_9 = arith.constant 0 : index
    %6 = vector.load %arg4[%c0_7, %c0_8, %c0_9] : memref<1x16x64xf32, #tpu.memory_space<vmem>>, vector<1x16x64xf32>
    %7 = vector.shape_cast %6 : vector<1x16x64xf32> to vector<16x64xf32>
    %8 = vector.shape_cast %5 : vector<16x64xf32> to vector<1x16x64xf32>
    tpu.vector_store %arg4[%c0_7, %c0_8, %c0_9], %8 {strides = array<i32>} : memref<1x16x64xf32, #tpu.memory_space<vmem>>, vector<1x16x64xf32>,
    return
  }
  func.func @transform_0(%arg0: i32) -> (i32, i32, i32) {
    %c0_i32 = arith.constant 0 : i32
    %c0_i32_0 = arith.constant 0 : i32
    %c0_i32_1 = arith.constant 0 : i32
    return %arg0, %c0_i32, %c0_i32_0 : i32, i32, i32
  }
  func.func @transform_1(%arg0: i32) -> (i32, i32) {
    %c0_i32 = arith.constant 0 : i32
    %c0_i32_0 = arith.constant 0 : i32
    %c0_i32_1 = arith.constant 0 : i32
    return %c0_i32, %c0_i32_0 : i32, i32
  }
  func.func @transform_2(%arg0: i32) -> (i32, i32) {
    %c0_i32 = arith.constant 0 : i32
    %c0_i32_0 = arith.constant 0 : i32
    %c0_i32_1 = arith.constant 0 : i32
    return %c0_i32, %c0_i32_0 : i32, i32
  }
  func.func @transform_3(%arg0: i32) -> (i32, i32, i32) {
    %c0_i32 = arith.constant 0 : i32
    %c0_i32_0 = arith.constant 0 : i32
    %c0_i32_1 = arith.constant 0 : i32
    return %arg0, %c0_i32, %c0_i32_0 : i32, i32, i32
  }
}

</mosaic_0001>

<llo_original>
// kernel: tile.83
$region0: #{tile.83}
  #allocation0 [shape = 's32[1]{0}', space=sflag, size = 0x4, scoped, tag = 'scoped memory for tile.83']
  %s0 = inlined_call_operand.vmem [shape: f32[8], index: 0, kind: input, shape index: {}]
  %s1 = inlined_call_operand.vmem [shape: f32[16,8], index: 1, kind: output, shape index: {}]
  // Predicated region
  $region2: #{tile.83} parent=0 // pred_check
    _
  $region3: #{tile.83} parent=0 // pred_check_branch
    %3 = sbr.rel (0) target = $region5
  $region4: #{tile.83} parent=0 // pred_region
    _
  $region5: #{tile.83} parent=0 // pred_fallthru
    _
  %v4 = vld [vmem:[%s0] ss:$0 sm:$0xff]
  %5 = vst [vmem:[%s1] sm:$0xff] %v4
  %s6 = scalar_lea.vmem %s1, 8
  %7 = vst [vmem:[%s6] sm:$0xff] %v4

// kernel: tile.84
$region0: #{tile.84}
  %s0 = inlined_call_operand.vmem [shape: f32[16,8], index: 0, kind: input, shape index: {}]
  %s1 = inlined_call_operand.vmem [shape: f32[1,128], index: 1, kind: output, shape index: {}]
  $region1: #{tile.84} parent=0
    #allocation0 [shape = 'u8[4096]{0}', space=vmem, size = 0x1000, scoped, tag = 'scoped mem for output reshape']
    %v2 = vld [vmem:[%s0] sm:$0x1]
    %vm3 = vcmask 64512
    %4 = vst.msk [vmem:[#allocation0] sm:$0x1] %vm3, %v2
    %s5 = scalar_lea.vmem %s0, 15
    %v6 = vld [vmem:[%s5] sm:$0x1]
    %7 = vrot.lane.b32.xlu0 %v6, 120
    %v8 = vpop.permute.xlu0 %7
    %vm9 = vcmask 1048512
    %10 = vst.msk [vmem:[#allocation0] sm:$0x1] %vm9, %v8
    %s11 = scalar_lea.vmem %s0, 14
    %v12 = vld [vmem:[%s11] sm:$0x1]
    %13 = vrot.lane.b32.xlu0 %v12, 112
    %v14 = vpop.permute.xlu0 %13
    %vm15 = vcmask 982912
    %16 = vst.msk [vmem:[#allocation0] sm:$0x1] %vm15, %v14
    %s17 = scalar_lea.vmem %s0, 13
    %v18 = vld [vmem:[%s17] sm:$0x1]
    %19 = vrot.lane.b32.xlu0 %v18, 104
    %v20 = vpop.permute.xlu0 %19
    %vm21 = vcmask 917312
    %22 = vst.msk [vmem:[#allocation0] sm:$0x1] %vm21, %v20
    %s23 = scalar_lea.vmem %s0, 12
    %v24 = vld [vmem:[%s23] sm:$0x1]
    %25 = vrot.lane.b32.xlu0 %v24, 96
    %v26 = vpop.permute.xlu0 %25
    %vm27 = vcmask 851712
    %28 = vst.msk [vmem:[#allocation0] sm:$0x1] %vm27, %v26
    %s29 = scalar_lea.vmem %s0, 11
    %v30 = vld [vmem:[%s29] sm:$0x1]
    %31 = vrot.lane.b32.xlu0 %v30, 88
    %v32 = vpop.permute.xlu0 %31
    %vm33 = vcmask 786112
    %34 = vst.msk [vmem:[#allocation0] sm:$0x1] %vm33, %v32
    %s35 = scalar_lea.vmem %s0, 10
    %v36 = vld [vmem:[%s35] sm:$0x1]
    %37 = vrot.lane.b32.xlu0 %v36, 80
    %v38 = vpop.permute.xlu0 %37
    %vm39 = vcmask 720512
    %40 = vst.msk [vmem:[#allocation0] sm:$0x1] %vm39, %v38
    %s41 = scalar_lea.vmem %s0, 9
    %v42 = vld [vmem:[%s41] sm:$0x1]
    %43 = vrot.lane.b32.xlu0 %v42, 72
    %v44 = vpop.permute.xlu0 %43
    %vm45 = vcmask 654912
    %46 = vst.msk [vmem:[#allocation0] sm:$0x1] %vm45, %v44
    %s47 = scalar_lea.vmem %s0, 8
    %v48 = vld [vmem:[%s47] sm:$0x1]
    %49 = vrot.lane.b32.xlu0 %v48, 64
    %v50 = vpop.permute.xlu0 %49
    %vm51 = vcmask 589312
    %52 = vst.msk [vmem:[#allocation0] sm:$0x1] %vm51, %v50
    %s53 = scalar_lea.vmem %s0, 7
    %v54 = vld [vmem:[%s53] sm:$0x1]
    %55 = vrot.lane.b32.xlu0 %v54, 56
    %v56 = vpop.permute.xlu0 %55
    %vm57 = vcmask 523712
    %58 = vst.msk [vmem:[#allocation0] sm:$0x1] %vm57, %v56
    %s59 = scalar_lea.vmem %s0, 6
    %v60 = vld [vmem:[%s59] sm:$0x1]
    %61 = vrot.lane.b32.xlu0 %v60, 48
    %v62 = vpop.permute.xlu0 %61
    %vm63 = vcmask 458112
    %64 = vst.msk [vmem:[#allocation0] sm:$0x1] %vm63, %v62
    %s65 = scalar_lea.vmem %s0, 5
    %v66 = vld [vmem:[%s65] sm:$0x1]
    %67 = vrot.lane.b32.xlu0 %v66, 40
    %v68 = vpop.permute.xlu0 %67
    %vm69 = vcmask 392512
    %70 = vst.msk [vmem:[#allocation0] sm:$0x1] %vm69, %v68
    %s71 = scalar_lea.vmem %s0, 4
    %v72 = vld [vmem:[%s71] sm:$0x1]
    %73 = vrot.lane.b32.xlu0 %v72, 32
    %v74 = vpop.permute.xlu0 %73
    %vm75 = vcmask 326912
    %76 = vst.msk [vmem:[#allocation0] sm:$0x1] %vm75, %v74
    %s77 = scalar_lea.vmem %s0, 3
    %v78 = vld [vmem:[%s77] sm:$0x1]
    %79 = vrot.lane.b32.xlu0 %v78, 24
    %v80 = vpop.permute.xlu0 %79
    %vm81 = vcmask 261312
    %82 = vst.msk [vmem:[#allocation0] sm:$0x1] %vm81, %v80
    %s83 = scalar_lea.vmem %s0, 2
    %v84 = vld [vmem:[%s83] sm:$0x1]
    %85 = vrot.lane.b32.xlu0 %v84, 16
    %v86 = vpop.permute.xlu0 %85
    %vm87 = vcmask 195712
    %88 = vst.msk [vmem:[#allocation0] sm:$0x1] %vm87, %v86
    %s89 = scalar_lea.vmem %s0, 1
    %v90 = vld [vmem:[%s89] sm:$0x1]
    %91 = vrot.lane.b32.xlu0 %v90, 8
    %v92 = vpop.permute.xlu0 %91
    %vm93 = vcmask 130112
    %94 = vst.msk [vmem:[#allocation0] sm:$0x1] %vm93, %v92
    %s96 = sshllo.u32 0, 1
    %v98 = vld [vmem:[#allocation0] sm:%s96]
    %s99 = sshllo.u32 0, 1
    %100 = vst [vmem:[%s1] sm:%s99] %v98

// kernel: conv_ae_forward.20
$region0: #{conv_ae_forward.20}
  #allocation0 [shape = 'u32[]', space=smem, size = 0x4, offset = 0x4, fixed_abs, tag = 'smem constant byte address 0x4 - core index']
  #allocation1 [shape = 'u32[144,128]{1,0:T(1,128)}', space=vmem, size = 0x12000, scoped, tag = 'internal scratch']
  %s0 = inlined_call_operand.vmem [shape: f32[2,18,72], index: 0, kind: input, shape index: {}]
  %s1 = inlined_call_operand.vmem [shape: bf16[216,128], index: 1, kind: input, shape index: {}]
  %s2 = inlined_call_operand.vmem [shape: f32[2,16,128], index: 2, kind: output, shape index: {0}]
  %s3 = inlined_call_operand.vmem [shape: f32[2,2,128], index: 3, kind: output, shape index: {1}]
  %4 = xla_tuple %s2, %s3
  %s5 = sld [smem:[#allocation0]]
  $region49: #{conv_ae_forward.20} parent=0
    _
  %s7 = ssub.s32 1, %s5
  %s8 = scalar_select 0, %s7, %s5
  loop: start=0, step=1, limit=4
  $region2: #{conv_ae_forward.20} parent=0 // loop_pre_header
    _
  $region3: #{conv_ae_forward.20} parent=0 // loop_header
    %s10 = sphi 0, %s14
    %p11 = scmp.ge.s32.totalorder %s10, 4
    %s20 = sphi 0, %s22
    %s23 = sphi 0, %s20
    %s24 = sphi 0, %s23
    %s40 = sphi 0, %s24
    %s44 = sphi 0, %s44
    %s46 = sphi 0, %s44
    %s47 = sphi 0, %s46
    %s61 = sphi 0, %s47
    %s67 = sphi 0, %s69
    %s70 = sphi 0, %s67
    %s71 = sphi 0, %s70
    %s87 = sphi 0, %s71
    %s93 = sphi 0, %s95
    %s96 = sphi 0, %s93
    %s97 = sphi 0, %s96
    %s113 = sphi 0, %s97
  $region4: #{conv_ae_forward.20} parent=0 // loop_header_branch
    %13 = sbr.rel (%p11) target = $region8
  $region5: #{conv_ae_forward.20} parent=0 // loop_body
    %s15 = ssub.s32 %s10, 1
    %s16 = ssub.s32 %s10, 2
    %s17 = sadd.s32 %s10, 1
    %s18 = ssub.s32 %s10, %s17
    %p19 = scmp.eq.s32.totalorder %s18, 0
    %s21 = sadd.s32 %s20, 1
    %s22 = scalar_select %p19, %s20, %s21
    %p25 = pneg %p19
    %p26 = scmp.eq.s32.totalorder %s10, 1
    %p27 = por %p25, %p26
    %p28 = scmp.ne.s32.totalorder %s20, %s23
    %p29 = scmp.eq.s32.totalorder %s10, 0
    %p30 = por %p28, %p29
    %p31 = scmp.ne.s32.totalorder %s20, %s23
    %p32 = scmp.eq.s32.totalorder %s15, 1
    %p33 = por %p31, %p32
    %p34 = scmp.ne.s32.totalorder %s23, %s24
    %p35 = scmp.eq.s32.totalorder %s15, 0
    %p36 = por %p34, %p35
    %p37 = scmp.ne.s32.totalorder %s23, %s24
    %p38 = scmp.eq.s32.totalorder %s16, 1
    %p39 = por %p37, %p38
    %p41 = scmp.ne.s32.totalorder %s24, %s40
    %p42 = scmp.eq.s32.totalorder %s16, 0
    %p43 = por %p41, %p42
    %s45 = sadd.s32 %s44, 1
    %p48 = scmp.eq.s32.totalorder %s10, 1
    %p49 = scmp.ne.s32.totalorder %s44, %s46
    %p50 = scmp.eq.s32.totalorder %s10, 0
    %p51 = por %p49, %p50
    %p52 = scmp.ne.s32.totalorder %s44, %s46
    %p53 = scmp.eq.s32.totalorder %s15, 1
    %p54 = por %p52, %p53
    %p55 = scmp.ne.s32.totalorder %s46, %s47
    %p56 = scmp.eq.s32.totalorder %s15, 0
    %p57 = por %p55, %p56
    %p58 = scmp.ne.s32.totalorder %s46, %s47
    %p59 = scmp.eq.s32.totalorder %s16, 1
    %p60 = por %p58, %p59
    %p62 = scmp.ne.s32.totalorder %s47, %s61
    %p63 = scmp.eq.s32.totalorder %s16, 0
    %p64 = por %p62, %p63
    %s65 = ssub.s32 %s10, %s17
    %p66 = scmp.eq.s32.totalorder %s65, 0
    %s68 = sadd.s32 %s67, 1
    %s69 = scalar_select %p66, %s67, %s68
    %p72 = pneg %p66
    %p73 = scmp.eq.s32.totalorder %s10, 1
    %p74 = por %p72, %p73
    %p75 = scmp.ne.s32.totalorder %s67, %s70
    %p76 = scmp.eq.s32.totalorder %s10, 0
    %p77 = por %p75, %p76
    %p78 = scmp.ne.s32.totalorder %s67, %s70
    %p79 = scmp.eq.s32.totalorder %s15, 1
    %p80 = por %p78, %p79
    %p81 = scmp.ne.s32.totalorder %s70, %s71
    %p82 = scmp.eq.s32.totalorder %s15, 0
    %p83 = por %p81, %p82
    %p84 = scmp.ne.s32.totalorder %s70, %s71
    %p85 = scmp.eq.s32.totalorder %s16, 1
    %p86 = por %p84, %p85
    %p88 = scmp.ne.s32.totalorder %s71, %s87
    %p89 = scmp.eq.s32.totalorder %s16, 0
    %p90 = por %p88, %p89
    %s91 = ssub.s32 %s10, %s17
    %p92 = scmp.eq.s32.totalorder %s91, 0
    %s94 = sadd.s32 %s93, 1
    %s95 = scalar_select %p92, %s93, %s94
    %p98 = pneg %p92
    %p99 = scmp.eq.s32.totalorder %s10, 1
    %p100 = por %p98, %p99
    %p101 = scmp.ne.s32.totalorder %s93, %s96
    %p102 = scmp.eq.s32.totalorder %s10, 0
    %p103 = por %p101, %p102
    %p104 = scmp.ne.s32.totalorder %s93, %s96
    %p105 = scmp.eq.s32.totalorder %s15, 1
    %p106 = por %p104, %p105
    %p107 = scmp.ne.s32.totalorder %s96, %s97
    %p108 = scmp.eq.s32.totalorder %s15, 0
    %p109 = por %p107, %p108
    %p110 = scmp.ne.s32.totalorder %s96, %s97
    %p111 = scmp.eq.s32.totalorder %s16, 1
    %p112 = por %p110, %p111
    %p114 = scmp.ne.s32.totalorder %s97, %s113
    %p115 = scmp.eq.s32.totalorder %s16, 0
    %p116 = por %p114, %p115
    %p117 = scmp.le.s32.totalorder 1, %s10
    %p118 = scmp.lt.s32.totalorder %s10, 3
    %p119 = pnand %p117, %p118
    %p120 = pneg %p119
    // Predicated region
    $region9: #{conv_ae_forward.20} parent=5 // pred_check
      _
    $region10: #{conv_ae_forward.20} parent=5 // pred_check_branch
      %122 = sbr.rel (%p119) target = $region12
    $region11: #{conv_ae_forward.20} parent=5 // pred_region
      %s123 = ssub.s32 %s10, 1
      // Predicated region
      $region13: #{conv_ae_forward.20} parent=11 // pred_check
        %p124 = pneg %p57
      $region14: #{conv_ae_forward.20} parent=11 // pred_check_branch
        %126 = sbr.rel (%p124) target = $region16
      $region15: #{conv_ae_forward.20} parent=11 // pred_region
        _
      $region16: #{conv_ae_forward.20} parent=11 // pred_fallthru
        _
    $region12: #{conv_ae_forward.20} parent=5 // pred_fallthru
      _
    %p127 = scmp.lt.s32.totalorder %s10, 2
    // Predicated region
    $region17: #{conv_ae_forward.20} parent=5 // pred_check
      %p128 = pneg %p127
    $region18: #{conv_ae_forward.20} parent=5 // pred_check_branch
      %130 = sbr.rel (%p128) target = $region20
    $region19: #{conv_ae_forward.20} parent=5 // pred_region
      // Predicated region
      $region21: #{conv_ae_forward.20} parent=19 // pred_check
        %p131 = pneg %p30
      $region22: #{conv_ae_forward.20} parent=19 // pred_check_branch
        %133 = sbr.rel (%p131) target = $region24
      $region23: #{conv_ae_forward.20} parent=19 // pred_region
        %p134 = scmp.lt.s32.totalorder %s10, 1
        %s135 = scalar_select %p134, %s10, 1
        %s136 = smul.addr %s135, 3
        %s137 = smul.addr %s136, 8
        %s138 = scalar_lea.vmem %s0, %s137
      $region24: #{conv_ae_forward.20} parent=19 // pred_fallthru
        _
    $region20: #{conv_ae_forward.20} parent=5 // pred_fallthru
      _
    %p139 = scmp.le.s32.totalorder 1, %s10
    %p140 = scmp.lt.s32.totalorder %s10, 3
    %p141 = pnand %p139, %p140
    %p142 = pneg %p141
    // Predicated region
    $region25: #{conv_ae_forward.20} parent=5 // pred_check
      _
    $region26: #{conv_ae_forward.20} parent=5 // pred_check_branch
      %144 = sbr.rel (%p141) target = $region28
    $region27: #{conv_ae_forward.20} parent=5 // pred_region
      %s145 = ssub.s32 %s10, 1
      %p146 = scmp.lt.s32.totalorder %s15, 1
      %s147 = scalar_select %p146, %s15, 1
      %s148 = smul.addr %s147, 3
      %s149 = smul.addr %s148, 8
      %s150 = scalar_lea.vmem %s0, %s149
      %p151 = pneg %p36
      %p152 = pneg %p33
      %p153 = pneg %p57
      %p154 = pneg %p54
      %p155 = pneg %p83
      %p156 = pneg %p80
      %p157 = scmp.lt.s32.totalorder %s15, 1
      %s158 = scalar_select %p157, %s15, 1
      %s159 = smul.addr %s158, 2
      %s160 = smul.addr %s159, 8
      %s161 = scalar_lea.vmem %s2, %s160
      %p162 = pneg %p109
      %p163 = pneg %p106
      %p164 = scmp.lt.s32.totalorder %s15, 1
      %s165 = scalar_select %p164, %s15, 1
      %s166 = smul.addr %s165, 2
      %s167 = scalar_lea.vmem %s3, %s166
      %p168 = scmp.lt.s32.totalorder %s15, 1
      %s169 = scalar_select %p168, %s15, 1
      %s170 = smul.addr %s169, 3
      %s171 = smul.addr %s170, 8
      %s172 = scalar_lea.vmem %s0, %s171
      %p173 = scmp.lt.s32.totalorder %s15, 1
      %s174 = scalar_select %p173, %s15, 1
      %s175 = smul.addr %s174, 2
      %s176 = smul.addr %s175, 8
      %s177 = scalar_lea.vmem %s2, %s176
      %p178 = scmp.lt.s32.totalorder %s15, 1
      %s179 = scalar_select %p178, %s15, 1
      %s180 = smul.addr %s179, 2
      %s181 = scalar_lea.vmem %s3, %s180
      %v183 = vld [vmem:[%s172] sm:$0xff]
      %v184 = vld [vmem:[%s172 + $0x8] sm:$0xff]
      %v185 = vld [vmem:[%s172 + $0x1] sm:$0xff]
      %v186 = vld [vmem:[%s172 + $0x9] sm:$0xff]
      %v187 = vld [vmem:[%s172 + $0x2] sm:$0xff]
      %v188 = vld [vmem:[%s172 + $0xa] sm:$0xff]
      %191 = vrot.lane.b32.xlu0 %v185, 72
      %v192 = vpop.permute.xlu0 %191
      %193 = vrot.lane.b32.xlu0 %v186, 72
      %v194 = vpop.permute.xlu0 %193
      %199 = vrot.lane.b32.xlu0 %v187, 16
      %v200 = vpop.permute.xlu0 %199
      %201 = vrot.lane.b32.xlu0 %v188, 16
      %v202 = vpop.permute.xlu0 %201
      %vm205 = vcmask 588800
      %v206 = vsel %vm205, %v183, %v192
      %v207 = vsel %vm205, %v184, %v194
      %vm208 = vcmask 130048
      %v209 = vsel %vm208, %v192, %v200
      %v210 = vsel %vm208, %v194, %v202
      %v211 = vpack.c.bf16 %v207, %v206
      %v212 = vpack.c.bf16 %v210, %v209
      %v213 = vld [vmem:[%s1] sm:$0xf]
      %v214 = vld [vmem:[%s1 + $0x4] sm:$0xf]
      %v215 = vld [vmem:[%s1 + $0x8] sm:$0xf]
      %v216 = vld [vmem:[%s1 + $0xc] sm:$0xf]
      %v217 = vld [vmem:[%s1 + $0x10] sm:$0xf]
      %v218 = vld [vmem:[%s1 + $0x14] sm:$0xf]
      %v219 = vld [vmem:[%s1 + $0x18] sm:$0xf]
      %v220 = vld [vmem:[%s1 + $0x1c] sm:$0xf]
      %v221 = vld [vmem:[%s1 + $0x20] sm:$0xf]
      %v222 = vld [vmem:[%s1 + $0x24] sm:$0xf]
      %v223 = vld [vmem:[%s1 + $0x28] sm:$0xf]
      %v224 = vld [vmem:[%s1 + $0x2c] sm:$0xf]
      %v225 = vld [vmem:[%s1 + $0x30] sm:$0xf]
      %v226 = vld [vmem:[%s1 + $0x34] sm:$0xf]
      %v227 = vld [vmem:[%s1 + $0x38] sm:$0xf]
      %v228 = vld [vmem:[%s1 + $0x3c] sm:$0xf]
      %v229 = vld [vmem:[%s1 + $0x40] sm:$0xf]
      %v230 = vld [vmem:[%s1 + $0x44] sm:$0xf]
      %v231 = vld [vmem:[%s1 + $0x48] sm:$0xf]
      %v232 = vld [vmem:[%s1 + $0x4c] sm:$0xf]
      %v233 = vld [vmem:[%s1 + $0x50] sm:$0xf]
      %v234 = vld [vmem:[%s1 + $0x54] sm:$0xf]
      %v235 = vld [vmem:[%s1 + $0x58] sm:$0xf]
      %v236 = vld [vmem:[%s1 + $0x5c] sm:$0xf]
      %v237 = vld [vmem:[%s1 + $0x60] sm:$0xf]
      %v238 = vld [vmem:[%s1 + $0x64] sm:$0xf]
      %v239 = vld [vmem:[%s1 + $0x68] sm:$0xf]
      %v267 = vunpack.c.l.b16 %v213
      %v268 = vunpack.c.l.b16 %v214
      %v269 = vunpack.c.l.b16 %v215
      %v270 = vunpack.c.l.b16 %v216
      %v271 = vunpack.c.l.b16 %v217
      %v272 = vunpack.c.l.b16 %v218
      %v273 = vunpack.c.l.b16 %v219
      %v274 = vunpack.c.l.b16 %v220
      %v275 = vunpack.c.l.b16 %v221
      %v276 = vunpack.c.l.b16 %v222
      %v277 = vunpack.c.l.b16 %v223
      %v278 = vunpack.c.l.b16 %v224
      %v279 = vunpack.c.l.b16 %v225
      %v280 = vunpack.c.l.b16 %v226
      %v281 = vunpack.c.l.b16 %v227
      %v282 = vunpack.c.l.b16 %v228
      %v283 = vunpack.c.l.b16 %v229
      %v284 = vunpack.c.l.b16 %v230
      %v285 = vunpack.c.l.b16 %v231
      %v286 = vunpack.c.l.b16 %v232
      %v287 = vunpack.c.l.b16 %v233
      %v288 = vunpack.c.l.b16 %v234
      %v289 = vunpack.c.l.b16 %v235
      %v290 = vunpack.c.l.b16 %v236
      %v291 = vunpack.c.l.b16 %v237
      %v292 = vunpack.c.l.b16 %v238
      %v293 = vunpack.c.l.b16 %v239
      %v294 = vpack.c.b16 %v268, %v267
      %v295 = vpack.c.b16 %v270, %v269
      %v296 = vpack.c.b16 %v272, %v271
      %v297 = vpack.c.b16 %v274, %v273
      %v298 = vpack.c.b16 %v276, %v275
      %v299 = vpack.c.b16 %v278, %v277
      %v300 = vpack.c.b16 %v280, %v279
      %v301 = vpack.c.b16 %v282, %v281
      %v302 = vpack.c.b16 %v284, %v283
      %v303 = vpack.c.b16 %v286, %v285
      %v304 = vpack.c.b16 %v288, %v287
      %v305 = vpack.c.b16 %v290, %v289
      %v306 = vpack.c.b16 %v292, %v291
      %v307 = vpack.c.b16 %v293, %v293
      %vm321 = vcmask 719872
      %v323 = vsel %vm321, %v212, 0
      %vm325 = vcmask 1043456
      %v327 = vsel %vm325, %v307, 0
      %329 = vmatprep.subr.bf16.mxu0 0
      %330 = vmatpush1.bf16.msra.mxu0 %v294
      %331 = vmatprep.subr.bf16.mxu0 0
      %332 = vmatpush1.bf16.msra.mxu0 %v295
      %333 = vmatprep.subr.bf16.mxu0 0
      %334 = vmatpush1.bf16.msra.mxu0 %v296
      %335 = vmatprep.subr.bf16.mxu0 0
      %336 = vmatpush1.bf16.msra.mxu0 %v297
      %337 = vmatprep.subr.bf16.mxu0 0
      %338 = vmatpush1.bf16.msra.mxu0 %v298
      %339 = vmatprep.subr.bf16.mxu0 0
      %340 = vmatpush1.bf16.msra.mxu0 %v299
      %341 = vmatprep.subr.bf16.mxu0 0
      %342 = vmatpush1.bf16.msra.mxu0 %v300
      %343 = vmatprep.subr.bf16.mxu0 0
      %344 = vmatpush1.bf16.msra.mxu0 %v301
      %345 = vmatprep.subr.bf16.mxu0 0
      %346 = vmatpush1.bf16.msra.mxu0 %v302
      %347 = vmatprep.subr.bf16.mxu0 0
      %348 = vmatpush1.bf16.msra.mxu0 %v303
      %349 = vmatprep.subr.bf16.mxu0 0
      %350 = vmatpush1.bf16.msra.mxu0 %v304
      %351 = vmatprep.subr.bf16.mxu0 0
      %352 = vmatpush1.bf16.msra.mxu0 %v305
      %353 = vmatprep.subr.bf16.mxu0 0
      %354 = vmatpush1.bf16.msra.mxu0 %v306
      %355 = vmatprep.subr.bf16.mxu0 0
      %356 = vmatpush1.bf16.msra.mxu0 %v327
      %357 = vmatprep.subr.bf16.mxu0 0
      %358 = vmatpush1.bf16.msra.mxu0 0
      %359 = vmatprep.subr.bf16.mxu0 0
      %360 = vmatpush1.bf16.msra.mxu0 0
      %361 = vmatprep.mubr.bf16.mxu0 %v323
      %362 = vmatmul.mubr.bf16.gmra.mrb[0].mxu0 %v211
      %v363 = vpop.f32.mrb[0].mxu0
      %v364 = vadd.f32 0.0, %v363
      %v365 = vpop.f32.mrb[0].mxu0
      %v366 = vpop.f32.mrb[0].mxu0
      %v367 = vadd.f32 0.0, %v366
      %v368 = vpop.f32.mrb[0].mxu0
      %369 = vdwg.mxu0
      %370 = vst [vmem:[%s177] sm:$0xff] %v364
      %371 = vst [vmem:[%s177 + $0x8] sm:$0xff] %v367
      %v372 = vadd.f32 %v364, %v367
      %v373 = vrot.slane %v372, 4
      %v374 = vadd.f32 %v372, %v373
      %v375 = vrot.slane %v374, 2
      %v376 = vadd.f32 %v374, %v375
      %v377 = vrot.slane %v376, 1
      %v378 = vadd.f32 %v376, %v377
      %379 = vst [vmem:[%s181] sm:$0x1] %v378
      %v380 = vmul.f32 %v364, %v364
      %v381 = vmul.f32 %v367, %v367
      %v382 = vadd.f32 %v380, %v381
      %v383 = vrot.slane %v382, 4
      %v384 = vadd.f32 %v382, %v383
      %v385 = vrot.slane %v384, 2
      %v386 = vadd.f32 %v384, %v385
      %v387 = vrot.slane %v386, 1
      %v388 = vadd.f32 %v386, %v387
      %389 = vst [vmem:[%s181 + $0x1] sm:$0x1] %v388
      %p390 = scmp.lt.s32.totalorder %s15, 1
      %s391 = scalar_select %p390, %s15, 1
      %s392 = smul.addr %s391, 2
      %s393 = smul.addr %s392, 8
      %s394 = scalar_lea.vmem %s2, %s393
      %p395 = scmp.lt.s32.totalorder %s15, 1
      %s396 = scalar_select %p395, %s15, 1
      %s397 = smul.addr %s396, 2
      %s398 = scalar_lea.vmem %s3, %s397
      // Predicated region
      $region29: #{conv_ae_forward.20} parent=27 // pred_check
        %p399 = pneg %p80
      $region30: #{conv_ae_forward.20} parent=27 // pred_check_branch
        %401 = sbr.rel (%p399) target = $region32
      $region31: #{conv_ae_forward.20} parent=27 // pred_region
        _
      $region32: #{conv_ae_forward.20} parent=27 // pred_fallthru
        _
      // Predicated region
      $region33: #{conv_ae_forward.20} parent=27 // pred_check
        %p402 = pneg %p106
      $region34: #{conv_ae_forward.20} parent=27 // pred_check_branch
        %404 = sbr.rel (%p402) target = $region36
      $region35: #{conv_ae_forward.20} parent=27 // pred_region
        _
      $region36: #{conv_ae_forward.20} parent=27 // pred_fallthru
        _
    $region28: #{conv_ae_forward.20} parent=5 // pred_fallthru
      _
    %p405 = scmp.le.s32.totalorder 2, %s10
    // Predicated region
    $region37: #{conv_ae_forward.20} parent=5 // pred_check
      %p406 = pneg %p405
    $region38: #{conv_ae_forward.20} parent=5 // pred_check_branch
      %408 = sbr.rel (%p406) target = $region40
    $region39: #{conv_ae_forward.20} parent=5 // pred_region
      %s409 = ssub.s32 %s10, 2
      // Predicated region
      $region41: #{conv_ae_forward.20} parent=39 // pred_check
        %p410 = pneg %p86
      $region42: #{conv_ae_forward.20} parent=39 // pred_check_branch
        %412 = sbr.rel (%p410) target = $region44
      $region43: #{conv_ae_forward.20} parent=39 // pred_region
        %p413 = scmp.lt.s32.totalorder %s16, 1
        %s414 = scalar_select %p413, %s16, 1
        %s415 = smul.addr %s414, 2
        %s416 = smul.addr %s415, 8
        %s417 = scalar_lea.vmem %s2, %s416
      $region44: #{conv_ae_forward.20} parent=39 // pred_fallthru
        _
      // Predicated region
      $region45: #{conv_ae_forward.20} parent=39 // pred_check
        %p418 = pneg %p112
      $region46: #{conv_ae_forward.20} parent=39 // pred_check_branch
        %420 = sbr.rel (%p418) target = $region48
      $region47: #{conv_ae_forward.20} parent=39 // pred_region
        %p421 = scmp.lt.s32.totalorder %s16, 1
        %s422 = scalar_select %p421, %s16, 1
        %s423 = smul.addr %s422, 2
        %s424 = scalar_lea.vmem %s3, %s423
      $region48: #{conv_ae_forward.20} parent=39 // pred_fallthru
        _
    $region40: #{conv_ae_forward.20} parent=5 // pred_fallthru
      _
  $region6: #{conv_ae_forward.20} parent=0 // loop_footer
    %s14 = sadd.s32 1, %s10
  $region7: #{conv_ae_forward.20} parent=0 // loop_footer_branch
    %9 = sbr.rel target = $region3
  $region8: #{conv_ae_forward.20} parent=0 // loop_exit
    _

// kernel: conv_ae_forward.21
$region0: #{conv_ae_forward.21}
  #allocation0 [shape = 'u32[]', space=smem, size = 0x4, offset = 0x4, fixed_abs, tag = 'smem constant byte address 0x4 - core index']
  #allocation1 [shape = 'u32[144,128]{1,0:T(1,128)}', space=vmem, size = 0x12000, scoped, tag = 'internal scratch']
  %s0 = inlined_call_operand.vmem [shape: f32[32,128], index: 0, kind: input, shape index: {}]
  %s1 = inlined_call_operand.vmem [shape: f32[1,128], index: 1, kind: input, shape index: {}]
  %s2 = inlined_call_operand.vmem [shape: f32[1,128], index: 2, kind: input, shape index: {}]
  %s3 = inlined_call_operand.vmem [shape: f32[32,128], index: 3, kind: output, shape index: {}]
  %s4 = sld [smem:[#allocation0]]
  $region22: #{conv_ae_forward.21} parent=0
    _
  %s6 = ssub.s32 1, %s4
  %s7 = scalar_select 0, %s6, %s4
  // Predicated region
  $region2: #{conv_ae_forward.21} parent=0 // pred_check
    _
  $region3: #{conv_ae_forward.21} parent=0 // pred_check_branch
    %9 = sbr.rel (0) target = $region5
  $region4: #{conv_ae_forward.21} parent=0 // pred_region
    _
  $region5: #{conv_ae_forward.21} parent=0 // pred_fallthru
    _
  // Predicated region
  $region6: #{conv_ae_forward.21} parent=0 // pred_check
    _
  $region7: #{conv_ae_forward.21} parent=0 // pred_check_branch
    %11 = sbr.rel (0) target = $region9
  $region8: #{conv_ae_forward.21} parent=0 // pred_region
    _
  $region9: #{conv_ae_forward.21} parent=0 // pred_fallthru
    _
  // Predicated region
  $region10: #{conv_ae_forward.21} parent=0 // pred_check
    _
  $region11: #{conv_ae_forward.21} parent=0 // pred_check_branch
    %13 = sbr.rel (0) target = $region13
  $region12: #{conv_ae_forward.21} parent=0 // pred_region
    _
  $region13: #{conv_ae_forward.21} parent=0 // pred_fallthru
    _
  %v14 = vld [vmem:[%s0] sm:$0xff]
  %v15 = vld [vmem:[%s0 + $0x8] sm:$0xff]
  %v16 = vld [vmem:[%s0 + $0x10] sm:$0xff]
  %v17 = vld [vmem:[%s0 + $0x18] sm:$0xff]
  %v18 = vld [vmem:[%s1] sm:$0x1]
  %v20 = vlaneseq
  %v21 = vshrl.u32 %v20, 7
  %v22 = vsub.s32 0, %v21
  %v23 = vrot.slane %v18, %v22
  %v25 = vmul.f32 %v14, %v23
  %v26 = vmul.f32 %v15, %v23
  %v27 = vmul.f32 %v16, %v23
  %v28 = vmul.f32 %v17, %v23
  %v29 = vld [vmem:[%s2] sm:$0x1]
  %v31 = vlaneseq
  %v32 = vshrl.u32 %v31, 7
  %v33 = vsub.s32 0, %v32
  %v34 = vrot.slane %v29, %v33
  %v36 = vadd.f32 %v25, %v34
  %v37 = vadd.f32 %v26, %v34
  %v38 = vadd.f32 %v27, %v34
  %v39 = vadd.f32 %v28, %v34
  %v40 = vmax.f32 %v36, 0.0
  %v41 = vmax.f32 %v37, 0.0
  %v42 = vmax.f32 %v38, 0.0
  %v43 = vmax.f32 %v39, 0.0
  %44 = vst [vmem:[%s3] sm:$0xff] %v40
  %45 = vst [vmem:[%s3 + $0x8] sm:$0xff] %v41
  %46 = vst [vmem:[%s3 + $0x10] sm:$0xff] %v42
  %47 = vst [vmem:[%s3 + $0x18] sm:$0xff] %v43
  // Predicated region
  $region14: #{conv_ae_forward.21} parent=0 // pred_check
    _
  $region15: #{conv_ae_forward.21} parent=0 // pred_check_branch
    %49 = sbr.rel (0) target = $region17
  $region16: #{conv_ae_forward.21} parent=0 // pred_region
    _
  $region17: #{conv_ae_forward.21} parent=0 // pred_fallthru
    _
  // Predicated region
  $region18: #{conv_ae_forward.21} parent=0 // pred_check
    _
  $region19: #{conv_ae_forward.21} parent=0 // pred_check_branch
    %51 = sbr.rel (0) target = $region21
  $region20: #{conv_ae_forward.21} parent=0 // pred_region
    _
  $region21: #{conv_ae_forward.21} parent=0 // pred_fallthru
    _

// kernel: tile.93
$region0: #{tile.93}
  #allocation0 [shape = 's32[1]{0}', space=sflag, size = 0x4, scoped, tag = 'scoped memory for tile.93']
  %s0 = inlined_call_operand.vmem [shape: f32[8], index: 0, kind: input, shape index: {}]
  %s1 = inlined_call_operand.vmem [shape: f32[2,8], index: 1, kind: output, shape index: {}]
  // Predicated region
  $region2: #{tile.93} parent=0 // pred_check
    _
  $region3: #{tile.93} parent=0 // pred_check_branch
    %3 = sbr.rel (0) target = $region5
  $region4: #{tile.93} parent=0 // pred_region
    _
  $region5: #{tile.93} parent=0 // pred_fallthru
    _
  %v4 = vld [vmem:[%s0] ss:$0 sm:$0xff]
  %5 = vst [vmem:[%s1] sm:$0x3] %v4

// kernel: tile.94
$region0: #{tile.94}
  %s0 = inlined_call_operand.vmem [shape: f32[2,8], index: 0, kind: input, shape index: {}]
  %s1 = inlined_call_operand.vmem [shape: f32[1,1,1,16], index: 1, kind: output, shape index: {}]
  $region1: #{tile.94} parent=0
    #allocation0 [shape = 'u8[4096]{0}', space=vmem, size = 0x1000, scoped, tag = 'scoped mem for output reshape']
    #allocation1 [shape = 'u8[4096]{0}', space=vmem, size = 0x1000, scoped, tag = 'scoped mem for input reshape']
    %s3 = sshllo.u32 0, 2
    %v4 = vld [vmem:[%s0] sm:%s3]
    %5 = vst [vmem:[#allocation1] sm:%s3] %v4
    %v6 = vld [vmem:[#allocation1] sm:$0x1]
    %vm7 = vcmask 64512
    %8 = vst.msk [vmem:[#allocation0] sm:$0x1] %vm7, %v6
    %s9 = scalar_lea.vmem [#allocation1], 1
    %v10 = vld [vmem:[%s9] sm:$0x1]
    %11 = vrot.lane.b32.xlu0 %v10, 8
    %v12 = vpop.permute.xlu0 %11
    %vm13 = vcmask 130112
    %14 = vst.msk [vmem:[#allocation0] sm:$0x1] %vm13, %v12
    %s16 = sshllo.u32 0, 1
    %v18 = vld [vmem:[#allocation0] sm:%s16]
    %s19 = sshllo.u32 0, 1
    %20 = vst [vmem:[%s1] sm:%s19] %v18

// kernel: conv_ae_forward.22
$region0: #{conv_ae_forward.22}
  #allocation0 [shape = 'u32[]', space=smem, size = 0x4, offset = 0x4, fixed_abs, tag = 'smem constant byte address 0x4 - core index']
  #allocation1 [shape = 'u32[144,128]{1,0:T(1,128)}', space=vmem, size = 0x12000, scoped, tag = 'internal scratch']
  %s0 = inlined_call_operand.vmem [shape: f32[2,18,144], index: 0, kind: input, shape index: {}]
  %s1 = inlined_call_operand.vmem [shape: bf16[432,128], index: 1, kind: input, shape index: {}]
  %s2 = inlined_call_operand.vmem [shape: f32[2,16,128], index: 2, kind: output, shape index: {0}]
  %s3 = inlined_call_operand.vmem [shape: f32[2,2,128], index: 3, kind: output, shape index: {1}]
  %4 = xla_tuple %s2, %s3
  %s5 = sld [smem:[#allocation0]]
  $region49: #{conv_ae_forward.22} parent=0
    _
  %s7 = ssub.s32 1, %s5
  %s8 = scalar_select 0, %s7, %s5
  loop: start=0, step=1, limit=4
  $region2: #{conv_ae_forward.22} parent=0 // loop_pre_header
    _
  $region3: #{conv_ae_forward.22} parent=0 // loop_header
    %s10 = sphi 0, %s14
    %p11 = scmp.ge.s32.totalorder %s10, 4
    %s20 = sphi 0, %s22
    %s23 = sphi 0, %s20
    %s24 = sphi 0, %s23
    %s40 = sphi 0, %s24
    %s44 = sphi 0, %s44
    %s46 = sphi 0, %s44
    %s47 = sphi 0, %s46
    %s61 = sphi 0, %s47
    %s67 = sphi 0, %s69
    %s70 = sphi 0, %s67
    %s71 = sphi 0, %s70
    %s87 = sphi 0, %s71
    %s93 = sphi 0, %s95
    %s96 = sphi 0, %s93
    %s97 = sphi 0, %s96
    %s113 = sphi 0, %s97
  $region4: #{conv_ae_forward.22} parent=0 // loop_header_branch
    %13 = sbr.rel (%p11) target = $region8
  $region5: #{conv_ae_forward.22} parent=0 // loop_body
    %s15 = ssub.s32 %s10, 1
    %s16 = ssub.s32 %s10, 2
    %s17 = sadd.s32 %s10, 1
    %s18 = ssub.s32 %s10, %s17
    %p19 = scmp.eq.s32.totalorder %s18, 0
    %s21 = sadd.s32 %s20, 1
    %s22 = scalar_select %p19, %s20, %s21
    %p25 = pneg %p19
    %p26 = scmp.eq.s32.totalorder %s10, 1
    %p27 = por %p25, %p26
    %p28 = scmp.ne.s32.totalorder %s20, %s23
    %p29 = scmp.eq.s32.totalorder %s10, 0
    %p30 = por %p28, %p29
    %p31 = scmp.ne.s32.totalorder %s20, %s23
    %p32 = scmp.eq.s32.totalorder %s15, 1
    %p33 = por %p31, %p32
    %p34 = scmp.ne.s32.totalorder %s23, %s24
    %p35 = scmp.eq.s32.totalorder %s15, 0
    %p36 = por %p34, %p35
    %p37 = scmp.ne.s32.totalorder %s23, %s24
    %p38 = scmp.eq.s32.totalorder %s16, 1
    %p39 = por %p37, %p38
    %p41 = scmp.ne.s32.totalorder %s24, %s40
    %p42 = scmp.eq.s32.totalorder %s16, 0
    %p43 = por %p41, %p42
    %s45 = sadd.s32 %s44, 1
    %p48 = scmp.eq.s32.totalorder %s10, 1
    %p49 = scmp.ne.s32.totalorder %s44, %s46
    %p50 = scmp.eq.s32.totalorder %s10, 0
    %p51 = por %p49, %p50
    %p52 = scmp.ne.s32.totalorder %s44, %s46
    %p53 = scmp.eq.s32.totalorder %s15, 1
    %p54 = por %p52, %p53
    %p55 = scmp.ne.s32.totalorder %s46, %s47
    %p56 = scmp.eq.s32.totalorder %s15, 0
    %p57 = por %p55, %p56
    %p58 = scmp.ne.s32.totalorder %s46, %s47
    %p59 = scmp.eq.s32.totalorder %s16, 1
    %p60 = por %p58, %p59
    %p62 = scmp.ne.s32.totalorder %s47, %s61
    %p63 = scmp.eq.s32.totalorder %s16, 0
    %p64 = por %p62, %p63
    %s65 = ssub.s32 %s10, %s17
    %p66 = scmp.eq.s32.totalorder %s65, 0
    %s68 = sadd.s32 %s67, 1
    %s69 = scalar_select %p66, %s67, %s68
    %p72 = pneg %p66
    %p73 = scmp.eq.s32.totalorder %s10, 1
    %p74 = por %p72, %p73
    %p75 = scmp.ne.s32.totalorder %s67, %s70
    %p76 = scmp.eq.s32.totalorder %s10, 0
    %p77 = por %p75, %p76
    %p78 = scmp.ne.s32.totalorder %s67, %s70
    %p79 = scmp.eq.s32.totalorder %s15, 1
    %p80 = por %p78, %p79
    %p81 = scmp.ne.s32.totalorder %s70, %s71
    %p82 = scmp.eq.s32.totalorder %s15, 0
    %p83 = por %p81, %p82
    %p84 = scmp.ne.s32.totalorder %s70, %s71
    %p85 = scmp.eq.s32.totalorder %s16, 1
    %p86 = por %p84, %p85
    %p88 = scmp.ne.s32.totalorder %s71, %s87
    %p89 = scmp.eq.s32.totalorder %s16, 0
    %p90 = por %p88, %p89
    %s91 = ssub.s32 %s10, %s17
    %p92 = scmp.eq.s32.totalorder %s91, 0
    %s94 = sadd.s32 %s93, 1
    %s95 = scalar_select %p92, %s93, %s94
    %p98 = pneg %p92
    %p99 = scmp.eq.s32.totalorder %s10, 1
    %p100 = por %p98, %p99
    %p101 = scmp.ne.s32.totalorder %s93, %s96
    %p102 = scmp.eq.s32.totalorder %s10, 0
    %p103 = por %p101, %p102
    %p104 = scmp.ne.s32.totalorder %s93, %s96
    %p105 = scmp.eq.s32.totalorder %s15, 1
    %p106 = por %p104, %p105
    %p107 = scmp.ne.s32.totalorder %s96, %s97
    %p108 = scmp.eq.s32.totalorder %s15, 0
    %p109 = por %p107, %p108
    %p110 = scmp.ne.s32.totalorder %s96, %s97
    %p111 = scmp.eq.s32.totalorder %s16, 1
    %p112 = por %p110, %p111
    %p114 = scmp.ne.s32.totalorder %s97, %s113
    %p115 = scmp.eq.s32.totalorder %s16, 0
    %p116 = por %p114, %p115
    %p117 = scmp.le.s32.totalorder 1, %s10
    %p118 = scmp.lt.s32.totalorder %s10, 3
    %p119 = pnand %p117, %p118
    %p120 = pneg %p119
    // Predicated region
    $region9: #{conv_ae_forward.22} parent=5 // pred_check
      _
    $region10: #{conv_ae_forward.22} parent=5 // pred_check_branch
      %122 = sbr.rel (%p119) target = $region12
    $region11: #{conv_ae_forward.22} parent=5 // pred_region
      %s123 = ssub.s32 %s10, 1
      // Predicated region
      $region13: #{conv_ae_forward.22} parent=11 // pred_check
        %p124 = pneg %p57
      $region14: #{conv_ae_forward.22} parent=11 // pred_check_branch
        %126 = sbr.rel (%p124) target = $region16
      $region15: #{conv_ae_forward.22} parent=11 // pred_region
        _
      $region16: #{conv_ae_forward.22} parent=11 // pred_fallthru
        _
    $region12: #{conv_ae_forward.22} parent=5 // pred_fallthru
      _
    %p127 = scmp.lt.s32.totalorder %s10, 2
    // Predicated region
    $region17: #{conv_ae_forward.22} parent=5 // pred_check
      %p128 = pneg %p127
    $region18: #{conv_ae_forward.22} parent=5 // pred_check_branch
      %130 = sbr.rel (%p128) target = $region20
    $region19: #{conv_ae_forward.22} parent=5 // pred_region
      // Predicated region
      $region21: #{conv_ae_forward.22} parent=19 // pred_check
        %p131 = pneg %p30
      $region22: #{conv_ae_forward.22} parent=19 // pred_check_branch
        %133 = sbr.rel (%p131) target = $region24
      $region23: #{conv_ae_forward.22} parent=19 // pred_region
        %p134 = scmp.lt.s32.totalorder %s10, 1
        %s135 = scalar_select %p134, %s10, 1
        %s136 = smul.addr %s135, 6
        %s137 = smul.addr %s136, 8
        %s138 = scalar_lea.vmem %s0, %s137
      $region24: #{conv_ae_forward.22} parent=19 // pred_fallthru
        _
    $region20: #{conv_ae_forward.22} parent=5 // pred_fallthru
      _
    %p139 = scmp.le.s32.totalorder 1, %s10
    %p140 = scmp.lt.s32.totalorder %s10, 3
    %p141 = pnand %p139, %p140
    %p142 = pneg %p141
    // Predicated region
    $region25: #{conv_ae_forward.22} parent=5 // pred_check
      _
    $region26: #{conv_ae_forward.22} parent=5 // pred_check_branch
      %144 = sbr.rel (%p141) target = $region28
    $region27: #{conv_ae_forward.22} parent=5 // pred_region
      %s145 = ssub.s32 %s10, 1
      %p146 = scmp.lt.s32.totalorder %s15, 1
      %s147 = scalar_select %p146, %s15, 1
      %s148 = smul.addr %s147, 6
      %s149 = smul.addr %s148, 8
      %s150 = scalar_lea.vmem %s0, %s149
      %p151 = pneg %p36
      %p152 = pneg %p33
      %p153 = pneg %p57
      %p154 = pneg %p54
      %p155 = pneg %p83
      %p156 = pneg %p80
      %p157 = scmp.lt.s32.totalorder %s15, 1
      %s158 = scalar_select %p157, %s15, 1
      %s159 = smul.addr %s158, 2
      %s160 = smul.addr %s159, 8
      %s161 = scalar_lea.vmem %s2, %s160
      %p162 = pneg %p109
      %p163 = pneg %p106
      %p164 = scmp.lt.s32.totalorder %s15, 1
      %s165 = scalar_select %p164, %s15, 1
      %s166 = smul.addr %s165, 2
      %s167 = scalar_lea.vmem %s3, %s166
      %p168 = scmp.lt.s32.totalorder %s15, 1
      %s169 = scalar_select %p168, %s15, 1
      %s170 = smul.addr %s169, 6
      %s171 = smul.addr %s170, 8
      %s172 = scalar_lea.vmem %s0, %s171
      %p173 = scmp.lt.s32.totalorder %s15, 1
      %s174 = scalar_select %p173, %s15, 1
      %s175 = smul.addr %s174, 2
      %s176 = smul.addr %s175, 8
      %s177 = scalar_lea.vmem %s2, %s176
      %p178 = scmp.lt.s32.totalorder %s15, 1
      %s179 = scalar_select %p178, %s15, 1
      %s180 = smul.addr %s179, 2
      %s181 = scalar_lea.vmem %s3, %s180
      %v183 = vld [vmem:[%s172] sm:$0xff]
      %v184 = vld [vmem:[%s172 + $0x8] sm:$0xff]
      %v185 = vld [vmem:[%s172 + $0x10] sm:$0xff]
      %v186 = vld [vmem:[%s172 + $0x18] sm:$0xff]
      %v187 = vld [vmem:[%s172] sm:$0xfe]
      %v188 = vld [vmem:[%s172 + $0x8] sm:$0xfe]
      %v189 = vld [vmem:[%s172 + $0x20] sm:$0x1]
      %v190 = vld [vmem:[%s172 + $0x28] sm:$0x1]
      %v191 = vld [vmem:[%s172] sm:$0xfc]
      %v192 = vld [vmem:[%s172 + $0x8] sm:$0xfc]
      %v193 = vld [vmem:[%s172 + $0x20] sm:$0x3]
      %v194 = vld [vmem:[%s172 + $0x28] sm:$0x3]
      %vm201 = vcmask 1046528
      %v202 = vrot.slane %v187, 1
      %v203 = vrot.slane %v185, 1
      %v204 = vsel %vm201, %v202, %v203
      %v205 = vrot.slane %v188, 1
      %v206 = vrot.slane %v186, 1
      %v207 = vsel %vm201, %v205, %v206
      %v208 = vrot.slane %v189, 1
      %v209 = vsel %vm201, %v203, %v208
      %v210 = vrot.slane %v190, 1
      %v211 = vsel %vm201, %v206, %v210
      %212 = vrot.lane.b32.xlu0 %v204, 16
      %v213 = vpop.permute.xlu0 %212
      %214 = vrot.lane.b32.xlu0 %v207, 16
      %v215 = vpop.permute.xlu0 %214
      %216 = vrot.lane.b32.xlu0 %v209, 16
      %v217 = vpop.permute.xlu0 %216
      %218 = vrot.lane.b32.xlu0 %v211, 16
      %v219 = vpop.permute.xlu0 %218
      %vm220 = vcmask 130048
      %v221 = vsel %vm220, %v213, %v215
      %v222 = vsel %vm220, %v217, %v219
      %vm231 = vcmask 1045504
      %v232 = vrot.slane %v191, 2
      %v233 = vrot.slane %v185, 2
      %v234 = vsel %vm231, %v232, %v233
      %v235 = vrot.slane %v192, 2
      %v236 = vrot.slane %v186, 2
      %v237 = vsel %vm231, %v235, %v236
      %v238 = vrot.slane %v193, 2
      %v239 = vsel %vm231, %v233, %v238
      %v240 = vrot.slane %v194, 2
      %v241 = vsel %vm231, %v236, %v240
      %242 = vrot.lane.b32.xlu0 %v234, 32
      %v243 = vpop.permute.xlu0 %242
      %244 = vrot.lane.b32.xlu0 %v237, 32
      %v245 = vpop.permute.xlu0 %244
      %246 = vrot.lane.b32.xlu0 %v239, 32
      %v247 = vpop.permute.xlu0 %246
      %248 = vrot.lane.b32.xlu0 %v241, 32
      %v249 = vpop.permute.xlu0 %248
      %vm250 = vcmask 261120
      %v251 = vsel %vm250, %v243, %v245
      %v252 = vsel %vm250, %v247, %v249
      %v257 = vsel %vm220, %v184, %v213
      %v258 = vsel %vm220, %v186, %v217
      %v259 = vsel %vm250, %v221, %v243
      %v260 = vsel %vm250, %v222, %v247
      %v261 = vpack.c.bf16 %v185, %v183
      %v262 = vpack.c.bf16 %v258, %v257
      %v263 = vpack.c.bf16 %v260, %v259
      %v264 = vpack.c.bf16 %v252, %v251
      %v265 = vld [vmem:[%s1] sm:$0xf]
      %v266 = vld [vmem:[%s1 + $0x4] sm:$0xf]
      %v267 = vld [vmem:[%s1 + $0x8] sm:$0xf]
      %v268 = vld [vmem:[%s1 + $0xc] sm:$0xf]
      %v269 = vld [vmem:[%s1 + $0x10] sm:$0xf]
      %v270 = vld [vmem:[%s1 + $0x14] sm:$0xf]
      %v271 = vld [vmem:[%s1 + $0x18] sm:$0xf]
      %v272 = vld [vmem:[%s1 + $0x1c] sm:$0xf]
      %v273 = vld [vmem:[%s1 + $0x20] sm:$0xf]
      %v274 = vld [vmem:[%s1 + $0x24] sm:$0xf]
      %v275 = vld [vmem:[%s1 + $0x28] sm:$0xf]
      %v276 = vld [vmem:[%s1 + $0x2c] sm:$0xf]
      %v277 = vld [vmem:[%s1 + $0x30] sm:$0xf]
      %v278 = vld [vmem:[%s1 + $0x34] sm:$0xf]
      %v279 = vld [vmem:[%s1 + $0x38] sm:$0xf]
      %v280 = vld [vmem:[%s1 + $0x3c] sm:$0xf]
      %v281 = vld [vmem:[%s1 + $0x40] sm:$0xf]
      %v282 = vld [vmem:[%s1 + $0x44] sm:$0xf]
      %v283 = vld [vmem:[%s1 + $0x48] sm:$0xf]
      %v284 = vld [vmem:[%s1 + $0x4c] sm:$0xf]
      %v285 = vld [vmem:[%s1 + $0x50] sm:$0xf]
      %v286 = vld [vmem:[%s1 + $0x54] sm:$0xf]
      %v287 = vld [vmem:[%s1 + $0x58] sm:$0xf]
      %v288 = vld [vmem:[%s1 + $0x5c] sm:$0xf]
      %v289 = vld [vmem:[%s1 + $0x60] sm:$0xf]
      %v290 = vld [vmem:[%s1 + $0x64] sm:$0xf]
      %v291 = vld [vmem:[%s1 + $0x68] sm:$0xf]
      %v292 = vld [vmem:[%s1 + $0x6c] sm:$0xf]
      %v293 = vld [vmem:[%s1 + $0x70] sm:$0xf]
      %v294 = vld [vmem:[%s1 + $0x74] sm:$0xf]
      %v295 = vld [vmem:[%s1 + $0x78] sm:$0xf]
      %v296 = vld [vmem:[%s1 + $0x7c] sm:$0xf]
      %v297 = vld [vmem:[%s1 + $0x80] sm:$0xf]
      %v298 = vld [vmem:[%s1 + $0x84] sm:$0xf]
      %v299 = vld [vmem:[%s1 + $0x88] sm:$0xf]
      %v300 = vld [vmem:[%s1 + $0x8c] sm:$0xf]
      %v301 = vld [vmem:[%s1 + $0x90] sm:$0xf]
      %v302 = vld [vmem:[%s1 + $0x94] sm:$0xf]
      %v303 = vld [vmem:[%s1 + $0x98] sm:$0xf]
      %v304 = vld [vmem:[%s1 + $0x9c] sm:$0xf]
      %v305 = vld [vmem:[%s1 + $0xa0] sm:$0xf]
      %v306 = vld [vmem:[%s1 + $0xa4] sm:$0xf]
      %v307 = vld [vmem:[%s1 + $0xa8] sm:$0xf]
      %v308 = vld [vmem:[%s1 + $0xac] sm:$0xf]
      %v309 = vld [vmem:[%s1 + $0xb0] sm:$0xf]
      %v310 = vld [vmem:[%s1 + $0xb4] sm:$0xf]
      %v311 = vld [vmem:[%s1 + $0xb8] sm:$0xf]
      %v312 = vld [vmem:[%s1 + $0xbc] sm:$0xf]
      %v313 = vld [vmem:[%s1 + $0xc0] sm:$0xf]
      %v314 = vld [vmem:[%s1 + $0xc4] sm:$0xf]
      %v315 = vld [vmem:[%s1 + $0xc8] sm:$0xf]
      %v316 = vld [vmem:[%s1 + $0xcc] sm:$0xf]
      %v317 = vld [vmem:[%s1 + $0xd0] sm:$0xf]
      %v318 = vld [vmem:[%s1 + $0xd4] sm:$0xf]
      %v373 = vunpack.c.l.b16 %v265
      %v374 = vunpack.c.l.b16 %v266
      %v375 = vunpack.c.l.b16 %v267
      %v376 = vunpack.c.l.b16 %v268
      %v377 = vunpack.c.l.b16 %v269
      %v378 = vunpack.c.l.b16 %v270
      %v379 = vunpack.c.l.b16 %v271
      %v380 = vunpack.c.l.b16 %v272
      %v381 = vunpack.c.l.b16 %v273
      %v382 = vunpack.c.l.b16 %v274
      %v383 = vunpack.c.l.b16 %v275
      %v384 = vunpack.c.l.b16 %v276
      %v385 = vunpack.c.l.b16 %v277
      %v386 = vunpack.c.l.b16 %v278
      %v387 = vunpack.c.l.b16 %v279
      %v388 = vunpack.c.l.b16 %v280
      %v389 = vunpack.c.l.b16 %v281
      %v390 = vunpack.c.l.b16 %v282
      %v391 = vunpack.c.l.b16 %v283
      %v392 = vunpack.c.l.b16 %v284
      %v393 = vunpack.c.l.b16 %v285
      %v394 = vunpack.c.l.b16 %v286
      %v395 = vunpack.c.l.b16 %v287
      %v396 = vunpack.c.l.b16 %v288
      %v397 = vunpack.c.l.b16 %v289
      %v398 = vunpack.c.l.b16 %v290
      %v399 = vunpack.c.l.b16 %v291
      %v400 = vunpack.c.l.b16 %v292
      %v401 = vunpack.c.l.b16 %v293
      %v402 = vunpack.c.l.b16 %v294
      %v403 = vunpack.c.l.b16 %v295
      %v404 = vunpack.c.l.b16 %v296
      %v405 = vunpack.c.l.b16 %v297
      %v406 = vunpack.c.l.b16 %v298
      %v407 = vunpack.c.l.b16 %v299
      %v408 = vunpack.c.l.b16 %v300
      %v409 = vunpack.c.l.b16 %v301
      %v410 = vunpack.c.l.b16 %v302
      %v411 = vunpack.c.l.b16 %v303
      %v412 = vunpack.c.l.b16 %v304
      %v413 = vunpack.c.l.b16 %v305
      %v414 = vunpack.c.l.b16 %v306
      %v415 = vunpack.c.l.b16 %v307
      %v416 = vunpack.c.l.b16 %v308
      %v417 = vunpack.c.l.b16 %v309
      %v418 = vunpack.c.l.b16 %v310
      %v419 = vunpack.c.l.b16 %v311
      %v420 = vunpack.c.l.b16 %v312
      %v421 = vunpack.c.l.b16 %v313
      %v422 = vunpack.c.l.b16 %v314
      %v423 = vunpack.c.l.b16 %v315
      %v424 = vunpack.c.l.b16 %v316
      %v425 = vunpack.c.l.b16 %v317
      %v426 = vunpack.c.l.b16 %v318
      %v427 = vpack.c.b16 %v374, %v373
      %v428 = vpack.c.b16 %v376, %v375
      %v429 = vpack.c.b16 %v378, %v377
      %v430 = vpack.c.b16 %v380, %v379
      %v431 = vpack.c.b16 %v382, %v381
      %v432 = vpack.c.b16 %v384, %v383
      %v433 = vpack.c.b16 %v386, %v385
      %v434 = vpack.c.b16 %v388, %v387
      %v435 = vpack.c.b16 %v390, %v389
      %v436 = vpack.c.b16 %v392, %v391
      %v437 = vpack.c.b16 %v394, %v393
      %v438 = vpack.c.b16 %v396, %v395
      %v439 = vpack.c.b16 %v398, %v397
      %v440 = vpack.c.b16 %v400, %v399
      %v441 = vpack.c.b16 %v402, %v401
      %v442 = vpack.c.b16 %v404, %v403
      %v443 = vpack.c.b16 %v406, %v405
      %v444 = vpack.c.b16 %v408, %v407
      %v445 = vpack.c.b16 %v410, %v409
      %v446 = vpack.c.b16 %v412, %v411
      %v447 = vpack.c.b16 %v414, %v413
      %v448 = vpack.c.b16 %v416, %v415
      %v449 = vpack.c.b16 %v418, %v417
      %v450 = vpack.c.b16 %v420, %v419
      %v451 = vpack.c.b16 %v422, %v421
      %v452 = vpack.c.b16 %v424, %v423
      %v453 = vpack.c.b16 %v426, %v425
      %vm481 = vcmask 392192
      %v483 = vsel %vm481, %v264, 0
      %485 = vmatprep.subr.bf16.mxu0 0
      %486 = vmatpush1.bf16.msra.mxu0 %v427
      %487 = vmatprep.subr.bf16.mxu0 0
      %488 = vmatpush1.bf16.msra.mxu0 %v428
      %489 = vmatprep.subr.bf16.mxu0 0
      %490 = vmatpush1.bf16.msra.mxu0 %v429
      %491 = vmatprep.subr.bf16.mxu0 0
      %492 = vmatpush1.bf16.msra.mxu0 %v430
      %493 = vmatprep.subr.bf16.mxu0 0
      %494 = vmatpush1.bf16.msra.mxu0 %v431
      %495 = vmatprep.subr.bf16.mxu0 0
      %496 = vmatpush1.bf16.msra.mxu0 %v432
      %497 = vmatprep.subr.bf16.mxu0 0
      %498 = vmatpush1.bf16.msra.mxu0 %v433
      %499 = vmatprep.subr.bf16.mxu0 0
      %500 = vmatpush1.bf16.msra.mxu0 %v434
      %501 = vmatprep.subr.bf16.mxu0 0
      %502 = vmatpush1.bf16.msra.mxu0 %v435
      %503 = vmatprep.subr.bf16.mxu0 0
      %504 = vmatpush1.bf16.msra.mxu0 %v436
      %505 = vmatprep.subr.bf16.mxu0 0
      %506 = vmatpush1.bf16.msra.mxu0 %v437
      %507 = vmatprep.subr.bf16.mxu0 0
      %508 = vmatpush1.bf16.msra.mxu0 %v438
      %509 = vmatprep.subr.bf16.mxu0 0
      %510 = vmatpush1.bf16.msra.mxu0 %v439
      %511 = vmatprep.subr.bf16.mxu0 0
      %512 = vmatpush1.bf16.msra.mxu0 %v440
      %513 = vmatprep.subr.bf16.mxu0 0
      %514 = vmatpush1.bf16.msra.mxu0 %v441
      %515 = vmatprep.subr.bf16.mxu0 0
      %516 = vmatpush1.bf16.msra.mxu0 %v442
      %517 = vmatprep.mubr.bf16.mxu0 %v262
      %518 = vmatmul.mubr.bf16.gmra.mrb[0].mxu0 %v261
      %v519 = vpop.f32.mrb[0].mxu0
      %v520 = vadd.f32 0.0, %v519
      %v521 = vpop.f32.mrb[0].mxu0
      %v522 = vpop.f32.mrb[0].mxu0
      %v523 = vadd.f32 0.0, %v522
      %v524 = vpop.f32.mrb[0].mxu0
      %525 = vdwg.mxu0
      %526 = vmatprep.subr.bf16.mxu0 0
      %527 = vmatpush1.bf16.msra.mxu0 %v443
      %528 = vmatprep.subr.bf16.mxu0 0
      %529 = vmatpush1.bf16.msra.mxu0 %v444
      %530 = vmatprep.subr.bf16.mxu0 0
      %531 = vmatpush1.bf16.msra.mxu0 %v445
      %532 = vmatprep.subr.bf16.mxu0 0
      %533 = vmatpush1.bf16.msra.mxu0 %v446
      %534 = vmatprep.subr.bf16.mxu0 0
      %535 = vmatpush1.bf16.msra.mxu0 %v447
      %536 = vmatprep.subr.bf16.mxu0 0
      %537 = vmatpush1.bf16.msra.mxu0 %v448
      %538 = vmatprep.subr.bf16.mxu0 0
      %539 = vmatpush1.bf16.msra.mxu0 %v449
      %540 = vmatprep.subr.bf16.mxu0 0
      %541 = vmatpush1.bf16.msra.mxu0 %v450
      %542 = vmatprep.subr.bf16.mxu0 0
      %543 = vmatpush1.bf16.msra.mxu0 %v451
      %544 = vmatprep.subr.bf16.mxu0 0
      %545 = vmatpush1.bf16.msra.mxu0 %v452
      %546 = vmatprep.subr.bf16.mxu0 0
      %547 = vmatpush1.bf16.msra.mxu0 %v453
      %548 = vmatprep.subr.bf16.mxu0 0
      %549 = vmatpush1.bf16.msra.mxu0 0
      %550 = vmatprep.subr.bf16.mxu0 0
      %551 = vmatpush1.bf16.msra.mxu0 0
      %552 = vmatprep.subr.bf16.mxu0 0
      %553 = vmatpush1.bf16.msra.mxu0 0
      %554 = vmatprep.subr.bf16.mxu0 0
      %555 = vmatpush1.bf16.msra.mxu0 0
      %556 = vmatprep.subr.bf16.mxu0 0
      %557 = vmatpush1.bf16.msra.mxu0 0
      %558 = vmatprep.mubr.bf16.mxu0 %v483
      %559 = vmatmul.mubr.bf16.gmra.mrb[0].mxu0 %v263
      %v560 = vpop.f32.mrb[0].mxu0
      %v561 = vadd.f32 %v520, %v560
      %v562 = vpop.f32.mrb[0].mxu0
      %v563 = vpop.f32.mrb[0].mxu0
      %v564 = vadd.f32 %v523, %v563
      %v565 = vpop.f32.mrb[0].mxu0
      %566 = vdwg.mxu0
      %567 = vst [vmem:[%s177] sm:$0xff] %v561
      %568 = vst [vmem:[%s177 + $0x8] sm:$0xff] %v564
      %v569 = vadd.f32 %v561, %v564
      %v570 = vrot.slane %v569, 4
      %v571 = vadd.f32 %v569, %v570
      %v572 = vrot.slane %v571, 2
      %v573 = vadd.f32 %v571, %v572
      %v574 = vrot.slane %v573, 1
      %v575 = vadd.f32 %v573, %v574
      %576 = vst [vmem:[%s181] sm:$0x1] %v575
      %v577 = vmul.f32 %v561, %v561
      %v578 = vmul.f32 %v564, %v564
      %v579 = vadd.f32 %v577, %v578
      %v580 = vrot.slane %v579, 4
      %v581 = vadd.f32 %v579, %v580
      %v582 = vrot.slane %v581, 2
      %v583 = vadd.f32 %v581, %v582
      %v584 = vrot.slane %v583, 1
      %v585 = vadd.f32 %v583, %v584
      %586 = vst [vmem:[%s181 + $0x1] sm:$0x1] %v585
      %p587 = scmp.lt.s32.totalorder %s15, 1
      %s588 = scalar_select %p587, %s15, 1
      %s589 = smul.addr %s588, 2
      %s590 = smul.addr %s589, 8
      %s591 = scalar_lea.vmem %s2, %s590
      %p592 = scmp.lt.s32.totalorder %s15, 1
      %s593 = scalar_select %p592, %s15, 1
      %s594 = smul.addr %s593, 2
      %s595 = scalar_lea.vmem %s3, %s594
      // Predicated region
      $region29: #{conv_ae_forward.22} parent=27 // pred_check
        %p596 = pneg %p80
      $region30: #{conv_ae_forward.22} parent=27 // pred_check_branch
        %598 = sbr.rel (%p596) target = $region32
      $region31: #{conv_ae_forward.22} parent=27 // pred_region
        _
      $region32: #{conv_ae_forward.22} parent=27 // pred_fallthru
        _
      // Predicated region
      $region33: #{conv_ae_forward.22} parent=27 // pred_check
        %p599 = pneg %p106
      $region34: #{conv_ae_forward.22} parent=27 // pred_check_branch
        %601 = sbr.rel (%p599) target = $region36
      $region35: #{conv_ae_forward.22} parent=27 // pred_region
        _
      $region36: #{conv_ae_forward.22} parent=27 // pred_fallthru
        _
    $region28: #{conv_ae_forward.22} parent=5 // pred_fallthru
      _
    %p602 = scmp.le.s32.totalorder 2, %s10
    // Predicated region
    $region37: #{conv_ae_forward.22} parent=5 // pred_check
      %p603 = pneg %p602
    $region38: #{conv_ae_forward.22} parent=5 // pred_check_branch
      %605 = sbr.rel (%p603) target = $region40
    $region39: #{conv_ae_forward.22} parent=5 // pred_region
      %s606 = ssub.s32 %s10, 2
      // Predicated region
      $region41: #{conv_ae_forward.22} parent=39 // pred_check
        %p607 = pneg %p86
      $region42: #{conv_ae_forward.22} parent=39 // pred_check_branch
        %609 = sbr.rel (%p607) target = $region44
      $region43: #{conv_ae_forward.22} parent=39 // pred_region
        %p610 = scmp.lt.s32.totalorder %s16, 1
        %s611 = scalar_select %p610, %s16, 1
        %s612 = smul.addr %s611, 2
        %s613 = smul.addr %s612, 8
        %s614 = scalar_lea.vmem %s2, %s613
      $region44: #{conv_ae_forward.22} parent=39 // pred_fallthru
        _
      // Predicated region
      $region45: #{conv_ae_forward.22} parent=39 // pred_check
        %p615 = pneg %p112
      $region46: #{conv_ae_forward.22} parent=39 // pred_check_branch
        %617 = sbr.rel (%p615) target = $region48
      $region47: #{conv_ae_forward.22} parent=39 // pred_region
        %p618 = scmp.lt.s32.totalorder %s16, 1
        %s619 = scalar_select %p618, %s16, 1
        %s620 = smul.addr %s619, 2
        %s621 = scalar_lea.vmem %s3, %s620
      $region48: #{conv_ae_forward.22} parent=39 // pred_fallthru
        _
    $region40: #{conv_ae_forward.22} parent=5 // pred_fallthru
      _
  $region6: #{conv_ae_forward.22} parent=0 // loop_footer
    %s14 = sadd.s32 1, %s10
  $region7: #{conv_ae_forward.22} parent=0 // loop_footer_branch
    %9 = sbr.rel target = $region3
  $region8: #{conv_ae_forward.22} parent=0 // loop_exit
    _

// kernel: conv_ae_forward.23
$region0: #{conv_ae_forward.23}
  #allocation0 [shape = 'u32[]', space=smem, size = 0x4, offset = 0x4, fixed_abs, tag = 'smem constant byte address 0x4 - core index']
  #allocation1 [shape = 'u32[144,128]{1,0:T(1,128)}', space=vmem, size = 0x12000, scoped, tag = 'internal scratch']
  %s0 = inlined_call_operand.vmem [shape: f32[16,2,8,16], index: 0, kind: input, shape index: {}]
  %s1 = inlined_call_operand.vmem [shape: f32[1,1,1,16], index: 1, kind: input, shape index: {}]
  %s2 = inlined_call_operand.vmem [shape: f32[1,1,1,16], index: 2, kind: input, shape index: {}]
  %s3 = inlined_call_operand.vmem [shape: f32[16,8,8], index: 3, kind: output, shape index: {}]
  %s4 = sld [smem:[#allocation0]]
  $region22: #{conv_ae_forward.23} parent=0
    _
  %s6 = ssub.s32 1, %s4
  %s7 = scalar_select 0, %s6, %s4
  // Predicated region
  $region2: #{conv_ae_forward.23} parent=0 // pred_check
    _
  $region3: #{conv_ae_forward.23} parent=0 // pred_check_branch
    %9 = sbr.rel (0) target = $region5
  $region4: #{conv_ae_forward.23} parent=0 // pred_region
    _
  $region5: #{conv_ae_forward.23} parent=0 // pred_fallthru
    _
  // Predicated region
  $region6: #{conv_ae_forward.23} parent=0 // pred_check
    _
  $region7: #{conv_ae_forward.23} parent=0 // pred_check_branch
    %11 = sbr.rel (0) target = $region9
  $region8: #{conv_ae_forward.23} parent=0 // pred_region
    _
  $region9: #{conv_ae_forward.23} parent=0 // pred_fallthru
    _
  // Predicated region
  $region10: #{conv_ae_forward.23} parent=0 // pred_check
    _
  $region11: #{conv_ae_forward.23} parent=0 // pred_check_branch
    %13 = sbr.rel (0) target = $region13
  $region12: #{conv_ae_forward.23} parent=0 // pred_region
    _
  $region13: #{conv_ae_forward.23} parent=0 // pred_fallthru
    _
  %v14 = vld [vmem:[%s0] sm:$0xff]
  %v15 = vld [vmem:[%s0 + $0x8] sm:$0xff]
  %v16 = vld [vmem:[%s0 + $0x10] sm:$0xff]
  %v17 = vld [vmem:[%s0 + $0x18] sm:$0xff]
  %v18 = vld [vmem:[%s0 + $0x20] sm:$0xff]
  %v19 = vld [vmem:[%s0 + $0x28] sm:$0xff]
  %v20 = vld [vmem:[%s0 + $0x30] sm:$0xff]
  %v21 = vld [vmem:[%s0 + $0x38] sm:$0xff]
  %v22 = vld [vmem:[%s0 + $0x40] sm:$0xff]
  %v23 = vld [vmem:[%s0 + $0x48] sm:$0xff]
  %v24 = vld [vmem:[%s0 + $0x50] sm:$0xff]
  %v25 = vld [vmem:[%s0 + $0x58] sm:$0xff]
  %v26 = vld [vmem:[%s0 + $0x60] sm:$0xff]
  %v27 = vld [vmem:[%s0 + $0x68] sm:$0xff]
  %v28 = vld [vmem:[%s0 + $0x70] sm:$0xff]
  %v29 = vld [vmem:[%s0 + $0x78] sm:$0xff]
  %v30 = vld [vmem:[%s0 + $0x80] sm:$0xff]
  %v31 = vld [vmem:[%s0 + $0x88] sm:$0xff]
  %v32 = vld [vmem:[%s0 + $0x90] sm:$0xff]
  %v33 = vld [vmem:[%s0 + $0x98] sm:$0xff]
  %v34 = vld [vmem:[%s0 + $0xa0] sm:$0xff]
  %v35 = vld [vmem:[%s0 + $0xa8] sm:$0xff]
  %v36 = vld [vmem:[%s0 + $0xb0] sm:$0xff]
  %v37 = vld [vmem:[%s0 + $0xb8] sm:$0xff]
  %v38 = vld [vmem:[%s0 + $0xc0] sm:$0xff]
  %v39 = vld [vmem:[%s0 + $0xc8] sm:$0xff]
  %v40 = vld [vmem:[%s0 + $0xd0] sm:$0xff]
  %v41 = vld [vmem:[%s0 + $0xd8] sm:$0xff]
  %v42 = vld [vmem:[%s0 + $0xe0] sm:$0xff]
  %v43 = vld [vmem:[%s0 + $0xe8] sm:$0xff]
  %v44 = vld [vmem:[%s0 + $0xf0] sm:$0xff]
  %v45 = vld [vmem:[%s0 + $0xf8] sm:$0xff]
  %v46 = vld [vmem:[%s1] sm:$0x1]
  %v48 = vlaneseq
  %v49 = vshrl.u32 %v48, 7
  %v50 = vsub.s32 0, %v49
  %v51 = vrot.slane %v46, %v50
  %v53 = vmul.f32 %v14, %v51
  %v54 = vmul.f32 %v15, %v51
  %v55 = vmul.f32 %v16, %v51
  %v56 = vmul.f32 %v17, %v51
  %v57 = vmul.f32 %v18, %v51
  %v58 = vmul.f32 %v19, %v51
  %v59 = vmul.f32 %v20, %v51
  %v60 = vmul.f32 %v21, %v51
  %v61 = vmul.f32 %v22, %v51
  %v62 = vmul.f32 %v23, %v51
  %v63 = vmul.f32 %v24, %v51
  %v64 = vmul.f32 %v25, %v51
  %v65 = vmul.f32 %v26, %v51
  %v66 = vmul.f32 %v27, %v51
  %v67 = vmul.f32 %v28, %v51
  %v68 = vmul.f32 %v29, %v51
  %v69 = vmul.f32 %v30, %v51
  %v70 = vmul.f32 %v31, %v51
  %v71 = vmul.f32 %v32, %v51
  %v72 = vmul.f32 %v33, %v51
  %v73 = vmul.f32 %v34, %v51
  %v74 = vmul.f32 %v35, %v51
  %v75 = vmul.f32 %v36, %v51
  %v76 = vmul.f32 %v37, %v51
  %v77 = vmul.f32 %v38, %v51
  %v78 = vmul.f32 %v39, %v51
  %v79 = vmul.f32 %v40, %v51
  %v80 = vmul.f32 %v41, %v51
  %v81 = vmul.f32 %v42, %v51
  %v82 = vmul.f32 %v43, %v51
  %v83 = vmul.f32 %v44, %v51
  %v84 = vmul.f32 %v45, %v51
  %v85 = vld [vmem:[%s2] sm:$0x1]
  %v87 = vlaneseq
  %v88 = vshrl.u32 %v87, 7
  %v89 = vsub.s32 0, %v88
  %v90 = vrot.slane %v85, %v89
  %v92 = vadd.f32 %v53, %v90
  %v93 = vadd.f32 %v54, %v90
  %v94 = vadd.f32 %v55, %v90
  %v95 = vadd.f32 %v56, %v90
  %v96 = vadd.f32 %v57, %v90
  %v97 = vadd.f32 %v58, %v90
  %v98 = vadd.f32 %v59, %v90
  %v99 = vadd.f32 %v60, %v90
  %v100 = vadd.f32 %v61, %v90
  %v101 = vadd.f32 %v62, %v90
  %v102 = vadd.f32 %v63, %v90
  %v103 = vadd.f32 %v64, %v90
  %v104 = vadd.f32 %v65, %v90
  %v105 = vadd.f32 %v66, %v90
  %v106 = vadd.f32 %v67, %v90
  %v107 = vadd.f32 %v68, %v90
  %v108 = vadd.f32 %v69, %v90
  %v109 = vadd.f32 %v70, %v90
  %v110 = vadd.f32 %v71, %v90
  %v111 = vadd.f32 %v72, %v90
  %v112 = vadd.f32 %v73, %v90
  %v113 = vadd.f32 %v74, %v90
  %v114 = vadd.f32 %v75, %v90
  %v115 = vadd.f32 %v76, %v90
  %v116 = vadd.f32 %v77, %v90
  %v117 = vadd.f32 %v78, %v90
  %v118 = vadd.f32 %v79, %v90
  %v119 = vadd.f32 %v80, %v90
  %v120 = vadd.f32 %v81, %v90
  %v121 = vadd.f32 %v82, %v90
  %v122 = vadd.f32 %v83, %v90
  %v123 = vadd.f32 %v84, %v90
  %v124 = vmax.f32 %v92, 0.0
  %v125 = vmax.f32 %v93, 0.0
  %v126 = vmax.f32 %v94, 0.0
  %v127 = vmax.f32 %v95, 0.0
  %v128 = vmax.f32 %v96, 0.0
  %v129 = vmax.f32 %v97, 0.0
  %v130 = vmax.f32 %v98, 0.0
  %v131 = vmax.f32 %v99, 0.0
  %v132 = vmax.f32 %v100, 0.0
  %v133 = vmax.f32 %v101, 0.0
  %v134 = vmax.f32 %v102, 0.0
  %v135 = vmax.f32 %v103, 0.0
  %v136 = vmax.f32 %v104, 0.0
  %v137 = vmax.f32 %v105, 0.0
  %v138 = vmax.f32 %v106, 0.0
  %v139 = vmax.f32 %v107, 0.0
  %v140 = vmax.f32 %v108, 0.0
  %v141 = vmax.f32 %v109, 0.0
  %v142 = vmax.f32 %v110, 0.0
  %v143 = vmax.f32 %v111, 0.0
  %v144 = vmax.f32 %v112, 0.0
  %v145 = vmax.f32 %v113, 0.0
  %v146 = vmax.f32 %v114, 0.0
  %v147 = vmax.f32 %v115, 0.0
  %v148 = vmax.f32 %v116, 0.0
  %v149 = vmax.f32 %v117, 0.0
  %v150 = vmax.f32 %v118, 0.0
  %v151 = vmax.f32 %v119, 0.0
  %v152 = vmax.f32 %v120, 0.0
  %v153 = vmax.f32 %v121, 0.0
  %v154 = vmax.f32 %v122, 0.0
  %v155 = vmax.f32 %v123, 0.0
  %v156 = vmax.f32 %v124, %v125
  %v157 = vmax.f32 %v126, %v127
  %v158 = vmax.f32 %v128, %v129
  %v159 = vmax.f32 %v130, %v131
  %v160 = vmax.f32 %v132, %v133
  %v161 = vmax.f32 %v134, %v135
  %v162 = vmax.f32 %v136, %v137
  %v163 = vmax.f32 %v138, %v139
  %v164 = vmax.f32 %v140, %v141
  %v165 = vmax.f32 %v142, %v143
  %v166 = vmax.f32 %v144, %v145
  %v167 = vmax.f32 %v146, %v147
  %v168 = vmax.f32 %v148, %v149
  %v169 = vmax.f32 %v150, %v151
  %v170 = vmax.f32 %v152, %v153
  %v171 = vmax.f32 %v154, %v155
  %188 = vrot.lane.b32.xlu0 %v156, 120
  %v189 = vpop.permute.xlu0 %188
  %190 = vrot.lane.b32.xlu0 %v157, 120
  %v191 = vpop.permute.xlu0 %190
  %192 = vrot.lane.b32.xlu0 %v158, 120
  %v193 = vpop.permute.xlu0 %192
  %194 = vrot.lane.b32.xlu0 %v159, 120
  %v195 = vpop.permute.xlu0 %194
  %196 = vrot.lane.b32.xlu0 %v160, 120
  %v197 = vpop.permute.xlu0 %196
  %198 = vrot.lane.b32.xlu0 %v161, 120
  %v199 = vpop.permute.xlu0 %198
  %200 = vrot.lane.b32.xlu0 %v162, 120
  %v201 = vpop.permute.xlu0 %200
  %202 = vrot.lane.b32.xlu0 %v163, 120
  %v203 = vpop.permute.xlu0 %202
  %204 = vrot.lane.b32.xlu0 %v164, 120
  %v205 = vpop.permute.xlu0 %204
  %206 = vrot.lane.b32.xlu0 %v165, 120
  %v207 = vpop.permute.xlu0 %206
  %208 = vrot.lane.b32.xlu0 %v166, 120
  %v209 = vpop.permute.xlu0 %208
  %210 = vrot.lane.b32.xlu0 %v167, 120
  %v211 = vpop.permute.xlu0 %210
  %212 = vrot.lane.b32.xlu0 %v168, 120
  %v213 = vpop.permute.xlu0 %212
  %214 = vrot.lane.b32.xlu0 %v169, 120
  %v215 = vpop.permute.xlu0 %214
  %216 = vrot.lane.b32.xlu0 %v170, 120
  %v217 = vpop.permute.xlu0 %216
  %218 = vrot.lane.b32.xlu0 %v171, 120
  %v219 = vpop.permute.xlu0 %218
  %v236 = vmax.f32 %v156, %v189
  %v237 = vmax.f32 %v157, %v191
  %v238 = vmax.f32 %v158, %v193
  %v239 = vmax.f32 %v159, %v195
  %v240 = vmax.f32 %v160, %v197
  %v241 = vmax.f32 %v161, %v199
  %v242 = vmax.f32 %v162, %v201
  %v243 = vmax.f32 %v163, %v203
  %v244 = vmax.f32 %v164, %v205
  %v245 = vmax.f32 %v165, %v207
  %v246 = vmax.f32 %v166, %v209
  %v247 = vmax.f32 %v167, %v211
  %v248 = vmax.f32 %v168, %v213
  %v249 = vmax.f32 %v169, %v215
  %v250 = vmax.f32 %v170, %v217
  %v251 = vmax.f32 %v171, %v219
  %vm252 = vcmask 64512
  %253 = vst.msk [vmem:[%s3] sm:$0xff] %vm252, %v236
  %254 = vst.msk [vmem:[%s3 + $0x8] sm:$0xff] %vm252, %v237
  %255 = vst.msk [vmem:[%s3 + $0x10] sm:$0xff] %vm252, %v238
  %256 = vst.msk [vmem:[%s3 + $0x18] sm:$0xff] %vm252, %v239
  %257 = vst.msk [vmem:[%s3 + $0x20] sm:$0xff] %vm252, %v240
  %258 = vst.msk [vmem:[%s3 + $0x28] sm:$0xff] %vm252, %v241
  %259 = vst.msk [vmem:[%s3 + $0x30] sm:$0xff] %vm252, %v242
  %260 = vst.msk [vmem:[%s3 + $0x38] sm:$0xff] %vm252, %v243
  %261 = vst.msk [vmem:[%s3 + $0x40] sm:$0xff] %vm252, %v244
  %262 = vst.msk [vmem:[%s3 + $0x48] sm:$0xff] %vm252, %v245
  %263 = vst.msk [vmem:[%s3 + $0x50] sm:$0xff] %vm252, %v246
  %264 = vst.msk [vmem:[%s3 + $0x58] sm:$0xff] %vm252, %v247
  %265 = vst.msk [vmem:[%s3 + $0x60] sm:$0xff] %vm252, %v248
  %266 = vst.msk [vmem:[%s3 + $0x68] sm:$0xff] %vm252, %v249
  %267 = vst.msk [vmem:[%s3 + $0x70] sm:$0xff] %vm252, %v250
  %268 = vst.msk [vmem:[%s3 + $0x78] sm:$0xff] %vm252, %v251
  // Predicated region
  $region14: #{conv_ae_forward.23} parent=0 // pred_check
    _
  $region15: #{conv_ae_forward.23} parent=0 // pred_check_branch
    %270 = sbr.rel (0) target = $region17
  $region16: #{conv_ae_forward.23} parent=0 // pred_region
    _
  $region17: #{conv_ae_forward.23} parent=0 // pred_fallthru
    _
  // Predicated region
  $region18: #{conv_ae_forward.23} parent=0 // pred_check
    _
  $region19: #{conv_ae_forward.23} parent=0 // pred_check_branch
    %272 = sbr.rel (0) target = $region21
  $region20: #{conv_ae_forward.23} parent=0 // pred_region
    _
  $region21: #{conv_ae_forward.23} parent=0 // pred_fallthru
    _

// kernel: conv_ae_forward.24
$region0: #{conv_ae_forward.24}
  #allocation0 [shape = 'u32[]', space=smem, size = 0x4, offset = 0x4, fixed_abs, tag = 'smem constant byte address 0x4 - core index']
  #allocation1 [shape = 'u32[144,128]{1,0:T(1,128)}', space=vmem, size = 0x12000, scoped, tag = 'internal scratch']
  %s0 = inlined_call_operand.vmem [shape: f32[2,10,80], index: 0, kind: input, shape index: {}]
  %s1 = inlined_call_operand.vmem [shape: bf16[240,128], index: 1, kind: input, shape index: {}]
  %s2 = inlined_call_operand.vmem [shape: f32[2,8,128], index: 2, kind: output, shape index: {0}]
  %s3 = inlined_call_operand.vmem [shape: f32[2,2,128], index: 3, kind: output, shape index: {1}]
  %4 = xla_tuple %s2, %s3
  %s5 = sld [smem:[#allocation0]]
  $region49: #{conv_ae_forward.24} parent=0
    _
  %s7 = ssub.s32 1, %s5
  %s8 = scalar_select 0, %s7, %s5
  loop: start=0, step=1, limit=4
  $region2: #{conv_ae_forward.24} parent=0 // loop_pre_header
    _
  $region3: #{conv_ae_forward.24} parent=0 // loop_header
    %s10 = sphi 0, %s14
    %p11 = scmp.ge.s32.totalorder %s10, 4
    %s20 = sphi 0, %s22
    %s23 = sphi 0, %s20
    %s24 = sphi 0, %s23
    %s40 = sphi 0, %s24
    %s44 = sphi 0, %s44
    %s46 = sphi 0, %s44
    %s47 = sphi 0, %s46
    %s61 = sphi 0, %s47
    %s67 = sphi 0, %s69
    %s70 = sphi 0, %s67
    %s71 = sphi 0, %s70
    %s87 = sphi 0, %s71
    %s93 = sphi 0, %s95
    %s96 = sphi 0, %s93
    %s97 = sphi 0, %s96
    %s113 = sphi 0, %s97
  $region4: #{conv_ae_forward.24} parent=0 // loop_header_branch
    %13 = sbr.rel (%p11) target = $region8
  $region5: #{conv_ae_forward.24} parent=0 // loop_body
    %s15 = ssub.s32 %s10, 1
    %s16 = ssub.s32 %s10, 2
    %s17 = sadd.s32 %s10, 1
    %s18 = ssub.s32 %s10, %s17
    %p19 = scmp.eq.s32.totalorder %s18, 0
    %s21 = sadd.s32 %s20, 1
    %s22 = scalar_select %p19, %s20, %s21
    %p25 = pneg %p19
    %p26 = scmp.eq.s32.totalorder %s10, 1
    %p27 = por %p25, %p26
    %p28 = scmp.ne.s32.totalorder %s20, %s23
    %p29 = scmp.eq.s32.totalorder %s10, 0
    %p30 = por %p28, %p29
    %p31 = scmp.ne.s32.totalorder %s20, %s23
    %p32 = scmp.eq.s32.totalorder %s15, 1
    %p33 = por %p31, %p32
    %p34 = scmp.ne.s32.totalorder %s23, %s24
    %p35 = scmp.eq.s32.totalorder %s15, 0
    %p36 = por %p34, %p35
    %p37 = scmp.ne.s32.totalorder %s23, %s24
    %p38 = scmp.eq.s32.totalorder %s16, 1
    %p39 = por %p37, %p38
    %p41 = scmp.ne.s32.totalorder %s24, %s40
    %p42 = scmp.eq.s32.totalorder %s16, 0
    %p43 = por %p41, %p42
    %s45 = sadd.s32 %s44, 1
    %p48 = scmp.eq.s32.totalorder %s10, 1
    %p49 = scmp.ne.s32.totalorder %s44, %s46
    %p50 = scmp.eq.s32.totalorder %s10, 0
    %p51 = por %p49, %p50
    %p52 = scmp.ne.s32.totalorder %s44, %s46
    %p53 = scmp.eq.s32.totalorder %s15, 1
    %p54 = por %p52, %p53
    %p55 = scmp.ne.s32.totalorder %s46, %s47
    %p56 = scmp.eq.s32.totalorder %s15, 0
    %p57 = por %p55, %p56
    %p58 = scmp.ne.s32.totalorder %s46, %s47
    %p59 = scmp.eq.s32.totalorder %s16, 1
    %p60 = por %p58, %p59
    %p62 = scmp.ne.s32.totalorder %s47, %s61
    %p63 = scmp.eq.s32.totalorder %s16, 0
    %p64 = por %p62, %p63
    %s65 = ssub.s32 %s10, %s17
    %p66 = scmp.eq.s32.totalorder %s65, 0
    %s68 = sadd.s32 %s67, 1
    %s69 = scalar_select %p66, %s67, %s68
    %p72 = pneg %p66
    %p73 = scmp.eq.s32.totalorder %s10, 1
    %p74 = por %p72, %p73
    %p75 = scmp.ne.s32.totalorder %s67, %s70
    %p76 = scmp.eq.s32.totalorder %s10, 0
    %p77 = por %p75, %p76
    %p78 = scmp.ne.s32.totalorder %s67, %s70
    %p79 = scmp.eq.s32.totalorder %s15, 1
    %p80 = por %p78, %p79
    %p81 = scmp.ne.s32.totalorder %s70, %s71
    %p82 = scmp.eq.s32.totalorder %s15, 0
    %p83 = por %p81, %p82
    %p84 = scmp.ne.s32.totalorder %s70, %s71
    %p85 = scmp.eq.s32.totalorder %s16, 1
    %p86 = por %p84, %p85
    %p88 = scmp.ne.s32.totalorder %s71, %s87
    %p89 = scmp.eq.s32.totalorder %s16, 0
    %p90 = por %p88, %p89
    %s91 = ssub.s32 %s10, %s17
    %p92 = scmp.eq.s32.totalorder %s91, 0
    %s94 = sadd.s32 %s93, 1
    %s95 = scalar_select %p92, %s93, %s94
    %p98 = pneg %p92
    %p99 = scmp.eq.s32.totalorder %s10, 1
    %p100 = por %p98, %p99
    %p101 = scmp.ne.s32.totalorder %s93, %s96
    %p102 = scmp.eq.s32.totalorder %s10, 0
    %p103 = por %p101, %p102
    %p104 = scmp.ne.s32.totalorder %s93, %s96
    %p105 = scmp.eq.s32.totalorder %s15, 1
    %p106 = por %p104, %p105
    %p107 = scmp.ne.s32.totalorder %s96, %s97
    %p108 = scmp.eq.s32.totalorder %s15, 0
    %p109 = por %p107, %p108
    %p110 = scmp.ne.s32.totalorder %s96, %s97
    %p111 = scmp.eq.s32.totalorder %s16, 1
    %p112 = por %p110, %p111
    %p114 = scmp.ne.s32.totalorder %s97, %s113
    %p115 = scmp.eq.s32.totalorder %s16, 0
    %p116 = por %p114, %p115
    %p117 = scmp.le.s32.totalorder 1, %s10
    %p118 = scmp.lt.s32.totalorder %s10, 3
    %p119 = pnand %p117, %p118
    %p120 = pneg %p119
    // Predicated region
    $region9: #{conv_ae_forward.24} parent=5 // pred_check
      _
    $region10: #{conv_ae_forward.24} parent=5 // pred_check_branch
      %122 = sbr.rel (%p119) target = $region12
    $region11: #{conv_ae_forward.24} parent=5 // pred_region
      %s123 = ssub.s32 %s10, 1
      // Predicated region
      $region13: #{conv_ae_forward.24} parent=11 // pred_check
        %p124 = pneg %p57
      $region14: #{conv_ae_forward.24} parent=11 // pred_check_branch
        %126 = sbr.rel (%p124) target = $region16
      $region15: #{conv_ae_forward.24} parent=11 // pred_region
        _
      $region16: #{conv_ae_forward.24} parent=11 // pred_fallthru
        _
    $region12: #{conv_ae_forward.24} parent=5 // pred_fallthru
      _
    %p127 = scmp.lt.s32.totalorder %s10, 2
    // Predicated region
    $region17: #{conv_ae_forward.24} parent=5 // pred_check
      %p128 = pneg %p127
    $region18: #{conv_ae_forward.24} parent=5 // pred_check_branch
      %130 = sbr.rel (%p128) target = $region20
    $region19: #{conv_ae_forward.24} parent=5 // pred_region
      // Predicated region
      $region21: #{conv_ae_forward.24} parent=19 // pred_check
        %p131 = pneg %p30
      $region22: #{conv_ae_forward.24} parent=19 // pred_check_branch
        %133 = sbr.rel (%p131) target = $region24
      $region23: #{conv_ae_forward.24} parent=19 // pred_region
        %p134 = scmp.lt.s32.totalorder %s10, 1
        %s135 = scalar_select %p134, %s10, 1
        %s136 = smul.addr %s135, 2
        %s137 = smul.addr %s136, 8
        %s138 = scalar_lea.vmem %s0, %s137
      $region24: #{conv_ae_forward.24} parent=19 // pred_fallthru
        _
    $region20: #{conv_ae_forward.24} parent=5 // pred_fallthru
      _
    %p139 = scmp.le.s32.totalorder 1, %s10
    %p140 = scmp.lt.s32.totalorder %s10, 3
    %p141 = pnand %p139, %p140
    %p142 = pneg %p141
    // Predicated region
    $region25: #{conv_ae_forward.24} parent=5 // pred_check
      _
    $region26: #{conv_ae_forward.24} parent=5 // pred_check_branch
      %144 = sbr.rel (%p141) target = $region28
    $region27: #{conv_ae_forward.24} parent=5 // pred_region
      %s145 = ssub.s32 %s10, 1
      %p146 = scmp.lt.s32.totalorder %s15, 1
      %s147 = scalar_select %p146, %s15, 1
      %s148 = smul.addr %s147, 2
      %s149 = smul.addr %s148, 8
      %s150 = scalar_lea.vmem %s0, %s149
      %p151 = pneg %p36
      %p152 = pneg %p33
      %p153 = pneg %p57
      %p154 = pneg %p54
      %p155 = pneg %p83
      %p156 = pneg %p80
      %p157 = scmp.lt.s32.totalorder %s15, 1
      %s158 = scalar_select %p157, %s15, 1
      %s159 = smul.addr %s158, 8
      %s160 = scalar_lea.vmem %s2, %s159
      %p161 = pneg %p109
      %p162 = pneg %p106
      %p163 = scmp.lt.s32.totalorder %s15, 1
      %s164 = scalar_select %p163, %s15, 1
      %s165 = smul.addr %s164, 2
      %s166 = scalar_lea.vmem %s3, %s165
      %p167 = scmp.lt.s32.totalorder %s15, 1
      %s168 = scalar_select %p167, %s15, 1
      %s169 = smul.addr %s168, 2
      %s170 = smul.addr %s169, 8
      %s171 = scalar_lea.vmem %s0, %s170
      %p172 = scmp.lt.s32.totalorder %s15, 1
      %s173 = scalar_select %p172, %s15, 1
      %s174 = smul.addr %s173, 8
      %s175 = scalar_lea.vmem %s2, %s174
      %p176 = scmp.lt.s32.totalorder %s15, 1
      %s177 = scalar_select %p176, %s15, 1
      %s178 = smul.addr %s177, 2
      %s179 = scalar_lea.vmem %s3, %s178
      %v181 = vld [vmem:[%s171] sm:$0xff]
      %v182 = vld [vmem:[%s171 + $0x1] sm:$0xff]
      %v183 = vld [vmem:[%s171 + $0x2] sm:$0xff]
      %185 = vrot.lane.b32.xlu0 %v182, 80
      %v186 = vpop.permute.xlu0 %185
      %189 = vrot.lane.b32.xlu0 %v183, 32
      %v190 = vpop.permute.xlu0 %189
      %vm192 = vcmask 654336
      %v193 = vsel %vm192, %v181, %v186
      %vm194 = vcmask 261120
      %v195 = vsel %vm194, %v186, %v190
      %v196 = vpack.c.bf16 %v193, %v193
      %v197 = vpack.c.bf16 %v195, %v195
      %v198 = vld [vmem:[%s1] sm:$0xf]
      %v199 = vld [vmem:[%s1 + $0x4] sm:$0xf]
      %v200 = vld [vmem:[%s1 + $0x8] sm:$0xf]
      %v201 = vld [vmem:[%s1 + $0xc] sm:$0xf]
      %v202 = vld [vmem:[%s1 + $0x10] sm:$0xf]
      %v203 = vld [vmem:[%s1 + $0x14] sm:$0xf]
      %v204 = vld [vmem:[%s1 + $0x18] sm:$0xf]
      %v205 = vld [vmem:[%s1 + $0x1c] sm:$0xf]
      %v206 = vld [vmem:[%s1 + $0x20] sm:$0xf]
      %v207 = vld [vmem:[%s1 + $0x24] sm:$0xf]
      %v208 = vld [vmem:[%s1 + $0x28] sm:$0xf]
      %v209 = vld [vmem:[%s1 + $0x2c] sm:$0xf]
      %v210 = vld [vmem:[%s1 + $0x30] sm:$0xf]
      %v211 = vld [vmem:[%s1 + $0x34] sm:$0xf]
      %v212 = vld [vmem:[%s1 + $0x38] sm:$0xf]
      %v213 = vld [vmem:[%s1 + $0x3c] sm:$0xf]
      %v214 = vld [vmem:[%s1 + $0x40] sm:$0xf]
      %v215 = vld [vmem:[%s1 + $0x44] sm:$0xf]
      %v216 = vld [vmem:[%s1 + $0x48] sm:$0xf]
      %v217 = vld [vmem:[%s1 + $0x4c] sm:$0xf]
      %v218 = vld [vmem:[%s1 + $0x50] sm:$0xf]
      %v219 = vld [vmem:[%s1 + $0x54] sm:$0xf]
      %v220 = vld [vmem:[%s1 + $0x58] sm:$0xf]
      %v221 = vld [vmem:[%s1 + $0x5c] sm:$0xf]
      %v222 = vld [vmem:[%s1 + $0x60] sm:$0xf]
      %v223 = vld [vmem:[%s1 + $0x64] sm:$0xf]
      %v224 = vld [vmem:[%s1 + $0x68] sm:$0xf]
      %v225 = vld [vmem:[%s1 + $0x6c] sm:$0xf]
      %v226 = vld [vmem:[%s1 + $0x70] sm:$0xf]
      %v227 = vld [vmem:[%s1 + $0x74] sm:$0xf]
      %v258 = vunpack.c.l.b16 %v198
      %v259 = vunpack.c.l.b16 %v199
      %v260 = vunpack.c.l.b16 %v200
      %v261 = vunpack.c.l.b16 %v201
      %v262 = vunpack.c.l.b16 %v202
      %v263 = vunpack.c.l.b16 %v203
      %v264 = vunpack.c.l.b16 %v204
      %v265 = vunpack.c.l.b16 %v205
      %v266 = vunpack.c.l.b16 %v206
      %v267 = vunpack.c.l.b16 %v207
      %v268 = vunpack.c.l.b16 %v208
      %v269 = vunpack.c.l.b16 %v209
      %v270 = vunpack.c.l.b16 %v210
      %v271 = vunpack.c.l.b16 %v211
      %v272 = vunpack.c.l.b16 %v212
      %v273 = vunpack.c.l.b16 %v213
      %v274 = vunpack.c.l.b16 %v214
      %v275 = vunpack.c.l.b16 %v215
      %v276 = vunpack.c.l.b16 %v216
      %v277 = vunpack.c.l.b16 %v217
      %v278 = vunpack.c.l.b16 %v218
      %v279 = vunpack.c.l.b16 %v219
      %v280 = vunpack.c.l.b16 %v220
      %v281 = vunpack.c.l.b16 %v221
      %v282 = vunpack.c.l.b16 %v222
      %v283 = vunpack.c.l.b16 %v223
      %v284 = vunpack.c.l.b16 %v224
      %v285 = vunpack.c.l.b16 %v225
      %v286 = vunpack.c.l.b16 %v226
      %v287 = vunpack.c.l.b16 %v227
      %v288 = vpack.c.b16 %v259, %v258
      %v289 = vpack.c.b16 %v261, %v260
      %v290 = vpack.c.b16 %v263, %v262
      %v291 = vpack.c.b16 %v265, %v264
      %v292 = vpack.c.b16 %v267, %v266
      %v293 = vpack.c.b16 %v269, %v268
      %v294 = vpack.c.b16 %v271, %v270
      %v295 = vpack.c.b16 %v273, %v272
      %v296 = vpack.c.b16 %v275, %v274
      %v297 = vpack.c.b16 %v277, %v276
      %v298 = vpack.c.b16 %v279, %v278
      %v299 = vpack.c.b16 %v281, %v280
      %v300 = vpack.c.b16 %v283, %v282
      %v301 = vpack.c.b16 %v285, %v284
      %v302 = vpack.c.b16 %v287, %v286
      %vm318 = vcmask 916480
      %v320 = vsel %vm318, %v197, 0
      %322 = vmatprep.subr.bf16.mxu0 0
      %323 = vmatpush1.bf16.msra.mxu0 %v288
      %324 = vmatprep.subr.bf16.mxu0 0
      %325 = vmatpush1.bf16.msra.mxu0 %v289
      %326 = vmatprep.subr.bf16.mxu0 0
      %327 = vmatpush1.bf16.msra.mxu0 %v290
      %328 = vmatprep.subr.bf16.mxu0 0
      %329 = vmatpush1.bf16.msra.mxu0 %v291
      %330 = vmatprep.subr.bf16.mxu0 0
      %331 = vmatpush1.bf16.msra.mxu0 %v292
      %332 = vmatprep.subr.bf16.mxu0 0
      %333 = vmatpush1.bf16.msra.mxu0 %v293
      %334 = vmatprep.subr.bf16.mxu0 0
      %335 = vmatpush1.bf16.msra.mxu0 %v294
      %336 = vmatprep.subr.bf16.mxu0 0
      %337 = vmatpush1.bf16.msra.mxu0 %v295
      %338 = vmatprep.subr.bf16.mxu0 0
      %339 = vmatpush1.bf16.msra.mxu0 %v296
      %340 = vmatprep.subr.bf16.mxu0 0
      %341 = vmatpush1.bf16.msra.mxu0 %v297
      %342 = vmatprep.subr.bf16.mxu0 0
      %343 = vmatpush1.bf16.msra.mxu0 %v298
      %344 = vmatprep.subr.bf16.mxu0 0
      %345 = vmatpush1.bf16.msra.mxu0 %v299
      %346 = vmatprep.subr.bf16.mxu0 0
      %347 = vmatpush1.bf16.msra.mxu0 %v300
      %348 = vmatprep.subr.bf16.mxu0 0
      %349 = vmatpush1.bf16.msra.mxu0 %v301
      %350 = vmatprep.subr.bf16.mxu0 0
      %351 = vmatpush1.bf16.msra.mxu0 %v302
      %352 = vmatprep.subr.bf16.mxu0 0
      %353 = vmatpush1.bf16.msra.mxu0 0
      %354 = vmatprep.mubr.bf16.mxu0 %v320
      %355 = vmatmul.mubr.bf16.gmra.mrb[0].mxu0 %v196
      %v356 = vpop.f32.mrb[0].mxu0
      %v357 = vadd.f32 0.0, %v356
      %v358 = vpop.f32.mrb[0].mxu0
      %v359 = vpop.f32.mrb[0].mxu0
      %v360 = vpop.f32.mrb[0].mxu0
      %361 = vdwg.mxu0
      %362 = vst [vmem:[%s175] sm:$0xff] %v357
      %v363 = vrot.slane %v357, 4
      %v364 = vadd.f32 %v357, %v363
      %v365 = vrot.slane %v364, 2
      %v366 = vadd.f32 %v364, %v365
      %v367 = vrot.slane %v366, 1
      %v368 = vadd.f32 %v366, %v367
      %369 = vst [vmem:[%s179] sm:$0x1] %v368
      %v370 = vmul.f32 %v357, %v357
      %v371 = vrot.slane %v370, 4
      %v372 = vadd.f32 %v370, %v371
      %v373 = vrot.slane %v372, 2
      %v374 = vadd.f32 %v372, %v373
      %v375 = vrot.slane %v374, 1
      %v376 = vadd.f32 %v374, %v375
      %377 = vst [vmem:[%s179 + $0x1] sm:$0x1] %v376
      %p378 = scmp.lt.s32.totalorder %s15, 1
      %s379 = scalar_select %p378, %s15, 1
      %s380 = smul.addr %s379, 8
      %s381 = scalar_lea.vmem %s2, %s380
      %p382 = scmp.lt.s32.totalorder %s15, 1
      %s383 = scalar_select %p382, %s15, 1
      %s384 = smul.addr %s383, 2
      %s385 = scalar_lea.vmem %s3, %s384
      // Predicated region
      $region29: #{conv_ae_forward.24} parent=27 // pred_check
        %p386 = pneg %p80
      $region30: #{conv_ae_forward.24} parent=27 // pred_check_branch
        %388 = sbr.rel (%p386) target = $region32
      $region31: #{conv_ae_forward.24} parent=27 // pred_region
        _
      $region32: #{conv_ae_forward.24} parent=27 // pred_fallthru
        _
      // Predicated region
      $region33: #{conv_ae_forward.24} parent=27 // pred_check
        %p389 = pneg %p106
      $region34: #{conv_ae_forward.24} parent=27 // pred_check_branch
        %391 = sbr.rel (%p389) target = $region36
      $region35: #{conv_ae_forward.24} parent=27 // pred_region
        _
      $region36: #{conv_ae_forward.24} parent=27 // pred_fallthru
        _
    $region28: #{conv_ae_forward.24} parent=5 // pred_fallthru
      _
    %p392 = scmp.le.s32.totalorder 2, %s10
    // Predicated region
    $region37: #{conv_ae_forward.24} parent=5 // pred_check
      %p393 = pneg %p392
    $region38: #{conv_ae_forward.24} parent=5 // pred_check_branch
      %395 = sbr.rel (%p393) target = $region40
    $region39: #{conv_ae_forward.24} parent=5 // pred_region
      %s396 = ssub.s32 %s10, 2
      // Predicated region
      $region41: #{conv_ae_forward.24} parent=39 // pred_check
        %p397 = pneg %p86
      $region42: #{conv_ae_forward.24} parent=39 // pred_check_branch
        %399 = sbr.rel (%p397) target = $region44
      $region43: #{conv_ae_forward.24} parent=39 // pred_region
        %p400 = scmp.lt.s32.totalorder %s16, 1
        %s401 = scalar_select %p400, %s16, 1
        %s402 = smul.addr %s401, 8
        %s403 = scalar_lea.vmem %s2, %s402
      $region44: #{conv_ae_forward.24} parent=39 // pred_fallthru
        _
      // Predicated region
      $region45: #{conv_ae_forward.24} parent=39 // pred_check
        %p404 = pneg %p112
      $region46: #{conv_ae_forward.24} parent=39 // pred_check_branch
        %406 = sbr.rel (%p404) target = $region48
      $region47: #{conv_ae_forward.24} parent=39 // pred_region
        %p407 = scmp.lt.s32.totalorder %s16, 1
        %s408 = scalar_select %p407, %s16, 1
        %s409 = smul.addr %s408, 2
        %s410 = scalar_lea.vmem %s3, %s409
      $region48: #{conv_ae_forward.24} parent=39 // pred_fallthru
        _
    $region40: #{conv_ae_forward.24} parent=5 // pred_fallthru
      _
  $region6: #{conv_ae_forward.24} parent=0 // loop_footer
    %s14 = sadd.s32 1, %s10
  $region7: #{conv_ae_forward.24} parent=0 // loop_footer_branch
    %9 = sbr.rel target = $region3
  $region8: #{conv_ae_forward.24} parent=0 // loop_exit
    _

// kernel: tile.103
$region0: #{tile.103}
  #allocation0 [shape = 's32[1]{0}', space=sflag, size = 0x4, scoped, tag = 'scoped memory for tile.103']
  %s0 = inlined_call_operand.vmem [shape: f32[16], index: 0, kind: input, shape index: {}]
  %s1 = inlined_call_operand.vmem [shape: f32[8,16], index: 1, kind: output, shape index: {}]
  // Predicated region
  $region2: #{tile.103} parent=0 // pred_check
    _
  $region3: #{tile.103} parent=0 // pred_check_branch
    %3 = sbr.rel (0) target = $region5
  $region4: #{tile.103} parent=0 // pred_region
    _
  $region5: #{tile.103} parent=0 // pred_fallthru
    _
  %v4 = vld [vmem:[%s0] ss:$0 sm:$0xff]
  %5 = vst [vmem:[%s1] sm:$0xff] %v4

// kernel: tile.104
$region0: #{tile.104}
  %s0 = inlined_call_operand.vmem [shape: f32[8,16], index: 0, kind: input, shape index: {}]
  %s1 = inlined_call_operand.vmem [shape: f32[1,128], index: 1, kind: output, shape index: {}]
  $region1: #{tile.104} parent=0
    #allocation0 [shape = 'u8[4096]{0}', space=vmem, size = 0x1000, scoped, tag = 'scoped mem for output reshape']
    %v2 = vld [vmem:[%s0] sm:$0x1]
    %vm3 = vcmask 130048
    %4 = vst.msk [vmem:[#allocation0] sm:$0x1] %vm3, %v2
    %s5 = scalar_lea.vmem %s0, 7
    %v6 = vld [vmem:[%s5] sm:$0x1]
    %7 = vrot.lane.b32.xlu0 %v6, 112
    %v8 = vpop.permute.xlu0 %7
    %vm9 = vcmask 1048448
    %10 = vst.msk [vmem:[#allocation0] sm:$0x1] %vm9, %v8
    %s11 = scalar_lea.vmem %s0, 6
    %v12 = vld [vmem:[%s11] sm:$0x1]
    %13 = vrot.lane.b32.xlu0 %v12, 96
    %v14 = vpop.permute.xlu0 %13
    %vm15 = vcmask 917248
    %16 = vst.msk [vmem:[#allocation0] sm:$0x1] %vm15, %v14
    %s17 = scalar_lea.vmem %s0, 5
    %v18 = vld [vmem:[%s17] sm:$0x1]
    %19 = vrot.lane.b32.xlu0 %v18, 80
    %v20 = vpop.permute.xlu0 %19
    %vm21 = vcmask 786048
    %22 = vst.msk [vmem:[#allocation0] sm:$0x1] %vm21, %v20
    %s23 = scalar_lea.vmem %s0, 4
    %v24 = vld [vmem:[%s23] sm:$0x1]
    %25 = vrot.lane.b32.xlu0 %v24, 64
    %v26 = vpop.permute.xlu0 %25
    %vm27 = vcmask 654848
    %28 = vst.msk [vmem:[#allocation0] sm:$0x1] %vm27, %v26
    %s29 = scalar_lea.vmem %s0, 3
    %v30 = vld [vmem:[%s29] sm:$0x1]
    %31 = vrot.lane.b32.xlu0 %v30, 48
    %v32 = vpop.permute.xlu0 %31
    %vm33 = vcmask 523648
    %34 = vst.msk [vmem:[#allocation0] sm:$0x1] %vm33, %v32
    %s35 = scalar_lea.vmem %s0, 2
    %v36 = vld [vmem:[%s35] sm:$0x1]
    %37 = vrot.lane.b32.xlu0 %v36, 32
    %v38 = vpop.permute.xlu0 %37
    %vm39 = vcmask 392448
    %40 = vst.msk [vmem:[#allocation0] sm:$0x1] %vm39, %v38
    %s41 = scalar_lea.vmem %s0, 1
    %v42 = vld [vmem:[%s41] sm:$0x1]
    %43 = vrot.lane.b32.xlu0 %v42, 16
    %v44 = vpop.permute.xlu0 %43
    %vm45 = vcmask 261248
    %46 = vst.msk [vmem:[#allocation0] sm:$0x1] %vm45, %v44
    %s48 = sshllo.u32 0, 1
    %v50 = vld [vmem:[#allocation0] sm:%s48]
    %s51 = sshllo.u32 0, 1
    %52 = vst [vmem:[%s1] sm:%s51] %v50

// kernel: conv_ae_forward.25
$region0: #{conv_ae_forward.25}
  #allocation0 [shape = 'u32[]', space=smem, size = 0x4, offset = 0x4, fixed_abs, tag = 'smem constant byte address 0x4 - core index']
  #allocation1 [shape = 'u32[144,128]{1,0:T(1,128)}', space=vmem, size = 0x12000, scoped, tag = 'internal scratch']
  %s0 = inlined_call_operand.vmem [shape: f32[16,128], index: 0, kind: input, shape index: {}]
  %s1 = inlined_call_operand.vmem [shape: f32[1,128], index: 1, kind: input, shape index: {}]
  %s2 = inlined_call_operand.vmem [shape: f32[1,128], index: 2, kind: input, shape index: {}]
  %s3 = inlined_call_operand.vmem [shape: f32[16,128], index: 3, kind: output, shape index: {}]
  %s4 = sld [smem:[#allocation0]]
  $region22: #{conv_ae_forward.25} parent=0
    _
  %s6 = ssub.s32 1, %s4
  %s7 = scalar_select 0, %s6, %s4
  // Predicated region
  $region2: #{conv_ae_forward.25} parent=0 // pred_check
    _
  $region3: #{conv_ae_forward.25} parent=0 // pred_check_branch
    %9 = sbr.rel (0) target = $region5
  $region4: #{conv_ae_forward.25} parent=0 // pred_region
    _
  $region5: #{conv_ae_forward.25} parent=0 // pred_fallthru
    _
  // Predicated region
  $region6: #{conv_ae_forward.25} parent=0 // pred_check
    _
  $region7: #{conv_ae_forward.25} parent=0 // pred_check_branch
    %11 = sbr.rel (0) target = $region9
  $region8: #{conv_ae_forward.25} parent=0 // pred_region
    _
  $region9: #{conv_ae_forward.25} parent=0 // pred_fallthru
    _
  // Predicated region
  $region10: #{conv_ae_forward.25} parent=0 // pred_check
    _
  $region11: #{conv_ae_forward.25} parent=0 // pred_check_branch
    %13 = sbr.rel (0) target = $region13
  $region12: #{conv_ae_forward.25} parent=0 // pred_region
    _
  $region13: #{conv_ae_forward.25} parent=0 // pred_fallthru
    _
  %v14 = vld [vmem:[%s0] sm:$0xff]
  %v15 = vld [vmem:[%s0 + $0x8] sm:$0xff]
  %v16 = vld [vmem:[%s1] sm:$0x1]
  %v18 = vlaneseq
  %v19 = vshrl.u32 %v18, 7
  %v20 = vsub.s32 0, %v19
  %v21 = vrot.slane %v16, %v20
  %v23 = vmul.f32 %v14, %v21
  %v24 = vmul.f32 %v15, %v21
  %v25 = vld [vmem:[%s2] sm:$0x1]
  %v27 = vlaneseq
  %v28 = vshrl.u32 %v27, 7
  %v29 = vsub.s32 0, %v28
  %v30 = vrot.slane %v25, %v29
  %v32 = vadd.f32 %v23, %v30
  %v33 = vadd.f32 %v24, %v30
  %v34 = vmax.f32 %v32, 0.0
  %v35 = vmax.f32 %v33, 0.0
  %36 = vst [vmem:[%s3] sm:$0xff] %v34
  %37 = vst [vmem:[%s3 + $0x8] sm:$0xff] %v35
  // Predicated region
  $region14: #{conv_ae_forward.25} parent=0 // pred_check
    _
  $region15: #{conv_ae_forward.25} parent=0 // pred_check_branch
    %39 = sbr.rel (0) target = $region17
  $region16: #{conv_ae_forward.25} parent=0 // pred_region
    _
  $region17: #{conv_ae_forward.25} parent=0 // pred_fallthru
    _
  // Predicated region
  $region18: #{conv_ae_forward.25} parent=0 // pred_check
    _
  $region19: #{conv_ae_forward.25} parent=0 // pred_check_branch
    %41 = sbr.rel (0) target = $region21
  $region20: #{conv_ae_forward.25} parent=0 // pred_region
    _
  $region21: #{conv_ae_forward.25} parent=0 // pred_fallthru
    _

// kernel: conv_ae_forward.26
$region0: #{conv_ae_forward.26}
  #allocation0 [shape = 'u32[]', space=smem, size = 0x4, offset = 0x4, fixed_abs, tag = 'smem constant byte address 0x4 - core index']
  #allocation1 [shape = 'u32[144,128]{1,0:T(1,128)}', space=vmem, size = 0x12000, scoped, tag = 'internal scratch']
  %s0 = inlined_call_operand.vmem [shape: f32[2,10,160], index: 0, kind: input, shape index: {}]
  %s1 = inlined_call_operand.vmem [shape: bf16[480,128], index: 1, kind: input, shape index: {}]
  %s2 = inlined_call_operand.vmem [shape: f32[2,8,128], index: 2, kind: output, shape index: {0}]
  %s3 = inlined_call_operand.vmem [shape: f32[2,2,128], index: 3, kind: output, shape index: {1}]
  %4 = xla_tuple %s2, %s3
  %s5 = sld [smem:[#allocation0]]
  $region49: #{conv_ae_forward.26} parent=0
    _
  %s7 = ssub.s32 1, %s5
  %s8 = scalar_select 0, %s7, %s5
  loop: start=0, step=1, limit=4
  $region2: #{conv_ae_forward.26} parent=0 // loop_pre_header
    _
  $region3: #{conv_ae_forward.26} parent=0 // loop_header
    %s10 = sphi 0, %s14
    %p11 = scmp.ge.s32.totalorder %s10, 4
    %s20 = sphi 0, %s22
    %s23 = sphi 0, %s20
    %s24 = sphi 0, %s23
    %s40 = sphi 0, %s24
    %s44 = sphi 0, %s44
    %s46 = sphi 0, %s44
    %s47 = sphi 0, %s46
    %s61 = sphi 0, %s47
    %s67 = sphi 0, %s69
    %s70 = sphi 0, %s67
    %s71 = sphi 0, %s70
    %s87 = sphi 0, %s71
    %s93 = sphi 0, %s95
    %s96 = sphi 0, %s93
    %s97 = sphi 0, %s96
    %s113 = sphi 0, %s97
  $region4: #{conv_ae_forward.26} parent=0 // loop_header_branch
    %13 = sbr.rel (%p11) target = $region8
  $region5: #{conv_ae_forward.26} parent=0 // loop_body
    %s15 = ssub.s32 %s10, 1
    %s16 = ssub.s32 %s10, 2
    %s17 = sadd.s32 %s10, 1
    %s18 = ssub.s32 %s10, %s17
    %p19 = scmp.eq.s32.totalorder %s18, 0
    %s21 = sadd.s32 %s20, 1
    %s22 = scalar_select %p19, %s20, %s21
    %p25 = pneg %p19
    %p26 = scmp.eq.s32.totalorder %s10, 1
    %p27 = por %p25, %p26
    %p28 = scmp.ne.s32.totalorder %s20, %s23
    %p29 = scmp.eq.s32.totalorder %s10, 0
    %p30 = por %p28, %p29
    %p31 = scmp.ne.s32.totalorder %s20, %s23
    %p32 = scmp.eq.s32.totalorder %s15, 1
    %p33 = por %p31, %p32
    %p34 = scmp.ne.s32.totalorder %s23, %s24
    %p35 = scmp.eq.s32.totalorder %s15, 0
    %p36 = por %p34, %p35
    %p37 = scmp.ne.s32.totalorder %s23, %s24
    %p38 = scmp.eq.s32.totalorder %s16, 1
    %p39 = por %p37, %p38
    %p41 = scmp.ne.s32.totalorder %s24, %s40
    %p42 = scmp.eq.s32.totalorder %s16, 0
    %p43 = por %p41, %p42
    %s45 = sadd.s32 %s44, 1
    %p48 = scmp.eq.s32.totalorder %s10, 1
    %p49 = scmp.ne.s32.totalorder %s44, %s46
    %p50 = scmp.eq.s32.totalorder %s10, 0
    %p51 = por %p49, %p50
    %p52 = scmp.ne.s32.totalorder %s44, %s46
    %p53 = scmp.eq.s32.totalorder %s15, 1
    %p54 = por %p52, %p53
    %p55 = scmp.ne.s32.totalorder %s46, %s47
    %p56 = scmp.eq.s32.totalorder %s15, 0
    %p57 = por %p55, %p56
    %p58 = scmp.ne.s32.totalorder %s46, %s47
    %p59 = scmp.eq.s32.totalorder %s16, 1
    %p60 = por %p58, %p59
    %p62 = scmp.ne.s32.totalorder %s47, %s61
    %p63 = scmp.eq.s32.totalorder %s16, 0
    %p64 = por %p62, %p63
    %s65 = ssub.s32 %s10, %s17
    %p66 = scmp.eq.s32.totalorder %s65, 0
    %s68 = sadd.s32 %s67, 1
    %s69 = scalar_select %p66, %s67, %s68
    %p72 = pneg %p66
    %p73 = scmp.eq.s32.totalorder %s10, 1
    %p74 = por %p72, %p73
    %p75 = scmp.ne.s32.totalorder %s67, %s70
    %p76 = scmp.eq.s32.totalorder %s10, 0
    %p77 = por %p75, %p76
    %p78 = scmp.ne.s32.totalorder %s67, %s70
    %p79 = scmp.eq.s32.totalorder %s15, 1
    %p80 = por %p78, %p79
    %p81 = scmp.ne.s32.totalorder %s70, %s71
    %p82 = scmp.eq.s32.totalorder %s15, 0
    %p83 = por %p81, %p82
    %p84 = scmp.ne.s32.totalorder %s70, %s71
    %p85 = scmp.eq.s32.totalorder %s16, 1
    %p86 = por %p84, %p85
    %p88 = scmp.ne.s32.totalorder %s71, %s87
    %p89 = scmp.eq.s32.totalorder %s16, 0
    %p90 = por %p88, %p89
    %s91 = ssub.s32 %s10, %s17
    %p92 = scmp.eq.s32.totalorder %s91, 0
    %s94 = sadd.s32 %s93, 1
    %s95 = scalar_select %p92, %s93, %s94
    %p98 = pneg %p92
    %p99 = scmp.eq.s32.totalorder %s10, 1
    %p100 = por %p98, %p99
    %p101 = scmp.ne.s32.totalorder %s93, %s96
    %p102 = scmp.eq.s32.totalorder %s10, 0
    %p103 = por %p101, %p102
    %p104 = scmp.ne.s32.totalorder %s93, %s96
    %p105 = scmp.eq.s32.totalorder %s15, 1
    %p106 = por %p104, %p105
    %p107 = scmp.ne.s32.totalorder %s96, %s97
    %p108 = scmp.eq.s32.totalorder %s15, 0
    %p109 = por %p107, %p108
    %p110 = scmp.ne.s32.totalorder %s96, %s97
    %p111 = scmp.eq.s32.totalorder %s16, 1
    %p112 = por %p110, %p111
    %p114 = scmp.ne.s32.totalorder %s97, %s113
    %p115 = scmp.eq.s32.totalorder %s16, 0
    %p116 = por %p114, %p115
    %p117 = scmp.le.s32.totalorder 1, %s10
    %p118 = scmp.lt.s32.totalorder %s10, 3
    %p119 = pnand %p117, %p118
    %p120 = pneg %p119
    // Predicated region
    $region9: #{conv_ae_forward.26} parent=5 // pred_check
      _
    $region10: #{conv_ae_forward.26} parent=5 // pred_check_branch
      %122 = sbr.rel (%p119) target = $region12
    $region11: #{conv_ae_forward.26} parent=5 // pred_region
      %s123 = ssub.s32 %s10, 1
      // Predicated region
      $region13: #{conv_ae_forward.26} parent=11 // pred_check
        %p124 = pneg %p57
      $region14: #{conv_ae_forward.26} parent=11 // pred_check_branch
        %126 = sbr.rel (%p124) target = $region16
      $region15: #{conv_ae_forward.26} parent=11 // pred_region
        _
      $region16: #{conv_ae_forward.26} parent=11 // pred_fallthru
        _
    $region12: #{conv_ae_forward.26} parent=5 // pred_fallthru
      _
    %p127 = scmp.lt.s32.totalorder %s10, 2
    // Predicated region
    $region17: #{conv_ae_forward.26} parent=5 // pred_check
      %p128 = pneg %p127
    $region18: #{conv_ae_forward.26} parent=5 // pred_check_branch
      %130 = sbr.rel (%p128) target = $region20
    $region19: #{conv_ae_forward.26} parent=5 // pred_region
      // Predicated region
      $region21: #{conv_ae_forward.26} parent=19 // pred_check
        %p131 = pneg %p30
      $region22: #{conv_ae_forward.26} parent=19 // pred_check_branch
        %133 = sbr.rel (%p131) target = $region24
      $region23: #{conv_ae_forward.26} parent=19 // pred_region
        %p134 = scmp.lt.s32.totalorder %s10, 1
        %s135 = scalar_select %p134, %s10, 1
        %s136 = smul.addr %s135, 4
        %s137 = smul.addr %s136, 8
        %s138 = scalar_lea.vmem %s0, %s137
      $region24: #{conv_ae_forward.26} parent=19 // pred_fallthru
        _
    $region20: #{conv_ae_forward.26} parent=5 // pred_fallthru
      _
    %p139 = scmp.le.s32.totalorder 1, %s10
    %p140 = scmp.lt.s32.totalorder %s10, 3
    %p141 = pnand %p139, %p140
    %p142 = pneg %p141
    // Predicated region
    $region25: #{conv_ae_forward.26} parent=5 // pred_check
      _
    $region26: #{conv_ae_forward.26} parent=5 // pred_check_branch
      %144 = sbr.rel (%p141) target = $region28
    $region27: #{conv_ae_forward.26} parent=5 // pred_region
      %s145 = ssub.s32 %s10, 1
      %p146 = scmp.lt.s32.totalorder %s15, 1
      %s147 = scalar_select %p146, %s15, 1
      %s148 = smul.addr %s147, 4
      %s149 = smul.addr %s148, 8
      %s150 = scalar_lea.vmem %s0, %s149
      %p151 = pneg %p36
      %p152 = pneg %p33
      %p153 = pneg %p57
      %p154 = pneg %p54
      %p155 = pneg %p83
      %p156 = pneg %p80
      %p157 = scmp.lt.s32.totalorder %s15, 1
      %s158 = scalar_select %p157, %s15, 1
      %s159 = smul.addr %s158, 8
      %s160 = scalar_lea.vmem %s2, %s159
      %p161 = pneg %p109
      %p162 = pneg %p106
      %p163 = scmp.lt.s32.totalorder %s15, 1
      %s164 = scalar_select %p163, %s15, 1
      %s165 = smul.addr %s164, 2
      %s166 = scalar_lea.vmem %s3, %s165
      %p167 = scmp.lt.s32.totalorder %s15, 1
      %s168 = scalar_select %p167, %s15, 1
      %s169 = smul.addr %s168, 4
      %s170 = smul.addr %s169, 8
      %s171 = scalar_lea.vmem %s0, %s170
      %p172 = scmp.lt.s32.totalorder %s15, 1
      %s173 = scalar_select %p172, %s15, 1
      %s174 = smul.addr %s173, 8
      %s175 = scalar_lea.vmem %s2, %s174
      %p176 = scmp.lt.s32.totalorder %s15, 1
      %s177 = scalar_select %p176, %s15, 1
      %s178 = smul.addr %s177, 2
      %s179 = scalar_lea.vmem %s3, %s178
      %v181 = vld [vmem:[%s171] sm:$0xff]
      %v182 = vld [vmem:[%s171 + $0x8] sm:$0xff]
      %v183 = vld [vmem:[%s171] sm:$0xfe]
      %v184 = vld [vmem:[%s171 + $0x8] sm:$0xfe]
      %v185 = vld [vmem:[%s171 + $0x10] sm:$0x1]
      %v186 = vld [vmem:[%s171 + $0x18] sm:$0x1]
      %v187 = vld [vmem:[%s171] sm:$0xfc]
      %v188 = vld [vmem:[%s171 + $0x8] sm:$0xfc]
      %v189 = vld [vmem:[%s171 + $0x10] sm:$0x3]
      %v190 = vld [vmem:[%s171 + $0x18] sm:$0x3]
      %vm195 = vcmask 1046528
      %v196 = vrot.slane %v183, 1
      %v197 = vrot.slane %v185, 1
      %v198 = vsel %vm195, %v196, %v197
      %v199 = vrot.slane %v184, 1
      %v200 = vrot.slane %v186, 1
      %v201 = vsel %vm195, %v199, %v200
      %202 = vrot.lane.b32.xlu0 %v198, 32
      %v203 = vpop.permute.xlu0 %202
      %204 = vrot.lane.b32.xlu0 %v201, 32
      %v205 = vpop.permute.xlu0 %204
      %vm206 = vcmask 261120
      %v207 = vsel %vm206, %v203, %v205
      %vm214 = vcmask 1045504
      %v215 = vrot.slane %v187, 2
      %v216 = vrot.slane %v189, 2
      %v217 = vsel %vm214, %v215, %v216
      %v218 = vrot.slane %v188, 2
      %v219 = vrot.slane %v190, 2
      %v220 = vsel %vm214, %v218, %v219
      %221 = vrot.lane.b32.xlu0 %v217, 64
      %v222 = vpop.permute.xlu0 %221
      %223 = vrot.lane.b32.xlu0 %v220, 64
      %v224 = vpop.permute.xlu0 %223
      %vm225 = vcmask 523264
      %v226 = vsel %vm225, %v222, %v224
      %v229 = vsel %vm206, %v182, %v203
      %v230 = vsel %vm225, %v207, %v222
      %v231 = vpack.c.bf16 %v181, %v181
      %v232 = vpack.c.bf16 %v229, %v229
      %v233 = vpack.c.bf16 %v230, %v230
      %v234 = vpack.c.bf16 %v226, %v226
      %v235 = vld [vmem:[%s1] sm:$0xf]
      %v236 = vld [vmem:[%s1 + $0x4] sm:$0xf]
      %v237 = vld [vmem:[%s1 + $0x8] sm:$0xf]
      %v238 = vld [vmem:[%s1 + $0xc] sm:$0xf]
      %v239 = vld [vmem:[%s1 + $0x10] sm:$0xf]
      %v240 = vld [vmem:[%s1 + $0x14] sm:$0xf]
      %v241 = vld [vmem:[%s1 + $0x18] sm:$0xf]
      %v242 = vld [vmem:[%s1 + $0x1c] sm:$0xf]
      %v243 = vld [vmem:[%s1 + $0x20] sm:$0xf]
      %v244 = vld [vmem:[%s1 + $0x24] sm:$0xf]
      %v245 = vld [vmem:[%s1 + $0x28] sm:$0xf]
      %v246 = vld [vmem:[%s1 + $0x2c] sm:$0xf]
      %v247 = vld [vmem:[%s1 + $0x30] sm:$0xf]
      %v248 = vld [vmem:[%s1 + $0x34] sm:$0xf]
      %v249 = vld [vmem:[%s1 + $0x38] sm:$0xf]
      %v250 = vld [vmem:[%s1 + $0x3c] sm:$0xf]
      %v251 = vld [vmem:[%s1 + $0x40] sm:$0xf]
      %v252 = vld [vmem:[%s1 + $0x44] sm:$0xf]
      %v253 = vld [vmem:[%s1 + $0x48] sm:$0xf]
      %v254 = vld [vmem:[%s1 + $0x4c] sm:$0xf]
      %v255 = vld [vmem:[%s1 + $0x50] sm:$0xf]
      %v256 = vld [vmem:[%s1 + $0x54] sm:$0xf]
      %v257 = vld [vmem:[%s1 + $0x58] sm:$0xf]
      %v258 = vld [vmem:[%s1 + $0x5c] sm:$0xf]
      %v259 = vld [vmem:[%s1 + $0x60] sm:$0xf]
      %v260 = vld [vmem:[%s1 + $0x64] sm:$0xf]
      %v261 = vld [vmem:[%s1 + $0x68] sm:$0xf]
      %v262 = vld [vmem:[%s1 + $0x6c] sm:$0xf]
      %v263 = vld [vmem:[%s1 + $0x70] sm:$0xf]
      %v264 = vld [vmem:[%s1 + $0x74] sm:$0xf]
      %v265 = vld [vmem:[%s1 + $0x78] sm:$0xf]
      %v266 = vld [vmem:[%s1 + $0x7c] sm:$0xf]
      %v267 = vld [vmem:[%s1 + $0x80] sm:$0xf]
      %v268 = vld [vmem:[%s1 + $0x84] sm:$0xf]
      %v269 = vld [vmem:[%s1 + $0x88] sm:$0xf]
      %v270 = vld [vmem:[%s1 + $0x8c] sm:$0xf]
      %v271 = vld [vmem:[%s1 + $0x90] sm:$0xf]
      %v272 = vld [vmem:[%s1 + $0x94] sm:$0xf]
      %v273 = vld [vmem:[%s1 + $0x98] sm:$0xf]
      %v274 = vld [vmem:[%s1 + $0x9c] sm:$0xf]
      %v275 = vld [vmem:[%s1 + $0xa0] sm:$0xf]
      %v276 = vld [vmem:[%s1 + $0xa4] sm:$0xf]
      %v277 = vld [vmem:[%s1 + $0xa8] sm:$0xf]
      %v278 = vld [vmem:[%s1 + $0xac] sm:$0xf]
      %v279 = vld [vmem:[%s1 + $0xb0] sm:$0xf]
      %v280 = vld [vmem:[%s1 + $0xb4] sm:$0xf]
      %v281 = vld [vmem:[%s1 + $0xb8] sm:$0xf]
      %v282 = vld [vmem:[%s1 + $0xbc] sm:$0xf]
      %v283 = vld [vmem:[%s1 + $0xc0] sm:$0xf]
      %v284 = vld [vmem:[%s1 + $0xc4] sm:$0xf]
      %v285 = vld [vmem:[%s1 + $0xc8] sm:$0xf]
      %v286 = vld [vmem:[%s1 + $0xcc] sm:$0xf]
      %v287 = vld [vmem:[%s1 + $0xd0] sm:$0xf]
      %v288 = vld [vmem:[%s1 + $0xd4] sm:$0xf]
      %v289 = vld [vmem:[%s1 + $0xd8] sm:$0xf]
      %v290 = vld [vmem:[%s1 + $0xdc] sm:$0xf]
      %v291 = vld [vmem:[%s1 + $0xe0] sm:$0xf]
      %v292 = vld [vmem:[%s1 + $0xe4] sm:$0xf]
      %v293 = vld [vmem:[%s1 + $0xe8] sm:$0xf]
      %v294 = vld [vmem:[%s1 + $0xec] sm:$0xf]
      %v355 = vunpack.c.l.b16 %v235
      %v356 = vunpack.c.l.b16 %v236
      %v357 = vunpack.c.l.b16 %v237
      %v358 = vunpack.c.l.b16 %v238
      %v359 = vunpack.c.l.b16 %v239
      %v360 = vunpack.c.l.b16 %v240
      %v361 = vunpack.c.l.b16 %v241
      %v362 = vunpack.c.l.b16 %v242
      %v363 = vunpack.c.l.b16 %v243
      %v364 = vunpack.c.l.b16 %v244
      %v365 = vunpack.c.l.b16 %v245
      %v366 = vunpack.c.l.b16 %v246
      %v367 = vunpack.c.l.b16 %v247
      %v368 = vunpack.c.l.b16 %v248
      %v369 = vunpack.c.l.b16 %v249
      %v370 = vunpack.c.l.b16 %v250
      %v371 = vunpack.c.l.b16 %v251
      %v372 = vunpack.c.l.b16 %v252
      %v373 = vunpack.c.l.b16 %v253
      %v374 = vunpack.c.l.b16 %v254
      %v375 = vunpack.c.l.b16 %v255
      %v376 = vunpack.c.l.b16 %v256
      %v377 = vunpack.c.l.b16 %v257
      %v378 = vunpack.c.l.b16 %v258
      %v379 = vunpack.c.l.b16 %v259
      %v380 = vunpack.c.l.b16 %v260
      %v381 = vunpack.c.l.b16 %v261
      %v382 = vunpack.c.l.b16 %v262
      %v383 = vunpack.c.l.b16 %v263
      %v384 = vunpack.c.l.b16 %v264
      %v385 = vunpack.c.l.b16 %v265
      %v386 = vunpack.c.l.b16 %v266
      %v387 = vunpack.c.l.b16 %v267
      %v388 = vunpack.c.l.b16 %v268
      %v389 = vunpack.c.l.b16 %v269
      %v390 = vunpack.c.l.b16 %v270
      %v391 = vunpack.c.l.b16 %v271
      %v392 = vunpack.c.l.b16 %v272
      %v393 = vunpack.c.l.b16 %v273
      %v394 = vunpack.c.l.b16 %v274
      %v395 = vunpack.c.l.b16 %v275
      %v396 = vunpack.c.l.b16 %v276
      %v397 = vunpack.c.l.b16 %v277
      %v398 = vunpack.c.l.b16 %v278
      %v399 = vunpack.c.l.b16 %v279
      %v400 = vunpack.c.l.b16 %v280
      %v401 = vunpack.c.l.b16 %v281
      %v402 = vunpack.c.l.b16 %v282
      %v403 = vunpack.c.l.b16 %v283
      %v404 = vunpack.c.l.b16 %v284
      %v405 = vunpack.c.l.b16 %v285
      %v406 = vunpack.c.l.b16 %v286
      %v407 = vunpack.c.l.b16 %v287
      %v408 = vunpack.c.l.b16 %v288
      %v409 = vunpack.c.l.b16 %v289
      %v410 = vunpack.c.l.b16 %v290
      %v411 = vunpack.c.l.b16 %v291
      %v412 = vunpack.c.l.b16 %v292
      %v413 = vunpack.c.l.b16 %v293
      %v414 = vunpack.c.l.b16 %v294
      %v415 = vpack.c.b16 %v356, %v355
      %v416 = vpack.c.b16 %v358, %v357
      %v417 = vpack.c.b16 %v360, %v359
      %v418 = vpack.c.b16 %v362, %v361
      %v419 = vpack.c.b16 %v364, %v363
      %v420 = vpack.c.b16 %v366, %v365
      %v421 = vpack.c.b16 %v368, %v367
      %v422 = vpack.c.b16 %v370, %v369
      %v423 = vpack.c.b16 %v372, %v371
      %v424 = vpack.c.b16 %v374, %v373
      %v425 = vpack.c.b16 %v376, %v375
      %v426 = vpack.c.b16 %v378, %v377
      %v427 = vpack.c.b16 %v380, %v379
      %v428 = vpack.c.b16 %v382, %v381
      %v429 = vpack.c.b16 %v384, %v383
      %v430 = vpack.c.b16 %v386, %v385
      %v431 = vpack.c.b16 %v388, %v387
      %v432 = vpack.c.b16 %v390, %v389
      %v433 = vpack.c.b16 %v392, %v391
      %v434 = vpack.c.b16 %v394, %v393
      %v435 = vpack.c.b16 %v396, %v395
      %v436 = vpack.c.b16 %v398, %v397
      %v437 = vpack.c.b16 %v400, %v399
      %v438 = vpack.c.b16 %v402, %v401
      %v439 = vpack.c.b16 %v404, %v403
      %v440 = vpack.c.b16 %v406, %v405
      %v441 = vpack.c.b16 %v408, %v407
      %v442 = vpack.c.b16 %v410, %v409
      %v443 = vpack.c.b16 %v412, %v411
      %v444 = vpack.c.b16 %v414, %v413
      %vm475 = vcmask 785408
      %v477 = vsel %vm475, %v234, 0
      %479 = vmatprep.subr.bf16.mxu0 0
      %480 = vmatpush1.bf16.msra.mxu0 %v415
      %481 = vmatprep.subr.bf16.mxu0 0
      %482 = vmatpush1.bf16.msra.mxu0 %v416
      %483 = vmatprep.subr.bf16.mxu0 0
      %484 = vmatpush1.bf16.msra.mxu0 %v417
      %485 = vmatprep.subr.bf16.mxu0 0
      %486 = vmatpush1.bf16.msra.mxu0 %v418
      %487 = vmatprep.subr.bf16.mxu0 0
      %488 = vmatpush1.bf16.msra.mxu0 %v419
      %489 = vmatprep.subr.bf16.mxu0 0
      %490 = vmatpush1.bf16.msra.mxu0 %v420
      %491 = vmatprep.subr.bf16.mxu0 0
      %492 = vmatpush1.bf16.msra.mxu0 %v421
      %493 = vmatprep.subr.bf16.mxu0 0
      %494 = vmatpush1.bf16.msra.mxu0 %v422
      %495 = vmatprep.subr.bf16.mxu0 0
      %496 = vmatpush1.bf16.msra.mxu0 %v423
      %497 = vmatprep.subr.bf16.mxu0 0
      %498 = vmatpush1.bf16.msra.mxu0 %v424
      %499 = vmatprep.subr.bf16.mxu0 0
      %500 = vmatpush1.bf16.msra.mxu0 %v425
      %501 = vmatprep.subr.bf16.mxu0 0
      %502 = vmatpush1.bf16.msra.mxu0 %v426
      %503 = vmatprep.subr.bf16.mxu0 0
      %504 = vmatpush1.bf16.msra.mxu0 %v427
      %505 = vmatprep.subr.bf16.mxu0 0
      %506 = vmatpush1.bf16.msra.mxu0 %v428
      %507 = vmatprep.subr.bf16.mxu0 0
      %508 = vmatpush1.bf16.msra.mxu0 %v429
      %509 = vmatprep.subr.bf16.mxu0 0
      %510 = vmatpush1.bf16.msra.mxu0 %v430
      %511 = vmatprep.mubr.bf16.mxu0 %v232
      %512 = vmatmul.mubr.bf16.gmra.mrb[0].mxu0 %v231
      %v513 = vpop.f32.mrb[0].mxu0
      %v514 = vadd.f32 0.0, %v513
      %v515 = vpop.f32.mrb[0].mxu0
      %v516 = vpop.f32.mrb[0].mxu0
      %v517 = vpop.f32.mrb[0].mxu0
      %518 = vdwg.mxu0
      %519 = vmatprep.subr.bf16.mxu0 0
      %520 = vmatpush1.bf16.msra.mxu0 %v431
      %521 = vmatprep.subr.bf16.mxu0 0
      %522 = vmatpush1.bf16.msra.mxu0 %v432
      %523 = vmatprep.subr.bf16.mxu0 0
      %524 = vmatpush1.bf16.msra.mxu0 %v433
      %525 = vmatprep.subr.bf16.mxu0 0
      %526 = vmatpush1.bf16.msra.mxu0 %v434
      %527 = vmatprep.subr.bf16.mxu0 0
      %528 = vmatpush1.bf16.msra.mxu0 %v435
      %529 = vmatprep.subr.bf16.mxu0 0
      %530 = vmatpush1.bf16.msra.mxu0 %v436
      %531 = vmatprep.subr.bf16.mxu0 0
      %532 = vmatpush1.bf16.msra.mxu0 %v437
      %533 = vmatprep.subr.bf16.mxu0 0
      %534 = vmatpush1.bf16.msra.mxu0 %v438
      %535 = vmatprep.subr.bf16.mxu0 0
      %536 = vmatpush1.bf16.msra.mxu0 %v439
      %537 = vmatprep.subr.bf16.mxu0 0
      %538 = vmatpush1.bf16.msra.mxu0 %v440
      %539 = vmatprep.subr.bf16.mxu0 0
      %540 = vmatpush1.bf16.msra.mxu0 %v441
      %541 = vmatprep.subr.bf16.mxu0 0
      %542 = vmatpush1.bf16.msra.mxu0 %v442
      %543 = vmatprep.subr.bf16.mxu0 0
      %544 = vmatpush1.bf16.msra.mxu0 %v443
      %545 = vmatprep.subr.bf16.mxu0 0
      %546 = vmatpush1.bf16.msra.mxu0 %v444
      %547 = vmatprep.subr.bf16.mxu0 0
      %548 = vmatpush1.bf16.msra.mxu0 0
      %549 = vmatprep.subr.bf16.mxu0 0
      %550 = vmatpush1.bf16.msra.mxu0 0
      %551 = vmatprep.mubr.bf16.mxu0 %v477
      %552 = vmatmul.mubr.bf16.gmra.mrb[0].mxu0 %v233
      %v553 = vpop.f32.mrb[0].mxu0
      %v554 = vadd.f32 %v514, %v553
      %v555 = vpop.f32.mrb[0].mxu0
      %v556 = vpop.f32.mrb[0].mxu0
      %v557 = vpop.f32.mrb[0].mxu0
      %558 = vdwg.mxu0
      %559 = vst [vmem:[%s175] sm:$0xff] %v554
      %v560 = vrot.slane %v554, 4
      %v561 = vadd.f32 %v554, %v560
      %v562 = vrot.slane %v561, 2
      %v563 = vadd.f32 %v561, %v562
      %v564 = vrot.slane %v563, 1
      %v565 = vadd.f32 %v563, %v564
      %566 = vst [vmem:[%s179] sm:$0x1] %v565
      %v567 = vmul.f32 %v554, %v554
      %v568 = vrot.slane %v567, 4
      %v569 = vadd.f32 %v567, %v568
      %v570 = vrot.slane %v569, 2
      %v571 = vadd.f32 %v569, %v570
      %v572 = vrot.slane %v571, 1
      %v573 = vadd.f32 %v571, %v572
      %574 = vst [vmem:[%s179 + $0x1] sm:$0x1] %v573
      %p575 = scmp.lt.s32.totalorder %s15, 1
      %s576 = scalar_select %p575, %s15, 1
      %s577 = smul.addr %s576, 8
      %s578 = scalar_lea.vmem %s2, %s577
      %p579 = scmp.lt.s32.totalorder %s15, 1
      %s580 = scalar_select %p579, %s15, 1
      %s581 = smul.addr %s580, 2
      %s582 = scalar_lea.vmem %s3, %s581
      // Predicated region
      $region29: #{conv_ae_forward.26} parent=27 // pred_check
        %p583 = pneg %p80
      $region30: #{conv_ae_forward.26} parent=27 // pred_check_branch
        %585 = sbr.rel (%p583) target = $region32
      $region31: #{conv_ae_forward.26} parent=27 // pred_region
        _
      $region32: #{conv_ae_forward.26} parent=27 // pred_fallthru
        _
      // Predicated region
      $region33: #{conv_ae_forward.26} parent=27 // pred_check
        %p586 = pneg %p106
      $region34: #{conv_ae_forward.26} parent=27 // pred_check_branch
        %588 = sbr.rel (%p586) target = $region36
      $region35: #{conv_ae_forward.26} parent=27 // pred_region
        _
      $region36: #{conv_ae_forward.26} parent=27 // pred_fallthru
        _
    $region28: #{conv_ae_forward.26} parent=5 // pred_fallthru
      _
    %p589 = scmp.le.s32.totalorder 2, %s10
    // Predicated region
    $region37: #{conv_ae_forward.26} parent=5 // pred_check
      %p590 = pneg %p589
    $region38: #{conv_ae_forward.26} parent=5 // pred_check_branch
      %592 = sbr.rel (%p590) target = $region40
    $region39: #{conv_ae_forward.26} parent=5 // pred_region
      %s593 = ssub.s32 %s10, 2
      // Predicated region
      $region41: #{conv_ae_forward.26} parent=39 // pred_check
        %p594 = pneg %p86
      $region42: #{conv_ae_forward.26} parent=39 // pred_check_branch
        %596 = sbr.rel (%p594) target = $region44
      $region43: #{conv_ae_forward.26} parent=39 // pred_region
        %p597 = scmp.lt.s32.totalorder %s16, 1
        %s598 = scalar_select %p597, %s16, 1
        %s599 = smul.addr %s598, 8
        %s600 = scalar_lea.vmem %s2, %s599
      $region44: #{conv_ae_forward.26} parent=39 // pred_fallthru
        _
      // Predicated region
      $region45: #{conv_ae_forward.26} parent=39 // pred_check
        %p601 = pneg %p112
      $region46: #{conv_ae_forward.26} parent=39 // pred_check_branch
        %603 = sbr.rel (%p601) target = $region48
      $region47: #{conv_ae_forward.26} parent=39 // pred_region
        %p604 = scmp.lt.s32.totalorder %s16, 1
        %s605 = scalar_select %p604, %s16, 1
        %s606 = smul.addr %s605, 2
        %s607 = scalar_lea.vmem %s3, %s606
      $region48: #{conv_ae_forward.26} parent=39 // pred_fallthru
        _
    $region40: #{conv_ae_forward.26} parent=5 // pred_fallthru
      _
  $region6: #{conv_ae_forward.26} parent=0 // loop_footer
    %s14 = sadd.s32 1, %s10
  $region7: #{conv_ae_forward.26} parent=0 // loop_footer_branch
    %9 = sbr.rel target = $region3
  $region8: #{conv_ae_forward.26} parent=0 // loop_exit
    _

// kernel: tile.113
$region0: #{tile.113}
  #allocation0 [shape = 's32[1]{0}', space=sflag, size = 0x4, scoped, tag = 'scoped memory for tile.113']
  %s0 = inlined_call_operand.vmem [shape: f32[16], index: 0, kind: input, shape index: {}]
  %s1 = inlined_call_operand.vmem [shape: f32[2,16], index: 1, kind: output, shape index: {}]
  // Predicated region
  $region2: #{tile.113} parent=0 // pred_check
    _
  $region3: #{tile.113} parent=0 // pred_check_branch
    %3 = sbr.rel (0) target = $region5
  $region4: #{tile.113} parent=0 // pred_region
    _
  $region5: #{tile.113} parent=0 // pred_fallthru
    _
  %v4 = vld [vmem:[%s0] ss:$0 sm:$0xff]
  %5 = vst [vmem:[%s1] sm:$0x3] %v4

// kernel: tile.114
$region0: #{tile.114}
  %s0 = inlined_call_operand.vmem [shape: f32[2,16], index: 0, kind: input, shape index: {}]
  %s1 = inlined_call_operand.vmem [shape: f32[1,1,1,32], index: 1, kind: output, shape index: {}]
  $region1: #{tile.114} parent=0
    #allocation0 [shape = 'u8[4096]{0}', space=vmem, size = 0x1000, scoped, tag = 'scoped mem for output reshape']
    #allocation1 [shape = 'u8[4096]{0}', space=vmem, size = 0x1000, scoped, tag = 'scoped mem for input reshape']
    %s3 = sshllo.u32 0, 2
    %v4 = vld [vmem:[%s0] sm:%s3]
    %5 = vst [vmem:[#allocation1] sm:%s3] %v4
    %v6 = vld [vmem:[#allocation1] sm:$0x1]
    %vm7 = vcmask 130048
    %8 = vst.msk [vmem:[#allocation0] sm:$0x1] %vm7, %v6
    %s9 = scalar_lea.vmem [#allocation1], 1
    %v10 = vld [vmem:[%s9] sm:$0x1]
    %11 = vrot.lane.b32.xlu0 %v10, 16
    %v12 = vpop.permute.xlu0 %11
    %vm13 = vcmask 261248
    %14 = vst.msk [vmem:[#allocation0] sm:$0x1] %vm13, %v12
    %s16 = sshllo.u32 0, 1
    %v18 = vld [vmem:[#allocation0] sm:%s16]
    %s19 = sshllo.u32 0, 1
    %20 = vst [vmem:[%s1] sm:%s19] %v18

// kernel: conv_ae_forward.27
$region0: #{conv_ae_forward.27}
  #allocation0 [shape = 'u32[]', space=smem, size = 0x4, offset = 0x4, fixed_abs, tag = 'smem constant byte address 0x4 - core index']
  #allocation1 [shape = 'u32[144,128]{1,0:T(1,128)}', space=vmem, size = 0x12000, scoped, tag = 'internal scratch']
  %s0 = inlined_call_operand.vmem [shape: f32[8,2,4,32], index: 0, kind: input, shape index: {}]
  %s1 = inlined_call_operand.vmem [shape: f32[1,1,1,32], index: 1, kind: input, shape index: {}]
  %s2 = inlined_call_operand.vmem [shape: f32[1,1,1,32], index: 2, kind: input, shape index: {}]
  %s3 = inlined_call_operand.vmem [shape: f32[8,4,16], index: 3, kind: output, shape index: {}]
  %s4 = sld [smem:[#allocation0]]
  $region22: #{conv_ae_forward.27} parent=0
    _
  %s6 = ssub.s32 1, %s4
  %s7 = scalar_select 0, %s6, %s4
  // Predicated region
  $region2: #{conv_ae_forward.27} parent=0 // pred_check
    _
  $region3: #{conv_ae_forward.27} parent=0 // pred_check_branch
    %9 = sbr.rel (0) target = $region5
  $region4: #{conv_ae_forward.27} parent=0 // pred_region
    _
  $region5: #{conv_ae_forward.27} parent=0 // pred_fallthru
    _
  // Predicated region
  $region6: #{conv_ae_forward.27} parent=0 // pred_check
    _
  $region7: #{conv_ae_forward.27} parent=0 // pred_check_branch
    %11 = sbr.rel (0) target = $region9
  $region8: #{conv_ae_forward.27} parent=0 // pred_region
    _
  $region9: #{conv_ae_forward.27} parent=0 // pred_fallthru
    _
  // Predicated region
  $region10: #{conv_ae_forward.27} parent=0 // pred_check
    _
  $region11: #{conv_ae_forward.27} parent=0 // pred_check_branch
    %13 = sbr.rel (0) target = $region13
  $region12: #{conv_ae_forward.27} parent=0 // pred_region
    _
  $region13: #{conv_ae_forward.27} parent=0 // pred_fallthru
    _
  %v14 = vld [vmem:[%s0] sm:$0xf]
  %v15 = vld [vmem:[%s0 + $0x4] sm:$0xf]
  %v16 = vld [vmem:[%s0 + $0x8] sm:$0xf]
  %v17 = vld [vmem:[%s0 + $0xc] sm:$0xf]
  %v18 = vld [vmem:[%s0 + $0x10] sm:$0xf]
  %v19 = vld [vmem:[%s0 + $0x14] sm:$0xf]
  %v20 = vld [vmem:[%s0 + $0x18] sm:$0xf]
  %v21 = vld [vmem:[%s0 + $0x1c] sm:$0xf]
  %v22 = vld [vmem:[%s0 + $0x20] sm:$0xf]
  %v23 = vld [vmem:[%s0 + $0x24] sm:$0xf]
  %v24 = vld [vmem:[%s0 + $0x28] sm:$0xf]
  %v25 = vld [vmem:[%s0 + $0x2c] sm:$0xf]
  %v26 = vld [vmem:[%s0 + $0x30] sm:$0xf]
  %v27 = vld [vmem:[%s0 + $0x34] sm:$0xf]
  %v28 = vld [vmem:[%s0 + $0x38] sm:$0xf]
  %v29 = vld [vmem:[%s0 + $0x3c] sm:$0xf]
  %v30 = vld [vmem:[%s1] sm:$0x1]
  %v32 = vlaneseq
  %v33 = vshrl.u32 %v32, 7
  %v34 = vsub.s32 0, %v33
  %v35 = vrot.slane %v30, %v34
  %v37 = vmul.f32 %v14, %v35
  %v38 = vmul.f32 %v15, %v35
  %v39 = vmul.f32 %v16, %v35
  %v40 = vmul.f32 %v17, %v35
  %v41 = vmul.f32 %v18, %v35
  %v42 = vmul.f32 %v19, %v35
  %v43 = vmul.f32 %v20, %v35
  %v44 = vmul.f32 %v21, %v35
  %v45 = vmul.f32 %v22, %v35
  %v46 = vmul.f32 %v23, %v35
  %v47 = vmul.f32 %v24, %v35
  %v48 = vmul.f32 %v25, %v35
  %v49 = vmul.f32 %v26, %v35
  %v50 = vmul.f32 %v27, %v35
  %v51 = vmul.f32 %v28, %v35
  %v52 = vmul.f32 %v29, %v35
  %v53 = vld [vmem:[%s2] sm:$0x1]
  %v55 = vlaneseq
  %v56 = vshrl.u32 %v55, 7
  %v57 = vsub.s32 0, %v56
  %v58 = vrot.slane %v53, %v57
  %v60 = vadd.f32 %v37, %v58
  %v61 = vadd.f32 %v38, %v58
  %v62 = vadd.f32 %v39, %v58
  %v63 = vadd.f32 %v40, %v58
  %v64 = vadd.f32 %v41, %v58
  %v65 = vadd.f32 %v42, %v58
  %v66 = vadd.f32 %v43, %v58
  %v67 = vadd.f32 %v44, %v58
  %v68 = vadd.f32 %v45, %v58
  %v69 = vadd.f32 %v46, %v58
  %v70 = vadd.f32 %v47, %v58
  %v71 = vadd.f32 %v48, %v58
  %v72 = vadd.f32 %v49, %v58
  %v73 = vadd.f32 %v50, %v58
  %v74 = vadd.f32 %v51, %v58
  %v75 = vadd.f32 %v52, %v58
  %v76 = vmax.f32 %v60, 0.0
  %v77 = vmax.f32 %v61, 0.0
  %v78 = vmax.f32 %v62, 0.0
  %v79 = vmax.f32 %v63, 0.0
  %v80 = vmax.f32 %v64, 0.0
  %v81 = vmax.f32 %v65, 0.0
  %v82 = vmax.f32 %v66, 0.0
  %v83 = vmax.f32 %v67, 0.0
  %v84 = vmax.f32 %v68, 0.0
  %v85 = vmax.f32 %v69, 0.0
  %v86 = vmax.f32 %v70, 0.0
  %v87 = vmax.f32 %v71, 0.0
  %v88 = vmax.f32 %v72, 0.0
  %v89 = vmax.f32 %v73, 0.0
  %v90 = vmax.f32 %v74, 0.0
  %v91 = vmax.f32 %v75, 0.0
  %v92 = vmax.f32 %v76, %v77
  %v93 = vmax.f32 %v78, %v79
  %v94 = vmax.f32 %v80, %v81
  %v95 = vmax.f32 %v82, %v83
  %v96 = vmax.f32 %v84, %v85
  %v97 = vmax.f32 %v86, %v87
  %v98 = vmax.f32 %v88, %v89
  %v99 = vmax.f32 %v90, %v91
  %108 = vrot.lane.b32.xlu0 %v92, 112
  %v109 = vpop.permute.xlu0 %108
  %110 = vrot.lane.b32.xlu0 %v93, 112
  %v111 = vpop.permute.xlu0 %110
  %112 = vrot.lane.b32.xlu0 %v94, 112
  %v113 = vpop.permute.xlu0 %112
  %114 = vrot.lane.b32.xlu0 %v95, 112
  %v115 = vpop.permute.xlu0 %114
  %116 = vrot.lane.b32.xlu0 %v96, 112
  %v117 = vpop.permute.xlu0 %116
  %118 = vrot.lane.b32.xlu0 %v97, 112
  %v119 = vpop.permute.xlu0 %118
  %120 = vrot.lane.b32.xlu0 %v98, 112
  %v121 = vpop.permute.xlu0 %120
  %122 = vrot.lane.b32.xlu0 %v99, 112
  %v123 = vpop.permute.xlu0 %122
  %v132 = vmax.f32 %v92, %v109
  %v133 = vmax.f32 %v93, %v111
  %v134 = vmax.f32 %v94, %v113
  %v135 = vmax.f32 %v95, %v115
  %v136 = vmax.f32 %v96, %v117
  %v137 = vmax.f32 %v97, %v119
  %v138 = vmax.f32 %v98, %v121
  %v139 = vmax.f32 %v99, %v123
  %vm140 = vcmask 125952
  %141 = vst.msk [vmem:[%s3] sm:$0xf] %vm140, %v132
  %142 = vst.msk [vmem:[%s3 + $0x4] sm:$0xf] %vm140, %v133
  %143 = vst.msk [vmem:[%s3 + $0x8] sm:$0xf] %vm140, %v134
  %144 = vst.msk [vmem:[%s3 + $0xc] sm:$0xf] %vm140, %v135
  %145 = vst.msk [vmem:[%s3 + $0x10] sm:$0xf] %vm140, %v136
  %146 = vst.msk [vmem:[%s3 + $0x14] sm:$0xf] %vm140, %v137
  %147 = vst.msk [vmem:[%s3 + $0x18] sm:$0xf] %vm140, %v138
  %148 = vst.msk [vmem:[%s3 + $0x1c] sm:$0xf] %vm140, %v139
  // Predicated region
  $region14: #{conv_ae_forward.27} parent=0 // pred_check
    _
  $region15: #{conv_ae_forward.27} parent=0 // pred_check_branch
    %150 = sbr.rel (0) target = $region17
  $region16: #{conv_ae_forward.27} parent=0 // pred_region
    _
  $region17: #{conv_ae_forward.27} parent=0 // pred_fallthru
    _
  // Predicated region
  $region18: #{conv_ae_forward.27} parent=0 // pred_check
    _
  $region19: #{conv_ae_forward.27} parent=0 // pred_check_branch
    %152 = sbr.rel (0) target = $region21
  $region20: #{conv_ae_forward.27} parent=0 // pred_region
    _
  $region21: #{conv_ae_forward.27} parent=0 // pred_fallthru
    _

// kernel: conv_ae_forward.28
$region0: #{conv_ae_forward.28}
  #allocation0 [shape = 'u32[]', space=smem, size = 0x4, offset = 0x4, fixed_abs, tag = 'smem constant byte address 0x4 - core index']
  #allocation1 [shape = 'u32[144,128]{1,0:T(1,128)}', space=vmem, size = 0x12000, scoped, tag = 'internal scratch']
  %s0 = inlined_call_operand.vmem [shape: f32[2,256], index: 0, kind: input, shape index: {}]
  %s1 = inlined_call_operand.vmem [shape: bf16[256,32], index: 1, kind: input, shape index: {}]
  %s2 = inlined_call_operand.vmem [shape: f32[1,32], index: 2, kind: input, shape index: {}]
  %s3 = inlined_call_operand.vmem [shape: f32[1,32], index: 3, kind: input, shape index: {}]
  %s4 = inlined_call_operand.vmem [shape: f32[1,32], index: 4, kind: input, shape index: {}]
  %s5 = inlined_call_operand.vmem [shape: f32[2,32], index: 5, kind: output, shape index: {}]
  %s6 = sld [smem:[#allocation0]]
  $region30: #{conv_ae_forward.28} parent=0
    _
  %s8 = ssub.s32 1, %s6
  %s9 = scalar_select 0, %s8, %s6
  // Predicated region
  $region2: #{conv_ae_forward.28} parent=0 // pred_check
    _
  $region3: #{conv_ae_forward.28} parent=0 // pred_check_branch
    %11 = sbr.rel (0) target = $region5
  $region4: #{conv_ae_forward.28} parent=0 // pred_region
    _
  $region5: #{conv_ae_forward.28} parent=0 // pred_fallthru
    _
  // Predicated region
  $region6: #{conv_ae_forward.28} parent=0 // pred_check
    _
  $region7: #{conv_ae_forward.28} parent=0 // pred_check_branch
    %13 = sbr.rel (0) target = $region9
  $region8: #{conv_ae_forward.28} parent=0 // pred_region
    _
  $region9: #{conv_ae_forward.28} parent=0 // pred_fallthru
    _
  // Predicated region
  $region10: #{conv_ae_forward.28} parent=0 // pred_check
    _
  $region11: #{conv_ae_forward.28} parent=0 // pred_check_branch
    %15 = sbr.rel (0) target = $region13
  $region12: #{conv_ae_forward.28} parent=0 // pred_region
    _
  $region13: #{conv_ae_forward.28} parent=0 // pred_fallthru
    _
  // Predicated region
  $region14: #{conv_ae_forward.28} parent=0 // pred_check
    _
  $region15: #{conv_ae_forward.28} parent=0 // pred_check_branch
    %17 = sbr.rel (0) target = $region17
  $region16: #{conv_ae_forward.28} parent=0 // pred_region
    _
  $region17: #{conv_ae_forward.28} parent=0 // pred_fallthru
    _
  // Predicated region
  $region18: #{conv_ae_forward.28} parent=0 // pred_check
    _
  $region19: #{conv_ae_forward.28} parent=0 // pred_check_branch
    %19 = sbr.rel (0) target = $region21
  $region20: #{conv_ae_forward.28} parent=0 // pred_region
    _
  $region21: #{conv_ae_forward.28} parent=0 // pred_fallthru
    _
  %v21 = vld [vmem:[%s0] sm:$0xf]
  %v24 = vunpack.c.l.s4 1983009808
  %v25 = vunpack.c.0.s8 %v24
  %v26 = vlaneseq
  %v27 = vshrl.u32 %v26, 7
  %v28 = vsub.s32 %v25, %v27
  %v29 = vrot.slane %v21, %v28
  %v30 = vcombine.high %v29, %v29
  %v33 = vpack.c.bf16 %v29, %v29
  %v34 = vpack.c.bf16 %v30, %v30
  %v35 = vld [vmem:[%s1] sm:$0xf]
  %v36 = vld [vmem:[%s1 + $0x4] sm:$0xf]
  %v37 = vld [vmem:[%s1 + $0x8] sm:$0xf]
  %v38 = vld [vmem:[%s1 + $0xc] sm:$0xf]
  %v39 = vld [vmem:[%s1 + $0x10] sm:$0xf]
  %v40 = vld [vmem:[%s1 + $0x14] sm:$0xf]
  %v41 = vld [vmem:[%s1 + $0x18] sm:$0xf]
  %v42 = vld [vmem:[%s1 + $0x1c] sm:$0xf]
  %v43 = vld [vmem:[%s1 + $0x20] sm:$0xf]
  %v44 = vld [vmem:[%s1 + $0x24] sm:$0xf]
  %v45 = vld [vmem:[%s1 + $0x28] sm:$0xf]
  %v46 = vld [vmem:[%s1 + $0x2c] sm:$0xf]
  %v47 = vld [vmem:[%s1 + $0x30] sm:$0xf]
  %v48 = vld [vmem:[%s1 + $0x34] sm:$0xf]
  %v49 = vld [vmem:[%s1 + $0x38] sm:$0xf]
  %v50 = vld [vmem:[%s1 + $0x3c] sm:$0xf]
  %v51 = vld [vmem:[%s1 + $0x40] sm:$0xf]
  %v52 = vld [vmem:[%s1 + $0x44] sm:$0xf]
  %v53 = vld [vmem:[%s1 + $0x48] sm:$0xf]
  %v54 = vld [vmem:[%s1 + $0x4c] sm:$0xf]
  %v55 = vld [vmem:[%s1 + $0x50] sm:$0xf]
  %v56 = vld [vmem:[%s1 + $0x54] sm:$0xf]
  %v57 = vld [vmem:[%s1 + $0x58] sm:$0xf]
  %v58 = vld [vmem:[%s1 + $0x5c] sm:$0xf]
  %v59 = vld [vmem:[%s1 + $0x60] sm:$0xf]
  %v60 = vld [vmem:[%s1 + $0x64] sm:$0xf]
  %v61 = vld [vmem:[%s1 + $0x68] sm:$0xf]
  %v62 = vld [vmem:[%s1 + $0x6c] sm:$0xf]
  %v63 = vld [vmem:[%s1 + $0x70] sm:$0xf]
  %v64 = vld [vmem:[%s1 + $0x74] sm:$0xf]
  %v65 = vld [vmem:[%s1 + $0x78] sm:$0xf]
  %v66 = vld [vmem:[%s1 + $0x7c] sm:$0xf]
  %v67 = vld [vmem:[%s2] sm:$0x1]
  %v69 = vlaneseq
  %v70 = vshrl.u32 %v69, 7
  %v71 = vsub.s32 0, %v70
  %v72 = vrot.slane %v67, %v71
  %v106 = vunpack.c.l.b16 %v35
  %v107 = vunpack.c.l.b16 %v36
  %v108 = vunpack.c.l.b16 %v37
  %v109 = vunpack.c.l.b16 %v38
  %v110 = vunpack.c.l.b16 %v39
  %v111 = vunpack.c.l.b16 %v40
  %v112 = vunpack.c.l.b16 %v41
  %v113 = vunpack.c.l.b16 %v42
  %v114 = vunpack.c.l.b16 %v43
  %v115 = vunpack.c.l.b16 %v44
  %v116 = vunpack.c.l.b16 %v45
  %v117 = vunpack.c.l.b16 %v46
  %v118 = vunpack.c.l.b16 %v47
  %v119 = vunpack.c.l.b16 %v48
  %v120 = vunpack.c.l.b16 %v49
  %v121 = vunpack.c.l.b16 %v50
  %v122 = vunpack.c.l.b16 %v51
  %v123 = vunpack.c.l.b16 %v52
  %v124 = vunpack.c.l.b16 %v53
  %v125 = vunpack.c.l.b16 %v54
  %v126 = vunpack.c.l.b16 %v55
  %v127 = vunpack.c.l.b16 %v56
  %v128 = vunpack.c.l.b16 %v57
  %v129 = vunpack.c.l.b16 %v58
  %v130 = vunpack.c.l.b16 %v59
  %v131 = vunpack.c.l.b16 %v60
  %v132 = vunpack.c.l.b16 %v61
  %v133 = vunpack.c.l.b16 %v62
  %v134 = vunpack.c.l.b16 %v63
  %v135 = vunpack.c.l.b16 %v64
  %v136 = vunpack.c.l.b16 %v65
  %v137 = vunpack.c.l.b16 %v66
  %v138 = vpack.c.b16 %v107, %v106
  %v139 = vpack.c.b16 %v109, %v108
  %v140 = vpack.c.b16 %v111, %v110
  %v141 = vpack.c.b16 %v113, %v112
  %v142 = vpack.c.b16 %v115, %v114
  %v143 = vpack.c.b16 %v117, %v116
  %v144 = vpack.c.b16 %v119, %v118
  %v145 = vpack.c.b16 %v121, %v120
  %v146 = vpack.c.b16 %v123, %v122
  %v147 = vpack.c.b16 %v125, %v124
  %v148 = vpack.c.b16 %v127, %v126
  %v149 = vpack.c.b16 %v129, %v128
  %v150 = vpack.c.b16 %v131, %v130
  %v151 = vpack.c.b16 %v133, %v132
  %v152 = vpack.c.b16 %v135, %v134
  %v153 = vpack.c.b16 %v137, %v136
  %170 = vmatprep.subr.bf16.mxu0 0
  %171 = vmatpush1.bf16.msra.mxu0 %v138
  %172 = vmatprep.subr.bf16.mxu0 0
  %173 = vmatpush1.bf16.msra.mxu0 %v139
  %174 = vmatprep.subr.bf16.mxu0 0
  %175 = vmatpush1.bf16.msra.mxu0 %v140
  %176 = vmatprep.subr.bf16.mxu0 0
  %177 = vmatpush1.bf16.msra.mxu0 %v141
  %178 = vmatprep.subr.bf16.mxu0 0
  %179 = vmatpush1.bf16.msra.mxu0 %v142
  %180 = vmatprep.subr.bf16.mxu0 0
  %181 = vmatpush1.bf16.msra.mxu0 %v143
  %182 = vmatprep.subr.bf16.mxu0 0
  %183 = vmatpush1.bf16.msra.mxu0 %v144
  %184 = vmatprep.subr.bf16.mxu0 0
  %185 = vmatpush1.bf16.msra.mxu0 %v145
  %186 = vmatprep.subr.bf16.mxu0 0
  %187 = vmatpush1.bf16.msra.mxu0 %v146
  %188 = vmatprep.subr.bf16.mxu0 0
  %189 = vmatpush1.bf16.msra.mxu0 %v147
  %190 = vmatprep.subr.bf16.mxu0 0
  %191 = vmatpush1.bf16.msra.mxu0 %v148
  %192 = vmatprep.subr.bf16.mxu0 0
  %193 = vmatpush1.bf16.msra.mxu0 %v149
  %194 = vmatprep.subr.bf16.mxu0 0
  %195 = vmatpush1.bf16.msra.mxu0 %v150
  %196 = vmatprep.subr.bf16.mxu0 0
  %197 = vmatpush1.bf16.msra.mxu0 %v151
  %198 = vmatprep.subr.bf16.mxu0 0
  %199 = vmatpush1.bf16.msra.mxu0 %v152
  %200 = vmatprep.subr.bf16.mxu0 0
  %201 = vmatpush1.bf16.msra.mxu0 %v153
  %202 = vmatprep.mubr.bf16.mxu0 %v34
  %203 = vmatmul.mubr.bf16.gmra.mrb[0].mxu0 %v33
  %v204 = vpop.f32.mrb[0].mxu0
  %v205 = vadd.f32 %v72, %v204
  %v206 = vpop.f32.mrb[0].mxu0
  %v207 = vpop.f32.mrb[0].mxu0
  %v208 = vpop.f32.mrb[0].mxu0
  %209 = vdwg.mxu0
  %vm210 = vcmask 254976
  %v211 = vsel %vm210, %v205, 0.0
  %212 = vadd.xlane.f32.xlu0 %v211
  %v213 = vpop.xlane.xlu0 %212
  %v214 = vrcp.pop 32.0
  %v215 = vmul.f32 %v213, %v214
  %v216 = vsub.f32 %v205, %v215
  %v217 = vmul.f32 %v216, %v216
  %v218 = vsel %vm210, %v217, 0.0
  %219 = vadd.xlane.f32.xlu0 %v218
  %v220 = vpop.xlane.xlu0 %219
  %v221 = vmul.f32 %v220, %v214
  %v222 = vadd.f32 %v221, 1e-05
  %v223 = vrsqrt.pop %v222
  %v224 = vmul.f32 %v216, %v223
  %v225 = vld [vmem:[%s3] sm:$0x1]
  %v227 = vlaneseq
  %v228 = vshrl.u32 %v227, 7
  %v229 = vsub.s32 0, %v228
  %v230 = vrot.slane %v225, %v229
  %v232 = vmul.f32 %v224, %v230
  %v233 = vld [vmem:[%s4] sm:$0x1]
  %v235 = vlaneseq
  %v236 = vshrl.u32 %v235, 7
  %v237 = vsub.s32 0, %v236
  %v238 = vrot.slane %v233, %v237
  %v240 = vadd.f32 %v232, %v238
  %v241 = vmax.f32 %v240, 0.0
  %242 = vst.msk [vmem:[%s5] sm:$0x3] %vm210, %v241
  // Predicated region
  $region22: #{conv_ae_forward.28} parent=0 // pred_check
    _
  $region23: #{conv_ae_forward.28} parent=0 // pred_check_branch
    %244 = sbr.rel (0) target = $region25
  $region24: #{conv_ae_forward.28} parent=0 // pred_region
    _
  $region25: #{conv_ae_forward.28} parent=0 // pred_fallthru
    _
  // Predicated region
  $region26: #{conv_ae_forward.28} parent=0 // pred_check
    _
  $region27: #{conv_ae_forward.28} parent=0 // pred_check_branch
    %246 = sbr.rel (0) target = $region29
  $region28: #{conv_ae_forward.28} parent=0 // pred_region
    _
  $region29: #{conv_ae_forward.28} parent=0 // pred_fallthru
    _

// kernel: conv_ae_forward.29
$region0: #{conv_ae_forward.29}
  #allocation0 [shape = 'u32[]', space=smem, size = 0x4, offset = 0x4, fixed_abs, tag = 'smem constant byte address 0x4 - core index']
  #allocation1 [shape = 'u32[144,128]{1,0:T(1,128)}', space=vmem, size = 0x12000, scoped, tag = 'internal scratch']
  %s0 = inlined_call_operand.vmem [shape: f32[2,32], index: 0, kind: input, shape index: {}]
  %s1 = inlined_call_operand.vmem [shape: bf16[32,256], index: 1, kind: input, shape index: {}]
  %s2 = inlined_call_operand.vmem [shape: f32[1,256], index: 2, kind: input, shape index: {}]
  %s3 = inlined_call_operand.vmem [shape: f32[1,256], index: 3, kind: input, shape index: {}]
  %s4 = inlined_call_operand.vmem [shape: f32[1,256], index: 4, kind: input, shape index: {}]
  %s5 = inlined_call_operand.vmem [shape: f32[2,256], index: 5, kind: output, shape index: {}]
  %s6 = sld [smem:[#allocation0]]
  $region30: #{conv_ae_forward.29} parent=0
    _
  %s8 = ssub.s32 1, %s6
  %s9 = scalar_select 0, %s8, %s6
  // Predicated region
  $region2: #{conv_ae_forward.29} parent=0 // pred_check
    _
  $region3: #{conv_ae_forward.29} parent=0 // pred_check_branch
    %11 = sbr.rel (0) target = $region5
  $region4: #{conv_ae_forward.29} parent=0 // pred_region
    _
  $region5: #{conv_ae_forward.29} parent=0 // pred_fallthru
    _
  // Predicated region
  $region6: #{conv_ae_forward.29} parent=0 // pred_check
    _
  $region7: #{conv_ae_forward.29} parent=0 // pred_check_branch
    %13 = sbr.rel (0) target = $region9
  $region8: #{conv_ae_forward.29} parent=0 // pred_region
    _
  $region9: #{conv_ae_forward.29} parent=0 // pred_fallthru
    _
  // Predicated region
  $region10: #{conv_ae_forward.29} parent=0 // pred_check
    _
  $region11: #{conv_ae_forward.29} parent=0 // pred_check_branch
    %15 = sbr.rel (0) target = $region13
  $region12: #{conv_ae_forward.29} parent=0 // pred_region
    _
  $region13: #{conv_ae_forward.29} parent=0 // pred_fallthru
    _
  // Predicated region
  $region14: #{conv_ae_forward.29} parent=0 // pred_check
    _
  $region15: #{conv_ae_forward.29} parent=0 // pred_check_branch
    %17 = sbr.rel (0) target = $region17
  $region16: #{conv_ae_forward.29} parent=0 // pred_region
    _
  $region17: #{conv_ae_forward.29} parent=0 // pred_fallthru
    _
  // Predicated region
  $region18: #{conv_ae_forward.29} parent=0 // pred_check
    _
  $region19: #{conv_ae_forward.29} parent=0 // pred_check_branch
    %19 = sbr.rel (0) target = $region21
  $region20: #{conv_ae_forward.29} parent=0 // pred_region
    _
  $region21: #{conv_ae_forward.29} parent=0 // pred_fallthru
    _
  %v21 = vld [vmem:[%s0] sm:$0x3]
  %v22 = vpack.c.bf16 %v21, %v21
  %v23 = vld [vmem:[%s1] sm:$0xff]
  %v24 = vld [vmem:[%s1 + $0x8] sm:$0xff]
  %v25 = vld [vmem:[%s1 + $0x10] sm:$0xff]
  %v26 = vld [vmem:[%s1 + $0x18] sm:$0xff]
  %v27 = vld [vmem:[%s2] sm:$0x3]
  %v29 = vlaneseq
  %v30 = vshrl.u32 %v29, 7
  %v31 = vsub.s32 0, %v30
  %v32 = vrot.slane %v27, %v31
  %v33 = vlaneseq
  %v34 = vshrl.u32 %v33, 7
  %v35 = vsub.s32 1, %v34
  %v36 = vrot.slane %v27, %v35
  %v43 = vunpack.c.l.b16 %v23
  %v44 = vunpack.c.h.b16 %v23
  %v45 = vunpack.c.l.b16 %v24
  %v46 = vunpack.c.h.b16 %v24
  %v47 = vunpack.c.l.b16 %v25
  %v48 = vunpack.c.h.b16 %v25
  %v49 = vunpack.c.l.b16 %v26
  %v50 = vunpack.c.h.b16 %v26
  %v51 = vpack.c.b16 %v45, %v43
  %v52 = vpack.c.b16 %v46, %v44
  %v53 = vpack.c.b16 %v49, %v47
  %v54 = vpack.c.b16 %v50, %v48
  %vm59 = vcmask 261120
  %v61 = vsel %vm59, %v22, 0
  %63 = vmatprep.subr.bf16.mxu0 %v52
  %64 = vmatpush1.bf16.msra.mxu0 %v51
  %65 = vmatprep.subr.bf16.mxu0 %v54
  %66 = vmatpush1.bf16.msra.mxu0 %v53
  %67 = vmatprep.subr.bf16.mxu0 0
  %68 = vmatpush1.bf16.msra.mxu0 0
  %69 = vmatprep.subr.bf16.mxu0 0
  %70 = vmatpush1.bf16.msra.mxu0 0
  %71 = vmatprep.subr.bf16.mxu0 0
  %72 = vmatpush1.bf16.msra.mxu0 0
  %73 = vmatprep.subr.bf16.mxu0 0
  %74 = vmatpush1.bf16.msra.mxu0 0
  %75 = vmatprep.subr.bf16.mxu0 0
  %76 = vmatpush1.bf16.msra.mxu0 0
  %77 = vmatprep.subr.bf16.mxu0 0
  %78 = vmatpush1.bf16.msra.mxu0 0
  %79 = vmatprep.subr.bf16.mxu0 0
  %80 = vmatpush1.bf16.msra.mxu0 0
  %81 = vmatprep.subr.bf16.mxu0 0
  %82 = vmatpush1.bf16.msra.mxu0 0
  %83 = vmatprep.subr.bf16.mxu0 0
  %84 = vmatpush1.bf16.msra.mxu0 0
  %85 = vmatprep.subr.bf16.mxu0 0
  %86 = vmatpush1.bf16.msra.mxu0 0
  %87 = vmatprep.subr.bf16.mxu0 0
  %88 = vmatpush1.bf16.msra.mxu0 0
  %89 = vmatprep.subr.bf16.mxu0 0
  %90 = vmatpush1.bf16.msra.mxu0 0
  %91 = vmatprep.subr.bf16.mxu0 0
  %92 = vmatpush1.bf16.msra.mxu0 0
  %93 = vmatprep.subr.bf16.mxu0 0
  %94 = vmatpush1.bf16.msra.mxu0 0
  %95 = vmatprep.mubr.bf16.mxu0 0
  %96 = vmatmul.mubr.bf16.gmra.mrb[0].mxu0 %v61
  %v97 = vpop.f32.mrb[0].mxu0
  %v98 = vadd.f32 %v32, %v97
  %v99 = vpop.f32.mrb[0].mxu0
  %v100 = vadd.f32 %v36, %v99
  %v101 = vpop.f32.mrb[0].mxu0
  %v102 = vpop.f32.mrb[0].mxu0
  %103 = vdwg.mxu0
  %vm104 = vcmask 1041408
  %v105 = vsel %vm104, %v98, 0.0
  %v106 = vsel %vm104, %v100, 0.0
  %v107 = vadd.f32 %v105, %v106
  %108 = vadd.xlane.f32.xlu0 %v107
  %v109 = vpop.xlane.xlu0 %108
  %v110 = vrcp.pop 256.0
  %v111 = vmul.f32 %v109, %v110
  %v112 = vsub.f32 %v98, %v111
  %v113 = vsub.f32 %v100, %v111
  %v114 = vmul.f32 %v112, %v112
  %v115 = vmul.f32 %v113, %v113
  %v116 = vsel %vm104, %v114, 0.0
  %v117 = vsel %vm104, %v115, 0.0
  %v118 = vadd.f32 %v116, %v117
  %119 = vadd.xlane.f32.xlu0 %v118
  %v120 = vpop.xlane.xlu0 %119
  %v121 = vmul.f32 %v120, %v110
  %v122 = vadd.f32 %v121, 1e-05
  %v123 = vrsqrt.pop %v122
  %v124 = vmul.f32 %v112, %v123
  %v125 = vmul.f32 %v113, %v123
  %v126 = vld [vmem:[%s3] sm:$0x3]
  %v128 = vlaneseq
  %v129 = vshrl.u32 %v128, 7
  %v130 = vsub.s32 0, %v129
  %v131 = vrot.slane %v126, %v130
  %v132 = vlaneseq
  %v133 = vshrl.u32 %v132, 7
  %v134 = vsub.s32 1, %v133
  %v135 = vrot.slane %v126, %v134
  %v138 = vmul.f32 %v124, %v131
  %v139 = vmul.f32 %v125, %v135
  %v140 = vld [vmem:[%s4] sm:$0x3]
  %v142 = vlaneseq
  %v143 = vshrl.u32 %v142, 7
  %v144 = vsub.s32 0, %v143
  %v145 = vrot.slane %v140, %v144
  %v146 = vlaneseq
  %v147 = vshrl.u32 %v146, 7
  %v148 = vsub.s32 1, %v147
  %v149 = vrot.slane %v140, %v148
  %v152 = vadd.f32 %v138, %v145
  %v153 = vadd.f32 %v139, %v149
  %v154 = vmax.f32 %v152, 0.0
  %v155 = vmax.f32 %v153, 0.0
  %v158 = vcombine.low %v154, %v155
  %v160 = vunpack.c.l.s4 1983009808
  %v161 = vunpack.c.0.s8 %v160
  %v162 = vlaneseq
  %v163 = vshrl.u32 %v162, 7
  %v164 = vsub.s32 %v161, %v163
  %v165 = vrot.slane %v158, %v164
  %167 = vst [vmem:[%s5] sm:$0xf] %v165
  // Predicated region
  $region22: #{conv_ae_forward.29} parent=0 // pred_check
    _
  $region23: #{conv_ae_forward.29} parent=0 // pred_check_branch
    %169 = sbr.rel (0) target = $region25
  $region24: #{conv_ae_forward.29} parent=0 // pred_region
    _
  $region25: #{conv_ae_forward.29} parent=0 // pred_fallthru
    _
  // Predicated region
  $region26: #{conv_ae_forward.29} parent=0 // pred_check
    _
  $region27: #{conv_ae_forward.29} parent=0 // pred_check_branch
    %171 = sbr.rel (0) target = $region29
  $region28: #{conv_ae_forward.29} parent=0 // pred_region
    _
  $region29: #{conv_ae_forward.29} parent=0 // pred_fallthru
    _

// kernel: tile.123
$region0: #{tile.123}
  #allocation0 [shape = 's32[1]{0}', space=sflag, size = 0x4, scoped, tag = 'scoped memory for tile.123']
  %s0 = inlined_call_operand.vmem [shape: f32[16], index: 0, kind: input, shape index: {}]
  %s1 = inlined_call_operand.vmem [shape: f32[4,16], index: 1, kind: output, shape index: {}]
  // Predicated region
  $region2: #{tile.123} parent=0 // pred_check
    _
  $region3: #{tile.123} parent=0 // pred_check_branch
    %3 = sbr.rel (0) target = $region5
  $region4: #{tile.123} parent=0 // pred_region
    _
  $region5: #{tile.123} parent=0 // pred_fallthru
    _
  %v4 = vld [vmem:[%s0] ss:$0 sm:$0xff]
  %5 = vst [vmem:[%s1] sm:$0xf] %v4

// kernel: tile.124
$region0: #{tile.124}
  %s0 = inlined_call_operand.vmem [shape: f32[4,16], index: 0, kind: input, shape index: {}]
  %s1 = inlined_call_operand.vmem [shape: f32[1,64], index: 1, kind: output, shape index: {}]
  $region1: #{tile.124} parent=0
    #allocation0 [shape = 'u8[4096]{0}', space=vmem, size = 0x1000, scoped, tag = 'scoped mem for output reshape']
    #allocation1 [shape = 'u8[4096]{0}', space=vmem, size = 0x1000, scoped, tag = 'scoped mem for input reshape']
    %s3 = sshllo.u32 0, 4
    %v4 = vld [vmem:[%s0] sm:%s3]
    %5 = vst [vmem:[#allocation1] sm:%s3] %v4
    %v6 = vld [vmem:[#allocation1] sm:$0x1]
    %vm7 = vcmask 130048
    %8 = vst.msk [vmem:[#allocation0] sm:$0x1] %vm7, %v6
    %s9 = scalar_lea.vmem [#allocation1], 3
    %v10 = vld [vmem:[%s9] sm:$0x1]
    %11 = vrot.lane.b32.xlu0 %v10, 48
    %v12 = vpop.permute.xlu0 %11
    %vm13 = vcmask 523648
    %14 = vst.msk [vmem:[#allocation0] sm:$0x1] %vm13, %v12
    %s15 = scalar_lea.vmem [#allocation1], 2
    %v16 = vld [vmem:[%s15] sm:$0x1]
    %17 = vrot.lane.b32.xlu0 %v16, 32
    %v18 = vpop.permute.xlu0 %17
    %vm19 = vcmask 392448
    %20 = vst.msk [vmem:[#allocation0] sm:$0x1] %vm19, %v18
    %s21 = scalar_lea.vmem [#allocation1], 1
    %v22 = vld [vmem:[%s21] sm:$0x1]
    %23 = vrot.lane.b32.xlu0 %v22, 16
    %v24 = vpop.permute.xlu0 %23
    %vm25 = vcmask 261248
    %26 = vst.msk [vmem:[#allocation0] sm:$0x1] %vm25, %v24
    %s28 = sshllo.u32 0, 1
    %v30 = vld [vmem:[#allocation0] sm:%s28]
    %s31 = sshllo.u32 0, 1
    %32 = vst [vmem:[%s1] sm:%s31] %v30

// kernel: conv_ae_forward.30
$region0: #{conv_ae_forward.30}
  #allocation0 [shape = 'u32[]', space=smem, size = 0x4, offset = 0x4, fixed_abs, tag = 'smem constant byte address 0x4 - core index']
  #allocation1 [shape = 'u32[144,128]{1,0:T(1,128)}', space=vmem, size = 0x12000, scoped, tag = 'internal scratch']
  %s0 = inlined_call_operand.vmem [shape: f32[2,6,96], index: 0, kind: input, shape index: {}]
  %s1 = inlined_call_operand.vmem [shape: bf16[288,64], index: 1, kind: input, shape index: {}]
  %s2 = inlined_call_operand.vmem [shape: f32[2,4,64], index: 2, kind: output, shape index: {0}]
  %s3 = inlined_call_operand.vmem [shape: f32[2,2,64], index: 3, kind: output, shape index: {1}]
  %4 = xla_tuple %s2, %s3
  %s5 = sld [smem:[#allocation0]]
  $region49: #{conv_ae_forward.30} parent=0
    _
  %s7 = ssub.s32 1, %s5
  %s8 = scalar_select 0, %s7, %s5
  loop: start=0, step=1, limit=4
  $region2: #{conv_ae_forward.30} parent=0 // loop_pre_header
    _
  $region3: #{conv_ae_forward.30} parent=0 // loop_header
    %s10 = sphi 0, %s14
    %p11 = scmp.ge.s32.totalorder %s10, 4
    %s20 = sphi 0, %s22
    %s23 = sphi 0, %s20
    %s24 = sphi 0, %s23
    %s40 = sphi 0, %s24
    %s44 = sphi 0, %s44
    %s46 = sphi 0, %s44
    %s47 = sphi 0, %s46
    %s61 = sphi 0, %s47
    %s67 = sphi 0, %s69
    %s70 = sphi 0, %s67
    %s71 = sphi 0, %s70
    %s87 = sphi 0, %s71
    %s93 = sphi 0, %s95
    %s96 = sphi 0, %s93
    %s97 = sphi 0, %s96
    %s113 = sphi 0, %s97
  $region4: #{conv_ae_forward.30} parent=0 // loop_header_branch
    %13 = sbr.rel (%p11) target = $region8
  $region5: #{conv_ae_forward.30} parent=0 // loop_body
    %s15 = ssub.s32 %s10, 1
    %s16 = ssub.s32 %s10, 2
    %s17 = sadd.s32 %s10, 1
    %s18 = ssub.s32 %s10, %s17
    %p19 = scmp.eq.s32.totalorder %s18, 0
    %s21 = sadd.s32 %s20, 1
    %s22 = scalar_select %p19, %s20, %s21
    %p25 = pneg %p19
    %p26 = scmp.eq.s32.totalorder %s10, 1
    %p27 = por %p25, %p26
    %p28 = scmp.ne.s32.totalorder %s20, %s23
    %p29 = scmp.eq.s32.totalorder %s10, 0
    %p30 = por %p28, %p29
    %p31 = scmp.ne.s32.totalorder %s20, %s23
    %p32 = scmp.eq.s32.totalorder %s15, 1
    %p33 = por %p31, %p32
    %p34 = scmp.ne.s32.totalorder %s23, %s24
    %p35 = scmp.eq.s32.totalorder %s15, 0
    %p36 = por %p34, %p35
    %p37 = scmp.ne.s32.totalorder %s23, %s24
    %p38 = scmp.eq.s32.totalorder %s16, 1
    %p39 = por %p37, %p38
    %p41 = scmp.ne.s32.totalorder %s24, %s40
    %p42 = scmp.eq.s32.totalorder %s16, 0
    %p43 = por %p41, %p42
    %s45 = sadd.s32 %s44, 1
    %p48 = scmp.eq.s32.totalorder %s10, 1
    %p49 = scmp.ne.s32.totalorder %s44, %s46
    %p50 = scmp.eq.s32.totalorder %s10, 0
    %p51 = por %p49, %p50
    %p52 = scmp.ne.s32.totalorder %s44, %s46
    %p53 = scmp.eq.s32.totalorder %s15, 1
    %p54 = por %p52, %p53
    %p55 = scmp.ne.s32.totalorder %s46, %s47
    %p56 = scmp.eq.s32.totalorder %s15, 0
    %p57 = por %p55, %p56
    %p58 = scmp.ne.s32.totalorder %s46, %s47
    %p59 = scmp.eq.s32.totalorder %s16, 1
    %p60 = por %p58, %p59
    %p62 = scmp.ne.s32.totalorder %s47, %s61
    %p63 = scmp.eq.s32.totalorder %s16, 0
    %p64 = por %p62, %p63
    %s65 = ssub.s32 %s10, %s17
    %p66 = scmp.eq.s32.totalorder %s65, 0
    %s68 = sadd.s32 %s67, 1
    %s69 = scalar_select %p66, %s67, %s68
    %p72 = pneg %p66
    %p73 = scmp.eq.s32.totalorder %s10, 1
    %p74 = por %p72, %p73
    %p75 = scmp.ne.s32.totalorder %s67, %s70
    %p76 = scmp.eq.s32.totalorder %s10, 0
    %p77 = por %p75, %p76
    %p78 = scmp.ne.s32.totalorder %s67, %s70
    %p79 = scmp.eq.s32.totalorder %s15, 1
    %p80 = por %p78, %p79
    %p81 = scmp.ne.s32.totalorder %s70, %s71
    %p82 = scmp.eq.s32.totalorder %s15, 0
    %p83 = por %p81, %p82
    %p84 = scmp.ne.s32.totalorder %s70, %s71
    %p85 = scmp.eq.s32.totalorder %s16, 1
    %p86 = por %p84, %p85
    %p88 = scmp.ne.s32.totalorder %s71, %s87
    %p89 = scmp.eq.s32.totalorder %s16, 0
    %p90 = por %p88, %p89
    %s91 = ssub.s32 %s10, %s17
    %p92 = scmp.eq.s32.totalorder %s91, 0
    %s94 = sadd.s32 %s93, 1
    %s95 = scalar_select %p92, %s93, %s94
    %p98 = pneg %p92
    %p99 = scmp.eq.s32.totalorder %s10, 1
    %p100 = por %p98, %p99
    %p101 = scmp.ne.s32.totalorder %s93, %s96
    %p102 = scmp.eq.s32.totalorder %s10, 0
    %p103 = por %p101, %p102
    %p104 = scmp.ne.s32.totalorder %s93, %s96
    %p105 = scmp.eq.s32.totalorder %s15, 1
    %p106 = por %p104, %p105
    %p107 = scmp.ne.s32.totalorder %s96, %s97
    %p108 = scmp.eq.s32.totalorder %s15, 0
    %p109 = por %p107, %p108
    %p110 = scmp.ne.s32.totalorder %s96, %s97
    %p111 = scmp.eq.s32.totalorder %s16, 1
    %p112 = por %p110, %p111
    %p114 = scmp.ne.s32.totalorder %s97, %s113
    %p115 = scmp.eq.s32.totalorder %s16, 0
    %p116 = por %p114, %p115
    %p117 = scmp.le.s32.totalorder 1, %s10
    %p118 = scmp.lt.s32.totalorder %s10, 3
    %p119 = pnand %p117, %p118
    %p120 = pneg %p119
    // Predicated region
    $region9: #{conv_ae_forward.30} parent=5 // pred_check
      _
    $region10: #{conv_ae_forward.30} parent=5 // pred_check_branch
      %122 = sbr.rel (%p119) target = $region12
    $region11: #{conv_ae_forward.30} parent=5 // pred_region
      %s123 = ssub.s32 %s10, 1
      // Predicated region
      $region13: #{conv_ae_forward.30} parent=11 // pred_check
        %p124 = pneg %p57
      $region14: #{conv_ae_forward.30} parent=11 // pred_check_branch
        %126 = sbr.rel (%p124) target = $region16
      $region15: #{conv_ae_forward.30} parent=11 // pred_region
        _
      $region16: #{conv_ae_forward.30} parent=11 // pred_fallthru
        _
    $region12: #{conv_ae_forward.30} parent=5 // pred_fallthru
      _
    %p127 = scmp.lt.s32.totalorder %s10, 2
    // Predicated region
    $region17: #{conv_ae_forward.30} parent=5 // pred_check
      %p128 = pneg %p127
    $region18: #{conv_ae_forward.30} parent=5 // pred_check_branch
      %130 = sbr.rel (%p128) target = $region20
    $region19: #{conv_ae_forward.30} parent=5 // pred_region
      // Predicated region
      $region21: #{conv_ae_forward.30} parent=19 // pred_check
        %p131 = pneg %p30
      $region22: #{conv_ae_forward.30} parent=19 // pred_check_branch
        %133 = sbr.rel (%p131) target = $region24
      $region23: #{conv_ae_forward.30} parent=19 // pred_region
        %p134 = scmp.lt.s32.totalorder %s10, 1
        %s135 = scalar_select %p134, %s10, 1
        %s136 = smul.addr %s135, 8
        %s137 = scalar_lea.vmem %s0, %s136
      $region24: #{conv_ae_forward.30} parent=19 // pred_fallthru
        _
    $region20: #{conv_ae_forward.30} parent=5 // pred_fallthru
      _
    %p138 = scmp.le.s32.totalorder 1, %s10
    %p139 = scmp.lt.s32.totalorder %s10, 3
    %p140 = pnand %p138, %p139
    %p141 = pneg %p140
    // Predicated region
    $region25: #{conv_ae_forward.30} parent=5 // pred_check
      _
    $region26: #{conv_ae_forward.30} parent=5 // pred_check_branch
      %143 = sbr.rel (%p140) target = $region28
    $region27: #{conv_ae_forward.30} parent=5 // pred_region
      %s144 = ssub.s32 %s10, 1
      %p145 = scmp.lt.s32.totalorder %s15, 1
      %s146 = scalar_select %p145, %s15, 1
      %s147 = smul.addr %s146, 8
      %s148 = scalar_lea.vmem %s0, %s147
      %p149 = pneg %p36
      %p150 = pneg %p33
      %p151 = pneg %p57
      %p152 = pneg %p54
      %p153 = pneg %p83
      %p154 = pneg %p80
      %p155 = scmp.lt.s32.totalorder %s15, 1
      %s156 = scalar_select %p155, %s15, 1
      %s157 = smul.addr %s156, 4
      %s158 = scalar_lea.vmem %s2, %s157
      %p159 = pneg %p109
      %p160 = pneg %p106
      %p161 = scmp.lt.s32.totalorder %s15, 1
      %s162 = scalar_select %p161, %s15, 1
      %s163 = smul.addr %s162, 2
      %s164 = scalar_lea.vmem %s3, %s163
      %p165 = scmp.lt.s32.totalorder %s15, 1
      %s166 = scalar_select %p165, %s15, 1
      %s167 = smul.addr %s166, 8
      %s168 = scalar_lea.vmem %s0, %s167
      %p169 = scmp.lt.s32.totalorder %s15, 1
      %s170 = scalar_select %p169, %s15, 1
      %s171 = smul.addr %s170, 4
      %s172 = scalar_lea.vmem %s2, %s171
      %p173 = scmp.lt.s32.totalorder %s15, 1
      %s174 = scalar_select %p173, %s15, 1
      %s175 = smul.addr %s174, 2
      %s176 = scalar_lea.vmem %s3, %s175
      %v178 = vld [vmem:[%s168] sm:$0xf]
      %v179 = vld [vmem:[%s168 + $0x1] sm:$0xf]
      %v180 = vld [vmem:[%s168 + $0x2] sm:$0xf]
      %182 = vrot.lane.b32.xlu0 %v179, 96
      %v183 = vpop.permute.xlu0 %182
      %186 = vrot.lane.b32.xlu0 %v180, 64
      %v187 = vpop.permute.xlu0 %186
      %vm189 = vcmask 785408
      %v190 = vsel %vm189, %v178, %v183
      %vm191 = vcmask 523264
      %v192 = vsel %vm191, %v183, %v187
      %v193 = vpack.c.bf16 %v190, %v190
      %v194 = vpack.c.bf16 %v192, %v192
      %v195 = vpack.c.bf16 %v187, %v187
      %v196 = vld [vmem:[%s1] sm:$0xf]
      %v197 = vld [vmem:[%s1 + $0x4] sm:$0xf]
      %v198 = vld [vmem:[%s1 + $0x8] sm:$0xf]
      %v199 = vld [vmem:[%s1 + $0xc] sm:$0xf]
      %v200 = vld [vmem:[%s1 + $0x10] sm:$0xf]
      %v201 = vld [vmem:[%s1 + $0x14] sm:$0xf]
      %v202 = vld [vmem:[%s1 + $0x18] sm:$0xf]
      %v203 = vld [vmem:[%s1 + $0x1c] sm:$0xf]
      %v204 = vld [vmem:[%s1 + $0x20] sm:$0xf]
      %v205 = vld [vmem:[%s1 + $0x24] sm:$0xf]
      %v206 = vld [vmem:[%s1 + $0x28] sm:$0xf]
      %v207 = vld [vmem:[%s1 + $0x2c] sm:$0xf]
      %v208 = vld [vmem:[%s1 + $0x30] sm:$0xf]
      %v209 = vld [vmem:[%s1 + $0x34] sm:$0xf]
      %v210 = vld [vmem:[%s1 + $0x38] sm:$0xf]
      %v211 = vld [vmem:[%s1 + $0x3c] sm:$0xf]
      %v212 = vld [vmem:[%s1 + $0x40] sm:$0xf]
      %v213 = vld [vmem:[%s1 + $0x44] sm:$0xf]
      %v214 = vld [vmem:[%s1 + $0x48] sm:$0xf]
      %v215 = vld [vmem:[%s1 + $0x4c] sm:$0xf]
      %v216 = vld [vmem:[%s1 + $0x50] sm:$0xf]
      %v217 = vld [vmem:[%s1 + $0x54] sm:$0xf]
      %v218 = vld [vmem:[%s1 + $0x58] sm:$0xf]
      %v219 = vld [vmem:[%s1 + $0x5c] sm:$0xf]
      %v220 = vld [vmem:[%s1 + $0x60] sm:$0xf]
      %v221 = vld [vmem:[%s1 + $0x64] sm:$0xf]
      %v222 = vld [vmem:[%s1 + $0x68] sm:$0xf]
      %v223 = vld [vmem:[%s1 + $0x6c] sm:$0xf]
      %v224 = vld [vmem:[%s1 + $0x70] sm:$0xf]
      %v225 = vld [vmem:[%s1 + $0x74] sm:$0xf]
      %v226 = vld [vmem:[%s1 + $0x78] sm:$0xf]
      %v227 = vld [vmem:[%s1 + $0x7c] sm:$0xf]
      %v228 = vld [vmem:[%s1 + $0x80] sm:$0xf]
      %v229 = vld [vmem:[%s1 + $0x84] sm:$0xf]
      %v230 = vld [vmem:[%s1 + $0x88] sm:$0xf]
      %v231 = vld [vmem:[%s1 + $0x8c] sm:$0xf]
      %v268 = vunpack.c.l.b16 %v196
      %v269 = vunpack.c.l.b16 %v197
      %v270 = vunpack.c.l.b16 %v198
      %v271 = vunpack.c.l.b16 %v199
      %v272 = vunpack.c.l.b16 %v200
      %v273 = vunpack.c.l.b16 %v201
      %v274 = vunpack.c.l.b16 %v202
      %v275 = vunpack.c.l.b16 %v203
      %v276 = vunpack.c.l.b16 %v204
      %v277 = vunpack.c.l.b16 %v205
      %v278 = vunpack.c.l.b16 %v206
      %v279 = vunpack.c.l.b16 %v207
      %v280 = vunpack.c.l.b16 %v208
      %v281 = vunpack.c.l.b16 %v209
      %v282 = vunpack.c.l.b16 %v210
      %v283 = vunpack.c.l.b16 %v211
      %v284 = vunpack.c.l.b16 %v212
      %v285 = vunpack.c.l.b16 %v213
      %v286 = vunpack.c.l.b16 %v214
      %v287 = vunpack.c.l.b16 %v215
      %v288 = vunpack.c.l.b16 %v216
      %v289 = vunpack.c.l.b16 %v217
      %v290 = vunpack.c.l.b16 %v218
      %v291 = vunpack.c.l.b16 %v219
      %v292 = vunpack.c.l.b16 %v220
      %v293 = vunpack.c.l.b16 %v221
      %v294 = vunpack.c.l.b16 %v222
      %v295 = vunpack.c.l.b16 %v223
      %v296 = vunpack.c.l.b16 %v224
      %v297 = vunpack.c.l.b16 %v225
      %v298 = vunpack.c.l.b16 %v226
      %v299 = vunpack.c.l.b16 %v227
      %v300 = vunpack.c.l.b16 %v228
      %v301 = vunpack.c.l.b16 %v229
      %v302 = vunpack.c.l.b16 %v230
      %v303 = vunpack.c.l.b16 %v231
      %v304 = vpack.c.b16 %v269, %v268
      %v305 = vpack.c.b16 %v271, %v270
      %v306 = vpack.c.b16 %v273, %v272
      %v307 = vpack.c.b16 %v275, %v274
      %v308 = vpack.c.b16 %v277, %v276
      %v309 = vpack.c.b16 %v279, %v278
      %v310 = vpack.c.b16 %v281, %v280
      %v311 = vpack.c.b16 %v283, %v282
      %v312 = vpack.c.b16 %v285, %v284
      %v313 = vpack.c.b16 %v287, %v286
      %v314 = vpack.c.b16 %v289, %v288
      %v315 = vpack.c.b16 %v291, %v290
      %v316 = vpack.c.b16 %v293, %v292
      %v317 = vpack.c.b16 %v295, %v294
      %v318 = vpack.c.b16 %v297, %v296
      %v319 = vpack.c.b16 %v299, %v298
      %v320 = vpack.c.b16 %v301, %v300
      %v321 = vpack.c.b16 %v303, %v302
      %vm340 = vcmask 261120
      %v342 = vsel %vm340, %v195, 0
      %344 = vmatprep.subr.bf16.mxu0 0
      %345 = vmatpush1.bf16.msra.mxu0 %v304
      %346 = vmatprep.subr.bf16.mxu0 0
      %347 = vmatpush1.bf16.msra.mxu0 %v305
      %348 = vmatprep.subr.bf16.mxu0 0
      %349 = vmatpush1.bf16.msra.mxu0 %v306
      %350 = vmatprep.subr.bf16.mxu0 0
      %351 = vmatpush1.bf16.msra.mxu0 %v307
      %352 = vmatprep.subr.bf16.mxu0 0
      %353 = vmatpush1.bf16.msra.mxu0 %v308
      %354 = vmatprep.subr.bf16.mxu0 0
      %355 = vmatpush1.bf16.msra.mxu0 %v309
      %356 = vmatprep.subr.bf16.mxu0 0
      %357 = vmatpush1.bf16.msra.mxu0 %v310
      %358 = vmatprep.subr.bf16.mxu0 0
      %359 = vmatpush1.bf16.msra.mxu0 %v311
      %360 = vmatprep.subr.bf16.mxu0 0
      %361 = vmatpush1.bf16.msra.mxu0 %v312
      %362 = vmatprep.subr.bf16.mxu0 0
      %363 = vmatpush1.bf16.msra.mxu0 %v313
      %364 = vmatprep.subr.bf16.mxu0 0
      %365 = vmatpush1.bf16.msra.mxu0 %v314
      %366 = vmatprep.subr.bf16.mxu0 0
      %367 = vmatpush1.bf16.msra.mxu0 %v315
      %368 = vmatprep.subr.bf16.mxu0 0
      %369 = vmatpush1.bf16.msra.mxu0 %v316
      %370 = vmatprep.subr.bf16.mxu0 0
      %371 = vmatpush1.bf16.msra.mxu0 %v317
      %372 = vmatprep.subr.bf16.mxu0 0
      %373 = vmatpush1.bf16.msra.mxu0 %v318
      %374 = vmatprep.subr.bf16.mxu0 0
      %375 = vmatpush1.bf16.msra.mxu0 %v319
      %376 = vmatprep.mubr.bf16.mxu0 %v194
      %377 = vmatmul.mubr.bf16.gmra.mrb[0].mxu0 %v193
      %v378 = vpop.f32.mrb[0].mxu0
      %v379 = vadd.f32 0.0, %v378
      %v380 = vpop.f32.mrb[0].mxu0
      %v381 = vpop.f32.mrb[0].mxu0
      %v382 = vpop.f32.mrb[0].mxu0
      %383 = vdwg.mxu0
      %384 = vmatprep.subr.bf16.mxu0 0
      %385 = vmatpush1.bf16.msra.mxu0 %v320
      %386 = vmatprep.subr.bf16.mxu0 0
      %387 = vmatpush1.bf16.msra.mxu0 %v321
      %388 = vmatprep.subr.bf16.mxu0 0
      %389 = vmatpush1.bf16.msra.mxu0 0
      %390 = vmatprep.subr.bf16.mxu0 0
      %391 = vmatpush1.bf16.msra.mxu0 0
      %392 = vmatprep.subr.bf16.mxu0 0
      %393 = vmatpush1.bf16.msra.mxu0 0
      %394 = vmatprep.subr.bf16.mxu0 0
      %395 = vmatpush1.bf16.msra.mxu0 0
      %396 = vmatprep.subr.bf16.mxu0 0
      %397 = vmatpush1.bf16.msra.mxu0 0
      %398 = vmatprep.subr.bf16.mxu0 0
      %399 = vmatpush1.bf16.msra.mxu0 0
      %400 = vmatprep.subr.bf16.mxu0 0
      %401 = vmatpush1.bf16.msra.mxu0 0
      %402 = vmatprep.subr.bf16.mxu0 0
      %403 = vmatpush1.bf16.msra.mxu0 0
      %404 = vmatprep.subr.bf16.mxu0 0
      %405 = vmatpush1.bf16.msra.mxu0 0
      %406 = vmatprep.subr.bf16.mxu0 0
      %407 = vmatpush1.bf16.msra.mxu0 0
      %408 = vmatprep.subr.bf16.mxu0 0
      %409 = vmatpush1.bf16.msra.mxu0 0
      %410 = vmatprep.subr.bf16.mxu0 0
      %411 = vmatpush1.bf16.msra.mxu0 0
      %412 = vmatprep.subr.bf16.mxu0 0
      %413 = vmatpush1.bf16.msra.mxu0 0
      %414 = vmatprep.subr.bf16.mxu0 0
      %415 = vmatpush1.bf16.msra.mxu0 0
      %416 = vmatprep.mubr.bf16.mxu0 0
      %417 = vmatmul.mubr.bf16.gmra.mrb[0].mxu0 %v342
      %v418 = vpop.f32.mrb[0].mxu0
      %v419 = vadd.f32 %v379, %v418
      %v420 = vpop.f32.mrb[0].mxu0
      %v421 = vpop.f32.mrb[0].mxu0
      %v422 = vpop.f32.mrb[0].mxu0
      %423 = vdwg.mxu0
      %vm424 = vcmask 519168
      %425 = vst.msk [vmem:[%s172] sm:$0xf] %vm424, %v419
      %v426 = vsel %vm424, %v419, 0.0
      %v427 = vrot.slane %v426, 4
      %v428 = vadd.f32 %v426, %v427
      %v429 = vrot.slane %v428, 2
      %v430 = vadd.f32 %v428, %v429
      %v431 = vrot.slane %v430, 1
      %v432 = vadd.f32 %v430, %v431
      %vm433 = vcmask 516096
      %434 = vst.msk [vmem:[%s176] sm:$0x1] %vm433, %v432
      %v435 = vmul.f32 %v419, %v419
      %v436 = vsel %vm424, %v435, 0.0
      %v437 = vrot.slane %v436, 4
      %v438 = vadd.f32 %v436, %v437
      %v439 = vrot.slane %v438, 2
      %v440 = vadd.f32 %v438, %v439
      %v441 = vrot.slane %v440, 1
      %v442 = vadd.f32 %v440, %v441
      %443 = vst.msk [vmem:[%s176 + $0x1] sm:$0x1] %vm433, %v442
      %p444 = scmp.lt.s32.totalorder %s15, 1
      %s445 = scalar_select %p444, %s15, 1
      %s446 = smul.addr %s445, 4
      %s447 = scalar_lea.vmem %s2, %s446
      %p448 = scmp.lt.s32.totalorder %s15, 1
      %s449 = scalar_select %p448, %s15, 1
      %s450 = smul.addr %s449, 2
      %s451 = scalar_lea.vmem %s3, %s450
      // Predicated region
      $region29: #{conv_ae_forward.30} parent=27 // pred_check
        %p452 = pneg %p80
      $region30: #{conv_ae_forward.30} parent=27 // pred_check_branch
        %454 = sbr.rel (%p452) target = $region32
      $region31: #{conv_ae_forward.30} parent=27 // pred_region
        _
      $region32: #{conv_ae_forward.30} parent=27 // pred_fallthru
        _
      // Predicated region
      $region33: #{conv_ae_forward.30} parent=27 // pred_check
        %p455 = pneg %p106
      $region34: #{conv_ae_forward.30} parent=27 // pred_check_branch
        %457 = sbr.rel (%p455) target = $region36
      $region35: #{conv_ae_forward.30} parent=27 // pred_region
        _
      $region36: #{conv_ae_forward.30} parent=27 // pred_fallthru
        _
    $region28: #{conv_ae_forward.30} parent=5 // pred_fallthru
      _
    %p458 = scmp.le.s32.totalorder 2, %s10
    // Predicated region
    $region37: #{conv_ae_forward.30} parent=5 // pred_check
      %p459 = pneg %p458
    $region38: #{conv_ae_forward.30} parent=5 // pred_check_branch
      %461 = sbr.rel (%p459) target = $region40
    $region39: #{conv_ae_forward.30} parent=5 // pred_region
      %s462 = ssub.s32 %s10, 2
      // Predicated region
      $region41: #{conv_ae_forward.30} parent=39 // pred_check
        %p463 = pneg %p86
      $region42: #{conv_ae_forward.30} parent=39 // pred_check_branch
        %465 = sbr.rel (%p463) target = $region44
      $region43: #{conv_ae_forward.30} parent=39 // pred_region
        %p466 = scmp.lt.s32.totalorder %s16, 1
        %s467 = scalar_select %p466, %s16, 1
        %s468 = smul.addr %s467, 4
        %s469 = scalar_lea.vmem %s2, %s468
      $region44: #{conv_ae_forward.30} parent=39 // pred_fallthru
        _
      // Predicated region
      $region45: #{conv_ae_forward.30} parent=39 // pred_check
        %p470 = pneg %p112
      $region46: #{conv_ae_forward.30} parent=39 // pred_check_branch
        %472 = sbr.rel (%p470) target = $region48
      $region47: #{conv_ae_forward.30} parent=39 // pred_region
        %p473 = scmp.lt.s32.totalorder %s16, 1
        %s474 = scalar_select %p473, %s16, 1
        %s475 = smul.addr %s474, 2
        %s476 = scalar_lea.vmem %s3, %s475
      $region48: #{conv_ae_forward.30} parent=39 // pred_fallthru
        _
    $region40: #{conv_ae_forward.30} parent=5 // pred_fallthru
      _
  $region6: #{conv_ae_forward.30} parent=0 // loop_footer
    %s14 = sadd.s32 1, %s10
  $region7: #{conv_ae_forward.30} parent=0 // loop_footer_branch
    %9 = sbr.rel target = $region3
  $region8: #{conv_ae_forward.30} parent=0 // loop_exit
    _

// kernel: conv_ae_forward.31
$region0: #{conv_ae_forward.31}
  #allocation0 [shape = 'u32[]', space=smem, size = 0x4, offset = 0x4, fixed_abs, tag = 'smem constant byte address 0x4 - core index']
  #allocation1 [shape = 'u32[144,128]{1,0:T(1,128)}', space=vmem, size = 0x12000, scoped, tag = 'internal scratch']
  %s0 = inlined_call_operand.vmem [shape: f32[8,64], index: 0, kind: input, shape index: {}]
  %s1 = inlined_call_operand.vmem [shape: f32[1,64], index: 1, kind: input, shape index: {}]
  %s2 = inlined_call_operand.vmem [shape: f32[1,64], index: 2, kind: input, shape index: {}]
  %s3 = inlined_call_operand.vmem [shape: f32[8,64], index: 3, kind: output, shape index: {}]
  %s4 = sld [smem:[#allocation0]]
  $region22: #{conv_ae_forward.31} parent=0
    _
  %s6 = ssub.s32 1, %s4
  %s7 = scalar_select 0, %s6, %s4
  // Predicated region
  $region2: #{conv_ae_forward.31} parent=0 // pred_check
    _
  $region3: #{conv_ae_forward.31} parent=0 // pred_check_branch
    %9 = sbr.rel (0) target = $region5
  $region4: #{conv_ae_forward.31} parent=0 // pred_region
    _
  $region5: #{conv_ae_forward.31} parent=0 // pred_fallthru
    _
  // Predicated region
  $region6: #{conv_ae_forward.31} parent=0 // pred_check
    _
  $region7: #{conv_ae_forward.31} parent=0 // pred_check_branch
    %11 = sbr.rel (0) target = $region9
  $region8: #{conv_ae_forward.31} parent=0 // pred_region
    _
  $region9: #{conv_ae_forward.31} parent=0 // pred_fallthru
    _
  // Predicated region
  $region10: #{conv_ae_forward.31} parent=0 // pred_check
    _
  $region11: #{conv_ae_forward.31} parent=0 // pred_check_branch
    %13 = sbr.rel (0) target = $region13
  $region12: #{conv_ae_forward.31} parent=0 // pred_region
    _
  $region13: #{conv_ae_forward.31} parent=0 // pred_fallthru
    _
  %v14 = vld [vmem:[%s0] sm:$0xff]
  %v15 = vld [vmem:[%s1] sm:$0x1]
  %v17 = vlaneseq
  %v18 = vshrl.u32 %v17, 7
  %v19 = vsub.s32 0, %v18
  %v20 = vrot.slane %v15, %v19
  %v22 = vmul.f32 %v14, %v20
  %v23 = vld [vmem:[%s2] sm:$0x1]
  %v25 = vlaneseq
  %v26 = vshrl.u32 %v25, 7
  %v27 = vsub.s32 0, %v26
  %v28 = vrot.slane %v23, %v27
  %v30 = vadd.f32 %v22, %v28
  %v31 = vmax.f32 %v30, 0.0
  %vm32 = vcmask 523264
  %33 = vst.msk [vmem:[%s3] sm:$0xff] %vm32, %v31
  // Predicated region
  $region14: #{conv_ae_forward.31} parent=0 // pred_check
    _
  $region15: #{conv_ae_forward.31} parent=0 // pred_check_branch
    %35 = sbr.rel (0) target = $region17
  $region16: #{conv_ae_forward.31} parent=0 // pred_region
    _
  $region17: #{conv_ae_forward.31} parent=0 // pred_fallthru
    _
  // Predicated region
  $region18: #{conv_ae_forward.31} parent=0 // pred_check
    _
  $region19: #{conv_ae_forward.31} parent=0 // pred_check_branch
    %37 = sbr.rel (0) target = $region21
  $region20: #{conv_ae_forward.31} parent=0 // pred_region
    _
  $region21: #{conv_ae_forward.31} parent=0 // pred_fallthru
    _

// kernel: tile.133
$region0: #{tile.133}
  #allocation0 [shape = 's32[1]{0}', space=sflag, size = 0x4, scoped, tag = 'scoped memory for tile.133']
  %s0 = inlined_call_operand.vmem [shape: f32[8], index: 0, kind: input, shape index: {}]
  %s1 = inlined_call_operand.vmem [shape: f32[4,8], index: 1, kind: output, shape index: {}]
  // Predicated region
  $region2: #{tile.133} parent=0 // pred_check
    _
  $region3: #{tile.133} parent=0 // pred_check_branch
    %3 = sbr.rel (0) target = $region5
  $region4: #{tile.133} parent=0 // pred_region
    _
  $region5: #{tile.133} parent=0 // pred_fallthru
    _
  %v4 = vld [vmem:[%s0] ss:$0 sm:$0xff]
  %5 = vst [vmem:[%s1] sm:$0xf] %v4

// kernel: tile.134
$region0: #{tile.134}
  %s0 = inlined_call_operand.vmem [shape: f32[4,8], index: 0, kind: input, shape index: {}]
  %s1 = inlined_call_operand.vmem [shape: f32[1,32], index: 1, kind: output, shape index: {}]
  $region1: #{tile.134} parent=0
    #allocation0 [shape = 'u8[4096]{0}', space=vmem, size = 0x1000, scoped, tag = 'scoped mem for output reshape']
    #allocation1 [shape = 'u8[4096]{0}', space=vmem, size = 0x1000, scoped, tag = 'scoped mem for input reshape']
    %s3 = sshllo.u32 0, 4
    %v4 = vld [vmem:[%s0] sm:%s3]
    %5 = vst [vmem:[#allocation1] sm:%s3] %v4
    %v6 = vld [vmem:[#allocation1] sm:$0x1]
    %vm7 = vcmask 64512
    %8 = vst.msk [vmem:[#allocation0] sm:$0x1] %vm7, %v6
    %s9 = scalar_lea.vmem [#allocation1], 3
    %v10 = vld [vmem:[%s9] sm:$0x1]
    %11 = vrot.lane.b32.xlu0 %v10, 24
    %v12 = vpop.permute.xlu0 %11
    %vm13 = vcmask 261312
    %14 = vst.msk [vmem:[#allocation0] sm:$0x1] %vm13, %v12
    %s15 = scalar_lea.vmem [#allocation1], 2
    %v16 = vld [vmem:[%s15] sm:$0x1]
    %17 = vrot.lane.b32.xlu0 %v16, 16
    %v18 = vpop.permute.xlu0 %17
    %vm19 = vcmask 195712
    %20 = vst.msk [vmem:[#allocation0] sm:$0x1] %vm19, %v18
    %s21 = scalar_lea.vmem [#allocation1], 1
    %v22 = vld [vmem:[%s21] sm:$0x1]
    %23 = vrot.lane.b32.xlu0 %v22, 8
    %v24 = vpop.permute.xlu0 %23
    %vm25 = vcmask 130112
    %26 = vst.msk [vmem:[#allocation0] sm:$0x1] %vm25, %v24
    %s28 = sshllo.u32 0, 1
    %v30 = vld [vmem:[#allocation0] sm:%s28]
    %s31 = sshllo.u32 0, 1
    %32 = vst [vmem:[%s1] sm:%s31] %v30

// kernel: conv_ae_forward.33
$region0: #{conv_ae_forward.33}
  #allocation0 [shape = 'u32[]', space=smem, size = 0x4, offset = 0x4, fixed_abs, tag = 'smem constant byte address 0x4 - core index']
  #allocation1 [shape = 'u32[144,128]{1,0:T(1,128)}', space=vmem, size = 0x12000, scoped, tag = 'internal scratch']
  %s0 = inlined_call_operand.vmem [shape: f32[8,32], index: 0, kind: input, shape index: {}]
  %s1 = inlined_call_operand.vmem [shape: f32[1,32], index: 1, kind: input, shape index: {}]
  %s2 = inlined_call_operand.vmem [shape: f32[1,32], index: 2, kind: input, shape index: {}]
  %s3 = inlined_call_operand.vmem [shape: f32[8,32], index: 3, kind: output, shape index: {}]
  %s4 = sld [smem:[#allocation0]]
  $region22: #{conv_ae_forward.33} parent=0
    _
  %s6 = ssub.s32 1, %s4
  %s7 = scalar_select 0, %s6, %s4
  // Predicated region
  $region2: #{conv_ae_forward.33} parent=0 // pred_check
    _
  $region3: #{conv_ae_forward.33} parent=0 // pred_check_branch
    %9 = sbr.rel (0) target = $region5
  $region4: #{conv_ae_forward.33} parent=0 // pred_region
    _
  $region5: #{conv_ae_forward.33} parent=0 // pred_fallthru
    _
  // Predicated region
  $region6: #{conv_ae_forward.33} parent=0 // pred_check
    _
  $region7: #{conv_ae_forward.33} parent=0 // pred_check_branch
    %11 = sbr.rel (0) target = $region9
  $region8: #{conv_ae_forward.33} parent=0 // pred_region
    _
  $region9: #{conv_ae_forward.33} parent=0 // pred_fallthru
    _
  // Predicated region
  $region10: #{conv_ae_forward.33} parent=0 // pred_check
    _
  $region11: #{conv_ae_forward.33} parent=0 // pred_check_branch
    %13 = sbr.rel (0) target = $region13
  $region12: #{conv_ae_forward.33} parent=0 // pred_region
    _
  $region13: #{conv_ae_forward.33} parent=0 // pred_fallthru
    _
  %v14 = vld [vmem:[%s0] sm:$0xff]
  %v15 = vld [vmem:[%s1] sm:$0x1]
  %v17 = vlaneseq
  %v18 = vshrl.u32 %v17, 7
  %v19 = vsub.s32 0, %v18
  %v20 = vrot.slane %v15, %v19
  %v22 = vmul.f32 %v14, %v20
  %v23 = vld [vmem:[%s2] sm:$0x1]
  %v25 = vlaneseq
  %v26 = vshrl.u32 %v25, 7
  %v27 = vsub.s32 0, %v26
  %v28 = vrot.slane %v23, %v27
  %v30 = vadd.f32 %v22, %v28
  %v31 = vmax.f32 %v30, 0.0
  %vm32 = vcmask 261120
  %33 = vst.msk [vmem:[%s3] sm:$0xff] %vm32, %v31
  // Predicated region
  $region14: #{conv_ae_forward.33} parent=0 // pred_check
    _
  $region15: #{conv_ae_forward.33} parent=0 // pred_check_branch
    %35 = sbr.rel (0) target = $region17
  $region16: #{conv_ae_forward.33} parent=0 // pred_region
    _
  $region17: #{conv_ae_forward.33} parent=0 // pred_fallthru
    _
  // Predicated region
  $region18: #{conv_ae_forward.33} parent=0 // pred_check
    _
  $region19: #{conv_ae_forward.33} parent=0 // pred_check_branch
    %37 = sbr.rel (0) target = $region21
  $region20: #{conv_ae_forward.33} parent=0 // pred_region
    _
  $region21: #{conv_ae_forward.33} parent=0 // pred_fallthru
    _

// kernel: conv_ae_forward.32
$region0: #{conv_ae_forward.32}
  #allocation0 [shape = 'u32[]', space=smem, size = 0x4, offset = 0x4, fixed_abs, tag = 'smem constant byte address 0x4 - core index']
  #allocation1 [shape = 'u32[144,128]{1,0:T(1,128)}', space=vmem, size = 0x12000, scoped, tag = 'internal scratch']
  %s0 = inlined_call_operand.vmem [shape: f32[2,6,96], index: 0, kind: input, shape index: {}]
  %s1 = inlined_call_operand.vmem [shape: bf16[288,32], index: 1, kind: input, shape index: {}]
  %s2 = inlined_call_operand.vmem [shape: f32[2,4,32], index: 2, kind: output, shape index: {0}]
  %s3 = inlined_call_operand.vmem [shape: f32[2,2,32], index: 3, kind: output, shape index: {1}]
  %4 = xla_tuple %s2, %s3
  %s5 = sld [smem:[#allocation0]]
  $region49: #{conv_ae_forward.32} parent=0
    _
  %s7 = ssub.s32 1, %s5
  %s8 = scalar_select 0, %s7, %s5
  loop: start=0, step=1, limit=4
  $region2: #{conv_ae_forward.32} parent=0 // loop_pre_header
    _
  $region3: #{conv_ae_forward.32} parent=0 // loop_header
    %s10 = sphi 0, %s14
    %p11 = scmp.ge.s32.totalorder %s10, 4
    %s20 = sphi 0, %s22
    %s23 = sphi 0, %s20
    %s24 = sphi 0, %s23
    %s40 = sphi 0, %s24
    %s44 = sphi 0, %s44
    %s46 = sphi 0, %s44
    %s47 = sphi 0, %s46
    %s61 = sphi 0, %s47
    %s67 = sphi 0, %s69
    %s70 = sphi 0, %s67
    %s71 = sphi 0, %s70
    %s87 = sphi 0, %s71
    %s93 = sphi 0, %s95
    %s96 = sphi 0, %s93
    %s97 = sphi 0, %s96
    %s113 = sphi 0, %s97
  $region4: #{conv_ae_forward.32} parent=0 // loop_header_branch
    %13 = sbr.rel (%p11) target = $region8
  $region5: #{conv_ae_forward.32} parent=0 // loop_body
    %s15 = ssub.s32 %s10, 1
    %s16 = ssub.s32 %s10, 2
    %s17 = sadd.s32 %s10, 1
    %s18 = ssub.s32 %s10, %s17
    %p19 = scmp.eq.s32.totalorder %s18, 0
    %s21 = sadd.s32 %s20, 1
    %s22 = scalar_select %p19, %s20, %s21
    %p25 = pneg %p19
    %p26 = scmp.eq.s32.totalorder %s10, 1
    %p27 = por %p25, %p26
    %p28 = scmp.ne.s32.totalorder %s20, %s23
    %p29 = scmp.eq.s32.totalorder %s10, 0
    %p30 = por %p28, %p29
    %p31 = scmp.ne.s32.totalorder %s20, %s23
    %p32 = scmp.eq.s32.totalorder %s15, 1
    %p33 = por %p31, %p32
    %p34 = scmp.ne.s32.totalorder %s23, %s24
    %p35 = scmp.eq.s32.totalorder %s15, 0
    %p36 = por %p34, %p35
    %p37 = scmp.ne.s32.totalorder %s23, %s24
    %p38 = scmp.eq.s32.totalorder %s16, 1
    %p39 = por %p37, %p38
    %p41 = scmp.ne.s32.totalorder %s24, %s40
    %p42 = scmp.eq.s32.totalorder %s16, 0
    %p43 = por %p41, %p42
    %s45 = sadd.s32 %s44, 1
    %p48 = scmp.eq.s32.totalorder %s10, 1
    %p49 = scmp.ne.s32.totalorder %s44, %s46
    %p50 = scmp.eq.s32.totalorder %s10, 0
    %p51 = por %p49, %p50
    %p52 = scmp.ne.s32.totalorder %s44, %s46
    %p53 = scmp.eq.s32.totalorder %s15, 1
    %p54 = por %p52, %p53
    %p55 = scmp.ne.s32.totalorder %s46, %s47
    %p56 = scmp.eq.s32.totalorder %s15, 0
    %p57 = por %p55, %p56
    %p58 = scmp.ne.s32.totalorder %s46, %s47
    %p59 = scmp.eq.s32.totalorder %s16, 1
    %p60 = por %p58, %p59
    %p62 = scmp.ne.s32.totalorder %s47, %s61
    %p63 = scmp.eq.s32.totalorder %s16, 0
    %p64 = por %p62, %p63
    %s65 = ssub.s32 %s10, %s17
    %p66 = scmp.eq.s32.totalorder %s65, 0
    %s68 = sadd.s32 %s67, 1
    %s69 = scalar_select %p66, %s67, %s68
    %p72 = pneg %p66
    %p73 = scmp.eq.s32.totalorder %s10, 1
    %p74 = por %p72, %p73
    %p75 = scmp.ne.s32.totalorder %s67, %s70
    %p76 = scmp.eq.s32.totalorder %s10, 0
    %p77 = por %p75, %p76
    %p78 = scmp.ne.s32.totalorder %s67, %s70
    %p79 = scmp.eq.s32.totalorder %s15, 1
    %p80 = por %p78, %p79
    %p81 = scmp.ne.s32.totalorder %s70, %s71
    %p82 = scmp.eq.s32.totalorder %s15, 0
    %p83 = por %p81, %p82
    %p84 = scmp.ne.s32.totalorder %s70, %s71
    %p85 = scmp.eq.s32.totalorder %s16, 1
    %p86 = por %p84, %p85
    %p88 = scmp.ne.s32.totalorder %s71, %s87
    %p89 = scmp.eq.s32.totalorder %s16, 0
    %p90 = por %p88, %p89
    %s91 = ssub.s32 %s10, %s17
    %p92 = scmp.eq.s32.totalorder %s91, 0
    %s94 = sadd.s32 %s93, 1
    %s95 = scalar_select %p92, %s93, %s94
    %p98 = pneg %p92
    %p99 = scmp.eq.s32.totalorder %s10, 1
    %p100 = por %p98, %p99
    %p101 = scmp.ne.s32.totalorder %s93, %s96
    %p102 = scmp.eq.s32.totalorder %s10, 0
    %p103 = por %p101, %p102
    %p104 = scmp.ne.s32.totalorder %s93, %s96
    %p105 = scmp.eq.s32.totalorder %s15, 1
    %p106 = por %p104, %p105
    %p107 = scmp.ne.s32.totalorder %s96, %s97
    %p108 = scmp.eq.s32.totalorder %s15, 0
    %p109 = por %p107, %p108
    %p110 = scmp.ne.s32.totalorder %s96, %s97
    %p111 = scmp.eq.s32.totalorder %s16, 1
    %p112 = por %p110, %p111
    %p114 = scmp.ne.s32.totalorder %s97, %s113
    %p115 = scmp.eq.s32.totalorder %s16, 0
    %p116 = por %p114, %p115
    %p117 = scmp.le.s32.totalorder 1, %s10
    %p118 = scmp.lt.s32.totalorder %s10, 3
    %p119 = pnand %p117, %p118
    %p120 = pneg %p119
    // Predicated region
    $region9: #{conv_ae_forward.32} parent=5 // pred_check
      _
    $region10: #{conv_ae_forward.32} parent=5 // pred_check_branch
      %122 = sbr.rel (%p119) target = $region12
    $region11: #{conv_ae_forward.32} parent=5 // pred_region
      %s123 = ssub.s32 %s10, 1
      // Predicated region
      $region13: #{conv_ae_forward.32} parent=11 // pred_check
        %p124 = pneg %p57
      $region14: #{conv_ae_forward.32} parent=11 // pred_check_branch
        %126 = sbr.rel (%p124) target = $region16
      $region15: #{conv_ae_forward.32} parent=11 // pred_region
        _
      $region16: #{conv_ae_forward.32} parent=11 // pred_fallthru
        _
    $region12: #{conv_ae_forward.32} parent=5 // pred_fallthru
      _
    %p127 = scmp.lt.s32.totalorder %s10, 2
    // Predicated region
    $region17: #{conv_ae_forward.32} parent=5 // pred_check
      %p128 = pneg %p127
    $region18: #{conv_ae_forward.32} parent=5 // pred_check_branch
      %130 = sbr.rel (%p128) target = $region20
    $region19: #{conv_ae_forward.32} parent=5 // pred_region
      // Predicated region
      $region21: #{conv_ae_forward.32} parent=19 // pred_check
        %p131 = pneg %p30
      $region22: #{conv_ae_forward.32} parent=19 // pred_check_branch
        %133 = sbr.rel (%p131) target = $region24
      $region23: #{conv_ae_forward.32} parent=19 // pred_region
        %p134 = scmp.lt.s32.totalorder %s10, 1
        %s135 = scalar_select %p134, %s10, 1
        %s136 = smul.addr %s135, 8
        %s137 = scalar_lea.vmem %s0, %s136
      $region24: #{conv_ae_forward.32} parent=19 // pred_fallthru
        _
    $region20: #{conv_ae_forward.32} parent=5 // pred_fallthru
      _
    %p138 = scmp.le.s32.totalorder 1, %s10
    %p139 = scmp.lt.s32.totalorder %s10, 3
    %p140 = pnand %p138, %p139
    %p141 = pneg %p140
    // Predicated region
    $region25: #{conv_ae_forward.32} parent=5 // pred_check
      _
    $region26: #{conv_ae_forward.32} parent=5 // pred_check_branch
      %143 = sbr.rel (%p140) target = $region28
    $region27: #{conv_ae_forward.32} parent=5 // pred_region
      %s144 = ssub.s32 %s10, 1
      %p145 = scmp.lt.s32.totalorder %s15, 1
      %s146 = scalar_select %p145, %s15, 1
      %s147 = smul.addr %s146, 8
      %s148 = scalar_lea.vmem %s0, %s147
      %p149 = pneg %p36
      %p150 = pneg %p33
      %p151 = pneg %p57
      %p152 = pneg %p54
      %p153 = pneg %p83
      %p154 = pneg %p80
      %p155 = scmp.lt.s32.totalorder %s15, 1
      %s156 = scalar_select %p155, %s15, 1
      %s157 = smul.addr %s156, 4
      %s158 = scalar_lea.vmem %s2, %s157
      %p159 = pneg %p109
      %p160 = pneg %p106
      %p161 = scmp.lt.s32.totalorder %s15, 1
      %s162 = scalar_select %p161, %s15, 1
      %s163 = smul.addr %s162, 2
      %s164 = scalar_lea.vmem %s3, %s163
      %p165 = scmp.lt.s32.totalorder %s15, 1
      %s166 = scalar_select %p165, %s15, 1
      %s167 = smul.addr %s166, 8
      %s168 = scalar_lea.vmem %s0, %s167
      %p169 = scmp.lt.s32.totalorder %s15, 1
      %s170 = scalar_select %p169, %s15, 1
      %s171 = smul.addr %s170, 4
      %s172 = scalar_lea.vmem %s2, %s171
      %p173 = scmp.lt.s32.totalorder %s15, 1
      %s174 = scalar_select %p173, %s15, 1
      %s175 = smul.addr %s174, 2
      %s176 = scalar_lea.vmem %s3, %s175
      %v178 = vld [vmem:[%s168] sm:$0xf]
      %v179 = vld [vmem:[%s168 + $0x1] sm:$0xf]
      %v180 = vld [vmem:[%s168 + $0x2] sm:$0xf]
      %182 = vrot.lane.b32.xlu0 %v179, 96
      %v183 = vpop.permute.xlu0 %182
      %186 = vrot.lane.b32.xlu0 %v180, 64
      %v187 = vpop.permute.xlu0 %186
      %vm189 = vcmask 785408
      %v190 = vsel %vm189, %v178, %v183
      %vm191 = vcmask 523264
      %v192 = vsel %vm191, %v183, %v187
      %v193 = vpack.c.bf16 %v190, %v190
      %v194 = vpack.c.bf16 %v192, %v192
      %v195 = vpack.c.bf16 %v187, %v187
      %v196 = vld [vmem:[%s1] sm:$0xf]
      %v197 = vld [vmem:[%s1 + $0x4] sm:$0xf]
      %v198 = vld [vmem:[%s1 + $0x8] sm:$0xf]
      %v199 = vld [vmem:[%s1 + $0xc] sm:$0xf]
      %v200 = vld [vmem:[%s1 + $0x10] sm:$0xf]
      %v201 = vld [vmem:[%s1 + $0x14] sm:$0xf]
      %v202 = vld [vmem:[%s1 + $0x18] sm:$0xf]
      %v203 = vld [vmem:[%s1 + $0x1c] sm:$0xf]
      %v204 = vld [vmem:[%s1 + $0x20] sm:$0xf]
      %v205 = vld [vmem:[%s1 + $0x24] sm:$0xf]
      %v206 = vld [vmem:[%s1 + $0x28] sm:$0xf]
      %v207 = vld [vmem:[%s1 + $0x2c] sm:$0xf]
      %v208 = vld [vmem:[%s1 + $0x30] sm:$0xf]
      %v209 = vld [vmem:[%s1 + $0x34] sm:$0xf]
      %v210 = vld [vmem:[%s1 + $0x38] sm:$0xf]
      %v211 = vld [vmem:[%s1 + $0x3c] sm:$0xf]
      %v212 = vld [vmem:[%s1 + $0x40] sm:$0xf]
      %v213 = vld [vmem:[%s1 + $0x44] sm:$0xf]
      %v214 = vld [vmem:[%s1 + $0x48] sm:$0xf]
      %v215 = vld [vmem:[%s1 + $0x4c] sm:$0xf]
      %v216 = vld [vmem:[%s1 + $0x50] sm:$0xf]
      %v217 = vld [vmem:[%s1 + $0x54] sm:$0xf]
      %v218 = vld [vmem:[%s1 + $0x58] sm:$0xf]
      %v219 = vld [vmem:[%s1 + $0x5c] sm:$0xf]
      %v220 = vld [vmem:[%s1 + $0x60] sm:$0xf]
      %v221 = vld [vmem:[%s1 + $0x64] sm:$0xf]
      %v222 = vld [vmem:[%s1 + $0x68] sm:$0xf]
      %v223 = vld [vmem:[%s1 + $0x6c] sm:$0xf]
      %v224 = vld [vmem:[%s1 + $0x70] sm:$0xf]
      %v225 = vld [vmem:[%s1 + $0x74] sm:$0xf]
      %v226 = vld [vmem:[%s1 + $0x78] sm:$0xf]
      %v227 = vld [vmem:[%s1 + $0x7c] sm:$0xf]
      %v228 = vld [vmem:[%s1 + $0x80] sm:$0xf]
      %v229 = vld [vmem:[%s1 + $0x84] sm:$0xf]
      %v230 = vld [vmem:[%s1 + $0x88] sm:$0xf]
      %v231 = vld [vmem:[%s1 + $0x8c] sm:$0xf]
      %v268 = vunpack.c.l.b16 %v196
      %v269 = vunpack.c.l.b16 %v197
      %v270 = vunpack.c.l.b16 %v198
      %v271 = vunpack.c.l.b16 %v199
      %v272 = vunpack.c.l.b16 %v200
      %v273 = vunpack.c.l.b16 %v201
      %v274 = vunpack.c.l.b16 %v202
      %v275 = vunpack.c.l.b16 %v203
      %v276 = vunpack.c.l.b16 %v204
      %v277 = vunpack.c.l.b16 %v205
      %v278 = vunpack.c.l.b16 %v206
      %v279 = vunpack.c.l.b16 %v207
      %v280 = vunpack.c.l.b16 %v208
      %v281 = vunpack.c.l.b16 %v209
      %v282 = vunpack.c.l.b16 %v210
      %v283 = vunpack.c.l.b16 %v211
      %v284 = vunpack.c.l.b16 %v212
      %v285 = vunpack.c.l.b16 %v213
      %v286 = vunpack.c.l.b16 %v214
      %v287 = vunpack.c.l.b16 %v215
      %v288 = vunpack.c.l.b16 %v216
      %v289 = vunpack.c.l.b16 %v217
      %v290 = vunpack.c.l.b16 %v218
      %v291 = vunpack.c.l.b16 %v219
      %v292 = vunpack.c.l.b16 %v220
      %v293 = vunpack.c.l.b16 %v221
      %v294 = vunpack.c.l.b16 %v222
      %v295 = vunpack.c.l.b16 %v223
      %v296 = vunpack.c.l.b16 %v224
      %v297 = vunpack.c.l.b16 %v225
      %v298 = vunpack.c.l.b16 %v226
      %v299 = vunpack.c.l.b16 %v227
      %v300 = vunpack.c.l.b16 %v228
      %v301 = vunpack.c.l.b16 %v229
      %v302 = vunpack.c.l.b16 %v230
      %v303 = vunpack.c.l.b16 %v231
      %v304 = vpack.c.b16 %v269, %v268
      %v305 = vpack.c.b16 %v271, %v270
      %v306 = vpack.c.b16 %v273, %v272
      %v307 = vpack.c.b16 %v275, %v274
      %v308 = vpack.c.b16 %v277, %v276
      %v309 = vpack.c.b16 %v279, %v278
      %v310 = vpack.c.b16 %v281, %v280
      %v311 = vpack.c.b16 %v283, %v282
      %v312 = vpack.c.b16 %v285, %v284
      %v313 = vpack.c.b16 %v287, %v286
      %v314 = vpack.c.b16 %v289, %v288
      %v315 = vpack.c.b16 %v291, %v290
      %v316 = vpack.c.b16 %v293, %v292
      %v317 = vpack.c.b16 %v295, %v294
      %v318 = vpack.c.b16 %v297, %v296
      %v319 = vpack.c.b16 %v299, %v298
      %v320 = vpack.c.b16 %v301, %v300
      %v321 = vpack.c.b16 %v303, %v302
      %vm340 = vcmask 261120
      %v342 = vsel %vm340, %v195, 0
      %344 = vmatprep.subr.bf16.mxu0 0
      %345 = vmatpush1.bf16.msra.mxu0 %v304
      %346 = vmatprep.subr.bf16.mxu0 0
      %347 = vmatpush1.bf16.msra.mxu0 %v305
      %348 = vmatprep.subr.bf16.mxu0 0
      %349 = vmatpush1.bf16.msra.mxu0 %v306
      %350 = vmatprep.subr.bf16.mxu0 0
      %351 = vmatpush1.bf16.msra.mxu0 %v307
      %352 = vmatprep.subr.bf16.mxu0 0
      %353 = vmatpush1.bf16.msra.mxu0 %v308
      %354 = vmatprep.subr.bf16.mxu0 0
      %355 = vmatpush1.bf16.msra.mxu0 %v309
      %356 = vmatprep.subr.bf16.mxu0 0
      %357 = vmatpush1.bf16.msra.mxu0 %v310
      %358 = vmatprep.subr.bf16.mxu0 0
      %359 = vmatpush1.bf16.msra.mxu0 %v311
      %360 = vmatprep.subr.bf16.mxu0 0
      %361 = vmatpush1.bf16.msra.mxu0 %v312
      %362 = vmatprep.subr.bf16.mxu0 0
      %363 = vmatpush1.bf16.msra.mxu0 %v313
      %364 = vmatprep.subr.bf16.mxu0 0
      %365 = vmatpush1.bf16.msra.mxu0 %v314
      %366 = vmatprep.subr.bf16.mxu0 0
      %367 = vmatpush1.bf16.msra.mxu0 %v315
      %368 = vmatprep.subr.bf16.mxu0 0
      %369 = vmatpush1.bf16.msra.mxu0 %v316
      %370 = vmatprep.subr.bf16.mxu0 0
      %371 = vmatpush1.bf16.msra.mxu0 %v317
      %372 = vmatprep.subr.bf16.mxu0 0
      %373 = vmatpush1.bf16.msra.mxu0 %v318
      %374 = vmatprep.subr.bf16.mxu0 0
      %375 = vmatpush1.bf16.msra.mxu0 %v319
      %376 = vmatprep.mubr.bf16.mxu0 %v194
      %377 = vmatmul.mubr.bf16.gmra.mrb[0].mxu0 %v193
      %v378 = vpop.f32.mrb[0].mxu0
      %v379 = vadd.f32 0.0, %v378
      %v380 = vpop.f32.mrb[0].mxu0
      %v381 = vpop.f32.mrb[0].mxu0
      %v382 = vpop.f32.mrb[0].mxu0
      %383 = vdwg.mxu0
      %384 = vmatprep.subr.bf16.mxu0 0
      %385 = vmatpush1.bf16.msra.mxu0 %v320
      %386 = vmatprep.subr.bf16.mxu0 0
      %387 = vmatpush1.bf16.msra.mxu0 %v321
      %388 = vmatprep.subr.bf16.mxu0 0
      %389 = vmatpush1.bf16.msra.mxu0 0
      %390 = vmatprep.subr.bf16.mxu0 0
      %391 = vmatpush1.bf16.msra.mxu0 0
      %392 = vmatprep.subr.bf16.mxu0 0
      %393 = vmatpush1.bf16.msra.mxu0 0
      %394 = vmatprep.subr.bf16.mxu0 0
      %395 = vmatpush1.bf16.msra.mxu0 0
      %396 = vmatprep.subr.bf16.mxu0 0
      %397 = vmatpush1.bf16.msra.mxu0 0
      %398 = vmatprep.subr.bf16.mxu0 0
      %399 = vmatpush1.bf16.msra.mxu0 0
      %400 = vmatprep.subr.bf16.mxu0 0
      %401 = vmatpush1.bf16.msra.mxu0 0
      %402 = vmatprep.subr.bf16.mxu0 0
      %403 = vmatpush1.bf16.msra.mxu0 0
      %404 = vmatprep.subr.bf16.mxu0 0
      %405 = vmatpush1.bf16.msra.mxu0 0
      %406 = vmatprep.subr.bf16.mxu0 0
      %407 = vmatpush1.bf16.msra.mxu0 0
      %408 = vmatprep.subr.bf16.mxu0 0
      %409 = vmatpush1.bf16.msra.mxu0 0
      %410 = vmatprep.subr.bf16.mxu0 0
      %411 = vmatpush1.bf16.msra.mxu0 0
      %412 = vmatprep.subr.bf16.mxu0 0
      %413 = vmatpush1.bf16.msra.mxu0 0
      %414 = vmatprep.subr.bf16.mxu0 0
      %415 = vmatpush1.bf16.msra.mxu0 0
      %416 = vmatprep.mubr.bf16.mxu0 0
      %417 = vmatmul.mubr.bf16.gmra.mrb[0].mxu0 %v342
      %v418 = vpop.f32.mrb[0].mxu0
      %v419 = vadd.f32 %v379, %v418
      %v420 = vpop.f32.mrb[0].mxu0
      %v421 = vpop.f32.mrb[0].mxu0
      %v422 = vpop.f32.mrb[0].mxu0
      %423 = vdwg.mxu0
      %vm424 = vcmask 257024
      %425 = vst.msk [vmem:[%s172] sm:$0xf] %vm424, %v419
      %v426 = vsel %vm424, %v419, 0.0
      %v427 = vrot.slane %v426, 4
      %v428 = vadd.f32 %v426, %v427
      %v429 = vrot.slane %v428, 2
      %v430 = vadd.f32 %v428, %v429
      %v431 = vrot.slane %v430, 1
      %v432 = vadd.f32 %v430, %v431
      %vm433 = vcmask 253952
      %434 = vst.msk [vmem:[%s176] sm:$0x1] %vm433, %v432
      %v435 = vmul.f32 %v419, %v419
      %v436 = vsel %vm424, %v435, 0.0
      %v437 = vrot.slane %v436, 4
      %v438 = vadd.f32 %v436, %v437
      %v439 = vrot.slane %v438, 2
      %v440 = vadd.f32 %v438, %v439
      %v441 = vrot.slane %v440, 1
      %v442 = vadd.f32 %v440, %v441
      %443 = vst.msk [vmem:[%s176 + $0x1] sm:$0x1] %vm433, %v442
      %p444 = scmp.lt.s32.totalorder %s15, 1
      %s445 = scalar_select %p444, %s15, 1
      %s446 = smul.addr %s445, 4
      %s447 = scalar_lea.vmem %s2, %s446
      %p448 = scmp.lt.s32.totalorder %s15, 1
      %s449 = scalar_select %p448, %s15, 1
      %s450 = smul.addr %s449, 2
      %s451 = scalar_lea.vmem %s3, %s450
      // Predicated region
      $region29: #{conv_ae_forward.32} parent=27 // pred_check
        %p452 = pneg %p80
      $region30: #{conv_ae_forward.32} parent=27 // pred_check_branch
        %454 = sbr.rel (%p452) target = $region32
      $region31: #{conv_ae_forward.32} parent=27 // pred_region
        _
      $region32: #{conv_ae_forward.32} parent=27 // pred_fallthru
        _
      // Predicated region
      $region33: #{conv_ae_forward.32} parent=27 // pred_check
        %p455 = pneg %p106
      $region34: #{conv_ae_forward.32} parent=27 // pred_check_branch
        %457 = sbr.rel (%p455) target = $region36
      $region35: #{conv_ae_forward.32} parent=27 // pred_region
        _
      $region36: #{conv_ae_forward.32} parent=27 // pred_fallthru
        _
    $region28: #{conv_ae_forward.32} parent=5 // pred_fallthru
      _
    %p458 = scmp.le.s32.totalorder 2, %s10
    // Predicated region
    $region37: #{conv_ae_forward.32} parent=5 // pred_check
      %p459 = pneg %p458
    $region38: #{conv_ae_forward.32} parent=5 // pred_check_branch
      %461 = sbr.rel (%p459) target = $region40
    $region39: #{conv_ae_forward.32} parent=5 // pred_region
      %s462 = ssub.s32 %s10, 2
      // Predicated region
      $region41: #{conv_ae_forward.32} parent=39 // pred_check
        %p463 = pneg %p86
      $region42: #{conv_ae_forward.32} parent=39 // pred_check_branch
        %465 = sbr.rel (%p463) target = $region44
      $region43: #{conv_ae_forward.32} parent=39 // pred_region
        %p466 = scmp.lt.s32.totalorder %s16, 1
        %s467 = scalar_select %p466, %s16, 1
        %s468 = smul.addr %s467, 4
        %s469 = scalar_lea.vmem %s2, %s468
      $region44: #{conv_ae_forward.32} parent=39 // pred_fallthru
        _
      // Predicated region
      $region45: #{conv_ae_forward.32} parent=39 // pred_check
        %p470 = pneg %p112
      $region46: #{conv_ae_forward.32} parent=39 // pred_check_branch
        %472 = sbr.rel (%p470) target = $region48
      $region47: #{conv_ae_forward.32} parent=39 // pred_region
        %p473 = scmp.lt.s32.totalorder %s16, 1
        %s474 = scalar_select %p473, %s16, 1
        %s475 = smul.addr %s474, 2
        %s476 = scalar_lea.vmem %s3, %s475
      $region48: #{conv_ae_forward.32} parent=39 // pred_fallthru
        _
    $region40: #{conv_ae_forward.32} parent=5 // pred_fallthru
      _
  $region6: #{conv_ae_forward.32} parent=0 // loop_footer
    %s14 = sadd.s32 1, %s10
  $region7: #{conv_ae_forward.32} parent=0 // loop_footer_branch
    %9 = sbr.rel target = $region3
  $region8: #{conv_ae_forward.32} parent=0 // loop_exit
    _

// kernel: conv_ae_forward.34
$region0: #{conv_ae_forward.34}
  #allocation0 [shape = 'u32[]', space=smem, size = 0x4, offset = 0x4, fixed_abs, tag = 'smem constant byte address 0x4 - core index']
  #allocation1 [shape = 'u32[144,128]{1,0:T(1,128)}', space=vmem, size = 0x12000, scoped, tag = 'internal scratch']
  %s0 = inlined_call_operand.vmem [shape: f32[2,4,32], index: 0, kind: input, shape index: {}]
  %s1 = inlined_call_operand.vmem [shape: f32[8,4], index: 1, kind: input, shape index: {}]
  %s2 = inlined_call_operand.vmem [shape: f32[32,64], index: 2, kind: input, shape index: {}]
  %s3 = inlined_call_operand.vmem [shape: f32[2,8,64], index: 3, kind: output, shape index: {}]
  %s4 = sld [smem:[#allocation0]]
  $region45: #{conv_ae_forward.34} parent=0
    _
  %s6 = ssub.s32 1, %s4
  %s7 = scalar_select 0, %s6, %s4
  loop: start=0, step=1, limit=4
  $region2: #{conv_ae_forward.34} parent=0 // loop_pre_header
    _
  $region3: #{conv_ae_forward.34} parent=0 // loop_header
    %s9 = sphi 0, %s13
    %p10 = scmp.ge.s32.totalorder %s9, 4
    %s19 = sphi 0, %s21
    %s22 = sphi 0, %s19
    %s23 = sphi 0, %s22
    %s39 = sphi 0, %s23
    %s43 = sphi 0, %s43
    %s45 = sphi 0, %s43
    %s46 = sphi 0, %s45
    %s60 = sphi 0, %s46
    %s64 = sphi 0, %s64
    %s66 = sphi 0, %s64
    %s67 = sphi 0, %s66
    %s81 = sphi 0, %s67
    %s87 = sphi 0, %s89
    %s90 = sphi 0, %s87
    %s91 = sphi 0, %s90
    %s107 = sphi 0, %s91
  $region4: #{conv_ae_forward.34} parent=0 // loop_header_branch
    %12 = sbr.rel (%p10) target = $region8
  $region5: #{conv_ae_forward.34} parent=0 // loop_body
    %s14 = ssub.s32 %s9, 1
    %s15 = ssub.s32 %s9, 2
    %s16 = sadd.s32 %s9, 1
    %s17 = ssub.s32 %s9, %s16
    %p18 = scmp.eq.s32.totalorder %s17, 0
    %s20 = sadd.s32 %s19, 1
    %s21 = scalar_select %p18, %s19, %s20
    %p24 = pneg %p18
    %p25 = scmp.eq.s32.totalorder %s9, 1
    %p26 = por %p24, %p25
    %p27 = scmp.ne.s32.totalorder %s19, %s22
    %p28 = scmp.eq.s32.totalorder %s9, 0
    %p29 = por %p27, %p28
    %p30 = scmp.ne.s32.totalorder %s19, %s22
    %p31 = scmp.eq.s32.totalorder %s14, 1
    %p32 = por %p30, %p31
    %p33 = scmp.ne.s32.totalorder %s22, %s23
    %p34 = scmp.eq.s32.totalorder %s14, 0
    %p35 = por %p33, %p34
    %p36 = scmp.ne.s32.totalorder %s22, %s23
    %p37 = scmp.eq.s32.totalorder %s15, 1
    %p38 = por %p36, %p37
    %p40 = scmp.ne.s32.totalorder %s23, %s39
    %p41 = scmp.eq.s32.totalorder %s15, 0
    %p42 = por %p40, %p41
    %s44 = sadd.s32 %s43, 1
    %p47 = scmp.eq.s32.totalorder %s9, 1
    %p48 = scmp.ne.s32.totalorder %s43, %s45
    %p49 = scmp.eq.s32.totalorder %s9, 0
    %p50 = por %p48, %p49
    %p51 = scmp.ne.s32.totalorder %s43, %s45
    %p52 = scmp.eq.s32.totalorder %s14, 1
    %p53 = por %p51, %p52
    %p54 = scmp.ne.s32.totalorder %s45, %s46
    %p55 = scmp.eq.s32.totalorder %s14, 0
    %p56 = por %p54, %p55
    %p57 = scmp.ne.s32.totalorder %s45, %s46
    %p58 = scmp.eq.s32.totalorder %s15, 1
    %p59 = por %p57, %p58
    %p61 = scmp.ne.s32.totalorder %s46, %s60
    %p62 = scmp.eq.s32.totalorder %s15, 0
    %p63 = por %p61, %p62
    %s65 = sadd.s32 %s64, 1
    %p68 = scmp.eq.s32.totalorder %s9, 1
    %p69 = scmp.ne.s32.totalorder %s64, %s66
    %p70 = scmp.eq.s32.totalorder %s9, 0
    %p71 = por %p69, %p70
    %p72 = scmp.ne.s32.totalorder %s64, %s66
    %p73 = scmp.eq.s32.totalorder %s14, 1
    %p74 = por %p72, %p73
    %p75 = scmp.ne.s32.totalorder %s66, %s67
    %p76 = scmp.eq.s32.totalorder %s14, 0
    %p77 = por %p75, %p76
    %p78 = scmp.ne.s32.totalorder %s66, %s67
    %p79 = scmp.eq.s32.totalorder %s15, 1
    %p80 = por %p78, %p79
    %p82 = scmp.ne.s32.totalorder %s67, %s81
    %p83 = scmp.eq.s32.totalorder %s15, 0
    %p84 = por %p82, %p83
    %s85 = ssub.s32 %s9, %s16
    %p86 = scmp.eq.s32.totalorder %s85, 0
    %s88 = sadd.s32 %s87, 1
    %s89 = scalar_select %p86, %s87, %s88
    %p92 = pneg %p86
    %p93 = scmp.eq.s32.totalorder %s9, 1
    %p94 = por %p92, %p93
    %p95 = scmp.ne.s32.totalorder %s87, %s90
    %p96 = scmp.eq.s32.totalorder %s9, 0
    %p97 = por %p95, %p96
    %p98 = scmp.ne.s32.totalorder %s87, %s90
    %p99 = scmp.eq.s32.totalorder %s14, 1
    %p100 = por %p98, %p99
    %p101 = scmp.ne.s32.totalorder %s90, %s91
    %p102 = scmp.eq.s32.totalorder %s14, 0
    %p103 = por %p101, %p102
    %p104 = scmp.ne.s32.totalorder %s90, %s91
    %p105 = scmp.eq.s32.totalorder %s15, 1
    %p106 = por %p104, %p105
    %p108 = scmp.ne.s32.totalorder %s91, %s107
    %p109 = scmp.eq.s32.totalorder %s15, 0
    %p110 = por %p108, %p109
    %p111 = scmp.le.s32.totalorder 1, %s9
    %p112 = scmp.lt.s32.totalorder %s9, 3
    %p113 = pnand %p111, %p112
    %p114 = pneg %p113
    // Predicated region
    $region9: #{conv_ae_forward.34} parent=5 // pred_check
      _
    $region10: #{conv_ae_forward.34} parent=5 // pred_check_branch
      %116 = sbr.rel (%p113) target = $region12
    $region11: #{conv_ae_forward.34} parent=5 // pred_region
      %s117 = ssub.s32 %s9, 1
      // Predicated region
      $region13: #{conv_ae_forward.34} parent=11 // pred_check
        %p118 = pneg %p56
      $region14: #{conv_ae_forward.34} parent=11 // pred_check_branch
        %120 = sbr.rel (%p118) target = $region16
      $region15: #{conv_ae_forward.34} parent=11 // pred_region
        _
      $region16: #{conv_ae_forward.34} parent=11 // pred_fallthru
        _
      // Predicated region
      $region17: #{conv_ae_forward.34} parent=11 // pred_check
        %p121 = pneg %p77
      $region18: #{conv_ae_forward.34} parent=11 // pred_check_branch
        %123 = sbr.rel (%p121) target = $region20
      $region19: #{conv_ae_forward.34} parent=11 // pred_region
        _
      $region20: #{conv_ae_forward.34} parent=11 // pred_fallthru
        _
    $region12: #{conv_ae_forward.34} parent=5 // pred_fallthru
      _
    %p124 = scmp.lt.s32.totalorder %s9, 2
    // Predicated region
    $region21: #{conv_ae_forward.34} parent=5 // pred_check
      %p125 = pneg %p124
    $region22: #{conv_ae_forward.34} parent=5 // pred_check_branch
      %127 = sbr.rel (%p125) target = $region24
    $region23: #{conv_ae_forward.34} parent=5 // pred_region
      // Predicated region
      $region25: #{conv_ae_forward.34} parent=23 // pred_check
        %p128 = pneg %p29
      $region26: #{conv_ae_forward.34} parent=23 // pred_check_branch
        %130 = sbr.rel (%p128) target = $region28
      $region27: #{conv_ae_forward.34} parent=23 // pred_region
        %p131 = scmp.lt.s32.totalorder %s9, 1
        %s132 = scalar_select %p131, %s9, 1
        %s133 = smul.addr %s132, 4
        %s134 = scalar_lea.vmem %s0, %s133
      $region28: #{conv_ae_forward.34} parent=23 // pred_fallthru
        _
    $region24: #{conv_ae_forward.34} parent=5 // pred_fallthru
      _
    %p135 = scmp.le.s32.totalorder 1, %s9
    %p136 = scmp.lt.s32.totalorder %s9, 3
    %p137 = pnand %p135, %p136
    %p138 = pneg %p137
    // Predicated region
    $region29: #{conv_ae_forward.34} parent=5 // pred_check
      _
    $region30: #{conv_ae_forward.34} parent=5 // pred_check_branch
      %140 = sbr.rel (%p137) target = $region32
    $region31: #{conv_ae_forward.34} parent=5 // pred_region
      %s141 = ssub.s32 %s9, 1
      %p142 = scmp.lt.s32.totalorder %s14, 1
      %s143 = scalar_select %p142, %s14, 1
      %s144 = smul.addr %s143, 4
      %s145 = scalar_lea.vmem %s0, %s144
      %p146 = pneg %p35
      %p147 = pneg %p32
      %p148 = pneg %p56
      %p149 = pneg %p53
      %p150 = pneg %p77
      %p151 = pneg %p74
      %p152 = pneg %p103
      %p153 = pneg %p100
      %p154 = scmp.lt.s32.totalorder %s14, 1
      %s155 = scalar_select %p154, %s14, 1
      %s156 = smul.addr %s155, 8
      %s157 = scalar_lea.vmem %s3, %s156
      %p158 = scmp.lt.s32.totalorder %s14, 1
      %s159 = scalar_select %p158, %s14, 1
      %s160 = smul.addr %s159, 4
      %s161 = scalar_lea.vmem %s0, %s160
      %p162 = scmp.lt.s32.totalorder %s14, 1
      %s163 = scalar_select %p162, %s14, 1
      %s164 = smul.addr %s163, 8
      %s165 = scalar_lea.vmem %s3, %s164
      %v166 = vld [vmem:[%s1] sm:$0xff]
      %v167 = vld [vmem:[%s161] sm:$0xf]
      %vm168 = vcmask 31744
      %v170 = vsel %vm168, %v166, 0
      %vm172 = vcmask 1043456
      %v174 = vsel %vm172, %v167, 0
      %176 = vmatprep.subr.mxu0 0.0
      %177 = vmatpush1.msra.mxu0 %v174
      %178 = vmatprep.subr.mxu0 0.0
      %179 = vmatpush1.msra.mxu0 0.0
      %180 = vmatprep.subr.mxu0 0.0
      %181 = vmatpush1.msra.mxu0 0.0
      %182 = vmatprep.subr.mxu0 0.0
      %183 = vmatpush1.msra.mxu0 0.0
      %184 = vmatprep.subr.mxu0 0.0
      %185 = vmatpush1.msra.mxu0 0.0
      %186 = vmatprep.subr.mxu0 0.0
      %187 = vmatpush1.msra.mxu0 0.0
      %188 = vmatprep.subr.mxu0 0.0
      %189 = vmatpush1.msra.mxu0 0.0
      %190 = vmatprep.subr.mxu0 0.0
      %191 = vmatpush1.msra.mxu0 0.0
      %192 = vmatprep.subr.mxu0 0.0
      %193 = vmatpush1.msra.mxu0 0.0
      %194 = vmatprep.subr.mxu0 0.0
      %195 = vmatpush1.msra.mxu0 0.0
      %196 = vmatprep.subr.mxu0 0.0
      %197 = vmatpush1.msra.mxu0 0.0
      %198 = vmatprep.subr.mxu0 0.0
      %199 = vmatpush1.msra.mxu0 0.0
      %200 = vmatprep.subr.mxu0 0.0
      %201 = vmatpush1.msra.mxu0 0.0
      %202 = vmatprep.subr.mxu0 0.0
      %203 = vmatpush1.msra.mxu0 0.0
      %204 = vmatprep.subr.mxu0 0.0
      %205 = vmatpush1.msra.mxu0 0.0
      %206 = vmatprep.subr.mxu0 0.0
      %207 = vmatpush1.msra.mxu0 0.0
      %208 = vmatprep.subr.mxu0 0.0
      %209 = vmatpush1.msra.mxu0 0.0
      %210 = vmatprep.subr.mxu0 0.0
      %211 = vmatpush1.msra.mxu0 0.0
      %212 = vmatprep.subr.mxu0 0.0
      %213 = vmatpush1.msra.mxu0 0.0
      %214 = vmatprep.subr.mxu0 0.0
      %215 = vmatpush1.msra.mxu0 0.0
      %216 = vmatprep.subr.mxu0 0.0
      %217 = vmatpush1.msra.mxu0 0.0
      %218 = vmatprep.subr.mxu0 0.0
      %219 = vmatpush1.msra.mxu0 0.0
      %220 = vmatprep.subr.mxu0 0.0
      %221 = vmatpush1.msra.mxu0 0.0
      %222 = vmatprep.subr.mxu0 0.0
      %223 = vmatpush1.msra.mxu0 0.0
      %224 = vmatprep.subr.mxu0 0.0
      %225 = vmatpush1.msra.mxu0 0.0
      %226 = vmatprep.subr.mxu0 0.0
      %227 = vmatpush1.msra.mxu0 0.0
      %228 = vmatprep.subr.mxu0 0.0
      %229 = vmatpush1.msra.mxu0 0.0
      %230 = vmatprep.subr.mxu0 0.0
      %231 = vmatpush1.msra.mxu0 0.0
      %232 = vmatprep.subr.mxu0 0.0
      %233 = vmatpush1.msra.mxu0 0.0
      %234 = vmatprep.subr.mxu0 0.0
      %235 = vmatpush1.msra.mxu0 0.0
      %236 = vmatprep.subr.mxu0 0.0
      %237 = vmatpush1.msra.mxu0 0.0
      %238 = vmatprep.subr.mxu0 0.0
      %239 = vmatpush1.msra.mxu0 0.0
      %240 = vmatprep.mubr.f32.mxu0 0.0
      %241 = vmatmul.mubr.f32.gmra.mrb[0].mxu0 %v170
      %v242 = vpop.f32.mrb[0].mxu0
      %v243 = vadd.f32 0.0, %v242
      %v244 = vpop.f32.mrb[0].mxu0
      %245 = vdwg.mxu0
      %v246 = vld [vmem:[%s2] sm:$0xff]
      %v247 = vld [vmem:[%s2 + $0x8] sm:$0xff]
      %v248 = vld [vmem:[%s2 + $0x10] sm:$0xff]
      %v249 = vld [vmem:[%s2 + $0x18] sm:$0xff]
      %vm250 = vcmask 261120
      %v252 = vsel %vm250, %v243, 0
      %254 = vmatprep.subr.mxu0 0.0
      %255 = vmatpush1.msra.mxu0 %v246
      %256 = vmatprep.subr.mxu0 0.0
      %257 = vmatpush1.msra.mxu0 %v247
      %258 = vmatprep.subr.mxu0 0.0
      %259 = vmatpush1.msra.mxu0 %v248
      %260 = vmatprep.subr.mxu0 0.0
      %261 = vmatpush1.msra.mxu0 %v249
      %262 = vmatprep.subr.mxu0 0.0
      %263 = vmatpush1.msra.mxu0 0.0
      %264 = vmatprep.subr.mxu0 0.0
      %265 = vmatpush1.msra.mxu0 0.0
      %266 = vmatprep.subr.mxu0 0.0
      %267 = vmatpush1.msra.mxu0 0.0
      %268 = vmatprep.subr.mxu0 0.0
      %269 = vmatpush1.msra.mxu0 0.0
      %270 = vmatprep.subr.mxu0 0.0
      %271 = vmatpush1.msra.mxu0 0.0
      %272 = vmatprep.subr.mxu0 0.0
      %273 = vmatpush1.msra.mxu0 0.0
      %274 = vmatprep.subr.mxu0 0.0
      %275 = vmatpush1.msra.mxu0 0.0
      %276 = vmatprep.subr.mxu0 0.0
      %277 = vmatpush1.msra.mxu0 0.0
      %278 = vmatprep.subr.mxu0 0.0
      %279 = vmatpush1.msra.mxu0 0.0
      %280 = vmatprep.subr.mxu0 0.0
      %281 = vmatpush1.msra.mxu0 0.0
      %282 = vmatprep.subr.mxu0 0.0
      %283 = vmatpush1.msra.mxu0 0.0
      %284 = vmatprep.subr.mxu0 0.0
      %285 = vmatpush1.msra.mxu0 0.0
      %286 = vmatprep.subr.mxu0 0.0
      %287 = vmatpush1.msra.mxu0 0.0
      %288 = vmatprep.subr.mxu0 0.0
      %289 = vmatpush1.msra.mxu0 0.0
      %290 = vmatprep.subr.mxu0 0.0
      %291 = vmatpush1.msra.mxu0 0.0
      %292 = vmatprep.subr.mxu0 0.0
      %293 = vmatpush1.msra.mxu0 0.0
      %294 = vmatprep.subr.mxu0 0.0
      %295 = vmatpush1.msra.mxu0 0.0
      %296 = vmatprep.subr.mxu0 0.0
      %297 = vmatpush1.msra.mxu0 0.0
      %298 = vmatprep.subr.mxu0 0.0
      %299 = vmatpush1.msra.mxu0 0.0
      %300 = vmatprep.subr.mxu0 0.0
      %301 = vmatpush1.msra.mxu0 0.0
      %302 = vmatprep.subr.mxu0 0.0
      %303 = vmatpush1.msra.mxu0 0.0
      %304 = vmatprep.subr.mxu0 0.0
      %305 = vmatpush1.msra.mxu0 0.0
      %306 = vmatprep.subr.mxu0 0.0
      %307 = vmatpush1.msra.mxu0 0.0
      %308 = vmatprep.subr.mxu0 0.0
      %309 = vmatpush1.msra.mxu0 0.0
      %310 = vmatprep.subr.mxu0 0.0
      %311 = vmatpush1.msra.mxu0 0.0
      %312 = vmatprep.subr.mxu0 0.0
      %313 = vmatpush1.msra.mxu0 0.0
      %314 = vmatprep.subr.mxu0 0.0
      %315 = vmatpush1.msra.mxu0 0.0
      %316 = vmatprep.subr.mxu0 0.0
      %317 = vmatpush1.msra.mxu0 0.0
      %318 = vmatprep.mubr.f32.mxu0 0.0
      %319 = vmatmul.mubr.f32.gmra.mrb[0].mxu0 %v252
      %v320 = vpop.f32.mrb[0].mxu0
      %v321 = vadd.f32 0.0, %v320
      %v322 = vpop.f32.mrb[0].mxu0
      %323 = vdwg.mxu0
      %vm324 = vcmask 523264
      %325 = vst.msk [vmem:[%s165] sm:$0xff] %vm324, %v321
      %p326 = scmp.lt.s32.totalorder %s14, 1
      %s327 = scalar_select %p326, %s14, 1
      %s328 = smul.addr %s327, 8
      %s329 = scalar_lea.vmem %s3, %s328
      // Predicated region
      $region33: #{conv_ae_forward.34} parent=31 // pred_check
        %p330 = pneg %p100
      $region34: #{conv_ae_forward.34} parent=31 // pred_check_branch
        %332 = sbr.rel (%p330) target = $region36
      $region35: #{conv_ae_forward.34} parent=31 // pred_region
        _
      $region36: #{conv_ae_forward.34} parent=31 // pred_fallthru
        _
    $region32: #{conv_ae_forward.34} parent=5 // pred_fallthru
      _
    %p333 = scmp.le.s32.totalorder 2, %s9
    // Predicated region
    $region37: #{conv_ae_forward.34} parent=5 // pred_check
      %p334 = pneg %p333
    $region38: #{conv_ae_forward.34} parent=5 // pred_check_branch
      %336 = sbr.rel (%p334) target = $region40
    $region39: #{conv_ae_forward.34} parent=5 // pred_region
      %s337 = ssub.s32 %s9, 2
      // Predicated region
      $region41: #{conv_ae_forward.34} parent=39 // pred_check
        %p338 = pneg %p106
      $region42: #{conv_ae_forward.34} parent=39 // pred_check_branch
        %340 = sbr.rel (%p338) target = $region44
      $region43: #{conv_ae_forward.34} parent=39 // pred_region
        %p341 = scmp.lt.s32.totalorder %s15, 1
        %s342 = scalar_select %p341, %s15, 1
        %s343 = smul.addr %s342, 8
        %s344 = scalar_lea.vmem %s3, %s343
      $region44: #{conv_ae_forward.34} parent=39 // pred_fallthru
        _
    $region40: #{conv_ae_forward.34} parent=5 // pred_fallthru
      _
  $region6: #{conv_ae_forward.34} parent=0 // loop_footer
    %s13 = sadd.s32 1, %s9
  $region7: #{conv_ae_forward.34} parent=0 // loop_footer_branch
    %8 = sbr.rel target = $region3
  $region8: #{conv_ae_forward.34} parent=0 // loop_exit
    _

// kernel: conv_ae_forward.35
$region0: #{conv_ae_forward.35}
  #allocation0 [shape = 'u32[]', space=smem, size = 0x4, offset = 0x4, fixed_abs, tag = 'smem constant byte address 0x4 - core index']
  #allocation1 [shape = 'u32[144,128]{1,0:T(1,128)}', space=vmem, size = 0x12000, scoped, tag = 'internal scratch']
  %s0 = inlined_call_operand.vmem [shape: f32[2,10,80], index: 0, kind: input, shape index: {}]
  %s1 = inlined_call_operand.vmem [shape: bf16[240,64], index: 1, kind: input, shape index: {}]
  %s2 = inlined_call_operand.vmem [shape: f32[2,8,64], index: 2, kind: output, shape index: {0}]
  %s3 = inlined_call_operand.vmem [shape: f32[2,2,64], index: 3, kind: output, shape index: {1}]
  %4 = xla_tuple %s2, %s3
  %s5 = sld [smem:[#allocation0]]
  $region49: #{conv_ae_forward.35} parent=0
    _
  %s7 = ssub.s32 1, %s5
  %s8 = scalar_select 0, %s7, %s5
  loop: start=0, step=1, limit=4
  $region2: #{conv_ae_forward.35} parent=0 // loop_pre_header
    _
  $region3: #{conv_ae_forward.35} parent=0 // loop_header
    %s10 = sphi 0, %s14
    %p11 = scmp.ge.s32.totalorder %s10, 4
    %s20 = sphi 0, %s22
    %s23 = sphi 0, %s20
    %s24 = sphi 0, %s23
    %s40 = sphi 0, %s24
    %s44 = sphi 0, %s44
    %s46 = sphi 0, %s44
    %s47 = sphi 0, %s46
    %s61 = sphi 0, %s47
    %s67 = sphi 0, %s69
    %s70 = sphi 0, %s67
    %s71 = sphi 0, %s70
    %s87 = sphi 0, %s71
    %s93 = sphi 0, %s95
    %s96 = sphi 0, %s93
    %s97 = sphi 0, %s96
    %s113 = sphi 0, %s97
  $region4: #{conv_ae_forward.35} parent=0 // loop_header_branch
    %13 = sbr.rel (%p11) target = $region8
  $region5: #{conv_ae_forward.35} parent=0 // loop_body
    %s15 = ssub.s32 %s10, 1
    %s16 = ssub.s32 %s10, 2
    %s17 = sadd.s32 %s10, 1
    %s18 = ssub.s32 %s10, %s17
    %p19 = scmp.eq.s32.totalorder %s18, 0
    %s21 = sadd.s32 %s20, 1
    %s22 = scalar_select %p19, %s20, %s21
    %p25 = pneg %p19
    %p26 = scmp.eq.s32.totalorder %s10, 1
    %p27 = por %p25, %p26
    %p28 = scmp.ne.s32.totalorder %s20, %s23
    %p29 = scmp.eq.s32.totalorder %s10, 0
    %p30 = por %p28, %p29
    %p31 = scmp.ne.s32.totalorder %s20, %s23
    %p32 = scmp.eq.s32.totalorder %s15, 1
    %p33 = por %p31, %p32
    %p34 = scmp.ne.s32.totalorder %s23, %s24
    %p35 = scmp.eq.s32.totalorder %s15, 0
    %p36 = por %p34, %p35
    %p37 = scmp.ne.s32.totalorder %s23, %s24
    %p38 = scmp.eq.s32.totalorder %s16, 1
    %p39 = por %p37, %p38
    %p41 = scmp.ne.s32.totalorder %s24, %s40
    %p42 = scmp.eq.s32.totalorder %s16, 0
    %p43 = por %p41, %p42
    %s45 = sadd.s32 %s44, 1
    %p48 = scmp.eq.s32.totalorder %s10, 1
    %p49 = scmp.ne.s32.totalorder %s44, %s46
    %p50 = scmp.eq.s32.totalorder %s10, 0
    %p51 = por %p49, %p50
    %p52 = scmp.ne.s32.totalorder %s44, %s46
    %p53 = scmp.eq.s32.totalorder %s15, 1
    %p54 = por %p52, %p53
    %p55 = scmp.ne.s32.totalorder %s46, %s47
    %p56 = scmp.eq.s32.totalorder %s15, 0
    %p57 = por %p55, %p56
    %p58 = scmp.ne.s32.totalorder %s46, %s47
    %p59 = scmp.eq.s32.totalorder %s16, 1
    %p60 = por %p58, %p59
    %p62 = scmp.ne.s32.totalorder %s47, %s61
    %p63 = scmp.eq.s32.totalorder %s16, 0
    %p64 = por %p62, %p63
    %s65 = ssub.s32 %s10, %s17
    %p66 = scmp.eq.s32.totalorder %s65, 0
    %s68 = sadd.s32 %s67, 1
    %s69 = scalar_select %p66, %s67, %s68
    %p72 = pneg %p66
    %p73 = scmp.eq.s32.totalorder %s10, 1
    %p74 = por %p72, %p73
    %p75 = scmp.ne.s32.totalorder %s67, %s70
    %p76 = scmp.eq.s32.totalorder %s10, 0
    %p77 = por %p75, %p76
    %p78 = scmp.ne.s32.totalorder %s67, %s70
    %p79 = scmp.eq.s32.totalorder %s15, 1
    %p80 = por %p78, %p79
    %p81 = scmp.ne.s32.totalorder %s70, %s71
    %p82 = scmp.eq.s32.totalorder %s15, 0
    %p83 = por %p81, %p82
    %p84 = scmp.ne.s32.totalorder %s70, %s71
    %p85 = scmp.eq.s32.totalorder %s16, 1
    %p86 = por %p84, %p85
    %p88 = scmp.ne.s32.totalorder %s71, %s87
    %p89 = scmp.eq.s32.totalorder %s16, 0
    %p90 = por %p88, %p89
    %s91 = ssub.s32 %s10, %s17
    %p92 = scmp.eq.s32.totalorder %s91, 0
    %s94 = sadd.s32 %s93, 1
    %s95 = scalar_select %p92, %s93, %s94
    %p98 = pneg %p92
    %p99 = scmp.eq.s32.totalorder %s10, 1
    %p100 = por %p98, %p99
    %p101 = scmp.ne.s32.totalorder %s93, %s96
    %p102 = scmp.eq.s32.totalorder %s10, 0
    %p103 = por %p101, %p102
    %p104 = scmp.ne.s32.totalorder %s93, %s96
    %p105 = scmp.eq.s32.totalorder %s15, 1
    %p106 = por %p104, %p105
    %p107 = scmp.ne.s32.totalorder %s96, %s97
    %p108 = scmp.eq.s32.totalorder %s15, 0
    %p109 = por %p107, %p108
    %p110 = scmp.ne.s32.totalorder %s96, %s97
    %p111 = scmp.eq.s32.totalorder %s16, 1
    %p112 = por %p110, %p111
    %p114 = scmp.ne.s32.totalorder %s97, %s113
    %p115 = scmp.eq.s32.totalorder %s16, 0
    %p116 = por %p114, %p115
    %p117 = scmp.le.s32.totalorder 1, %s10
    %p118 = scmp.lt.s32.totalorder %s10, 3
    %p119 = pnand %p117, %p118
    %p120 = pneg %p119
    // Predicated region
    $region9: #{conv_ae_forward.35} parent=5 // pred_check
      _
    $region10: #{conv_ae_forward.35} parent=5 // pred_check_branch
      %122 = sbr.rel (%p119) target = $region12
    $region11: #{conv_ae_forward.35} parent=5 // pred_region
      %s123 = ssub.s32 %s10, 1
      // Predicated region
      $region13: #{conv_ae_forward.35} parent=11 // pred_check
        %p124 = pneg %p57
      $region14: #{conv_ae_forward.35} parent=11 // pred_check_branch
        %126 = sbr.rel (%p124) target = $region16
      $region15: #{conv_ae_forward.35} parent=11 // pred_region
        _
      $region16: #{conv_ae_forward.35} parent=11 // pred_fallthru
        _
    $region12: #{conv_ae_forward.35} parent=5 // pred_fallthru
      _
    %p127 = scmp.lt.s32.totalorder %s10, 2
    // Predicated region
    $region17: #{conv_ae_forward.35} parent=5 // pred_check
      %p128 = pneg %p127
    $region18: #{conv_ae_forward.35} parent=5 // pred_check_branch
      %130 = sbr.rel (%p128) target = $region20
    $region19: #{conv_ae_forward.35} parent=5 // pred_region
      // Predicated region
      $region21: #{conv_ae_forward.35} parent=19 // pred_check
        %p131 = pneg %p30
      $region22: #{conv_ae_forward.35} parent=19 // pred_check_branch
        %133 = sbr.rel (%p131) target = $region24
      $region23: #{conv_ae_forward.35} parent=19 // pred_region
        %p134 = scmp.lt.s32.totalorder %s10, 1
        %s135 = scalar_select %p134, %s10, 1
        %s136 = smul.addr %s135, 2
        %s137 = smul.addr %s136, 8
        %s138 = scalar_lea.vmem %s0, %s137
      $region24: #{conv_ae_forward.35} parent=19 // pred_fallthru
        _
    $region20: #{conv_ae_forward.35} parent=5 // pred_fallthru
      _
    %p139 = scmp.le.s32.totalorder 1, %s10
    %p140 = scmp.lt.s32.totalorder %s10, 3
    %p141 = pnand %p139, %p140
    %p142 = pneg %p141
    // Predicated region
    $region25: #{conv_ae_forward.35} parent=5 // pred_check
      _
    $region26: #{conv_ae_forward.35} parent=5 // pred_check_branch
      %144 = sbr.rel (%p141) target = $region28
    $region27: #{conv_ae_forward.35} parent=5 // pred_region
      %s145 = ssub.s32 %s10, 1
      %p146 = scmp.lt.s32.totalorder %s15, 1
      %s147 = scalar_select %p146, %s15, 1
      %s148 = smul.addr %s147, 2
      %s149 = smul.addr %s148, 8
      %s150 = scalar_lea.vmem %s0, %s149
      %p151 = pneg %p36
      %p152 = pneg %p33
      %p153 = pneg %p57
      %p154 = pneg %p54
      %p155 = pneg %p83
      %p156 = pneg %p80
      %p157 = scmp.lt.s32.totalorder %s15, 1
      %s158 = scalar_select %p157, %s15, 1
      %s159 = smul.addr %s158, 8
      %s160 = scalar_lea.vmem %s2, %s159
      %p161 = pneg %p109
      %p162 = pneg %p106
      %p163 = scmp.lt.s32.totalorder %s15, 1
      %s164 = scalar_select %p163, %s15, 1
      %s165 = smul.addr %s164, 2
      %s166 = scalar_lea.vmem %s3, %s165
      %p167 = scmp.lt.s32.totalorder %s15, 1
      %s168 = scalar_select %p167, %s15, 1
      %s169 = smul.addr %s168, 2
      %s170 = smul.addr %s169, 8
      %s171 = scalar_lea.vmem %s0, %s170
      %p172 = scmp.lt.s32.totalorder %s15, 1
      %s173 = scalar_select %p172, %s15, 1
      %s174 = smul.addr %s173, 8
      %s175 = scalar_lea.vmem %s2, %s174
      %p176 = scmp.lt.s32.totalorder %s15, 1
      %s177 = scalar_select %p176, %s15, 1
      %s178 = smul.addr %s177, 2
      %s179 = scalar_lea.vmem %s3, %s178
      %v181 = vld [vmem:[%s171] sm:$0xff]
      %v182 = vld [vmem:[%s171 + $0x1] sm:$0xff]
      %v183 = vld [vmem:[%s171 + $0x2] sm:$0xff]
      %185 = vrot.lane.b32.xlu0 %v182, 80
      %v186 = vpop.permute.xlu0 %185
      %189 = vrot.lane.b32.xlu0 %v183, 32
      %v190 = vpop.permute.xlu0 %189
      %vm192 = vcmask 654336
      %v193 = vsel %vm192, %v181, %v186
      %vm194 = vcmask 261120
      %v195 = vsel %vm194, %v186, %v190
      %v196 = vpack.c.bf16 %v193, %v193
      %v197 = vpack.c.bf16 %v195, %v195
      %v198 = vld [vmem:[%s1] sm:$0xf]
      %v199 = vld [vmem:[%s1 + $0x4] sm:$0xf]
      %v200 = vld [vmem:[%s1 + $0x8] sm:$0xf]
      %v201 = vld [vmem:[%s1 + $0xc] sm:$0xf]
      %v202 = vld [vmem:[%s1 + $0x10] sm:$0xf]
      %v203 = vld [vmem:[%s1 + $0x14] sm:$0xf]
      %v204 = vld [vmem:[%s1 + $0x18] sm:$0xf]
      %v205 = vld [vmem:[%s1 + $0x1c] sm:$0xf]
      %v206 = vld [vmem:[%s1 + $0x20] sm:$0xf]
      %v207 = vld [vmem:[%s1 + $0x24] sm:$0xf]
      %v208 = vld [vmem:[%s1 + $0x28] sm:$0xf]
      %v209 = vld [vmem:[%s1 + $0x2c] sm:$0xf]
      %v210 = vld [vmem:[%s1 + $0x30] sm:$0xf]
      %v211 = vld [vmem:[%s1 + $0x34] sm:$0xf]
      %v212 = vld [vmem:[%s1 + $0x38] sm:$0xf]
      %v213 = vld [vmem:[%s1 + $0x3c] sm:$0xf]
      %v214 = vld [vmem:[%s1 + $0x40] sm:$0xf]
      %v215 = vld [vmem:[%s1 + $0x44] sm:$0xf]
      %v216 = vld [vmem:[%s1 + $0x48] sm:$0xf]
      %v217 = vld [vmem:[%s1 + $0x4c] sm:$0xf]
      %v218 = vld [vmem:[%s1 + $0x50] sm:$0xf]
      %v219 = vld [vmem:[%s1 + $0x54] sm:$0xf]
      %v220 = vld [vmem:[%s1 + $0x58] sm:$0xf]
      %v221 = vld [vmem:[%s1 + $0x5c] sm:$0xf]
      %v222 = vld [vmem:[%s1 + $0x60] sm:$0xf]
      %v223 = vld [vmem:[%s1 + $0x64] sm:$0xf]
      %v224 = vld [vmem:[%s1 + $0x68] sm:$0xf]
      %v225 = vld [vmem:[%s1 + $0x6c] sm:$0xf]
      %v226 = vld [vmem:[%s1 + $0x70] sm:$0xf]
      %v227 = vld [vmem:[%s1 + $0x74] sm:$0xf]
      %v258 = vunpack.c.l.b16 %v198
      %v259 = vunpack.c.l.b16 %v199
      %v260 = vunpack.c.l.b16 %v200
      %v261 = vunpack.c.l.b16 %v201
      %v262 = vunpack.c.l.b16 %v202
      %v263 = vunpack.c.l.b16 %v203
      %v264 = vunpack.c.l.b16 %v204
      %v265 = vunpack.c.l.b16 %v205
      %v266 = vunpack.c.l.b16 %v206
      %v267 = vunpack.c.l.b16 %v207
      %v268 = vunpack.c.l.b16 %v208
      %v269 = vunpack.c.l.b16 %v209
      %v270 = vunpack.c.l.b16 %v210
      %v271 = vunpack.c.l.b16 %v211
      %v272 = vunpack.c.l.b16 %v212
      %v273 = vunpack.c.l.b16 %v213
      %v274 = vunpack.c.l.b16 %v214
      %v275 = vunpack.c.l.b16 %v215
      %v276 = vunpack.c.l.b16 %v216
      %v277 = vunpack.c.l.b16 %v217
      %v278 = vunpack.c.l.b16 %v218
      %v279 = vunpack.c.l.b16 %v219
      %v280 = vunpack.c.l.b16 %v220
      %v281 = vunpack.c.l.b16 %v221
      %v282 = vunpack.c.l.b16 %v222
      %v283 = vunpack.c.l.b16 %v223
      %v284 = vunpack.c.l.b16 %v224
      %v285 = vunpack.c.l.b16 %v225
      %v286 = vunpack.c.l.b16 %v226
      %v287 = vunpack.c.l.b16 %v227
      %v288 = vpack.c.b16 %v259, %v258
      %v289 = vpack.c.b16 %v261, %v260
      %v290 = vpack.c.b16 %v263, %v262
      %v291 = vpack.c.b16 %v265, %v264
      %v292 = vpack.c.b16 %v267, %v266
      %v293 = vpack.c.b16 %v269, %v268
      %v294 = vpack.c.b16 %v271, %v270
      %v295 = vpack.c.b16 %v273, %v272
      %v296 = vpack.c.b16 %v275, %v274
      %v297 = vpack.c.b16 %v277, %v276
      %v298 = vpack.c.b16 %v279, %v278
      %v299 = vpack.c.b16 %v281, %v280
      %v300 = vpack.c.b16 %v283, %v282
      %v301 = vpack.c.b16 %v285, %v284
      %v302 = vpack.c.b16 %v287, %v286
      %vm318 = vcmask 916480
      %v320 = vsel %vm318, %v197, 0
      %322 = vmatprep.subr.bf16.mxu0 0
      %323 = vmatpush1.bf16.msra.mxu0 %v288
      %324 = vmatprep.subr.bf16.mxu0 0
      %325 = vmatpush1.bf16.msra.mxu0 %v289
      %326 = vmatprep.subr.bf16.mxu0 0
      %327 = vmatpush1.bf16.msra.mxu0 %v290
      %328 = vmatprep.subr.bf16.mxu0 0
      %329 = vmatpush1.bf16.msra.mxu0 %v291
      %330 = vmatprep.subr.bf16.mxu0 0
      %331 = vmatpush1.bf16.msra.mxu0 %v292
      %332 = vmatprep.subr.bf16.mxu0 0
      %333 = vmatpush1.bf16.msra.mxu0 %v293
      %334 = vmatprep.subr.bf16.mxu0 0
      %335 = vmatpush1.bf16.msra.mxu0 %v294
      %336 = vmatprep.subr.bf16.mxu0 0
      %337 = vmatpush1.bf16.msra.mxu0 %v295
      %338 = vmatprep.subr.bf16.mxu0 0
      %339 = vmatpush1.bf16.msra.mxu0 %v296
      %340 = vmatprep.subr.bf16.mxu0 0
      %341 = vmatpush1.bf16.msra.mxu0 %v297
      %342 = vmatprep.subr.bf16.mxu0 0
      %343 = vmatpush1.bf16.msra.mxu0 %v298
      %344 = vmatprep.subr.bf16.mxu0 0
      %345 = vmatpush1.bf16.msra.mxu0 %v299
      %346 = vmatprep.subr.bf16.mxu0 0
      %347 = vmatpush1.bf16.msra.mxu0 %v300
      %348 = vmatprep.subr.bf16.mxu0 0
      %349 = vmatpush1.bf16.msra.mxu0 %v301
      %350 = vmatprep.subr.bf16.mxu0 0
      %351 = vmatpush1.bf16.msra.mxu0 %v302
      %352 = vmatprep.subr.bf16.mxu0 0
      %353 = vmatpush1.bf16.msra.mxu0 0
      %354 = vmatprep.mubr.bf16.mxu0 %v320
      %355 = vmatmul.mubr.bf16.gmra.mrb[0].mxu0 %v196
      %v356 = vpop.f32.mrb[0].mxu0
      %v357 = vadd.f32 0.0, %v356
      %v358 = vpop.f32.mrb[0].mxu0
      %v359 = vpop.f32.mrb[0].mxu0
      %v360 = vpop.f32.mrb[0].mxu0
      %361 = vdwg.mxu0
      %vm362 = vcmask 523264
      %363 = vst.msk [vmem:[%s175] sm:$0xff] %vm362, %v357
      %v364 = vsel %vm362, %v357, 0.0
      %v365 = vrot.slane %v364, 4
      %v366 = vadd.f32 %v364, %v365
      %v367 = vrot.slane %v366, 2
      %v368 = vadd.f32 %v366, %v367
      %v369 = vrot.slane %v368, 1
      %v370 = vadd.f32 %v368, %v369
      %vm371 = vcmask 516096
      %372 = vst.msk [vmem:[%s179] sm:$0x1] %vm371, %v370
      %v373 = vmul.f32 %v357, %v357
      %v374 = vsel %vm362, %v373, 0.0
      %v375 = vrot.slane %v374, 4
      %v376 = vadd.f32 %v374, %v375
      %v377 = vrot.slane %v376, 2
      %v378 = vadd.f32 %v376, %v377
      %v379 = vrot.slane %v378, 1
      %v380 = vadd.f32 %v378, %v379
      %381 = vst.msk [vmem:[%s179 + $0x1] sm:$0x1] %vm371, %v380
      %p382 = scmp.lt.s32.totalorder %s15, 1
      %s383 = scalar_select %p382, %s15, 1
      %s384 = smul.addr %s383, 8
      %s385 = scalar_lea.vmem %s2, %s384
      %p386 = scmp.lt.s32.totalorder %s15, 1
      %s387 = scalar_select %p386, %s15, 1
      %s388 = smul.addr %s387, 2
      %s389 = scalar_lea.vmem %s3, %s388
      // Predicated region
      $region29: #{conv_ae_forward.35} parent=27 // pred_check
        %p390 = pneg %p80
      $region30: #{conv_ae_forward.35} parent=27 // pred_check_branch
        %392 = sbr.rel (%p390) target = $region32
      $region31: #{conv_ae_forward.35} parent=27 // pred_region
        _
      $region32: #{conv_ae_forward.35} parent=27 // pred_fallthru
        _
      // Predicated region
      $region33: #{conv_ae_forward.35} parent=27 // pred_check
        %p393 = pneg %p106
      $region34: #{conv_ae_forward.35} parent=27 // pred_check_branch
        %395 = sbr.rel (%p393) target = $region36
      $region35: #{conv_ae_forward.35} parent=27 // pred_region
        _
      $region36: #{conv_ae_forward.35} parent=27 // pred_fallthru
        _
    $region28: #{conv_ae_forward.35} parent=5 // pred_fallthru
      _
    %p396 = scmp.le.s32.totalorder 2, %s10
    // Predicated region
    $region37: #{conv_ae_forward.35} parent=5 // pred_check
      %p397 = pneg %p396
    $region38: #{conv_ae_forward.35} parent=5 // pred_check_branch
      %399 = sbr.rel (%p397) target = $region40
    $region39: #{conv_ae_forward.35} parent=5 // pred_region
      %s400 = ssub.s32 %s10, 2
      // Predicated region
      $region41: #{conv_ae_forward.35} parent=39 // pred_check
        %p401 = pneg %p86
      $region42: #{conv_ae_forward.35} parent=39 // pred_check_branch
        %403 = sbr.rel (%p401) target = $region44
      $region43: #{conv_ae_forward.35} parent=39 // pred_region
        %p404 = scmp.lt.s32.totalorder %s16, 1
        %s405 = scalar_select %p404, %s16, 1
        %s406 = smul.addr %s405, 8
        %s407 = scalar_lea.vmem %s2, %s406
      $region44: #{conv_ae_forward.35} parent=39 // pred_fallthru
        _
      // Predicated region
      $region45: #{conv_ae_forward.35} parent=39 // pred_check
        %p408 = pneg %p112
      $region46: #{conv_ae_forward.35} parent=39 // pred_check_branch
        %410 = sbr.rel (%p408) target = $region48
      $region47: #{conv_ae_forward.35} parent=39 // pred_region
        %p411 = scmp.lt.s32.totalorder %s16, 1
        %s412 = scalar_select %p411, %s16, 1
        %s413 = smul.addr %s412, 2
        %s414 = scalar_lea.vmem %s3, %s413
      $region48: #{conv_ae_forward.35} parent=39 // pred_fallthru
        _
    $region40: #{conv_ae_forward.35} parent=5 // pred_fallthru
      _
  $region6: #{conv_ae_forward.35} parent=0 // loop_footer
    %s14 = sadd.s32 1, %s10
  $region7: #{conv_ae_forward.35} parent=0 // loop_footer_branch
    %9 = sbr.rel target = $region3
  $region8: #{conv_ae_forward.35} parent=0 // loop_exit
    _

// kernel: tile.143
$region0: #{tile.143}
  #allocation0 [shape = 's32[1]{0}', space=sflag, size = 0x4, scoped, tag = 'scoped memory for tile.143']
  %s0 = inlined_call_operand.vmem [shape: f32[8], index: 0, kind: input, shape index: {}]
  %s1 = inlined_call_operand.vmem [shape: f32[8,8], index: 1, kind: output, shape index: {}]
  // Predicated region
  $region2: #{tile.143} parent=0 // pred_check
    _
  $region3: #{tile.143} parent=0 // pred_check_branch
    %3 = sbr.rel (0) target = $region5
  $region4: #{tile.143} parent=0 // pred_region
    _
  $region5: #{tile.143} parent=0 // pred_fallthru
    _
  %v4 = vld [vmem:[%s0] ss:$0 sm:$0xff]
  %5 = vst [vmem:[%s1] sm:$0xff] %v4

// kernel: tile.144
$region0: #{tile.144}
  %s0 = inlined_call_operand.vmem [shape: f32[8,8], index: 0, kind: input, shape index: {}]
  %s1 = inlined_call_operand.vmem [shape: f32[1,64], index: 1, kind: output, shape index: {}]
  $region1: #{tile.144} parent=0
    #allocation0 [shape = 'u8[4096]{0}', space=vmem, size = 0x1000, scoped, tag = 'scoped mem for output reshape']
    %v2 = vld [vmem:[%s0] sm:$0x1]
    %vm3 = vcmask 64512
    %4 = vst.msk [vmem:[#allocation0] sm:$0x1] %vm3, %v2
    %s5 = scalar_lea.vmem %s0, 7
    %v6 = vld [vmem:[%s5] sm:$0x1]
    %7 = vrot.lane.b32.xlu0 %v6, 56
    %v8 = vpop.permute.xlu0 %7
    %vm9 = vcmask 523712
    %10 = vst.msk [vmem:[#allocation0] sm:$0x1] %vm9, %v8
    %s11 = scalar_lea.vmem %s0, 6
    %v12 = vld [vmem:[%s11] sm:$0x1]
    %13 = vrot.lane.b32.xlu0 %v12, 48
    %v14 = vpop.permute.xlu0 %13
    %vm15 = vcmask 458112
    %16 = vst.msk [vmem:[#allocation0] sm:$0x1] %vm15, %v14
    %s17 = scalar_lea.vmem %s0, 5
    %v18 = vld [vmem:[%s17] sm:$0x1]
    %19 = vrot.lane.b32.xlu0 %v18, 40
    %v20 = vpop.permute.xlu0 %19
    %vm21 = vcmask 392512
    %22 = vst.msk [vmem:[#allocation0] sm:$0x1] %vm21, %v20
    %s23 = scalar_lea.vmem %s0, 4
    %v24 = vld [vmem:[%s23] sm:$0x1]
    %25 = vrot.lane.b32.xlu0 %v24, 32
    %v26 = vpop.permute.xlu0 %25
    %vm27 = vcmask 326912
    %28 = vst.msk [vmem:[#allocation0] sm:$0x1] %vm27, %v26
    %s29 = scalar_lea.vmem %s0, 3
    %v30 = vld [vmem:[%s29] sm:$0x1]
    %31 = vrot.lane.b32.xlu0 %v30, 24
    %v32 = vpop.permute.xlu0 %31
    %vm33 = vcmask 261312
    %34 = vst.msk [vmem:[#allocation0] sm:$0x1] %vm33, %v32
    %s35 = scalar_lea.vmem %s0, 2
    %v36 = vld [vmem:[%s35] sm:$0x1]
    %37 = vrot.lane.b32.xlu0 %v36, 16
    %v38 = vpop.permute.xlu0 %37
    %vm39 = vcmask 195712
    %40 = vst.msk [vmem:[#allocation0] sm:$0x1] %vm39, %v38
    %s41 = scalar_lea.vmem %s0, 1
    %v42 = vld [vmem:[%s41] sm:$0x1]
    %43 = vrot.lane.b32.xlu0 %v42, 8
    %v44 = vpop.permute.xlu0 %43
    %vm45 = vcmask 130112
    %46 = vst.msk [vmem:[#allocation0] sm:$0x1] %vm45, %v44
    %s48 = sshllo.u32 0, 1
    %v50 = vld [vmem:[#allocation0] sm:%s48]
    %s51 = sshllo.u32 0, 1
    %52 = vst [vmem:[%s1] sm:%s51] %v50

// kernel: conv_ae_forward.36
$region0: #{conv_ae_forward.36}
  #allocation0 [shape = 'u32[]', space=smem, size = 0x4, offset = 0x4, fixed_abs, tag = 'smem constant byte address 0x4 - core index']
  #allocation1 [shape = 'u32[144,128]{1,0:T(1,128)}', space=vmem, size = 0x12000, scoped, tag = 'internal scratch']
  %s0 = inlined_call_operand.vmem [shape: f32[16,64], index: 0, kind: input, shape index: {}]
  %s1 = inlined_call_operand.vmem [shape: f32[1,64], index: 1, kind: input, shape index: {}]
  %s2 = inlined_call_operand.vmem [shape: f32[1,64], index: 2, kind: input, shape index: {}]
  %s3 = inlined_call_operand.vmem [shape: f32[16,64], index: 3, kind: output, shape index: {}]
  %s4 = sld [smem:[#allocation0]]
  $region22: #{conv_ae_forward.36} parent=0
    _
  %s6 = ssub.s32 1, %s4
  %s7 = scalar_select 0, %s6, %s4
  // Predicated region
  $region2: #{conv_ae_forward.36} parent=0 // pred_check
    _
  $region3: #{conv_ae_forward.36} parent=0 // pred_check_branch
    %9 = sbr.rel (0) target = $region5
  $region4: #{conv_ae_forward.36} parent=0 // pred_region
    _
  $region5: #{conv_ae_forward.36} parent=0 // pred_fallthru
    _
  // Predicated region
  $region6: #{conv_ae_forward.36} parent=0 // pred_check
    _
  $region7: #{conv_ae_forward.36} parent=0 // pred_check_branch
    %11 = sbr.rel (0) target = $region9
  $region8: #{conv_ae_forward.36} parent=0 // pred_region
    _
  $region9: #{conv_ae_forward.36} parent=0 // pred_fallthru
    _
  // Predicated region
  $region10: #{conv_ae_forward.36} parent=0 // pred_check
    _
  $region11: #{conv_ae_forward.36} parent=0 // pred_check_branch
    %13 = sbr.rel (0) target = $region13
  $region12: #{conv_ae_forward.36} parent=0 // pred_region
    _
  $region13: #{conv_ae_forward.36} parent=0 // pred_fallthru
    _
  %v14 = vld [vmem:[%s0] sm:$0xff]
  %v15 = vld [vmem:[%s0 + $0x8] sm:$0xff]
  %v16 = vld [vmem:[%s1] sm:$0x1]
  %v18 = vlaneseq
  %v19 = vshrl.u32 %v18, 7
  %v20 = vsub.s32 0, %v19
  %v21 = vrot.slane %v16, %v20
  %v23 = vmul.f32 %v14, %v21
  %v24 = vmul.f32 %v15, %v21
  %v25 = vld [vmem:[%s2] sm:$0x1]
  %v27 = vlaneseq
  %v28 = vshrl.u32 %v27, 7
  %v29 = vsub.s32 0, %v28
  %v30 = vrot.slane %v25, %v29
  %v32 = vadd.f32 %v23, %v30
  %v33 = vadd.f32 %v24, %v30
  %v34 = vmax.f32 %v32, 0.0
  %v35 = vmax.f32 %v33, 0.0
  %vm36 = vcmask 523264
  %37 = vst.msk [vmem:[%s3] sm:$0xff] %vm36, %v34
  %38 = vst.msk [vmem:[%s3 + $0x8] sm:$0xff] %vm36, %v35
  // Predicated region
  $region14: #{conv_ae_forward.36} parent=0 // pred_check
    _
  $region15: #{conv_ae_forward.36} parent=0 // pred_check_branch
    %40 = sbr.rel (0) target = $region17
  $region16: #{conv_ae_forward.36} parent=0 // pred_region
    _
  $region17: #{conv_ae_forward.36} parent=0 // pred_fallthru
    _
  // Predicated region
  $region18: #{conv_ae_forward.36} parent=0 // pred_check
    _
  $region19: #{conv_ae_forward.36} parent=0 // pred_check_branch
    %42 = sbr.rel (0) target = $region21
  $region20: #{conv_ae_forward.36} parent=0 // pred_region
    _
  $region21: #{conv_ae_forward.36} parent=0 // pred_fallthru
    _

// kernel: tile.153
$region0: #{tile.153}
  #allocation0 [shape = 's32[1]{0}', space=sflag, size = 0x4, scoped, tag = 'scoped memory for tile.153']
  %s0 = inlined_call_operand.vmem [shape: f32[4], index: 0, kind: input, shape index: {}]
  %s1 = inlined_call_operand.vmem [shape: f32[8,4], index: 1, kind: output, shape index: {}]
  // Predicated region
  $region2: #{tile.153} parent=0 // pred_check
    _
  $region3: #{tile.153} parent=0 // pred_check_branch
    %3 = sbr.rel (0) target = $region5
  $region4: #{tile.153} parent=0 // pred_region
    _
  $region5: #{tile.153} parent=0 // pred_fallthru
    _
  %v4 = vld [vmem:[%s0] ss:$0 sm:$0xff]
  %5 = vst [vmem:[%s1] sm:$0xff] %v4

// kernel: conv_ae_forward.37
$region0: #{conv_ae_forward.37}
  #allocation0 [shape = 'u32[]', space=smem, size = 0x4, offset = 0x4, fixed_abs, tag = 'smem constant byte address 0x4 - core index']
  #allocation1 [shape = 'u32[144,128]{1,0:T(1,128)}', space=vmem, size = 0x12000, scoped, tag = 'internal scratch']
  %s0 = inlined_call_operand.vmem [shape: f32[2,10,80], index: 0, kind: input, shape index: {}]
  %s1 = inlined_call_operand.vmem [shape: bf16[240,32], index: 1, kind: input, shape index: {}]
  %s2 = inlined_call_operand.vmem [shape: f32[2,8,32], index: 2, kind: output, shape index: {0}]
  %s3 = inlined_call_operand.vmem [shape: f32[2,2,32], index: 3, kind: output, shape index: {1}]
  %4 = xla_tuple %s2, %s3
  %s5 = sld [smem:[#allocation0]]
  $region49: #{conv_ae_forward.37} parent=0
    _
  %s7 = ssub.s32 1, %s5
  %s8 = scalar_select 0, %s7, %s5
  loop: start=0, step=1, limit=4
  $region2: #{conv_ae_forward.37} parent=0 // loop_pre_header
    _
  $region3: #{conv_ae_forward.37} parent=0 // loop_header
    %s10 = sphi 0, %s14
    %p11 = scmp.ge.s32.totalorder %s10, 4
    %s20 = sphi 0, %s22
    %s23 = sphi 0, %s20
    %s24 = sphi 0, %s23
    %s40 = sphi 0, %s24
    %s44 = sphi 0, %s44
    %s46 = sphi 0, %s44
    %s47 = sphi 0, %s46
    %s61 = sphi 0, %s47
    %s67 = sphi 0, %s69
    %s70 = sphi 0, %s67
    %s71 = sphi 0, %s70
    %s87 = sphi 0, %s71
    %s93 = sphi 0, %s95
    %s96 = sphi 0, %s93
    %s97 = sphi 0, %s96
    %s113 = sphi 0, %s97
  $region4: #{conv_ae_forward.37} parent=0 // loop_header_branch
    %13 = sbr.rel (%p11) target = $region8
  $region5: #{conv_ae_forward.37} parent=0 // loop_body
    %s15 = ssub.s32 %s10, 1
    %s16 = ssub.s32 %s10, 2
    %s17 = sadd.s32 %s10, 1
    %s18 = ssub.s32 %s10, %s17
    %p19 = scmp.eq.s32.totalorder %s18, 0
    %s21 = sadd.s32 %s20, 1
    %s22 = scalar_select %p19, %s20, %s21
    %p25 = pneg %p19
    %p26 = scmp.eq.s32.totalorder %s10, 1
    %p27 = por %p25, %p26
    %p28 = scmp.ne.s32.totalorder %s20, %s23
    %p29 = scmp.eq.s32.totalorder %s10, 0
    %p30 = por %p28, %p29
    %p31 = scmp.ne.s32.totalorder %s20, %s23
    %p32 = scmp.eq.s32.totalorder %s15, 1
    %p33 = por %p31, %p32
    %p34 = scmp.ne.s32.totalorder %s23, %s24
    %p35 = scmp.eq.s32.totalorder %s15, 0
    %p36 = por %p34, %p35
    %p37 = scmp.ne.s32.totalorder %s23, %s24
    %p38 = scmp.eq.s32.totalorder %s16, 1
    %p39 = por %p37, %p38
    %p41 = scmp.ne.s32.totalorder %s24, %s40
    %p42 = scmp.eq.s32.totalorder %s16, 0
    %p43 = por %p41, %p42
    %s45 = sadd.s32 %s44, 1
    %p48 = scmp.eq.s32.totalorder %s10, 1
    %p49 = scmp.ne.s32.totalorder %s44, %s46
    %p50 = scmp.eq.s32.totalorder %s10, 0
    %p51 = por %p49, %p50
    %p52 = scmp.ne.s32.totalorder %s44, %s46
    %p53 = scmp.eq.s32.totalorder %s15, 1
    %p54 = por %p52, %p53
    %p55 = scmp.ne.s32.totalorder %s46, %s47
    %p56 = scmp.eq.s32.totalorder %s15, 0
    %p57 = por %p55, %p56
    %p58 = scmp.ne.s32.totalorder %s46, %s47
    %p59 = scmp.eq.s32.totalorder %s16, 1
    %p60 = por %p58, %p59
    %p62 = scmp.ne.s32.totalorder %s47, %s61
    %p63 = scmp.eq.s32.totalorder %s16, 0
    %p64 = por %p62, %p63
    %s65 = ssub.s32 %s10, %s17
    %p66 = scmp.eq.s32.totalorder %s65, 0
    %s68 = sadd.s32 %s67, 1
    %s69 = scalar_select %p66, %s67, %s68
    %p72 = pneg %p66
    %p73 = scmp.eq.s32.totalorder %s10, 1
    %p74 = por %p72, %p73
    %p75 = scmp.ne.s32.totalorder %s67, %s70
    %p76 = scmp.eq.s32.totalorder %s10, 0
    %p77 = por %p75, %p76
    %p78 = scmp.ne.s32.totalorder %s67, %s70
    %p79 = scmp.eq.s32.totalorder %s15, 1
    %p80 = por %p78, %p79
    %p81 = scmp.ne.s32.totalorder %s70, %s71
    %p82 = scmp.eq.s32.totalorder %s15, 0
    %p83 = por %p81, %p82
    %p84 = scmp.ne.s32.totalorder %s70, %s71
    %p85 = scmp.eq.s32.totalorder %s16, 1
    %p86 = por %p84, %p85
    %p88 = scmp.ne.s32.totalorder %s71, %s87
    %p89 = scmp.eq.s32.totalorder %s16, 0
    %p90 = por %p88, %p89
    %s91 = ssub.s32 %s10, %s17
    %p92 = scmp.eq.s32.totalorder %s91, 0
    %s94 = sadd.s32 %s93, 1
    %s95 = scalar_select %p92, %s93, %s94
    %p98 = pneg %p92
    %p99 = scmp.eq.s32.totalorder %s10, 1
    %p100 = por %p98, %p99
    %p101 = scmp.ne.s32.totalorder %s93, %s96
    %p102 = scmp.eq.s32.totalorder %s10, 0
    %p103 = por %p101, %p102
    %p104 = scmp.ne.s32.totalorder %s93, %s96
    %p105 = scmp.eq.s32.totalorder %s15, 1
    %p106 = por %p104, %p105
    %p107 = scmp.ne.s32.totalorder %s96, %s97
    %p108 = scmp.eq.s32.totalorder %s15, 0
    %p109 = por %p107, %p108
    %p110 = scmp.ne.s32.totalorder %s96, %s97
    %p111 = scmp.eq.s32.totalorder %s16, 1
    %p112 = por %p110, %p111
    %p114 = scmp.ne.s32.totalorder %s97, %s113
    %p115 = scmp.eq.s32.totalorder %s16, 0
    %p116 = por %p114, %p115
    %p117 = scmp.le.s32.totalorder 1, %s10
    %p118 = scmp.lt.s32.totalorder %s10, 3
    %p119 = pnand %p117, %p118
    %p120 = pneg %p119
    // Predicated region
    $region9: #{conv_ae_forward.37} parent=5 // pred_check
      _
    $region10: #{conv_ae_forward.37} parent=5 // pred_check_branch
      %122 = sbr.rel (%p119) target = $region12
    $region11: #{conv_ae_forward.37} parent=5 // pred_region
      %s123 = ssub.s32 %s10, 1
      // Predicated region
      $region13: #{conv_ae_forward.37} parent=11 // pred_check
        %p124 = pneg %p57
      $region14: #{conv_ae_forward.37} parent=11 // pred_check_branch
        %126 = sbr.rel (%p124) target = $region16
      $region15: #{conv_ae_forward.37} parent=11 // pred_region
        _
      $region16: #{conv_ae_forward.37} parent=11 // pred_fallthru
        _
    $region12: #{conv_ae_forward.37} parent=5 // pred_fallthru
      _
    %p127 = scmp.lt.s32.totalorder %s10, 2
    // Predicated region
    $region17: #{conv_ae_forward.37} parent=5 // pred_check
      %p128 = pneg %p127
    $region18: #{conv_ae_forward.37} parent=5 // pred_check_branch
      %130 = sbr.rel (%p128) target = $region20
    $region19: #{conv_ae_forward.37} parent=5 // pred_region
      // Predicated region
      $region21: #{conv_ae_forward.37} parent=19 // pred_check
        %p131 = pneg %p30
      $region22: #{conv_ae_forward.37} parent=19 // pred_check_branch
        %133 = sbr.rel (%p131) target = $region24
      $region23: #{conv_ae_forward.37} parent=19 // pred_region
        %p134 = scmp.lt.s32.totalorder %s10, 1
        %s135 = scalar_select %p134, %s10, 1
        %s136 = smul.addr %s135, 2
        %s137 = smul.addr %s136, 8
        %s138 = scalar_lea.vmem %s0, %s137
      $region24: #{conv_ae_forward.37} parent=19 // pred_fallthru
        _
    $region20: #{conv_ae_forward.37} parent=5 // pred_fallthru
      _
    %p139 = scmp.le.s32.totalorder 1, %s10
    %p140 = scmp.lt.s32.totalorder %s10, 3
    %p141 = pnand %p139, %p140
    %p142 = pneg %p141
    // Predicated region
    $region25: #{conv_ae_forward.37} parent=5 // pred_check
      _
    $region26: #{conv_ae_forward.37} parent=5 // pred_check_branch
      %144 = sbr.rel (%p141) target = $region28
    $region27: #{conv_ae_forward.37} parent=5 // pred_region
      %s145 = ssub.s32 %s10, 1
      %p146 = scmp.lt.s32.totalorder %s15, 1
      %s147 = scalar_select %p146, %s15, 1
      %s148 = smul.addr %s147, 2
      %s149 = smul.addr %s148, 8
      %s150 = scalar_lea.vmem %s0, %s149
      %p151 = pneg %p36
      %p152 = pneg %p33
      %p153 = pneg %p57
      %p154 = pneg %p54
      %p155 = pneg %p83
      %p156 = pneg %p80
      %p157 = scmp.lt.s32.totalorder %s15, 1
      %s158 = scalar_select %p157, %s15, 1
      %s159 = smul.addr %s158, 8
      %s160 = scalar_lea.vmem %s2, %s159
      %p161 = pneg %p109
      %p162 = pneg %p106
      %p163 = scmp.lt.s32.totalorder %s15, 1
      %s164 = scalar_select %p163, %s15, 1
      %s165 = smul.addr %s164, 2
      %s166 = scalar_lea.vmem %s3, %s165
      %p167 = scmp.lt.s32.totalorder %s15, 1
      %s168 = scalar_select %p167, %s15, 1
      %s169 = smul.addr %s168, 2
      %s170 = smul.addr %s169, 8
      %s171 = scalar_lea.vmem %s0, %s170
      %p172 = scmp.lt.s32.totalorder %s15, 1
      %s173 = scalar_select %p172, %s15, 1
      %s174 = smul.addr %s173, 8
      %s175 = scalar_lea.vmem %s2, %s174
      %p176 = scmp.lt.s32.totalorder %s15, 1
      %s177 = scalar_select %p176, %s15, 1
      %s178 = smul.addr %s177, 2
      %s179 = scalar_lea.vmem %s3, %s178
      %v181 = vld [vmem:[%s171] sm:$0xff]
      %v182 = vld [vmem:[%s171 + $0x1] sm:$0xff]
      %v183 = vld [vmem:[%s171 + $0x2] sm:$0xff]
      %185 = vrot.lane.b32.xlu0 %v182, 80
      %v186 = vpop.permute.xlu0 %185
      %189 = vrot.lane.b32.xlu0 %v183, 32
      %v190 = vpop.permute.xlu0 %189
      %vm192 = vcmask 654336
      %v193 = vsel %vm192, %v181, %v186
      %vm194 = vcmask 261120
      %v195 = vsel %vm194, %v186, %v190
      %v196 = vpack.c.bf16 %v193, %v193
      %v197 = vpack.c.bf16 %v195, %v195
      %v198 = vld [vmem:[%s1] sm:$0xf]
      %v199 = vld [vmem:[%s1 + $0x4] sm:$0xf]
      %v200 = vld [vmem:[%s1 + $0x8] sm:$0xf]
      %v201 = vld [vmem:[%s1 + $0xc] sm:$0xf]
      %v202 = vld [vmem:[%s1 + $0x10] sm:$0xf]
      %v203 = vld [vmem:[%s1 + $0x14] sm:$0xf]
      %v204 = vld [vmem:[%s1 + $0x18] sm:$0xf]
      %v205 = vld [vmem:[%s1 + $0x1c] sm:$0xf]
      %v206 = vld [vmem:[%s1 + $0x20] sm:$0xf]
      %v207 = vld [vmem:[%s1 + $0x24] sm:$0xf]
      %v208 = vld [vmem:[%s1 + $0x28] sm:$0xf]
      %v209 = vld [vmem:[%s1 + $0x2c] sm:$0xf]
      %v210 = vld [vmem:[%s1 + $0x30] sm:$0xf]
      %v211 = vld [vmem:[%s1 + $0x34] sm:$0xf]
      %v212 = vld [vmem:[%s1 + $0x38] sm:$0xf]
      %v213 = vld [vmem:[%s1 + $0x3c] sm:$0xf]
      %v214 = vld [vmem:[%s1 + $0x40] sm:$0xf]
      %v215 = vld [vmem:[%s1 + $0x44] sm:$0xf]
      %v216 = vld [vmem:[%s1 + $0x48] sm:$0xf]
      %v217 = vld [vmem:[%s1 + $0x4c] sm:$0xf]
      %v218 = vld [vmem:[%s1 + $0x50] sm:$0xf]
      %v219 = vld [vmem:[%s1 + $0x54] sm:$0xf]
      %v220 = vld [vmem:[%s1 + $0x58] sm:$0xf]
      %v221 = vld [vmem:[%s1 + $0x5c] sm:$0xf]
      %v222 = vld [vmem:[%s1 + $0x60] sm:$0xf]
      %v223 = vld [vmem:[%s1 + $0x64] sm:$0xf]
      %v224 = vld [vmem:[%s1 + $0x68] sm:$0xf]
      %v225 = vld [vmem:[%s1 + $0x6c] sm:$0xf]
      %v226 = vld [vmem:[%s1 + $0x70] sm:$0xf]
      %v227 = vld [vmem:[%s1 + $0x74] sm:$0xf]
      %v258 = vunpack.c.l.b16 %v198
      %v259 = vunpack.c.l.b16 %v199
      %v260 = vunpack.c.l.b16 %v200
      %v261 = vunpack.c.l.b16 %v201
      %v262 = vunpack.c.l.b16 %v202
      %v263 = vunpack.c.l.b16 %v203
      %v264 = vunpack.c.l.b16 %v204
      %v265 = vunpack.c.l.b16 %v205
      %v266 = vunpack.c.l.b16 %v206
      %v267 = vunpack.c.l.b16 %v207
      %v268 = vunpack.c.l.b16 %v208
      %v269 = vunpack.c.l.b16 %v209
      %v270 = vunpack.c.l.b16 %v210
      %v271 = vunpack.c.l.b16 %v211
      %v272 = vunpack.c.l.b16 %v212
      %v273 = vunpack.c.l.b16 %v213
      %v274 = vunpack.c.l.b16 %v214
      %v275 = vunpack.c.l.b16 %v215
      %v276 = vunpack.c.l.b16 %v216
      %v277 = vunpack.c.l.b16 %v217
      %v278 = vunpack.c.l.b16 %v218
      %v279 = vunpack.c.l.b16 %v219
      %v280 = vunpack.c.l.b16 %v220
      %v281 = vunpack.c.l.b16 %v221
      %v282 = vunpack.c.l.b16 %v222
      %v283 = vunpack.c.l.b16 %v223
      %v284 = vunpack.c.l.b16 %v224
      %v285 = vunpack.c.l.b16 %v225
      %v286 = vunpack.c.l.b16 %v226
      %v287 = vunpack.c.l.b16 %v227
      %v288 = vpack.c.b16 %v259, %v258
      %v289 = vpack.c.b16 %v261, %v260
      %v290 = vpack.c.b16 %v263, %v262
      %v291 = vpack.c.b16 %v265, %v264
      %v292 = vpack.c.b16 %v267, %v266
      %v293 = vpack.c.b16 %v269, %v268
      %v294 = vpack.c.b16 %v271, %v270
      %v295 = vpack.c.b16 %v273, %v272
      %v296 = vpack.c.b16 %v275, %v274
      %v297 = vpack.c.b16 %v277, %v276
      %v298 = vpack.c.b16 %v279, %v278
      %v299 = vpack.c.b16 %v281, %v280
      %v300 = vpack.c.b16 %v283, %v282
      %v301 = vpack.c.b16 %v285, %v284
      %v302 = vpack.c.b16 %v287, %v286
      %vm318 = vcmask 916480
      %v320 = vsel %vm318, %v197, 0
      %322 = vmatprep.subr.bf16.mxu0 0
      %323 = vmatpush1.bf16.msra.mxu0 %v288
      %324 = vmatprep.subr.bf16.mxu0 0
      %325 = vmatpush1.bf16.msra.mxu0 %v289
      %326 = vmatprep.subr.bf16.mxu0 0
      %327 = vmatpush1.bf16.msra.mxu0 %v290
      %328 = vmatprep.subr.bf16.mxu0 0
      %329 = vmatpush1.bf16.msra.mxu0 %v291
      %330 = vmatprep.subr.bf16.mxu0 0
      %331 = vmatpush1.bf16.msra.mxu0 %v292
      %332 = vmatprep.subr.bf16.mxu0 0
      %333 = vmatpush1.bf16.msra.mxu0 %v293
      %334 = vmatprep.subr.bf16.mxu0 0
      %335 = vmatpush1.bf16.msra.mxu0 %v294
      %336 = vmatprep.subr.bf16.mxu0 0
      %337 = vmatpush1.bf16.msra.mxu0 %v295
      %338 = vmatprep.subr.bf16.mxu0 0
      %339 = vmatpush1.bf16.msra.mxu0 %v296
      %340 = vmatprep.subr.bf16.mxu0 0
      %341 = vmatpush1.bf16.msra.mxu0 %v297
      %342 = vmatprep.subr.bf16.mxu0 0
      %343 = vmatpush1.bf16.msra.mxu0 %v298
      %344 = vmatprep.subr.bf16.mxu0 0
      %345 = vmatpush1.bf16.msra.mxu0 %v299
      %346 = vmatprep.subr.bf16.mxu0 0
      %347 = vmatpush1.bf16.msra.mxu0 %v300
      %348 = vmatprep.subr.bf16.mxu0 0
      %349 = vmatpush1.bf16.msra.mxu0 %v301
      %350 = vmatprep.subr.bf16.mxu0 0
      %351 = vmatpush1.bf16.msra.mxu0 %v302
      %352 = vmatprep.subr.bf16.mxu0 0
      %353 = vmatpush1.bf16.msra.mxu0 0
      %354 = vmatprep.mubr.bf16.mxu0 %v320
      %355 = vmatmul.mubr.bf16.gmra.mrb[0].mxu0 %v196
      %v356 = vpop.f32.mrb[0].mxu0
      %v357 = vadd.f32 0.0, %v356
      %v358 = vpop.f32.mrb[0].mxu0
      %v359 = vpop.f32.mrb[0].mxu0
      %v360 = vpop.f32.mrb[0].mxu0
      %361 = vdwg.mxu0
      %362 = vst.msk [vmem:[%s175] sm:$0xff] %vm194, %v357
      %v363 = vsel %vm194, %v357, 0.0
      %v364 = vrot.slane %v363, 4
      %v365 = vadd.f32 %v363, %v364
      %v366 = vrot.slane %v365, 2
      %v367 = vadd.f32 %v365, %v366
      %v368 = vrot.slane %v367, 1
      %v369 = vadd.f32 %v367, %v368
      %vm370 = vcmask 253952
      %371 = vst.msk [vmem:[%s179] sm:$0x1] %vm370, %v369
      %v372 = vmul.f32 %v357, %v357
      %v373 = vsel %vm194, %v372, 0.0
      %v374 = vrot.slane %v373, 4
      %v375 = vadd.f32 %v373, %v374
      %v376 = vrot.slane %v375, 2
      %v377 = vadd.f32 %v375, %v376
      %v378 = vrot.slane %v377, 1
      %v379 = vadd.f32 %v377, %v378
      %380 = vst.msk [vmem:[%s179 + $0x1] sm:$0x1] %vm370, %v379
      %p381 = scmp.lt.s32.totalorder %s15, 1
      %s382 = scalar_select %p381, %s15, 1
      %s383 = smul.addr %s382, 8
      %s384 = scalar_lea.vmem %s2, %s383
      %p385 = scmp.lt.s32.totalorder %s15, 1
      %s386 = scalar_select %p385, %s15, 1
      %s387 = smul.addr %s386, 2
      %s388 = scalar_lea.vmem %s3, %s387
      // Predicated region
      $region29: #{conv_ae_forward.37} parent=27 // pred_check
        %p389 = pneg %p80
      $region30: #{conv_ae_forward.37} parent=27 // pred_check_branch
        %391 = sbr.rel (%p389) target = $region32
      $region31: #{conv_ae_forward.37} parent=27 // pred_region
        _
      $region32: #{conv_ae_forward.37} parent=27 // pred_fallthru
        _
      // Predicated region
      $region33: #{conv_ae_forward.37} parent=27 // pred_check
        %p392 = pneg %p106
      $region34: #{conv_ae_forward.37} parent=27 // pred_check_branch
        %394 = sbr.rel (%p392) target = $region36
      $region35: #{conv_ae_forward.37} parent=27 // pred_region
        _
      $region36: #{conv_ae_forward.37} parent=27 // pred_fallthru
        _
    $region28: #{conv_ae_forward.37} parent=5 // pred_fallthru
      _
    %p395 = scmp.le.s32.totalorder 2, %s10
    // Predicated region
    $region37: #{conv_ae_forward.37} parent=5 // pred_check
      %p396 = pneg %p395
    $region38: #{conv_ae_forward.37} parent=5 // pred_check_branch
      %398 = sbr.rel (%p396) target = $region40
    $region39: #{conv_ae_forward.37} parent=5 // pred_region
      %s399 = ssub.s32 %s10, 2
      // Predicated region
      $region41: #{conv_ae_forward.37} parent=39 // pred_check
        %p400 = pneg %p86
      $region42: #{conv_ae_forward.37} parent=39 // pred_check_branch
        %402 = sbr.rel (%p400) target = $region44
      $region43: #{conv_ae_forward.37} parent=39 // pred_region
        %p403 = scmp.lt.s32.totalorder %s16, 1
        %s404 = scalar_select %p403, %s16, 1
        %s405 = smul.addr %s404, 8
        %s406 = scalar_lea.vmem %s2, %s405
      $region44: #{conv_ae_forward.37} parent=39 // pred_fallthru
        _
      // Predicated region
      $region45: #{conv_ae_forward.37} parent=39 // pred_check
        %p407 = pneg %p112
      $region46: #{conv_ae_forward.37} parent=39 // pred_check_branch
        %409 = sbr.rel (%p407) target = $region48
      $region47: #{conv_ae_forward.37} parent=39 // pred_region
        %p410 = scmp.lt.s32.totalorder %s16, 1
        %s411 = scalar_select %p410, %s16, 1
        %s412 = smul.addr %s411, 2
        %s413 = scalar_lea.vmem %s3, %s412
      $region48: #{conv_ae_forward.37} parent=39 // pred_fallthru
        _
    $region40: #{conv_ae_forward.37} parent=5 // pred_fallthru
      _
  $region6: #{conv_ae_forward.37} parent=0 // loop_footer
    %s14 = sadd.s32 1, %s10
  $region7: #{conv_ae_forward.37} parent=0 // loop_footer_branch
    %9 = sbr.rel target = $region3
  $region8: #{conv_ae_forward.37} parent=0 // loop_exit
    _

// kernel: tile.154
$region0: #{tile.154}
  %s0 = inlined_call_operand.vmem [shape: f32[8,4], index: 0, kind: input, shape index: {}]
  %s1 = inlined_call_operand.vmem [shape: f32[1,32], index: 1, kind: output, shape index: {}]
  $region1: #{tile.154} parent=0
    #allocation0 [shape = 'u8[4096]{0}', space=vmem, size = 0x1000, scoped, tag = 'scoped mem for output reshape']
    %v2 = vld [vmem:[%s0] sm:$0x1]
    %vm3 = vcmask 31744
    %4 = vst.msk [vmem:[#allocation0] sm:$0x1] %vm3, %v2
    %s5 = scalar_lea.vmem %s0, 7
    %v6 = vld [vmem:[%s5] sm:$0x1]
    %7 = vrot.lane.b32.xlu0 %v6, 28
    %v8 = vpop.permute.xlu0 %7
    %vm9 = vcmask 261344
    %10 = vst.msk [vmem:[#allocation0] sm:$0x1] %vm9, %v8
    %s11 = scalar_lea.vmem %s0, 6
    %v12 = vld [vmem:[%s11] sm:$0x1]
    %13 = vrot.lane.b32.xlu0 %v12, 24
    %v14 = vpop.permute.xlu0 %13
    %vm15 = vcmask 228544
    %16 = vst.msk [vmem:[#allocation0] sm:$0x1] %vm15, %v14
    %s17 = scalar_lea.vmem %s0, 5
    %v18 = vld [vmem:[%s17] sm:$0x1]
    %19 = vrot.lane.b32.xlu0 %v18, 20
    %v20 = vpop.permute.xlu0 %19
    %vm21 = vcmask 195744
    %22 = vst.msk [vmem:[#allocation0] sm:$0x1] %vm21, %v20
    %s23 = scalar_lea.vmem %s0, 4
    %v24 = vld [vmem:[%s23] sm:$0x1]
    %25 = vrot.lane.b32.xlu0 %v24, 16
    %v26 = vpop.permute.xlu0 %25
    %vm27 = vcmask 162944
    %28 = vst.msk [vmem:[#allocation0] sm:$0x1] %vm27, %v26
    %s29 = scalar_lea.vmem %s0, 3
    %v30 = vld [vmem:[%s29] sm:$0x1]
    %31 = vrot.lane.b32.xlu0 %v30, 12
    %v32 = vpop.permute.xlu0 %31
    %vm33 = vcmask 130144
    %34 = vst.msk [vmem:[#allocation0] sm:$0x1] %vm33, %v32
    %s35 = scalar_lea.vmem %s0, 2
    %v36 = vld [vmem:[%s35] sm:$0x1]
    %37 = vrot.lane.b32.xlu0 %v36, 8
    %v38 = vpop.permute.xlu0 %37
    %vm39 = vcmask 97344
    %40 = vst.msk [vmem:[#allocation0] sm:$0x1] %vm39, %v38
    %s41 = scalar_lea.vmem %s0, 1
    %v42 = vld [vmem:[%s41] sm:$0x1]
    %43 = vrot.lane.b32.xlu0 %v42, 4
    %v44 = vpop.permute.xlu0 %43
    %vm45 = vcmask 64544
    %46 = vst.msk [vmem:[#allocation0] sm:$0x1] %vm45, %v44
    %s48 = sshllo.u32 0, 1
    %v50 = vld [vmem:[#allocation0] sm:%s48]
    %s51 = sshllo.u32 0, 1
    %52 = vst [vmem:[%s1] sm:%s51] %v50

// kernel: conv_ae_forward.38
$region0: #{conv_ae_forward.38}
  #allocation0 [shape = 'u32[]', space=smem, size = 0x4, offset = 0x4, fixed_abs, tag = 'smem constant byte address 0x4 - core index']
  #allocation1 [shape = 'u32[144,128]{1,0:T(1,128)}', space=vmem, size = 0x12000, scoped, tag = 'internal scratch']
  %s0 = inlined_call_operand.vmem [shape: f32[16,32], index: 0, kind: input, shape index: {}]
  %s1 = inlined_call_operand.vmem [shape: f32[1,32], index: 1, kind: input, shape index: {}]
  %s2 = inlined_call_operand.vmem [shape: f32[1,32], index: 2, kind: input, shape index: {}]
  %s3 = inlined_call_operand.vmem [shape: f32[16,32], index: 3, kind: output, shape index: {}]
  %s4 = sld [smem:[#allocation0]]
  $region22: #{conv_ae_forward.38} parent=0
    _
  %s6 = ssub.s32 1, %s4
  %s7 = scalar_select 0, %s6, %s4
  // Predicated region
  $region2: #{conv_ae_forward.38} parent=0 // pred_check
    _
  $region3: #{conv_ae_forward.38} parent=0 // pred_check_branch
    %9 = sbr.rel (0) target = $region5
  $region4: #{conv_ae_forward.38} parent=0 // pred_region
    _
  $region5: #{conv_ae_forward.38} parent=0 // pred_fallthru
    _
  // Predicated region
  $region6: #{conv_ae_forward.38} parent=0 // pred_check
    _
  $region7: #{conv_ae_forward.38} parent=0 // pred_check_branch
    %11 = sbr.rel (0) target = $region9
  $region8: #{conv_ae_forward.38} parent=0 // pred_region
    _
  $region9: #{conv_ae_forward.38} parent=0 // pred_fallthru
    _
  // Predicated region
  $region10: #{conv_ae_forward.38} parent=0 // pred_check
    _
  $region11: #{conv_ae_forward.38} parent=0 // pred_check_branch
    %13 = sbr.rel (0) target = $region13
  $region12: #{conv_ae_forward.38} parent=0 // pred_region
    _
  $region13: #{conv_ae_forward.38} parent=0 // pred_fallthru
    _
  %v14 = vld [vmem:[%s0] sm:$0xff]
  %v15 = vld [vmem:[%s0 + $0x8] sm:$0xff]
  %v16 = vld [vmem:[%s1] sm:$0x1]
  %v18 = vlaneseq
  %v19 = vshrl.u32 %v18, 7
  %v20 = vsub.s32 0, %v19
  %v21 = vrot.slane %v16, %v20
  %v23 = vmul.f32 %v14, %v21
  %v24 = vmul.f32 %v15, %v21
  %v25 = vld [vmem:[%s2] sm:$0x1]
  %v27 = vlaneseq
  %v28 = vshrl.u32 %v27, 7
  %v29 = vsub.s32 0, %v28
  %v30 = vrot.slane %v25, %v29
  %v32 = vadd.f32 %v23, %v30
  %v33 = vadd.f32 %v24, %v30
  %v34 = vmax.f32 %v32, 0.0
  %v35 = vmax.f32 %v33, 0.0
  %vm36 = vcmask 261120
  %37 = vst.msk [vmem:[%s3] sm:$0xff] %vm36, %v34
  %38 = vst.msk [vmem:[%s3 + $0x8] sm:$0xff] %vm36, %v35
  // Predicated region
  $region14: #{conv_ae_forward.38} parent=0 // pred_check
    _
  $region15: #{conv_ae_forward.38} parent=0 // pred_check_branch
    %40 = sbr.rel (0) target = $region17
  $region16: #{conv_ae_forward.38} parent=0 // pred_region
    _
  $region17: #{conv_ae_forward.38} parent=0 // pred_fallthru
    _
  // Predicated region
  $region18: #{conv_ae_forward.38} parent=0 // pred_check
    _
  $region19: #{conv_ae_forward.38} parent=0 // pred_check_branch
    %42 = sbr.rel (0) target = $region21
  $region20: #{conv_ae_forward.38} parent=0 // pred_region
    _
  $region21: #{conv_ae_forward.38} parent=0 // pred_fallthru
    _

// kernel: conv_ae_forward.39
$region0: #{conv_ae_forward.39}
  #allocation0 [shape = 'u32[]', space=smem, size = 0x4, offset = 0x4, fixed_abs, tag = 'smem constant byte address 0x4 - core index']
  #allocation1 [shape = 'u32[144,128]{1,0:T(1,128)}', space=vmem, size = 0x12000, scoped, tag = 'internal scratch']
  %s0 = inlined_call_operand.vmem [shape: f32[2,8,32], index: 0, kind: input, shape index: {}]
  %s1 = inlined_call_operand.vmem [shape: f32[16,8], index: 1, kind: input, shape index: {}]
  %s2 = inlined_call_operand.vmem [shape: f32[32,64], index: 2, kind: input, shape index: {}]
  %s3 = inlined_call_operand.vmem [shape: f32[2,16,64], index: 3, kind: output, shape index: {}]
  %s4 = sld [smem:[#allocation0]]
  $region45: #{conv_ae_forward.39} parent=0
    _
  %s6 = ssub.s32 1, %s4
  %s7 = scalar_select 0, %s6, %s4
  loop: start=0, step=1, limit=4
  $region2: #{conv_ae_forward.39} parent=0 // loop_pre_header
    _
  $region3: #{conv_ae_forward.39} parent=0 // loop_header
    %s9 = sphi 0, %s13
    %p10 = scmp.ge.s32.totalorder %s9, 4
    %s19 = sphi 0, %s21
    %s22 = sphi 0, %s19
    %s23 = sphi 0, %s22
    %s39 = sphi 0, %s23
    %s43 = sphi 0, %s43
    %s45 = sphi 0, %s43
    %s46 = sphi 0, %s45
    %s60 = sphi 0, %s46
    %s64 = sphi 0, %s64
    %s66 = sphi 0, %s64
    %s67 = sphi 0, %s66
    %s81 = sphi 0, %s67
    %s87 = sphi 0, %s89
    %s90 = sphi 0, %s87
    %s91 = sphi 0, %s90
    %s107 = sphi 0, %s91
  $region4: #{conv_ae_forward.39} parent=0 // loop_header_branch
    %12 = sbr.rel (%p10) target = $region8
  $region5: #{conv_ae_forward.39} parent=0 // loop_body
    %s14 = ssub.s32 %s9, 1
    %s15 = ssub.s32 %s9, 2
    %s16 = sadd.s32 %s9, 1
    %s17 = ssub.s32 %s9, %s16
    %p18 = scmp.eq.s32.totalorder %s17, 0
    %s20 = sadd.s32 %s19, 1
    %s21 = scalar_select %p18, %s19, %s20
    %p24 = pneg %p18
    %p25 = scmp.eq.s32.totalorder %s9, 1
    %p26 = por %p24, %p25
    %p27 = scmp.ne.s32.totalorder %s19, %s22
    %p28 = scmp.eq.s32.totalorder %s9, 0
    %p29 = por %p27, %p28
    %p30 = scmp.ne.s32.totalorder %s19, %s22
    %p31 = scmp.eq.s32.totalorder %s14, 1
    %p32 = por %p30, %p31
    %p33 = scmp.ne.s32.totalorder %s22, %s23
    %p34 = scmp.eq.s32.totalorder %s14, 0
    %p35 = por %p33, %p34
    %p36 = scmp.ne.s32.totalorder %s22, %s23
    %p37 = scmp.eq.s32.totalorder %s15, 1
    %p38 = por %p36, %p37
    %p40 = scmp.ne.s32.totalorder %s23, %s39
    %p41 = scmp.eq.s32.totalorder %s15, 0
    %p42 = por %p40, %p41
    %s44 = sadd.s32 %s43, 1
    %p47 = scmp.eq.s32.totalorder %s9, 1
    %p48 = scmp.ne.s32.totalorder %s43, %s45
    %p49 = scmp.eq.s32.totalorder %s9, 0
    %p50 = por %p48, %p49
    %p51 = scmp.ne.s32.totalorder %s43, %s45
    %p52 = scmp.eq.s32.totalorder %s14, 1
    %p53 = por %p51, %p52
    %p54 = scmp.ne.s32.totalorder %s45, %s46
    %p55 = scmp.eq.s32.totalorder %s14, 0
    %p56 = por %p54, %p55
    %p57 = scmp.ne.s32.totalorder %s45, %s46
    %p58 = scmp.eq.s32.totalorder %s15, 1
    %p59 = por %p57, %p58
    %p61 = scmp.ne.s32.totalorder %s46, %s60
    %p62 = scmp.eq.s32.totalorder %s15, 0
    %p63 = por %p61, %p62
    %s65 = sadd.s32 %s64, 1
    %p68 = scmp.eq.s32.totalorder %s9, 1
    %p69 = scmp.ne.s32.totalorder %s64, %s66
    %p70 = scmp.eq.s32.totalorder %s9, 0
    %p71 = por %p69, %p70
    %p72 = scmp.ne.s32.totalorder %s64, %s66
    %p73 = scmp.eq.s32.totalorder %s14, 1
    %p74 = por %p72, %p73
    %p75 = scmp.ne.s32.totalorder %s66, %s67
    %p76 = scmp.eq.s32.totalorder %s14, 0
    %p77 = por %p75, %p76
    %p78 = scmp.ne.s32.totalorder %s66, %s67
    %p79 = scmp.eq.s32.totalorder %s15, 1
    %p80 = por %p78, %p79
    %p82 = scmp.ne.s32.totalorder %s67, %s81
    %p83 = scmp.eq.s32.totalorder %s15, 0
    %p84 = por %p82, %p83
    %s85 = ssub.s32 %s9, %s16
    %p86 = scmp.eq.s32.totalorder %s85, 0
    %s88 = sadd.s32 %s87, 1
    %s89 = scalar_select %p86, %s87, %s88
    %p92 = pneg %p86
    %p93 = scmp.eq.s32.totalorder %s9, 1
    %p94 = por %p92, %p93
    %p95 = scmp.ne.s32.totalorder %s87, %s90
    %p96 = scmp.eq.s32.totalorder %s9, 0
    %p97 = por %p95, %p96
    %p98 = scmp.ne.s32.totalorder %s87, %s90
    %p99 = scmp.eq.s32.totalorder %s14, 1
    %p100 = por %p98, %p99
    %p101 = scmp.ne.s32.totalorder %s90, %s91
    %p102 = scmp.eq.s32.totalorder %s14, 0
    %p103 = por %p101, %p102
    %p104 = scmp.ne.s32.totalorder %s90, %s91
    %p105 = scmp.eq.s32.totalorder %s15, 1
    %p106 = por %p104, %p105
    %p108 = scmp.ne.s32.totalorder %s91, %s107
    %p109 = scmp.eq.s32.totalorder %s15, 0
    %p110 = por %p108, %p109
    %p111 = scmp.le.s32.totalorder 1, %s9
    %p112 = scmp.lt.s32.totalorder %s9, 3
    %p113 = pnand %p111, %p112
    %p114 = pneg %p113
    // Predicated region
    $region9: #{conv_ae_forward.39} parent=5 // pred_check
      _
    $region10: #{conv_ae_forward.39} parent=5 // pred_check_branch
      %116 = sbr.rel (%p113) target = $region12
    $region11: #{conv_ae_forward.39} parent=5 // pred_region
      %s117 = ssub.s32 %s9, 1
      // Predicated region
      $region13: #{conv_ae_forward.39} parent=11 // pred_check
        %p118 = pneg %p56
      $region14: #{conv_ae_forward.39} parent=11 // pred_check_branch
        %120 = sbr.rel (%p118) target = $region16
      $region15: #{conv_ae_forward.39} parent=11 // pred_region
        _
      $region16: #{conv_ae_forward.39} parent=11 // pred_fallthru
        _
      // Predicated region
      $region17: #{conv_ae_forward.39} parent=11 // pred_check
        %p121 = pneg %p77
      $region18: #{conv_ae_forward.39} parent=11 // pred_check_branch
        %123 = sbr.rel (%p121) target = $region20
      $region19: #{conv_ae_forward.39} parent=11 // pred_region
        _
      $region20: #{conv_ae_forward.39} parent=11 // pred_fallthru
        _
    $region12: #{conv_ae_forward.39} parent=5 // pred_fallthru
      _
    %p124 = scmp.lt.s32.totalorder %s9, 2
    // Predicated region
    $region21: #{conv_ae_forward.39} parent=5 // pred_check
      %p125 = pneg %p124
    $region22: #{conv_ae_forward.39} parent=5 // pred_check_branch
      %127 = sbr.rel (%p125) target = $region24
    $region23: #{conv_ae_forward.39} parent=5 // pred_region
      // Predicated region
      $region25: #{conv_ae_forward.39} parent=23 // pred_check
        %p128 = pneg %p29
      $region26: #{conv_ae_forward.39} parent=23 // pred_check_branch
        %130 = sbr.rel (%p128) target = $region28
      $region27: #{conv_ae_forward.39} parent=23 // pred_region
        %p131 = scmp.lt.s32.totalorder %s9, 1
        %s132 = scalar_select %p131, %s9, 1
        %s133 = smul.addr %s132, 8
        %s134 = scalar_lea.vmem %s0, %s133
      $region28: #{conv_ae_forward.39} parent=23 // pred_fallthru
        _
    $region24: #{conv_ae_forward.39} parent=5 // pred_fallthru
      _
    %p135 = scmp.le.s32.totalorder 1, %s9
    %p136 = scmp.lt.s32.totalorder %s9, 3
    %p137 = pnand %p135, %p136
    %p138 = pneg %p137
    // Predicated region
    $region29: #{conv_ae_forward.39} parent=5 // pred_check
      _
    $region30: #{conv_ae_forward.39} parent=5 // pred_check_branch
      %140 = sbr.rel (%p137) target = $region32
    $region31: #{conv_ae_forward.39} parent=5 // pred_region
      %s141 = ssub.s32 %s9, 1
      %p142 = scmp.lt.s32.totalorder %s14, 1
      %s143 = scalar_select %p142, %s14, 1
      %s144 = smul.addr %s143, 8
      %s145 = scalar_lea.vmem %s0, %s144
      %p146 = pneg %p35
      %p147 = pneg %p32
      %p148 = pneg %p56
      %p149 = pneg %p53
      %p150 = pneg %p77
      %p151 = pneg %p74
      %p152 = pneg %p103
      %p153 = pneg %p100
      %p154 = scmp.lt.s32.totalorder %s14, 1
      %s155 = scalar_select %p154, %s14, 1
      %s156 = smul.addr %s155, 2
      %s157 = smul.addr %s156, 8
      %s158 = scalar_lea.vmem %s3, %s157
      %p159 = scmp.lt.s32.totalorder %s14, 1
      %s160 = scalar_select %p159, %s14, 1
      %s161 = smul.addr %s160, 8
      %s162 = scalar_lea.vmem %s0, %s161
      %p163 = scmp.lt.s32.totalorder %s14, 1
      %s164 = scalar_select %p163, %s14, 1
      %s165 = smul.addr %s164, 2
      %s166 = smul.addr %s165, 8
      %s167 = scalar_lea.vmem %s3, %s166
      %v168 = vld [vmem:[%s1] sm:$0xff]
      %v169 = vld [vmem:[%s1 + $0x8] sm:$0xff]
      %v170 = vld [vmem:[%s162] sm:$0xff]
      %vm171 = vcmask 64512
      %v173 = vsel %vm171, %v168, 0
      %v176 = vsel %vm171, %v169, 0
      %178 = vmatprep.subr.mxu0 0.0
      %179 = vmatpush1.msra.mxu0 %v170
      %180 = vmatprep.subr.mxu0 0.0
      %181 = vmatpush1.msra.mxu0 0.0
      %182 = vmatprep.subr.mxu0 0.0
      %183 = vmatpush1.msra.mxu0 0.0
      %184 = vmatprep.subr.mxu0 0.0
      %185 = vmatpush1.msra.mxu0 0.0
      %186 = vmatprep.subr.mxu0 0.0
      %187 = vmatpush1.msra.mxu0 0.0
      %188 = vmatprep.subr.mxu0 0.0
      %189 = vmatpush1.msra.mxu0 0.0
      %190 = vmatprep.subr.mxu0 0.0
      %191 = vmatpush1.msra.mxu0 0.0
      %192 = vmatprep.subr.mxu0 0.0
      %193 = vmatpush1.msra.mxu0 0.0
      %194 = vmatprep.subr.mxu0 0.0
      %195 = vmatpush1.msra.mxu0 0.0
      %196 = vmatprep.subr.mxu0 0.0
      %197 = vmatpush1.msra.mxu0 0.0
      %198 = vmatprep.subr.mxu0 0.0
      %199 = vmatpush1.msra.mxu0 0.0
      %200 = vmatprep.subr.mxu0 0.0
      %201 = vmatpush1.msra.mxu0 0.0
      %202 = vmatprep.subr.mxu0 0.0
      %203 = vmatpush1.msra.mxu0 0.0
      %204 = vmatprep.subr.mxu0 0.0
      %205 = vmatpush1.msra.mxu0 0.0
      %206 = vmatprep.subr.mxu0 0.0
      %207 = vmatpush1.msra.mxu0 0.0
      %208 = vmatprep.subr.mxu0 0.0
      %209 = vmatpush1.msra.mxu0 0.0
      %210 = vmatprep.subr.mxu0 0.0
      %211 = vmatpush1.msra.mxu0 0.0
      %212 = vmatprep.subr.mxu0 0.0
      %213 = vmatpush1.msra.mxu0 0.0
      %214 = vmatprep.subr.mxu0 0.0
      %215 = vmatpush1.msra.mxu0 0.0
      %216 = vmatprep.subr.mxu0 0.0
      %217 = vmatpush1.msra.mxu0 0.0
      %218 = vmatprep.subr.mxu0 0.0
      %219 = vmatpush1.msra.mxu0 0.0
      %220 = vmatprep.subr.mxu0 0.0
      %221 = vmatpush1.msra.mxu0 0.0
      %222 = vmatprep.subr.mxu0 0.0
      %223 = vmatpush1.msra.mxu0 0.0
      %224 = vmatprep.subr.mxu0 0.0
      %225 = vmatpush1.msra.mxu0 0.0
      %226 = vmatprep.subr.mxu0 0.0
      %227 = vmatpush1.msra.mxu0 0.0
      %228 = vmatprep.subr.mxu0 0.0
      %229 = vmatpush1.msra.mxu0 0.0
      %230 = vmatprep.subr.mxu0 0.0
      %231 = vmatpush1.msra.mxu0 0.0
      %232 = vmatprep.subr.mxu0 0.0
      %233 = vmatpush1.msra.mxu0 0.0
      %234 = vmatprep.subr.mxu0 0.0
      %235 = vmatpush1.msra.mxu0 0.0
      %236 = vmatprep.subr.mxu0 0.0
      %237 = vmatpush1.msra.mxu0 0.0
      %238 = vmatprep.subr.mxu0 0.0
      %239 = vmatpush1.msra.mxu0 0.0
      %240 = vmatprep.subr.mxu0 0.0
      %241 = vmatpush1.msra.mxu0 0.0
      %242 = vmatprep.mubr.f32.mxu0 0.0
      %243 = vmatmul.mubr.f32.gmra.mrb[0].mxu0 %v173
      %v244 = vpop.f32.mrb[0].mxu0
      %v245 = vadd.f32 0.0, %v244
      %v246 = vpop.f32.mrb[0].mxu0
      %247 = vmatprep.mubr.f32.mxu0 0.0
      %248 = vmatmul.mubr.f32.gmra.mrb[0].mxu0 %v176
      %v249 = vpop.f32.mrb[0].mxu0
      %v250 = vadd.f32 0.0, %v249
      %v251 = vpop.f32.mrb[0].mxu0
      %252 = vdwg.mxu0
      %v253 = vld [vmem:[%s2] sm:$0xff]
      %v254 = vld [vmem:[%s2 + $0x8] sm:$0xff]
      %v255 = vld [vmem:[%s2 + $0x10] sm:$0xff]
      %v256 = vld [vmem:[%s2 + $0x18] sm:$0xff]
      %vm257 = vcmask 261120
      %v259 = vsel %vm257, %v245, 0
      %v262 = vsel %vm257, %v250, 0
      %264 = vmatprep.subr.mxu0 0.0
      %265 = vmatpush1.msra.mxu0 %v253
      %266 = vmatprep.subr.mxu0 0.0
      %267 = vmatpush1.msra.mxu0 %v254
      %268 = vmatprep.subr.mxu0 0.0
      %269 = vmatpush1.msra.mxu0 %v255
      %270 = vmatprep.subr.mxu0 0.0
      %271 = vmatpush1.msra.mxu0 %v256
      %272 = vmatprep.subr.mxu0 0.0
      %273 = vmatpush1.msra.mxu0 0.0
      %274 = vmatprep.subr.mxu0 0.0
      %275 = vmatpush1.msra.mxu0 0.0
      %276 = vmatprep.subr.mxu0 0.0
      %277 = vmatpush1.msra.mxu0 0.0
      %278 = vmatprep.subr.mxu0 0.0
      %279 = vmatpush1.msra.mxu0 0.0
      %280 = vmatprep.subr.mxu0 0.0
      %281 = vmatpush1.msra.mxu0 0.0
      %282 = vmatprep.subr.mxu0 0.0
      %283 = vmatpush1.msra.mxu0 0.0
      %284 = vmatprep.subr.mxu0 0.0
      %285 = vmatpush1.msra.mxu0 0.0
      %286 = vmatprep.subr.mxu0 0.0
      %287 = vmatpush1.msra.mxu0 0.0
      %288 = vmatprep.subr.mxu0 0.0
      %289 = vmatpush1.msra.mxu0 0.0
      %290 = vmatprep.subr.mxu0 0.0
      %291 = vmatpush1.msra.mxu0 0.0
      %292 = vmatprep.subr.mxu0 0.0
      %293 = vmatpush1.msra.mxu0 0.0
      %294 = vmatprep.subr.mxu0 0.0
      %295 = vmatpush1.msra.mxu0 0.0
      %296 = vmatprep.subr.mxu0 0.0
      %297 = vmatpush1.msra.mxu0 0.0
      %298 = vmatprep.subr.mxu0 0.0
      %299 = vmatpush1.msra.mxu0 0.0
      %300 = vmatprep.subr.mxu0 0.0
      %301 = vmatpush1.msra.mxu0 0.0
      %302 = vmatprep.subr.mxu0 0.0
      %303 = vmatpush1.msra.mxu0 0.0
      %304 = vmatprep.subr.mxu0 0.0
      %305 = vmatpush1.msra.mxu0 0.0
      %306 = vmatprep.subr.mxu0 0.0
      %307 = vmatpush1.msra.mxu0 0.0
      %308 = vmatprep.subr.mxu0 0.0
      %309 = vmatpush1.msra.mxu0 0.0
      %310 = vmatprep.subr.mxu0 0.0
      %311 = vmatpush1.msra.mxu0 0.0
      %312 = vmatprep.subr.mxu0 0.0
      %313 = vmatpush1.msra.mxu0 0.0
      %314 = vmatprep.subr.mxu0 0.0
      %315 = vmatpush1.msra.mxu0 0.0
      %316 = vmatprep.subr.mxu0 0.0
      %317 = vmatpush1.msra.mxu0 0.0
      %318 = vmatprep.subr.mxu0 0.0
      %319 = vmatpush1.msra.mxu0 0.0
      %320 = vmatprep.subr.mxu0 0.0
      %321 = vmatpush1.msra.mxu0 0.0
      %322 = vmatprep.subr.mxu0 0.0
      %323 = vmatpush1.msra.mxu0 0.0
      %324 = vmatprep.subr.mxu0 0.0
      %325 = vmatpush1.msra.mxu0 0.0
      %326 = vmatprep.subr.mxu0 0.0
      %327 = vmatpush1.msra.mxu0 0.0
      %328 = vmatprep.mubr.f32.mxu0 0.0
      %329 = vmatmul.mubr.f32.gmra.mrb[0].mxu0 %v259
      %v330 = vpop.f32.mrb[0].mxu0
      %v331 = vadd.f32 0.0, %v330
      %v332 = vpop.f32.mrb[0].mxu0
      %333 = vmatprep.mubr.f32.mxu0 0.0
      %334 = vmatmul.mubr.f32.gmra.mrb[0].mxu0 %v262
      %v335 = vpop.f32.mrb[0].mxu0
      %v336 = vadd.f32 0.0, %v335
      %v337 = vpop.f32.mrb[0].mxu0
      %338 = vdwg.mxu0
      %vm339 = vcmask 523264
      %340 = vst.msk [vmem:[%s167] sm:$0xff] %vm339, %v331
      %341 = vst.msk [vmem:[%s167 + $0x8] sm:$0xff] %vm339, %v336
      %p342 = scmp.lt.s32.totalorder %s14, 1
      %s343 = scalar_select %p342, %s14, 1
      %s344 = smul.addr %s343, 2
      %s345 = smul.addr %s344, 8
      %s346 = scalar_lea.vmem %s3, %s345
      // Predicated region
      $region33: #{conv_ae_forward.39} parent=31 // pred_check
        %p347 = pneg %p100
      $region34: #{conv_ae_forward.39} parent=31 // pred_check_branch
        %349 = sbr.rel (%p347) target = $region36
      $region35: #{conv_ae_forward.39} parent=31 // pred_region
        _
      $region36: #{conv_ae_forward.39} parent=31 // pred_fallthru
        _
    $region32: #{conv_ae_forward.39} parent=5 // pred_fallthru
      _
    %p350 = scmp.le.s32.totalorder 2, %s9
    // Predicated region
    $region37: #{conv_ae_forward.39} parent=5 // pred_check
      %p351 = pneg %p350
    $region38: #{conv_ae_forward.39} parent=5 // pred_check_branch
      %353 = sbr.rel (%p351) target = $region40
    $region39: #{conv_ae_forward.39} parent=5 // pred_region
      %s354 = ssub.s32 %s9, 2
      // Predicated region
      $region41: #{conv_ae_forward.39} parent=39 // pred_check
        %p355 = pneg %p106
      $region42: #{conv_ae_forward.39} parent=39 // pred_check_branch
        %357 = sbr.rel (%p355) target = $region44
      $region43: #{conv_ae_forward.39} parent=39 // pred_region
        %p358 = scmp.lt.s32.totalorder %s15, 1
        %s359 = scalar_select %p358, %s15, 1
        %s360 = smul.addr %s359, 2
        %s361 = smul.addr %s360, 8
        %s362 = scalar_lea.vmem %s3, %s361
      $region44: #{conv_ae_forward.39} parent=39 // pred_fallthru
        _
    $region40: #{conv_ae_forward.39} parent=5 // pred_fallthru
      _
  $region6: #{conv_ae_forward.39} parent=0 // loop_footer
    %s13 = sadd.s32 1, %s9
  $region7: #{conv_ae_forward.39} parent=0 // loop_footer_branch
    %8 = sbr.rel target = $region3
  $region8: #{conv_ae_forward.39} parent=0 // loop_exit
    _

</llo_original>
